<compile_context>
chip_gen: v5e
topology: v5e:2x2
jax: 0.10.0
libtpu: 0.0.40
codegen_flags: <defaults>
</compile_context>

<pallas_src>
import functools

import numpy as np
import jax
import jax.numpy as jnp
from jax import lax
from jax.experimental import pallas as pl
from jax.experimental.pallas import tpu as pltpu

CP = 128            # lane-dense channel padding for hidden activations
CIN_P = 8           # network input channels padded 3 -> 8
COUT_LAST_P = 8     # final layer channels padded 3 -> 8 (trimmed HBM writeback)


# --------------------- constant gather matrices (host/numpy) --------------------- #

def _conv_gather(h, w):
    """S[(kh*3+kw)*M + a*ow + b, ih*w + iw] = 1 for Conv2d(k=3, stride=2, pad=1)."""
    oh, ow = h // 2, w // 2
    m = oh * ow
    s = np.zeros((9, m, h * w), np.float32)
    for kh in range(3):
        for kw in range(3):
            t = kh * 3 + kw
            for a in range(oh):
                for b in range(ow):
                    ih, iw = 2 * a + kh - 1, 2 * b + kw - 1
                    if 0 <= ih < h and 0 <= iw < w:
                        s[t, a * ow + b, ih * w + iw] = 1.0
    return s.reshape(9 * m, h * w)


def _deconv_gather(h, w):
    """Gather for ConvTranspose2d(k=3, stride=2, pad=1, output_pad=1): out = 2h x 2w.

    out[oh, ow] gets tap (kh, kw) from x[ih, iw] iff oh = 2*ih - 1 + kh and
    ow = 2*iw - 1 + kw with (ih, iw) in range.
    """
    OH, OW = 2 * h, 2 * w
    m = OH * OW
    s = np.zeros((9, m, h * w), np.float32)
    for kh in range(3):
        for kw in range(3):
            t = kh * 3 + kw
            for oh_ in range(OH):
                dh = oh_ + 1 - kh
                if dh % 2 or not (0 <= dh // 2 < h):
                    continue
                for ow_ in range(OW):
                    dw = ow_ + 1 - kw
                    if dw % 2 or not (0 <= dw // 2 < w):
                        continue
                    s[t, oh_ * OW + ow_, (dh // 2) * w + dw // 2] = 1.0
    return s.reshape(9 * m, h * w)


# ------------------------------ parameter preparation ---------------------------- #

_LAYER_DEFS = (("conv", "enc1"), ("conv", "enc2"), ("conv", "enc3"),
               ("deconv", "dec1"), ("deconv", "dec2"), ("deconv", "dec3"))


def prepare_params(params, h=16, w=16):
    """PyTorch-layout weights -> fused-kernel constant operands (+ static configs)."""
    arrays, cfgs = [], []
    n = len(_LAYER_DEFS)
    for li, (kind, name) in enumerate(_LAYER_DEFS):
        wt, bias = params[name + "_w"], params[name + "_b"]
        if kind == "conv":
            cout, cin = wt.shape[0], wt.shape[1]
            gather = _conv_gather(h, w)
            oh, ow = h // 2, w // 2
            # tap t rows = W_t[ci, co] = w[co, ci, kh, kw]
            taps = jnp.transpose(wt, (2, 3, 1, 0)).reshape(9, cin, cout)
        else:
            cin, cout = wt.shape[0], wt.shape[1]
            gather = _deconv_gather(h, w)
            oh, ow = 2 * h, 2 * w
            # PyTorch ConvTranspose2d weight is (Cin, Cout, kh, kw); no flip needed
            taps = jnp.transpose(wt, (2, 3, 0, 1)).reshape(9, cin, cout)
        cin_p = CIN_P if li == 0 else CP
        cout_p = COUT_LAST_P if li == n - 1 else CP
        taps = jnp.pad(taps, ((0, 0), (0, cin_p - cin), (0, cout_p - cout)))
        arrays.append((jnp.asarray(gather),
                       taps.reshape(9 * cin_p, cout_p).astype(jnp.float32),
                       jnp.pad(bias, (0, cout_p - cout)).reshape(1, cout_p)))
        cfgs.append((oh * ow, cin_p, cout_p, "sigmoid" if li == n - 1 else "relu"))
        h, w = oh, ow
    return tuple(arrays), tuple(cfgs)


# ----------------------------------- fused kernel -------------------------------- #

def _fused_kernel(*refs, cfgs):
    """refs = [x, (S, W, b) * 6, out].  One image (grid step) end-to-end in VMEM."""
    out_ref = refs[-1]
    h = refs[0][0]                                 # (H*W, CIN_P) input slab
    r = 1
    for (m, cin_p, cout_p, act) in cfgs:
        s_ref, w_ref, b_ref = refs[r], refs[r + 1], refs[r + 2]
        r += 3
        # One MXU dot gathers all nine 3x3 tap slabs at once: (9*M, Cin_p).
        g = jnp.dot(s_ref[...], h, preferred_element_type=jnp.float32)
        w_all = w_ref[...]
        acc = jnp.zeros((m, cout_p), jnp.float32)
        for t in range(9):                          # nine (M, Cin_p)x(Cin_p, Cout_p) dots
            acc = acc + jnp.dot(g[t * m:(t + 1) * m, :],
                                w_all[t * cin_p:(t + 1) * cin_p, :],
                                preferred_element_type=jnp.float32)
        acc = acc + b_ref[...]
        h = jnp.maximum(acc, 0.0) if act == "relu" else jax.nn.sigmoid(acc)
    out_ref[0] = h                                  # (out_H*out_W, COUT_LAST_P)


@functools.partial(jax.jit, static_argnames=("cfgs",))
def _forward_impl(x_nchw, layer_arrays, cfgs):
    B, C, H, W = x_nchw.shape
    # NCHW -> flattened NHWC once at the boundary (tiny), channels padded to 8.
    x = jnp.transpose(x_nchw, (0, 2, 3, 1))
    x = jnp.pad(x, ((0, 0), (0, 0), (0, 0), (0, CIN_P - C)))
    x = x.reshape(B, H * W, CIN_P)

    operands = [x]
    in_specs = [pl.BlockSpec((1, H * W, CIN_P), lambda i: (i, 0, 0))]
    for (S, Wm, b) in layer_arrays:                 # constant, VMEM-resident operands
        operands += [S, Wm, b]
        in_specs += [pl.BlockSpec(S.shape, lambda i: (0, 0)),
                     pl.BlockSpec(Wm.shape, lambda i: (0, 0)),
                     pl.BlockSpec(b.shape, lambda i: (0, 0))]

    out = pl.pallas_call(
        functools.partial(_fused_kernel, cfgs=cfgs),
        out_shape=jax.ShapeDtypeStruct((B, H * W, COUT_LAST_P), jnp.float32),
        grid=(B,),
        in_specs=in_specs,
        out_specs=pl.BlockSpec((1, H * W, COUT_LAST_P), lambda i: (i, 0, 0)),
        compiler_params=pltpu.CompilerParams(
            dimension_semantics=("parallel",),      # 1 image / TC on v7x megacore
            vmem_limit_bytes=32 * 1024 * 1024),
    )(*operands)

    # Output already comes out in dense row-major NHWC order: no pixel shuffle.
    y = out.reshape(B, H, W, COUT_LAST_P)[..., :3]
    return jnp.transpose(y, (0, 3, 1, 2))           # back to NCHW


def autoencoder_forward(x_nchw, prepared):
    layer_arrays, cfgs = prepared
    return _forward_impl(x_nchw, layer_arrays, cfgs=cfgs)


# ----------------------------- reference (lax conv) ------------------------------- #

def _ref_forward(x, p):
    def conv(x, w, b, stride, pad, lhs_dil):
        y = lax.conv_general_dilated(
            x, w, window_strides=(stride, stride), padding=pad,
            lhs_dilation=(lhs_dil, lhs_dil),
            dimension_numbers=("NCHW", "OIHW", "NCHW"),
            precision=lax.Precision.HIGHEST)
        return y + b[None, :, None, None]

    def tconv_w(w):  # PyTorch ConvTranspose weight -> equivalent conv weight
        return jnp.flip(w, axis=(2, 3)).transpose(1, 0, 2, 3)

    h = jax.nn.relu(conv(x, p["enc1_w"], p["enc1_b"], 2, ((1, 1), (1, 1)), 1))
    h = jax.nn.relu(conv(h, p["enc2_w"], p["enc2_b"], 2, ((1, 1), (1, 1)), 1))
    h = jax.nn.relu(conv(h, p["enc3_w"], p["enc3_b"], 2, ((1, 1), (1, 1)), 1))
    h = jax.nn.relu(conv(h, tconv_w(p["dec1_w"]), p["dec1_b"], 1, ((1, 2), (1, 2)), 2))
    h = jax.nn.relu(conv(h, tconv_w(p["dec2_w"]), p["dec2_b"], 1, ((1, 2), (1, 2)), 2))
    h = jax.nn.sigmoid(conv(h, tconv_w(p["dec3_w"]), p["dec3_b"], 1, ((1, 2), (1, 2)), 2))
    return h


# -------------------------------------- main -------------------------------------- #

def _init_params(key):
    scale = 0.1
    shapes = {
        "enc1_w": (16, 3, 3, 3),  "enc1_b": (16,),
        "enc2_w": (32, 16, 3, 3), "enc2_b": (32,),
        "enc3_w": (64, 32, 3, 3), "enc3_b": (64,),
        # ConvTranspose2d weights are (C_in, C_out, kH, kW) in PyTorch
        "dec1_w": (64, 32, 3, 3), "dec1_b": (32,),
        "dec2_w": (32, 16, 3, 3), "dec2_b": (16,),
        "dec3_w": (16, 3, 3, 3),  "dec3_b": (3,),
    }
    keys = jax.random.split(key, len(shapes))
    return {name: jax.random.normal(k, shp, jnp.float32) * scale
            for (name, shp), k in zip(shapes.items(), keys)}


if __name__ == "__main__":
    key = jax.random.PRNGKey(0)
    k_x, k_p = jax.random.split(key)
    x = jax.random.normal(k_x, (2, 3, 16, 16), jnp.float32)
    params = _init_params(k_p)

    prepared = prepare_params(params, h=16, w=16)   # one-time weight/gather prep
    out = jax.block_until_ready(autoencoder_forward(x, prepared))
    assert out.shape == (2, 3, 16, 16), out.shape

    ref = jax.block_until_ready(_ref_forward(x, params))
    err = float(jnp.abs(out - ref).max())
    assert jnp.allclose(out, ref, rtol=1e-3, atol=1e-5), err

    print("KERNEL_OK")
</pallas_src>

<mosaic_0001>
module attributes {stable_mosaic.version = 11 : i64} {
  func.func @_fused_kernel(%arg0: i32, %arg1: memref<1x256x8xf32, #tpu.memory_space<vmem>>, %arg2: memref<576x256xf32, #tpu.memory_space<vmem>>, %arg3: memref<72x128xf32, #tpu.memory_space<vmem>>, %arg4: memref<1x128xf32, #tpu.memory_space<vmem>>, %arg5: memref<144x64xf32, #tpu.memory_space<vmem>>, %arg6: memref<1152x128xf32, #tpu.memory_space<vmem>>, %arg7: memref<1x128xf32, #tpu.memory_space<vmem>>, %arg8: memref<36x16xf32, #tpu.memory_space<vmem>>, %arg9: memref<1152x128xf32, #tpu.memory_space<vmem>>, %arg10: memref<1x128xf32, #tpu.memory_space<vmem>>, %arg11: memref<144x4xf32, #tpu.memory_space<vmem>>, %arg12: memref<1152x128xf32, #tpu.memory_space<vmem>>, %arg13: memref<1x128xf32, #tpu.memory_space<vmem>>, %arg14: memref<576x16xf32, #tpu.memory_space<vmem>>, %arg15: memref<1152x128xf32, #tpu.memory_space<vmem>>, %arg16: memref<1x128xf32, #tpu.memory_space<vmem>>, %arg17: memref<2304x64xf32, #tpu.memory_space<vmem>>, %arg18: memref<1152x8xf32, #tpu.memory_space<vmem>>, %arg19: memref<1x8xf32, #tpu.memory_space<vmem>>, %arg20: memref<1x256x8xf32, #tpu.memory_space<vmem>>) attributes {dimension_semantics = [#tpu.dimension_semantics<parallel>], iteration_bounds = array<i64: 2>, scalar_prefetch = 0 : i64, scratch_operands = 0 : i64, tpu.core_type = #tpu.core_type<tc>, window_params = [{transform_indices = @transform_0, window_bounds = array<i64: 1, 256, 8>}, {pipeline_mode = #tpu.pipeline_mode<synchronous>, transform_indices = @transform_1, window_bounds = array<i64: 576, 256>}, {pipeline_mode = #tpu.pipeline_mode<synchronous>, transform_indices = @transform_2, window_bounds = array<i64: 72, 128>}, {pipeline_mode = #tpu.pipeline_mode<synchronous>, transform_indices = @transform_3, window_bounds = array<i64: 1, 128>}, {pipeline_mode = #tpu.pipeline_mode<synchronous>, transform_indices = @transform_4, window_bounds = array<i64: 144, 64>}, {pipeline_mode = #tpu.pipeline_mode<synchronous>, transform_indices = @transform_5, window_bounds = array<i64: 1152, 128>}, {pipeline_mode = #tpu.pipeline_mode<synchronous>, transform_indices = @transform_6, window_bounds = array<i64: 1, 128>}, {pipeline_mode = #tpu.pipeline_mode<synchronous>, transform_indices = @transform_7, window_bounds = array<i64: 36, 16>}, {pipeline_mode = #tpu.pipeline_mode<synchronous>, transform_indices = @transform_8, window_bounds = array<i64: 1152, 128>}, {pipeline_mode = #tpu.pipeline_mode<synchronous>, transform_indices = @transform_9, window_bounds = array<i64: 1, 128>}, {pipeline_mode = #tpu.pipeline_mode<synchronous>, transform_indices = @transform_10, window_bounds = array<i64: 144, 4>}, {pipeline_mode = #tpu.pipeline_mode<synchronous>, transform_indices = @transform_11, window_bounds = array<i64: 1152, 128>}, {pipeline_mode = #tpu.pipeline_mode<synchronous>, transform_indices = @transform_12, window_bounds = array<i64: 1, 128>}, {pipeline_mode = #tpu.pipeline_mode<synchronous>, transform_indices = @transform_13, window_bounds = array<i64: 576, 16>}, {pipeline_mode = #tpu.pipeline_mode<synchronous>, transform_indices = @transform_14, window_bounds = array<i64: 1152, 128>}, {pipeline_mode = #tpu.pipeline_mode<synchronous>, transform_indices = @transform_15, window_bounds = array<i64: 1, 128>}, {pipeline_mode = #tpu.pipeline_mode<synchronous>, transform_indices = @transform_16, window_bounds = array<i64: 2304, 64>}, {pipeline_mode = #tpu.pipeline_mode<synchronous>, transform_indices = @transform_17, window_bounds = array<i64: 1152, 8>}, {pipeline_mode = #tpu.pipeline_mode<synchronous>, transform_indices = @transform_18, window_bounds = array<i64: 1, 8>}, {transform_indices = @transform_19, window_bounds = array<i64: 1, 256, 8>}]} {
    %c0 = arith.constant 0 : index
    %c0_0 = arith.constant 0 : index
    %c0_1 = arith.constant 0 : index
    %0 = vector.load %arg1[%c0, %c0_0, %c0_1] : memref<1x256x8xf32, #tpu.memory_space<vmem>>, vector<1x256x8xf32>
    %1 = vector.shape_cast %0 : vector<1x256x8xf32> to vector<256x8xf32>
    %c0_2 = arith.constant 0 : index
    %c0_3 = arith.constant 0 : index
    %2 = vector.load %arg2[%c0_2, %c0_3] : memref<576x256xf32, #tpu.memory_space<vmem>>, vector<576x256xf32>
    %cst = arith.constant dense<0.000000e+00> : vector<576x8xf32>
    %3 = tpu.matmul %2, %1, %cst {dimension_numbers = #tpu.dot_dimension_numbers<[1], [0], [0], [1], [0, 0, 1, 1], [], []>} : vector<576x256xf32>, vector<256x8xf32>, vector<576x8xf32> -> vector<576x8xf32>
    %c0_4 = arith.constant 0 : index
    %c0_5 = arith.constant 0 : index
    %4 = vector.load %arg3[%c0_4, %c0_5] : memref<72x128xf32, #tpu.memory_space<vmem>>, vector<72x128xf32>
    %cst_6 = arith.constant 0.000000e+00 : f32
    %5 = vector.broadcast %cst_6 : f32 to vector<64x128xf32>
    %6 = vector.extract_strided_slice %3 {offsets = [0, 0], sizes = [64, 8], strides = [1, 1]} : vector<576x8xf32> to vector<64x8xf32>
    %7 = vector.extract_strided_slice %4 {offsets = [0, 0], sizes = [8, 128], strides = [1, 1]} : vector<72x128xf32> to vector<8x128xf32>
    %cst_7 = arith.constant dense<0.000000e+00> : vector<64x128xf32>
    %8 = tpu.matmul %6, %7, %cst_7 {dimension_numbers = #tpu.dot_dimension_numbers<[1], [0], [0], [1], [0, 0, 1, 1], [], []>} : vector<64x8xf32>, vector<8x128xf32>, vector<64x128xf32> -> vector<64x128xf32>
    %9 = arith.addf %5, %8 : vector<64x128xf32>
    %10 = vector.extract_strided_slice %3 {offsets = [64, 0], sizes = [64, 8], strides = [1, 1]} : vector<576x8xf32> to vector<64x8xf32>
    %11 = vector.extract_strided_slice %4 {offsets = [8, 0], sizes = [8, 128], strides = [1, 1]} : vector<72x128xf32> to vector<8x128xf32>
    %cst_8 = arith.constant dense<0.000000e+00> : vector<64x128xf32>
    %12 = tpu.matmul %10, %11, %cst_8 {dimension_numbers = #tpu.dot_dimension_numbers<[1], [0], [0], [1], [0, 0, 1, 1], [], []>} : vector<64x8xf32>, vector<8x128xf32>, vector<64x128xf32> -> vector<64x128xf32>
    %13 = arith.addf %9, %12 : vector<64x128xf32>
    %14 = vector.extract_strided_slice %3 {offsets = [128, 0], sizes = [64, 8], strides = [1, 1]} : vector<576x8xf32> to vector<64x8xf32>
    %15 = vector.extract_strided_slice %4 {offsets = [16, 0], sizes = [8, 128], strides = [1, 1]} : vector<72x128xf32> to vector<8x128xf32>
    %cst_9 = arith.constant dense<0.000000e+00> : vector<64x128xf32>
    %16 = tpu.matmul %14, %15, %cst_9 {dimension_numbers = #tpu.dot_dimension_numbers<[1], [0], [0], [1], [0, 0, 1, 1], [], []>} : vector<64x8xf32>, vector<8x128xf32>, vector<64x128xf32> -> vector<64x128xf32>
    %17 = arith.addf %13, %16 : vector<64x128xf32>
    %18 = vector.extract_strided_slice %3 {offsets = [192, 0], sizes = [64, 8], strides = [1, 1]} : vector<576x8xf32> to vector<64x8xf32>
    %19 = vector.extract_strided_slice %4 {offsets = [24, 0], sizes = [8, 128], strides = [1, 1]} : vector<72x128xf32> to vector<8x128xf32>
    %cst_10 = arith.constant dense<0.000000e+00> : vector<64x128xf32>
    %20 = tpu.matmul %18, %19, %cst_10 {dimension_numbers = #tpu.dot_dimension_numbers<[1], [0], [0], [1], [0, 0, 1, 1], [], []>} : vector<64x8xf32>, vector<8x128xf32>, vector<64x128xf32> -> vector<64x128xf32>
    %21 = arith.addf %17, %20 : vector<64x128xf32>
    %22 = vector.extract_strided_slice %3 {offsets = [256, 0], sizes = [64, 8], strides = [1, 1]} : vector<576x8xf32> to vector<64x8xf32>
    %23 = vector.extract_strided_slice %4 {offsets = [32, 0], sizes = [8, 128], strides = [1, 1]} : vector<72x128xf32> to vector<8x128xf32>
    %cst_11 = arith.constant dense<0.000000e+00> : vector<64x128xf32>
    %24 = tpu.matmul %22, %23, %cst_11 {dimension_numbers = #tpu.dot_dimension_numbers<[1], [0], [0], [1], [0, 0, 1, 1], [], []>} : vector<64x8xf32>, vector<8x128xf32>, vector<64x128xf32> -> vector<64x128xf32>
    %25 = arith.addf %21, %24 : vector<64x128xf32>
    %26 = vector.extract_strided_slice %3 {offsets = [320, 0], sizes = [64, 8], strides = [1, 1]} : vector<576x8xf32> to vector<64x8xf32>
    %27 = vector.extract_strided_slice %4 {offsets = [40, 0], sizes = [8, 128], strides = [1, 1]} : vector<72x128xf32> to vector<8x128xf32>
    %cst_12 = arith.constant dense<0.000000e+00> : vector<64x128xf32>
    %28 = tpu.matmul %26, %27, %cst_12 {dimension_numbers = #tpu.dot_dimension_numbers<[1], [0], [0], [1], [0, 0, 1, 1], [], []>} : vector<64x8xf32>, vector<8x128xf32>, vector<64x128xf32> -> vector<64x128xf32>
    %29 = arith.addf %25, %28 : vector<64x128xf32>
    %30 = vector.extract_strided_slice %3 {offsets = [384, 0], sizes = [64, 8], strides = [1, 1]} : vector<576x8xf32> to vector<64x8xf32>
    %31 = vector.extract_strided_slice %4 {offsets = [48, 0], sizes = [8, 128], strides = [1, 1]} : vector<72x128xf32> to vector<8x128xf32>
    %cst_13 = arith.constant dense<0.000000e+00> : vector<64x128xf32>
    %32 = tpu.matmul %30, %31, %cst_13 {dimension_numbers = #tpu.dot_dimension_numbers<[1], [0], [0], [1], [0, 0, 1, 1], [], []>} : vector<64x8xf32>, vector<8x128xf32>, vector<64x128xf32> -> vector<64x128xf32>
    %33 = arith.addf %29, %32 : vector<64x128xf32>
    %34 = vector.extract_strided_slice %3 {offsets = [448, 0], sizes = [64, 8], strides = [1, 1]} : vector<576x8xf32> to vector<64x8xf32>
    %35 = vector.extract_strided_slice %4 {offsets = [56, 0], sizes = [8, 128], strides = [1, 1]} : vector<72x128xf32> to vector<8x128xf32>
    %cst_14 = arith.constant dense<0.000000e+00> : vector<64x128xf32>
    %36 = tpu.matmul %34, %35, %cst_14 {dimension_numbers = #tpu.dot_dimension_numbers<[1], [0], [0], [1], [0, 0, 1, 1], [], []>} : vector<64x8xf32>, vector<8x128xf32>, vector<64x128xf32> -> vector<64x128xf32>
    %37 = arith.addf %33, %36 : vector<64x128xf32>
    %38 = vector.extract_strided_slice %3 {offsets = [512, 0], sizes = [64, 8], strides = [1, 1]} : vector<576x8xf32> to vector<64x8xf32>
    %39 = vector.extract_strided_slice %4 {offsets = [64, 0], sizes = [8, 128], strides = [1, 1]} : vector<72x128xf32> to vector<8x128xf32>
    %cst_15 = arith.constant dense<0.000000e+00> : vector<64x128xf32>
    %40 = tpu.matmul %38, %39, %cst_15 {dimension_numbers = #tpu.dot_dimension_numbers<[1], [0], [0], [1], [0, 0, 1, 1], [], []>} : vector<64x8xf32>, vector<8x128xf32>, vector<64x128xf32> -> vector<64x128xf32>
    %41 = arith.addf %37, %40 : vector<64x128xf32>
    %c0_16 = arith.constant 0 : index
    %c0_17 = arith.constant 0 : index
    %42 = vector.load %arg4[%c0_16, %c0_17] : memref<1x128xf32, #tpu.memory_space<vmem>>, vector<1x128xf32>
    %43 = vector.broadcast %42 : vector<1x128xf32> to vector<64x128xf32>
    %44 = arith.addf %41, %43 : vector<64x128xf32>
    %cst_18 = arith.constant 0.000000e+00 : f32
    %45 = vector.broadcast %cst_18 : f32 to vector<64x128xf32>
    %46 = arith.maximumf %44, %45 : vector<64x128xf32>
    %c0_19 = arith.constant 0 : index
    %c0_20 = arith.constant 0 : index
    %47 = vector.load %arg5[%c0_19, %c0_20] : memref<144x64xf32, #tpu.memory_space<vmem>>, vector<144x64xf32>
    %cst_21 = arith.constant dense<0.000000e+00> : vector<144x128xf32>
    %48 = tpu.matmul %47, %46, %cst_21 {dimension_numbers = #tpu.dot_dimension_numbers<[1], [0], [0], [1], [0, 0, 1, 1], [], []>} : vector<144x64xf32>, vector<64x128xf32>, vector<144x128xf32> -> vector<144x128xf32>
    %c0_22 = arith.constant 0 : index
    %c0_23 = arith.constant 0 : index
    %49 = vector.load %arg6[%c0_22, %c0_23] : memref<1152x128xf32, #tpu.memory_space<vmem>>, vector<1152x128xf32>
    %cst_24 = arith.constant 0.000000e+00 : f32
    %50 = vector.broadcast %cst_24 : f32 to vector<16x128xf32>
    %51 = vector.extract_strided_slice %48 {offsets = [0, 0], sizes = [16, 128], strides = [1, 1]} : vector<144x128xf32> to vector<16x128xf32>
    %52 = vector.extract_strided_slice %49 {offsets = [0, 0], sizes = [128, 128], strides = [1, 1]} : vector<1152x128xf32> to vector<128x128xf32>
    %cst_25 = arith.constant dense<0.000000e+00> : vector<16x128xf32>
    %53 = tpu.matmul %51, %52, %cst_25 {dimension_numbers = #tpu.dot_dimension_numbers<[1], [0], [0], [1], [0, 0, 1, 1], [], []>} : vector<16x128xf32>, vector<128x128xf32>, vector<16x128xf32> -> vector<16x128xf32>
    %54 = arith.addf %50, %53 : vector<16x128xf32>
    %55 = vector.extract_strided_slice %48 {offsets = [16, 0], sizes = [16, 128], strides = [1, 1]} : vector<144x128xf32> to vector<16x128xf32>
    %56 = vector.extract_strided_slice %49 {offsets = [128, 0], sizes = [128, 128], strides = [1, 1]} : vector<1152x128xf32> to vector<128x128xf32>
    %cst_26 = arith.constant dense<0.000000e+00> : vector<16x128xf32>
    %57 = tpu.matmul %55, %56, %cst_26 {dimension_numbers = #tpu.dot_dimension_numbers<[1], [0], [0], [1], [0, 0, 1, 1], [], []>} : vector<16x128xf32>, vector<128x128xf32>, vector<16x128xf32> -> vector<16x128xf32>
    %58 = arith.addf %54, %57 : vector<16x128xf32>
    %59 = vector.extract_strided_slice %48 {offsets = [32, 0], sizes = [16, 128], strides = [1, 1]} : vector<144x128xf32> to vector<16x128xf32>
    %60 = vector.extract_strided_slice %49 {offsets = [256, 0], sizes = [128, 128], strides = [1, 1]} : vector<1152x128xf32> to vector<128x128xf32>
    %cst_27 = arith.constant dense<0.000000e+00> : vector<16x128xf32>
    %61 = tpu.matmul %59, %60, %cst_27 {dimension_numbers = #tpu.dot_dimension_numbers<[1], [0], [0], [1], [0, 0, 1, 1], [], []>} : vector<16x128xf32>, vector<128x128xf32>, vector<16x128xf32> -> vector<16x128xf32>
    %62 = arith.addf %58, %61 : vector<16x128xf32>
    %63 = vector.extract_strided_slice %48 {offsets = [48, 0], sizes = [16, 128], strides = [1, 1]} : vector<144x128xf32> to vector<16x128xf32>
    %64 = vector.extract_strided_slice %49 {offsets = [384, 0], sizes = [128, 128], strides = [1, 1]} : vector<1152x128xf32> to vector<128x128xf32>
    %cst_28 = arith.constant dense<0.000000e+00> : vector<16x128xf32>
    %65 = tpu.matmul %63, %64, %cst_28 {dimension_numbers = #tpu.dot_dimension_numbers<[1], [0], [0], [1], [0, 0, 1, 1], [], []>} : vector<16x128xf32>, vector<128x128xf32>, vector<16x128xf32> -> vector<16x128xf32>
    %66 = arith.addf %62, %65 : vector<16x128xf32>
    %67 = vector.extract_strided_slice %48 {offsets = [64, 0], sizes = [16, 128], strides = [1, 1]} : vector<144x128xf32> to vector<16x128xf32>
    %68 = vector.extract_strided_slice %49 {offsets = [512, 0], sizes = [128, 128], strides = [1, 1]} : vector<1152x128xf32> to vector<128x128xf32>
    %cst_29 = arith.constant dense<0.000000e+00> : vector<16x128xf32>
    %69 = tpu.matmul %67, %68, %cst_29 {dimension_numbers = #tpu.dot_dimension_numbers<[1], [0], [0], [1], [0, 0, 1, 1], [], []>} : vector<16x128xf32>, vector<128x128xf32>, vector<16x128xf32> -> vector<16x128xf32>
    %70 = arith.addf %66, %69 : vector<16x128xf32>
    %71 = vector.extract_strided_slice %48 {offsets = [80, 0], sizes = [16, 128], strides = [1, 1]} : vector<144x128xf32> to vector<16x128xf32>
    %72 = vector.extract_strided_slice %49 {offsets = [640, 0], sizes = [128, 128], strides = [1, 1]} : vector<1152x128xf32> to vector<128x128xf32>
    %cst_30 = arith.constant dense<0.000000e+00> : vector<16x128xf32>
    %73 = tpu.matmul %71, %72, %cst_30 {dimension_numbers = #tpu.dot_dimension_numbers<[1], [0], [0], [1], [0, 0, 1, 1], [], []>} : vector<16x128xf32>, vector<128x128xf32>, vector<16x128xf32> -> vector<16x128xf32>
    %74 = arith.addf %70, %73 : vector<16x128xf32>
    %75 = vector.extract_strided_slice %48 {offsets = [96, 0], sizes = [16, 128], strides = [1, 1]} : vector<144x128xf32> to vector<16x128xf32>
    %76 = vector.extract_strided_slice %49 {offsets = [768, 0], sizes = [128, 128], strides = [1, 1]} : vector<1152x128xf32> to vector<128x128xf32>
    %cst_31 = arith.constant dense<0.000000e+00> : vector<16x128xf32>
    %77 = tpu.matmul %75, %76, %cst_31 {dimension_numbers = #tpu.dot_dimension_numbers<[1], [0], [0], [1], [0, 0, 1, 1], [], []>} : vector<16x128xf32>, vector<128x128xf32>, vector<16x128xf32> -> vector<16x128xf32>
    %78 = arith.addf %74, %77 : vector<16x128xf32>
    %79 = vector.extract_strided_slice %48 {offsets = [112, 0], sizes = [16, 128], strides = [1, 1]} : vector<144x128xf32> to vector<16x128xf32>
    %80 = vector.extract_strided_slice %49 {offsets = [896, 0], sizes = [128, 128], strides = [1, 1]} : vector<1152x128xf32> to vector<128x128xf32>
    %cst_32 = arith.constant dense<0.000000e+00> : vector<16x128xf32>
    %81 = tpu.matmul %79, %80, %cst_32 {dimension_numbers = #tpu.dot_dimension_numbers<[1], [0], [0], [1], [0, 0, 1, 1], [], []>} : vector<16x128xf32>, vector<128x128xf32>, vector<16x128xf32> -> vector<16x128xf32>
    %82 = arith.addf %78, %81 : vector<16x128xf32>
    %83 = vector.extract_strided_slice %48 {offsets = [128, 0], sizes = [16, 128], strides = [1, 1]} : vector<144x128xf32> to vector<16x128xf32>
    %84 = vector.extract_strided_slice %49 {offsets = [1024, 0], sizes = [128, 128], strides = [1, 1]} : vector<1152x128xf32> to vector<128x128xf32>
    %cst_33 = arith.constant dense<0.000000e+00> : vector<16x128xf32>
    %85 = tpu.matmul %83, %84, %cst_33 {dimension_numbers = #tpu.dot_dimension_numbers<[1], [0], [0], [1], [0, 0, 1, 1], [], []>} : vector<16x128xf32>, vector<128x128xf32>, vector<16x128xf32> -> vector<16x128xf32>
    %86 = arith.addf %82, %85 : vector<16x128xf32>
    %c0_34 = arith.constant 0 : index
    %c0_35 = arith.constant 0 : index
    %87 = vector.load %arg7[%c0_34, %c0_35] : memref<1x128xf32, #tpu.memory_space<vmem>>, vector<1x128xf32>
    %88 = vector.broadcast %87 : vector<1x128xf32> to vector<16x128xf32>
    %89 = arith.addf %86, %88 : vector<16x128xf32>
    %cst_36 = arith.constant 0.000000e+00 : f32
    %90 = vector.broadcast %cst_36 : f32 to vector<16x128xf32>
    %91 = arith.maximumf %89, %90 : vector<16x128xf32>
    %c0_37 = arith.constant 0 : index
    %c0_38 = arith.constant 0 : index
    %92 = vector.load %arg8[%c0_37, %c0_38] : memref<36x16xf32, #tpu.memory_space<vmem>>, vector<36x16xf32>
    %cst_39 = arith.constant dense<0.000000e+00> : vector<36x128xf32>
    %93 = tpu.matmul %92, %91, %cst_39 {dimension_numbers = #tpu.dot_dimension_numbers<[1], [0], [0], [1], [0, 0, 1, 1], [], []>} : vector<36x16xf32>, vector<16x128xf32>, vector<36x128xf32> -> vector<36x128xf32>
    %c0_40 = arith.constant 0 : index
    %c0_41 = arith.constant 0 : index
    %94 = vector.load %arg9[%c0_40, %c0_41] : memref<1152x128xf32, #tpu.memory_space<vmem>>, vector<1152x128xf32>
    %cst_42 = arith.constant 0.000000e+00 : f32
    %95 = vector.broadcast %cst_42 : f32 to vector<4x128xf32>
    %96 = vector.extract_strided_slice %93 {offsets = [0, 0], sizes = [4, 128], strides = [1, 1]} : vector<36x128xf32> to vector<4x128xf32>
    %97 = vector.extract_strided_slice %94 {offsets = [0, 0], sizes = [128, 128], strides = [1, 1]} : vector<1152x128xf32> to vector<128x128xf32>
    %cst_43 = arith.constant dense<0.000000e+00> : vector<4x128xf32>
    %98 = tpu.matmul %96, %97, %cst_43 {dimension_numbers = #tpu.dot_dimension_numbers<[1], [0], [0], [1], [0, 0, 1, 1], [], []>} : vector<4x128xf32>, vector<128x128xf32>, vector<4x128xf32> -> vector<4x128xf32>
    %99 = arith.addf %95, %98 : vector<4x128xf32>
    %100 = vector.extract_strided_slice %93 {offsets = [4, 0], sizes = [4, 128], strides = [1, 1]} : vector<36x128xf32> to vector<4x128xf32>
    %101 = vector.extract_strided_slice %94 {offsets = [128, 0], sizes = [128, 128], strides = [1, 1]} : vector<1152x128xf32> to vector<128x128xf32>
    %cst_44 = arith.constant dense<0.000000e+00> : vector<4x128xf32>
    %102 = tpu.matmul %100, %101, %cst_44 {dimension_numbers = #tpu.dot_dimension_numbers<[1], [0], [0], [1], [0, 0, 1, 1], [], []>} : vector<4x128xf32>, vector<128x128xf32>, vector<4x128xf32> -> vector<4x128xf32>
    %103 = arith.addf %99, %102 : vector<4x128xf32>
    %104 = vector.extract_strided_slice %93 {offsets = [8, 0], sizes = [4, 128], strides = [1, 1]} : vector<36x128xf32> to vector<4x128xf32>
    %105 = vector.extract_strided_slice %94 {offsets = [256, 0], sizes = [128, 128], strides = [1, 1]} : vector<1152x128xf32> to vector<128x128xf32>
    %cst_45 = arith.constant dense<0.000000e+00> : vector<4x128xf32>
    %106 = tpu.matmul %104, %105, %cst_45 {dimension_numbers = #tpu.dot_dimension_numbers<[1], [0], [0], [1], [0, 0, 1, 1], [], []>} : vector<4x128xf32>, vector<128x128xf32>, vector<4x128xf32> -> vector<4x128xf32>
    %107 = arith.addf %103, %106 : vector<4x128xf32>
    %108 = vector.extract_strided_slice %93 {offsets = [12, 0], sizes = [4, 128], strides = [1, 1]} : vector<36x128xf32> to vector<4x128xf32>
    %109 = vector.extract_strided_slice %94 {offsets = [384, 0], sizes = [128, 128], strides = [1, 1]} : vector<1152x128xf32> to vector<128x128xf32>
    %cst_46 = arith.constant dense<0.000000e+00> : vector<4x128xf32>
    %110 = tpu.matmul %108, %109, %cst_46 {dimension_numbers = #tpu.dot_dimension_numbers<[1], [0], [0], [1], [0, 0, 1, 1], [], []>} : vector<4x128xf32>, vector<128x128xf32>, vector<4x128xf32> -> vector<4x128xf32>
    %111 = arith.addf %107, %110 : vector<4x128xf32>
    %112 = vector.extract_strided_slice %93 {offsets = [16, 0], sizes = [4, 128], strides = [1, 1]} : vector<36x128xf32> to vector<4x128xf32>
    %113 = vector.extract_strided_slice %94 {offsets = [512, 0], sizes = [128, 128], strides = [1, 1]} : vector<1152x128xf32> to vector<128x128xf32>
    %cst_47 = arith.constant dense<0.000000e+00> : vector<4x128xf32>
    %114 = tpu.matmul %112, %113, %cst_47 {dimension_numbers = #tpu.dot_dimension_numbers<[1], [0], [0], [1], [0, 0, 1, 1], [], []>} : vector<4x128xf32>, vector<128x128xf32>, vector<4x128xf32> -> vector<4x128xf32>
    %115 = arith.addf %111, %114 : vector<4x128xf32>
    %116 = vector.extract_strided_slice %93 {offsets = [20, 0], sizes = [4, 128], strides = [1, 1]} : vector<36x128xf32> to vector<4x128xf32>
    %117 = vector.extract_strided_slice %94 {offsets = [640, 0], sizes = [128, 128], strides = [1, 1]} : vector<1152x128xf32> to vector<128x128xf32>
    %cst_48 = arith.constant dense<0.000000e+00> : vector<4x128xf32>
    %118 = tpu.matmul %116, %117, %cst_48 {dimension_numbers = #tpu.dot_dimension_numbers<[1], [0], [0], [1], [0, 0, 1, 1], [], []>} : vector<4x128xf32>, vector<128x128xf32>, vector<4x128xf32> -> vector<4x128xf32>
    %119 = arith.addf %115, %118 : vector<4x128xf32>
    %120 = vector.extract_strided_slice %93 {offsets = [24, 0], sizes = [4, 128], strides = [1, 1]} : vector<36x128xf32> to vector<4x128xf32>
    %121 = vector.extract_strided_slice %94 {offsets = [768, 0], sizes = [128, 128], strides = [1, 1]} : vector<1152x128xf32> to vector<128x128xf32>
    %cst_49 = arith.constant dense<0.000000e+00> : vector<4x128xf32>
    %122 = tpu.matmul %120, %121, %cst_49 {dimension_numbers = #tpu.dot_dimension_numbers<[1], [0], [0], [1], [0, 0, 1, 1], [], []>} : vector<4x128xf32>, vector<128x128xf32>, vector<4x128xf32> -> vector<4x128xf32>
    %123 = arith.addf %119, %122 : vector<4x128xf32>
    %124 = vector.extract_strided_slice %93 {offsets = [28, 0], sizes = [4, 128], strides = [1, 1]} : vector<36x128xf32> to vector<4x128xf32>
    %125 = vector.extract_strided_slice %94 {offsets = [896, 0], sizes = [128, 128], strides = [1, 1]} : vector<1152x128xf32> to vector<128x128xf32>
    %cst_50 = arith.constant dense<0.000000e+00> : vector<4x128xf32>
    %126 = tpu.matmul %124, %125, %cst_50 {dimension_numbers = #tpu.dot_dimension_numbers<[1], [0], [0], [1], [0, 0, 1, 1], [], []>} : vector<4x128xf32>, vector<128x128xf32>, vector<4x128xf32> -> vector<4x128xf32>
    %127 = arith.addf %123, %126 : vector<4x128xf32>
    %128 = vector.extract_strided_slice %93 {offsets = [32, 0], sizes = [4, 128], strides = [1, 1]} : vector<36x128xf32> to vector<4x128xf32>
    %129 = vector.extract_strided_slice %94 {offsets = [1024, 0], sizes = [128, 128], strides = [1, 1]} : vector<1152x128xf32> to vector<128x128xf32>
    %cst_51 = arith.constant dense<0.000000e+00> : vector<4x128xf32>
    %130 = tpu.matmul %128, %129, %cst_51 {dimension_numbers = #tpu.dot_dimension_numbers<[1], [0], [0], [1], [0, 0, 1, 1], [], []>} : vector<4x128xf32>, vector<128x128xf32>, vector<4x128xf32> -> vector<4x128xf32>
    %131 = arith.addf %127, %130 : vector<4x128xf32>
    %c0_52 = arith.constant 0 : index
    %c0_53 = arith.constant 0 : index
    %132 = vector.load %arg10[%c0_52, %c0_53] : memref<1x128xf32, #tpu.memory_space<vmem>>, vector<1x128xf32>
    %133 = vector.broadcast %132 : vector<1x128xf32> to vector<4x128xf32>
    %134 = arith.addf %131, %133 : vector<4x128xf32>
    %cst_54 = arith.constant 0.000000e+00 : f32
    %135 = vector.broadcast %cst_54 : f32 to vector<4x128xf32>
    %136 = arith.maximumf %134, %135 : vector<4x128xf32>
    %c0_55 = arith.constant 0 : index
    %c0_56 = arith.constant 0 : index
    %137 = vector.load %arg11[%c0_55, %c0_56] : memref<144x4xf32, #tpu.memory_space<vmem>>, vector<144x4xf32>
    %cst_57 = arith.constant dense<0.000000e+00> : vector<144x128xf32>
    %138 = tpu.matmul %137, %136, %cst_57 {dimension_numbers = #tpu.dot_dimension_numbers<[1], [0], [0], [1], [0, 0, 1, 1], [], []>} : vector<144x4xf32>, vector<4x128xf32>, vector<144x128xf32> -> vector<144x128xf32>
    %c0_58 = arith.constant 0 : index
    %c0_59 = arith.constant 0 : index
    %139 = vector.load %arg12[%c0_58, %c0_59] : memref<1152x128xf32, #tpu.memory_space<vmem>>, vector<1152x128xf32>
    %cst_60 = arith.constant 0.000000e+00 : f32
    %140 = vector.broadcast %cst_60 : f32 to vector<16x128xf32>
    %141 = vector.extract_strided_slice %138 {offsets = [0, 0], sizes = [16, 128], strides = [1, 1]} : vector<144x128xf32> to vector<16x128xf32>
    %142 = vector.extract_strided_slice %139 {offsets = [0, 0], sizes = [128, 128], strides = [1, 1]} : vector<1152x128xf32> to vector<128x128xf32>
    %cst_61 = arith.constant dense<0.000000e+00> : vector<16x128xf32>
    %143 = tpu.matmul %141, %142, %cst_61 {dimension_numbers = #tpu.dot_dimension_numbers<[1], [0], [0], [1], [0, 0, 1, 1], [], []>} : vector<16x128xf32>, vector<128x128xf32>, vector<16x128xf32> -> vector<16x128xf32>
    %144 = arith.addf %140, %143 : vector<16x128xf32>
    %145 = vector.extract_strided_slice %138 {offsets = [16, 0], sizes = [16, 128], strides = [1, 1]} : vector<144x128xf32> to vector<16x128xf32>
    %146 = vector.extract_strided_slice %139 {offsets = [128, 0], sizes = [128, 128], strides = [1, 1]} : vector<1152x128xf32> to vector<128x128xf32>
    %cst_62 = arith.constant dense<0.000000e+00> : vector<16x128xf32>
    %147 = tpu.matmul %145, %146, %cst_62 {dimension_numbers = #tpu.dot_dimension_numbers<[1], [0], [0], [1], [0, 0, 1, 1], [], []>} : vector<16x128xf32>, vector<128x128xf32>, vector<16x128xf32> -> vector<16x128xf32>
    %148 = arith.addf %144, %147 : vector<16x128xf32>
    %149 = vector.extract_strided_slice %138 {offsets = [32, 0], sizes = [16, 128], strides = [1, 1]} : vector<144x128xf32> to vector<16x128xf32>
    %150 = vector.extract_strided_slice %139 {offsets = [256, 0], sizes = [128, 128], strides = [1, 1]} : vector<1152x128xf32> to vector<128x128xf32>
    %cst_63 = arith.constant dense<0.000000e+00> : vector<16x128xf32>
    %151 = tpu.matmul %149, %150, %cst_63 {dimension_numbers = #tpu.dot_dimension_numbers<[1], [0], [0], [1], [0, 0, 1, 1], [], []>} : vector<16x128xf32>, vector<128x128xf32>, vector<16x128xf32> -> vector<16x128xf32>
    %152 = arith.addf %148, %151 : vector<16x128xf32>
    %153 = vector.extract_strided_slice %138 {offsets = [48, 0], sizes = [16, 128], strides = [1, 1]} : vector<144x128xf32> to vector<16x128xf32>
    %154 = vector.extract_strided_slice %139 {offsets = [384, 0], sizes = [128, 128], strides = [1, 1]} : vector<1152x128xf32> to vector<128x128xf32>
    %cst_64 = arith.constant dense<0.000000e+00> : vector<16x128xf32>
    %155 = tpu.matmul %153, %154, %cst_64 {dimension_numbers = #tpu.dot_dimension_numbers<[1], [0], [0], [1], [0, 0, 1, 1], [], []>} : vector<16x128xf32>, vector<128x128xf32>, vector<16x128xf32> -> vector<16x128xf32>
    %156 = arith.addf %152, %155 : vector<16x128xf32>
    %157 = vector.extract_strided_slice %138 {offsets = [64, 0], sizes = [16, 128], strides = [1, 1]} : vector<144x128xf32> to vector<16x128xf32>
    %158 = vector.extract_strided_slice %139 {offsets = [512, 0], sizes = [128, 128], strides = [1, 1]} : vector<1152x128xf32> to vector<128x128xf32>
    %cst_65 = arith.constant dense<0.000000e+00> : vector<16x128xf32>
    %159 = tpu.matmul %157, %158, %cst_65 {dimension_numbers = #tpu.dot_dimension_numbers<[1], [0], [0], [1], [0, 0, 1, 1], [], []>} : vector<16x128xf32>, vector<128x128xf32>, vector<16x128xf32> -> vector<16x128xf32>
    %160 = arith.addf %156, %159 : vector<16x128xf32>
    %161 = vector.extract_strided_slice %138 {offsets = [80, 0], sizes = [16, 128], strides = [1, 1]} : vector<144x128xf32> to vector<16x128xf32>
    %162 = vector.extract_strided_slice %139 {offsets = [640, 0], sizes = [128, 128], strides = [1, 1]} : vector<1152x128xf32> to vector<128x128xf32>
    %cst_66 = arith.constant dense<0.000000e+00> : vector<16x128xf32>
    %163 = tpu.matmul %161, %162, %cst_66 {dimension_numbers = #tpu.dot_dimension_numbers<[1], [0], [0], [1], [0, 0, 1, 1], [], []>} : vector<16x128xf32>, vector<128x128xf32>, vector<16x128xf32> -> vector<16x128xf32>
    %164 = arith.addf %160, %163 : vector<16x128xf32>
    %165 = vector.extract_strided_slice %138 {offsets = [96, 0], sizes = [16, 128], strides = [1, 1]} : vector<144x128xf32> to vector<16x128xf32>
    %166 = vector.extract_strided_slice %139 {offsets = [768, 0], sizes = [128, 128], strides = [1, 1]} : vector<1152x128xf32> to vector<128x128xf32>
    %cst_67 = arith.constant dense<0.000000e+00> : vector<16x128xf32>
    %167 = tpu.matmul %165, %166, %cst_67 {dimension_numbers = #tpu.dot_dimension_numbers<[1], [0], [0], [1], [0, 0, 1, 1], [], []>} : vector<16x128xf32>, vector<128x128xf32>, vector<16x128xf32> -> vector<16x128xf32>
    %168 = arith.addf %164, %167 : vector<16x128xf32>
    %169 = vector.extract_strided_slice %138 {offsets = [112, 0], sizes = [16, 128], strides = [1, 1]} : vector<144x128xf32> to vector<16x128xf32>
    %170 = vector.extract_strided_slice %139 {offsets = [896, 0], sizes = [128, 128], strides = [1, 1]} : vector<1152x128xf32> to vector<128x128xf32>
    %cst_68 = arith.constant dense<0.000000e+00> : vector<16x128xf32>
    %171 = tpu.matmul %169, %170, %cst_68 {dimension_numbers = #tpu.dot_dimension_numbers<[1], [0], [0], [1], [0, 0, 1, 1], [], []>} : vector<16x128xf32>, vector<128x128xf32>, vector<16x128xf32> -> vector<16x128xf32>
    %172 = arith.addf %168, %171 : vector<16x128xf32>
    %173 = vector.extract_strided_slice %138 {offsets = [128, 0], sizes = [16, 128], strides = [1, 1]} : vector<144x128xf32> to vector<16x128xf32>
    %174 = vector.extract_strided_slice %139 {offsets = [1024, 0], sizes = [128, 128], strides = [1, 1]} : vector<1152x128xf32> to vector<128x128xf32>
    %cst_69 = arith.constant dense<0.000000e+00> : vector<16x128xf32>
    %175 = tpu.matmul %173, %174, %cst_69 {dimension_numbers = #tpu.dot_dimension_numbers<[1], [0], [0], [1], [0, 0, 1, 1], [], []>} : vector<16x128xf32>, vector<128x128xf32>, vector<16x128xf32> -> vector<16x128xf32>
    %176 = arith.addf %172, %175 : vector<16x128xf32>
    %c0_70 = arith.constant 0 : index
    %c0_71 = arith.constant 0 : index
    %177 = vector.load %arg13[%c0_70, %c0_71] : memref<1x128xf32, #tpu.memory_space<vmem>>, vector<1x128xf32>
    %178 = vector.broadcast %177 : vector<1x128xf32> to vector<16x128xf32>
    %179 = arith.addf %176, %178 : vector<16x128xf32>
    %cst_72 = arith.constant 0.000000e+00 : f32
    %180 = vector.broadcast %cst_72 : f32 to vector<16x128xf32>
    %181 = arith.maximumf %179, %180 : vector<16x128xf32>
    %c0_73 = arith.constant 0 : index
    %c0_74 = arith.constant 0 : index
    %182 = vector.load %arg14[%c0_73, %c0_74] : memref<576x16xf32, #tpu.memory_space<vmem>>, vector<576x16xf32>
    %cst_75 = arith.constant dense<0.000000e+00> : vector<576x128xf32>
    %183 = tpu.matmul %182, %181, %cst_75 {dimension_numbers = #tpu.dot_dimension_numbers<[1], [0], [0], [1], [0, 0, 1, 1], [], []>} : vector<576x16xf32>, vector<16x128xf32>, vector<576x128xf32> -> vector<576x128xf32>
    %c0_76 = arith.constant 0 : index
    %c0_77 = arith.constant 0 : index
    %184 = vector.load %arg15[%c0_76, %c0_77] : memref<1152x128xf32, #tpu.memory_space<vmem>>, vector<1152x128xf32>
    %cst_78 = arith.constant 0.000000e+00 : f32
    %185 = vector.broadcast %cst_78 : f32 to vector<64x128xf32>
    %186 = vector.extract_strided_slice %183 {offsets = [0, 0], sizes = [64, 128], strides = [1, 1]} : vector<576x128xf32> to vector<64x128xf32>
    %187 = vector.extract_strided_slice %184 {offsets = [0, 0], sizes = [128, 128], strides = [1, 1]} : vector<1152x128xf32> to vector<128x128xf32>
    %cst_79 = arith.constant dense<0.000000e+00> : vector<64x128xf32>
    %188 = tpu.matmul %186, %187, %cst_79 {dimension_numbers = #tpu.dot_dimension_numbers<[1], [0], [0], [1], [0, 0, 1, 1], [], []>} : vector<64x128xf32>, vector<128x128xf32>, vector<64x128xf32> -> vector<64x128xf32>
    %189 = arith.addf %185, %188 : vector<64x128xf32>
    %190 = vector.extract_strided_slice %183 {offsets = [64, 0], sizes = [64, 128], strides = [1, 1]} : vector<576x128xf32> to vector<64x128xf32>
    %191 = vector.extract_strided_slice %184 {offsets = [128, 0], sizes = [128, 128], strides = [1, 1]} : vector<1152x128xf32> to vector<128x128xf32>
    %cst_80 = arith.constant dense<0.000000e+00> : vector<64x128xf32>
    %192 = tpu.matmul %190, %191, %cst_80 {dimension_numbers = #tpu.dot_dimension_numbers<[1], [0], [0], [1], [0, 0, 1, 1], [], []>} : vector<64x128xf32>, vector<128x128xf32>, vector<64x128xf32> -> vector<64x128xf32>
    %193 = arith.addf %189, %192 : vector<64x128xf32>
    %194 = vector.extract_strided_slice %183 {offsets = [128, 0], sizes = [64, 128], strides = [1, 1]} : vector<576x128xf32> to vector<64x128xf32>
    %195 = vector.extract_strided_slice %184 {offsets = [256, 0], sizes = [128, 128], strides = [1, 1]} : vector<1152x128xf32> to vector<128x128xf32>
    %cst_81 = arith.constant dense<0.000000e+00> : vector<64x128xf32>
    %196 = tpu.matmul %194, %195, %cst_81 {dimension_numbers = #tpu.dot_dimension_numbers<[1], [0], [0], [1], [0, 0, 1, 1], [], []>} : vector<64x128xf32>, vector<128x128xf32>, vector<64x128xf32> -> vector<64x128xf32>
    %197 = arith.addf %193, %196 : vector<64x128xf32>
    %198 = vector.extract_strided_slice %183 {offsets = [192, 0], sizes = [64, 128], strides = [1, 1]} : vector<576x128xf32> to vector<64x128xf32>
    %199 = vector.extract_strided_slice %184 {offsets = [384, 0], sizes = [128, 128], strides = [1, 1]} : vector<1152x128xf32> to vector<128x128xf32>
    %cst_82 = arith.constant dense<0.000000e+00> : vector<64x128xf32>
    %200 = tpu.matmul %198, %199, %cst_82 {dimension_numbers = #tpu.dot_dimension_numbers<[1], [0], [0], [1], [0, 0, 1, 1], [], []>} : vector<64x128xf32>, vector<128x128xf32>, vector<64x128xf32> -> vector<64x128xf32>
    %201 = arith.addf %197, %200 : vector<64x128xf32>
    %202 = vector.extract_strided_slice %183 {offsets = [256, 0], sizes = [64, 128], strides = [1, 1]} : vector<576x128xf32> to vector<64x128xf32>
    %203 = vector.extract_strided_slice %184 {offsets = [512, 0], sizes = [128, 128], strides = [1, 1]} : vector<1152x128xf32> to vector<128x128xf32>
    %cst_83 = arith.constant dense<0.000000e+00> : vector<64x128xf32>
    %204 = tpu.matmul %202, %203, %cst_83 {dimension_numbers = #tpu.dot_dimension_numbers<[1], [0], [0], [1], [0, 0, 1, 1], [], []>} : vector<64x128xf32>, vector<128x128xf32>, vector<64x128xf32> -> vector<64x128xf32>
    %205 = arith.addf %201, %204 : vector<64x128xf32>
    %206 = vector.extract_strided_slice %183 {offsets = [320, 0], sizes = [64, 128], strides = [1, 1]} : vector<576x128xf32> to vector<64x128xf32>
    %207 = vector.extract_strided_slice %184 {offsets = [640, 0], sizes = [128, 128], strides = [1, 1]} : vector<1152x128xf32> to vector<128x128xf32>
    %cst_84 = arith.constant dense<0.000000e+00> : vector<64x128xf32>
    %208 = tpu.matmul %206, %207, %cst_84 {dimension_numbers = #tpu.dot_dimension_numbers<[1], [0], [0], [1], [0, 0, 1, 1], [], []>} : vector<64x128xf32>, vector<128x128xf32>, vector<64x128xf32> -> vector<64x128xf32>
    %209 = arith.addf %205, %208 : vector<64x128xf32>
    %210 = vector.extract_strided_slice %183 {offsets = [384, 0], sizes = [64, 128], strides = [1, 1]} : vector<576x128xf32> to vector<64x128xf32>
    %211 = vector.extract_strided_slice %184 {offsets = [768, 0], sizes = [128, 128], strides = [1, 1]} : vector<1152x128xf32> to vector<128x128xf32>
    %cst_85 = arith.constant dense<0.000000e+00> : vector<64x128xf32>
    %212 = tpu.matmul %210, %211, %cst_85 {dimension_numbers = #tpu.dot_dimension_numbers<[1], [0], [0], [1], [0, 0, 1, 1], [], []>} : vector<64x128xf32>, vector<128x128xf32>, vector<64x128xf32> -> vector<64x128xf32>
    %213 = arith.addf %209, %212 : vector<64x128xf32>
    %214 = vector.extract_strided_slice %183 {offsets = [448, 0], sizes = [64, 128], strides = [1, 1]} : vector<576x128xf32> to vector<64x128xf32>
    %215 = vector.extract_strided_slice %184 {offsets = [896, 0], sizes = [128, 128], strides = [1, 1]} : vector<1152x128xf32> to vector<128x128xf32>
    %cst_86 = arith.constant dense<0.000000e+00> : vector<64x128xf32>
    %216 = tpu.matmul %214, %215, %cst_86 {dimension_numbers = #tpu.dot_dimension_numbers<[1], [0], [0], [1], [0, 0, 1, 1], [], []>} : vector<64x128xf32>, vector<128x128xf32>, vector<64x128xf32> -> vector<64x128xf32>
    %217 = arith.addf %213, %216 : vector<64x128xf32>
    %218 = vector.extract_strided_slice %183 {offsets = [512, 0], sizes = [64, 128], strides = [1, 1]} : vector<576x128xf32> to vector<64x128xf32>
    %219 = vector.extract_strided_slice %184 {offsets = [1024, 0], sizes = [128, 128], strides = [1, 1]} : vector<1152x128xf32> to vector<128x128xf32>
    %cst_87 = arith.constant dense<0.000000e+00> : vector<64x128xf32>
    %220 = tpu.matmul %218, %219, %cst_87 {dimension_numbers = #tpu.dot_dimension_numbers<[1], [0], [0], [1], [0, 0, 1, 1], [], []>} : vector<64x128xf32>, vector<128x128xf32>, vector<64x128xf32> -> vector<64x128xf32>
    %221 = arith.addf %217, %220 : vector<64x128xf32>
    %c0_88 = arith.constant 0 : index
    %c0_89 = arith.constant 0 : index
    %222 = vector.load %arg16[%c0_88, %c0_89] : memref<1x128xf32, #tpu.memory_space<vmem>>, vector<1x128xf32>
    %223 = vector.broadcast %222 : vector<1x128xf32> to vector<64x128xf32>
    %224 = arith.addf %221, %223 : vector<64x128xf32>
    %cst_90 = arith.constant 0.000000e+00 : f32
    %225 = vector.broadcast %cst_90 : f32 to vector<64x128xf32>
    %226 = arith.maximumf %224, %225 : vector<64x128xf32>
    %c0_91 = arith.constant 0 : index
    %c0_92 = arith.constant 0 : index
    %227 = vector.load %arg17[%c0_91, %c0_92] : memref<2304x64xf32, #tpu.memory_space<vmem>>, vector<2304x64xf32>
    %cst_93 = arith.constant dense<0.000000e+00> : vector<2304x128xf32>
    %228 = tpu.matmul %227, %226, %cst_93 {dimension_numbers = #tpu.dot_dimension_numbers<[1], [0], [0], [1], [0, 0, 1, 1], [], []>} : vector<2304x64xf32>, vector<64x128xf32>, vector<2304x128xf32> -> vector<2304x128xf32>
    %c0_94 = arith.constant 0 : index
    %c0_95 = arith.constant 0 : index
    %229 = vector.load %arg18[%c0_94, %c0_95] : memref<1152x8xf32, #tpu.memory_space<vmem>>, vector<1152x8xf32>
    %cst_96 = arith.constant 0.000000e+00 : f32
    %230 = vector.broadcast %cst_96 : f32 to vector<256x8xf32>
    %231 = vector.extract_strided_slice %228 {offsets = [0, 0], sizes = [256, 128], strides = [1, 1]} : vector<2304x128xf32> to vector<256x128xf32>
    %232 = vector.extract_strided_slice %229 {offsets = [0, 0], sizes = [128, 8], strides = [1, 1]} : vector<1152x8xf32> to vector<128x8xf32>
    %cst_97 = arith.constant dense<0.000000e+00> : vector<256x8xf32>
    %233 = tpu.matmul %231, %232, %cst_97 {dimension_numbers = #tpu.dot_dimension_numbers<[1], [0], [0], [1], [0, 0, 1, 1], [], []>} : vector<256x128xf32>, vector<128x8xf32>, vector<256x8xf32> -> vector<256x8xf32>
    %234 = arith.addf %230, %233 : vector<256x8xf32>
    %235 = vector.extract_strided_slice %228 {offsets = [256, 0], sizes = [256, 128], strides = [1, 1]} : vector<2304x128xf32> to vector<256x128xf32>
    %236 = vector.extract_strided_slice %229 {offsets = [128, 0], sizes = [128, 8], strides = [1, 1]} : vector<1152x8xf32> to vector<128x8xf32>
    %cst_98 = arith.constant dense<0.000000e+00> : vector<256x8xf32>
    %237 = tpu.matmul %235, %236, %cst_98 {dimension_numbers = #tpu.dot_dimension_numbers<[1], [0], [0], [1], [0, 0, 1, 1], [], []>} : vector<256x128xf32>, vector<128x8xf32>, vector<256x8xf32> -> vector<256x8xf32>
    %238 = arith.addf %234, %237 : vector<256x8xf32>
    %239 = vector.extract_strided_slice %228 {offsets = [512, 0], sizes = [256, 128], strides = [1, 1]} : vector<2304x128xf32> to vector<256x128xf32>
    %240 = vector.extract_strided_slice %229 {offsets = [256, 0], sizes = [128, 8], strides = [1, 1]} : vector<1152x8xf32> to vector<128x8xf32>
    %cst_99 = arith.constant dense<0.000000e+00> : vector<256x8xf32>
    %241 = tpu.matmul %239, %240, %cst_99 {dimension_numbers = #tpu.dot_dimension_numbers<[1], [0], [0], [1], [0, 0, 1, 1], [], []>} : vector<256x128xf32>, vector<128x8xf32>, vector<256x8xf32> -> vector<256x8xf32>
    %242 = arith.addf %238, %241 : vector<256x8xf32>
    %243 = vector.extract_strided_slice %228 {offsets = [768, 0], sizes = [256, 128], strides = [1, 1]} : vector<2304x128xf32> to vector<256x128xf32>
    %244 = vector.extract_strided_slice %229 {offsets = [384, 0], sizes = [128, 8], strides = [1, 1]} : vector<1152x8xf32> to vector<128x8xf32>
    %cst_100 = arith.constant dense<0.000000e+00> : vector<256x8xf32>
    %245 = tpu.matmul %243, %244, %cst_100 {dimension_numbers = #tpu.dot_dimension_numbers<[1], [0], [0], [1], [0, 0, 1, 1], [], []>} : vector<256x128xf32>, vector<128x8xf32>, vector<256x8xf32> -> vector<256x8xf32>
    %246 = arith.addf %242, %245 : vector<256x8xf32>
    %247 = vector.extract_strided_slice %228 {offsets = [1024, 0], sizes = [256, 128], strides = [1, 1]} : vector<2304x128xf32> to vector<256x128xf32>
    %248 = vector.extract_strided_slice %229 {offsets = [512, 0], sizes = [128, 8], strides = [1, 1]} : vector<1152x8xf32> to vector<128x8xf32>
    %cst_101 = arith.constant dense<0.000000e+00> : vector<256x8xf32>
    %249 = tpu.matmul %247, %248, %cst_101 {dimension_numbers = #tpu.dot_dimension_numbers<[1], [0], [0], [1], [0, 0, 1, 1], [], []>} : vector<256x128xf32>, vector<128x8xf32>, vector<256x8xf32> -> vector<256x8xf32>
    %250 = arith.addf %246, %249 : vector<256x8xf32>
    %251 = vector.extract_strided_slice %228 {offsets = [1280, 0], sizes = [256, 128], strides = [1, 1]} : vector<2304x128xf32> to vector<256x128xf32>
    %252 = vector.extract_strided_slice %229 {offsets = [640, 0], sizes = [128, 8], strides = [1, 1]} : vector<1152x8xf32> to vector<128x8xf32>
    %cst_102 = arith.constant dense<0.000000e+00> : vector<256x8xf32>
    %253 = tpu.matmul %251, %252, %cst_102 {dimension_numbers = #tpu.dot_dimension_numbers<[1], [0], [0], [1], [0, 0, 1, 1], [], []>} : vector<256x128xf32>, vector<128x8xf32>, vector<256x8xf32> -> vector<256x8xf32>
    %254 = arith.addf %250, %253 : vector<256x8xf32>
    %255 = vector.extract_strided_slice %228 {offsets = [1536, 0], sizes = [256, 128], strides = [1, 1]} : vector<2304x128xf32> to vector<256x128xf32>
    %256 = vector.extract_strided_slice %229 {offsets = [768, 0], sizes = [128, 8], strides = [1, 1]} : vector<1152x8xf32> to vector<128x8xf32>
    %cst_103 = arith.constant dense<0.000000e+00> : vector<256x8xf32>
    %257 = tpu.matmul %255, %256, %cst_103 {dimension_numbers = #tpu.dot_dimension_numbers<[1], [0], [0], [1], [0, 0, 1, 1], [], []>} : vector<256x128xf32>, vector<128x8xf32>, vector<256x8xf32> -> vector<256x8xf32>
    %258 = arith.addf %254, %257 : vector<256x8xf32>
    %259 = vector.extract_strided_slice %228 {offsets = [1792, 0], sizes = [256, 128], strides = [1, 1]} : vector<2304x128xf32> to vector<256x128xf32>
    %260 = vector.extract_strided_slice %229 {offsets = [896, 0], sizes = [128, 8], strides = [1, 1]} : vector<1152x8xf32> to vector<128x8xf32>
    %cst_104 = arith.constant dense<0.000000e+00> : vector<256x8xf32>
    %261 = tpu.matmul %259, %260, %cst_104 {dimension_numbers = #tpu.dot_dimension_numbers<[1], [0], [0], [1], [0, 0, 1, 1], [], []>} : vector<256x128xf32>, vector<128x8xf32>, vector<256x8xf32> -> vector<256x8xf32>
    %262 = arith.addf %258, %261 : vector<256x8xf32>
    %263 = vector.extract_strided_slice %228 {offsets = [2048, 0], sizes = [256, 128], strides = [1, 1]} : vector<2304x128xf32> to vector<256x128xf32>
    %264 = vector.extract_strided_slice %229 {offsets = [1024, 0], sizes = [128, 8], strides = [1, 1]} : vector<1152x8xf32> to vector<128x8xf32>
    %cst_105 = arith.constant dense<0.000000e+00> : vector<256x8xf32>
    %265 = tpu.matmul %263, %264, %cst_105 {dimension_numbers = #tpu.dot_dimension_numbers<[1], [0], [0], [1], [0, 0, 1, 1], [], []>} : vector<256x128xf32>, vector<128x8xf32>, vector<256x8xf32> -> vector<256x8xf32>
    %266 = arith.addf %262, %265 : vector<256x8xf32>
    %c0_106 = arith.constant 0 : index
    %c0_107 = arith.constant 0 : index
    %267 = vector.load %arg19[%c0_106, %c0_107] : memref<1x8xf32, #tpu.memory_space<vmem>>, vector<1x8xf32>
    %268 = vector.broadcast %267 : vector<1x8xf32> to vector<256x8xf32>
    %269 = arith.addf %266, %268 : vector<256x8xf32>
    %270 = arith.negf %269 : vector<256x8xf32>
    %271 = math.exp %270 : vector<256x8xf32>
    %cst_108 = arith.constant 1.000000e+00 : f32
    %272 = vector.broadcast %cst_108 : f32 to vector<256x8xf32>
    %273 = arith.addf %272, %271 : vector<256x8xf32>
    %274 = arith.divf %272, %273 : vector<256x8xf32>
    %c0_109 = arith.constant 0 : index
    %c0_110 = arith.constant 0 : index
    %c0_111 = arith.constant 0 : index
    %275 = vector.load %arg20[%c0_109, %c0_110, %c0_111] : memref<1x256x8xf32, #tpu.memory_space<vmem>>, vector<1x256x8xf32>
    %276 = vector.shape_cast %275 : vector<1x256x8xf32> to vector<256x8xf32>
    %277 = vector.shape_cast %274 : vector<256x8xf32> to vector<1x256x8xf32>
    tpu.vector_store %arg20[%c0_109, %c0_110, %c0_111], %277 {strides = array<i32>} : memref<1x256x8xf32, #tpu.memory_space<vmem>>, vector<1x256x8xf32>,
    return
  }
  func.func @transform_0(%arg0: i32) -> (i32, i32, i32) {
    %c0_i32 = arith.constant 0 : i32
    %c0_i32_0 = arith.constant 0 : i32
    %c0_i32_1 = arith.constant 0 : i32
    return %arg0, %c0_i32, %c0_i32_0 : i32, i32, i32
  }
  func.func @transform_1(%arg0: i32) -> (i32, i32) {
    %c0_i32 = arith.constant 0 : i32
    %c0_i32_0 = arith.constant 0 : i32
    %c0_i32_1 = arith.constant 0 : i32
    return %c0_i32, %c0_i32_0 : i32, i32
  }
  func.func @transform_2(%arg0: i32) -> (i32, i32) {
    %c0_i32 = arith.constant 0 : i32
    %c0_i32_0 = arith.constant 0 : i32
    %c0_i32_1 = arith.constant 0 : i32
    return %c0_i32, %c0_i32_0 : i32, i32
  }
  func.func @transform_3(%arg0: i32) -> (i32, i32) {
    %c0_i32 = arith.constant 0 : i32
    %c0_i32_0 = arith.constant 0 : i32
    %c0_i32_1 = arith.constant 0 : i32
    return %c0_i32, %c0_i32_0 : i32, i32
  }
  func.func @transform_4(%arg0: i32) -> (i32, i32) {
    %c0_i32 = arith.constant 0 : i32
    %c0_i32_0 = arith.constant 0 : i32
    %c0_i32_1 = arith.constant 0 : i32
    return %c0_i32, %c0_i32_0 : i32, i32
  }
  func.func @transform_5(%arg0: i32) -> (i32, i32) {
    %c0_i32 = arith.constant 0 : i32
    %c0_i32_0 = arith.constant 0 : i32
    %c0_i32_1 = arith.constant 0 : i32
    return %c0_i32, %c0_i32_0 : i32, i32
  }
  func.func @transform_6(%arg0: i32) -> (i32, i32) {
    %c0_i32 = arith.constant 0 : i32
    %c0_i32_0 = arith.constant 0 : i32
    %c0_i32_1 = arith.constant 0 : i32
    return %c0_i32, %c0_i32_0 : i32, i32
  }
  func.func @transform_7(%arg0: i32) -> (i32, i32) {
    %c0_i32 = arith.constant 0 : i32
    %c0_i32_0 = arith.constant 0 : i32
    %c0_i32_1 = arith.constant 0 : i32
    return %c0_i32, %c0_i32_0 : i32, i32
  }
  func.func @transform_8(%arg0: i32) -> (i32, i32) {
    %c0_i32 = arith.constant 0 : i32
    %c0_i32_0 = arith.constant 0 : i32
    %c0_i32_1 = arith.constant 0 : i32
    return %c0_i32, %c0_i32_0 : i32, i32
  }
  func.func @transform_9(%arg0: i32) -> (i32, i32) {
    %c0_i32 = arith.constant 0 : i32
    %c0_i32_0 = arith.constant 0 : i32
    %c0_i32_1 = arith.constant 0 : i32
    return %c0_i32, %c0_i32_0 : i32, i32
  }
  func.func @transform_10(%arg0: i32) -> (i32, i32) {
    %c0_i32 = arith.constant 0 : i32
    %c0_i32_0 = arith.constant 0 : i32
    %c0_i32_1 = arith.constant 0 : i32
    return %c0_i32, %c0_i32_0 : i32, i32
  }
  func.func @transform_11(%arg0: i32) -> (i32, i32) {
    %c0_i32 = arith.constant 0 : i32
    %c0_i32_0 = arith.constant 0 : i32
    %c0_i32_1 = arith.constant 0 : i32
    return %c0_i32, %c0_i32_0 : i32, i32
  }
  func.func @transform_12(%arg0: i32) -> (i32, i32) {
    %c0_i32 = arith.constant 0 : i32
    %c0_i32_0 = arith.constant 0 : i32
    %c0_i32_1 = arith.constant 0 : i32
    return %c0_i32, %c0_i32_0 : i32, i32
  }
  func.func @transform_13(%arg0: i32) -> (i32, i32) {
    %c0_i32 = arith.constant 0 : i32
    %c0_i32_0 = arith.constant 0 : i32
    %c0_i32_1 = arith.constant 0 : i32
    return %c0_i32, %c0_i32_0 : i32, i32
  }
  func.func @transform_14(%arg0: i32) -> (i32, i32) {
    %c0_i32 = arith.constant 0 : i32
    %c0_i32_0 = arith.constant 0 : i32
    %c0_i32_1 = arith.constant 0 : i32
    return %c0_i32, %c0_i32_0 : i32, i32
  }
  func.func @transform_15(%arg0: i32) -> (i32, i32) {
    %c0_i32 = arith.constant 0 : i32
    %c0_i32_0 = arith.constant 0 : i32
    %c0_i32_1 = arith.constant 0 : i32
    return %c0_i32, %c0_i32_0 : i32, i32
  }
  func.func @transform_16(%arg0: i32) -> (i32, i32) {
    %c0_i32 = arith.constant 0 : i32
    %c0_i32_0 = arith.constant 0 : i32
    %c0_i32_1 = arith.constant 0 : i32
    return %c0_i32, %c0_i32_0 : i32, i32
  }
  func.func @transform_17(%arg0: i32) -> (i32, i32) {
    %c0_i32 = arith.constant 0 : i32
    %c0_i32_0 = arith.constant 0 : i32
    %c0_i32_1 = arith.constant 0 : i32
    return %c0_i32, %c0_i32_0 : i32, i32
  }
  func.func @transform_18(%arg0: i32) -> (i32, i32) {
    %c0_i32 = arith.constant 0 : i32
    %c0_i32_0 = arith.constant 0 : i32
    %c0_i32_1 = arith.constant 0 : i32
    return %c0_i32, %c0_i32_0 : i32, i32
  }
  func.func @transform_19(%arg0: i32) -> (i32, i32, i32) {
    %c0_i32 = arith.constant 0 : i32
    %c0_i32_0 = arith.constant 0 : i32
    %c0_i32_1 = arith.constant 0 : i32
    return %arg0, %c0_i32, %c0_i32_0 : i32, i32, i32
  }
}

</mosaic_0001>

<llo_original>
// kernel: _forward_impl.1
$region0: #{_forward_impl.1}
  #allocation0 [shape = 'u32[]', space=smem, size = 0x4, offset = 0x4, fixed_abs, tag = 'smem constant byte address 0x4 - core index']
  #allocation1 [shape = 'u32[72,128]{1,0:T(1,128)}', space=vmem, size = 0x9000, scoped, tag = 'internal scratch']
  %s0 = inlined_call_operand.vmem [shape: f32[2,256,8], index: 0, kind: input, shape index: {}]
  %s1 = inlined_call_operand.vmem [shape: f32[576,256], index: 1, kind: input, shape index: {}]
  %s2 = inlined_call_operand.vmem [shape: f32[72,128], index: 2, kind: input, shape index: {}]
  %s3 = inlined_call_operand.vmem [shape: f32[1,128], index: 3, kind: input, shape index: {}]
  %s4 = inlined_call_operand.vmem [shape: f32[144,64], index: 4, kind: input, shape index: {}]
  %s5 = inlined_call_operand.vmem [shape: f32[1152,128], index: 5, kind: input, shape index: {}]
  %s6 = inlined_call_operand.vmem [shape: f32[1,128], index: 6, kind: input, shape index: {}]
  %s7 = inlined_call_operand.vmem [shape: f32[36,16], index: 7, kind: input, shape index: {}]
  %s8 = inlined_call_operand.vmem [shape: f32[1152,128], index: 8, kind: input, shape index: {}]
  %s9 = inlined_call_operand.vmem [shape: f32[1,128], index: 9, kind: input, shape index: {}]
  %s10 = inlined_call_operand.vmem [shape: f32[144,4], index: 10, kind: input, shape index: {}]
  %s11 = inlined_call_operand.vmem [shape: f32[1152,128], index: 11, kind: input, shape index: {}]
  %s12 = inlined_call_operand.vmem [shape: f32[1,128], index: 12, kind: input, shape index: {}]
  %s13 = inlined_call_operand.vmem [shape: f32[576,16], index: 13, kind: input, shape index: {}]
  %s14 = inlined_call_operand.vmem [shape: f32[1152,128], index: 14, kind: input, shape index: {}]
  %s15 = inlined_call_operand.vmem [shape: f32[1,128], index: 15, kind: input, shape index: {}]
  %s16 = inlined_call_operand.vmem [shape: f32[2304,64], index: 16, kind: input, shape index: {}]
  %s17 = inlined_call_operand.vmem [shape: f32[1152,8], index: 17, kind: input, shape index: {}]
  %s18 = inlined_call_operand.vmem [shape: f32[1,8], index: 18, kind: input, shape index: {}]
  %s19 = inlined_call_operand.vmem [shape: f32[2,256,8], index: 19, kind: output, shape index: {}]
  %s20 = sld [smem:[#allocation0]]
  $region109: #{_forward_impl.1} parent=0
    _
  %s22 = ssub.s32 1, %s20
  %s23 = scalar_select 0, %s22, %s20
  loop: start=0, step=1, limit=4
  $region2: #{_forward_impl.1} parent=0 // loop_pre_header
    _
  $region3: #{_forward_impl.1} parent=0 // loop_header
    %s25 = sphi 0, %s29
    %p26 = scmp.ge.s32.totalorder %s25, 4
    %s35 = sphi 0, %s37
    %s38 = sphi 0, %s35
    %s39 = sphi 0, %s38
    %s55 = sphi 0, %s39
    %s59 = sphi 0, %s59
    %s61 = sphi 0, %s59
    %s62 = sphi 0, %s61
    %s76 = sphi 0, %s62
    %s80 = sphi 0, %s80
    %s82 = sphi 0, %s80
    %s83 = sphi 0, %s82
    %s97 = sphi 0, %s83
    %s101 = sphi 0, %s101
    %s103 = sphi 0, %s101
    %s104 = sphi 0, %s103
    %s118 = sphi 0, %s104
    %s122 = sphi 0, %s122
    %s124 = sphi 0, %s122
    %s125 = sphi 0, %s124
    %s139 = sphi 0, %s125
    %s143 = sphi 0, %s143
    %s145 = sphi 0, %s143
    %s146 = sphi 0, %s145
    %s160 = sphi 0, %s146
    %s164 = sphi 0, %s164
    %s166 = sphi 0, %s164
    %s167 = sphi 0, %s166
    %s181 = sphi 0, %s167
    %s185 = sphi 0, %s185
    %s187 = sphi 0, %s185
    %s188 = sphi 0, %s187
    %s202 = sphi 0, %s188
    %s206 = sphi 0, %s206
    %s208 = sphi 0, %s206
    %s209 = sphi 0, %s208
    %s223 = sphi 0, %s209
    %s227 = sphi 0, %s227
    %s229 = sphi 0, %s227
    %s230 = sphi 0, %s229
    %s244 = sphi 0, %s230
    %s248 = sphi 0, %s248
    %s250 = sphi 0, %s248
    %s251 = sphi 0, %s250
    %s265 = sphi 0, %s251
    %s269 = sphi 0, %s269
    %s271 = sphi 0, %s269
    %s272 = sphi 0, %s271
    %s286 = sphi 0, %s272
    %s290 = sphi 0, %s290
    %s292 = sphi 0, %s290
    %s293 = sphi 0, %s292
    %s307 = sphi 0, %s293
    %s311 = sphi 0, %s311
    %s313 = sphi 0, %s311
    %s314 = sphi 0, %s313
    %s328 = sphi 0, %s314
    %s332 = sphi 0, %s332
    %s334 = sphi 0, %s332
    %s335 = sphi 0, %s334
    %s349 = sphi 0, %s335
    %s353 = sphi 0, %s353
    %s355 = sphi 0, %s353
    %s356 = sphi 0, %s355
    %s370 = sphi 0, %s356
    %s374 = sphi 0, %s374
    %s376 = sphi 0, %s374
    %s377 = sphi 0, %s376
    %s391 = sphi 0, %s377
    %s395 = sphi 0, %s395
    %s397 = sphi 0, %s395
    %s398 = sphi 0, %s397
    %s412 = sphi 0, %s398
    %s416 = sphi 0, %s416
    %s418 = sphi 0, %s416
    %s419 = sphi 0, %s418
    %s433 = sphi 0, %s419
    %s439 = sphi 0, %s441
    %s442 = sphi 0, %s439
    %s443 = sphi 0, %s442
    %s459 = sphi 0, %s443
  $region4: #{_forward_impl.1} parent=0 // loop_header_branch
    %28 = sbr.rel (%p26) target = $region8
  $region5: #{_forward_impl.1} parent=0 // loop_body
    %s30 = ssub.s32 %s25, 1
    %s31 = ssub.s32 %s25, 2
    %s32 = sadd.s32 %s25, 1
    %s33 = ssub.s32 %s25, %s32
    %p34 = scmp.eq.s32.totalorder %s33, 0
    %s36 = sadd.s32 %s35, 1
    %s37 = scalar_select %p34, %s35, %s36
    %p40 = pneg %p34
    %p41 = scmp.eq.s32.totalorder %s25, 1
    %p42 = por %p40, %p41
    %p43 = scmp.ne.s32.totalorder %s35, %s38
    %p44 = scmp.eq.s32.totalorder %s25, 0
    %p45 = por %p43, %p44
    %p46 = scmp.ne.s32.totalorder %s35, %s38
    %p47 = scmp.eq.s32.totalorder %s30, 1
    %p48 = por %p46, %p47
    %p49 = scmp.ne.s32.totalorder %s38, %s39
    %p50 = scmp.eq.s32.totalorder %s30, 0
    %p51 = por %p49, %p50
    %p52 = scmp.ne.s32.totalorder %s38, %s39
    %p53 = scmp.eq.s32.totalorder %s31, 1
    %p54 = por %p52, %p53
    %p56 = scmp.ne.s32.totalorder %s39, %s55
    %p57 = scmp.eq.s32.totalorder %s31, 0
    %p58 = por %p56, %p57
    %s60 = sadd.s32 %s59, 1
    %p63 = scmp.eq.s32.totalorder %s25, 1
    %p64 = scmp.ne.s32.totalorder %s59, %s61
    %p65 = scmp.eq.s32.totalorder %s25, 0
    %p66 = por %p64, %p65
    %p67 = scmp.ne.s32.totalorder %s59, %s61
    %p68 = scmp.eq.s32.totalorder %s30, 1
    %p69 = por %p67, %p68
    %p70 = scmp.ne.s32.totalorder %s61, %s62
    %p71 = scmp.eq.s32.totalorder %s30, 0
    %p72 = por %p70, %p71
    %p73 = scmp.ne.s32.totalorder %s61, %s62
    %p74 = scmp.eq.s32.totalorder %s31, 1
    %p75 = por %p73, %p74
    %p77 = scmp.ne.s32.totalorder %s62, %s76
    %p78 = scmp.eq.s32.totalorder %s31, 0
    %p79 = por %p77, %p78
    %s81 = sadd.s32 %s80, 1
    %p84 = scmp.eq.s32.totalorder %s25, 1
    %p85 = scmp.ne.s32.totalorder %s80, %s82
    %p86 = scmp.eq.s32.totalorder %s25, 0
    %p87 = por %p85, %p86
    %p88 = scmp.ne.s32.totalorder %s80, %s82
    %p89 = scmp.eq.s32.totalorder %s30, 1
    %p90 = por %p88, %p89
    %p91 = scmp.ne.s32.totalorder %s82, %s83
    %p92 = scmp.eq.s32.totalorder %s30, 0
    %p93 = por %p91, %p92
    %p94 = scmp.ne.s32.totalorder %s82, %s83
    %p95 = scmp.eq.s32.totalorder %s31, 1
    %p96 = por %p94, %p95
    %p98 = scmp.ne.s32.totalorder %s83, %s97
    %p99 = scmp.eq.s32.totalorder %s31, 0
    %p100 = por %p98, %p99
    %s102 = sadd.s32 %s101, 1
    %p105 = scmp.eq.s32.totalorder %s25, 1
    %p106 = scmp.ne.s32.totalorder %s101, %s103
    %p107 = scmp.eq.s32.totalorder %s25, 0
    %p108 = por %p106, %p107
    %p109 = scmp.ne.s32.totalorder %s101, %s103
    %p110 = scmp.eq.s32.totalorder %s30, 1
    %p111 = por %p109, %p110
    %p112 = scmp.ne.s32.totalorder %s103, %s104
    %p113 = scmp.eq.s32.totalorder %s30, 0
    %p114 = por %p112, %p113
    %p115 = scmp.ne.s32.totalorder %s103, %s104
    %p116 = scmp.eq.s32.totalorder %s31, 1
    %p117 = por %p115, %p116
    %p119 = scmp.ne.s32.totalorder %s104, %s118
    %p120 = scmp.eq.s32.totalorder %s31, 0
    %p121 = por %p119, %p120
    %s123 = sadd.s32 %s122, 1
    %p126 = scmp.eq.s32.totalorder %s25, 1
    %p127 = scmp.ne.s32.totalorder %s122, %s124
    %p128 = scmp.eq.s32.totalorder %s25, 0
    %p129 = por %p127, %p128
    %p130 = scmp.ne.s32.totalorder %s122, %s124
    %p131 = scmp.eq.s32.totalorder %s30, 1
    %p132 = por %p130, %p131
    %p133 = scmp.ne.s32.totalorder %s124, %s125
    %p134 = scmp.eq.s32.totalorder %s30, 0
    %p135 = por %p133, %p134
    %p136 = scmp.ne.s32.totalorder %s124, %s125
    %p137 = scmp.eq.s32.totalorder %s31, 1
    %p138 = por %p136, %p137
    %p140 = scmp.ne.s32.totalorder %s125, %s139
    %p141 = scmp.eq.s32.totalorder %s31, 0
    %p142 = por %p140, %p141
    %s144 = sadd.s32 %s143, 1
    %p147 = scmp.eq.s32.totalorder %s25, 1
    %p148 = scmp.ne.s32.totalorder %s143, %s145
    %p149 = scmp.eq.s32.totalorder %s25, 0
    %p150 = por %p148, %p149
    %p151 = scmp.ne.s32.totalorder %s143, %s145
    %p152 = scmp.eq.s32.totalorder %s30, 1
    %p153 = por %p151, %p152
    %p154 = scmp.ne.s32.totalorder %s145, %s146
    %p155 = scmp.eq.s32.totalorder %s30, 0
    %p156 = por %p154, %p155
    %p157 = scmp.ne.s32.totalorder %s145, %s146
    %p158 = scmp.eq.s32.totalorder %s31, 1
    %p159 = por %p157, %p158
    %p161 = scmp.ne.s32.totalorder %s146, %s160
    %p162 = scmp.eq.s32.totalorder %s31, 0
    %p163 = por %p161, %p162
    %s165 = sadd.s32 %s164, 1
    %p168 = scmp.eq.s32.totalorder %s25, 1
    %p169 = scmp.ne.s32.totalorder %s164, %s166
    %p170 = scmp.eq.s32.totalorder %s25, 0
    %p171 = por %p169, %p170
    %p172 = scmp.ne.s32.totalorder %s164, %s166
    %p173 = scmp.eq.s32.totalorder %s30, 1
    %p174 = por %p172, %p173
    %p175 = scmp.ne.s32.totalorder %s166, %s167
    %p176 = scmp.eq.s32.totalorder %s30, 0
    %p177 = por %p175, %p176
    %p178 = scmp.ne.s32.totalorder %s166, %s167
    %p179 = scmp.eq.s32.totalorder %s31, 1
    %p180 = por %p178, %p179
    %p182 = scmp.ne.s32.totalorder %s167, %s181
    %p183 = scmp.eq.s32.totalorder %s31, 0
    %p184 = por %p182, %p183
    %s186 = sadd.s32 %s185, 1
    %p189 = scmp.eq.s32.totalorder %s25, 1
    %p190 = scmp.ne.s32.totalorder %s185, %s187
    %p191 = scmp.eq.s32.totalorder %s25, 0
    %p192 = por %p190, %p191
    %p193 = scmp.ne.s32.totalorder %s185, %s187
    %p194 = scmp.eq.s32.totalorder %s30, 1
    %p195 = por %p193, %p194
    %p196 = scmp.ne.s32.totalorder %s187, %s188
    %p197 = scmp.eq.s32.totalorder %s30, 0
    %p198 = por %p196, %p197
    %p199 = scmp.ne.s32.totalorder %s187, %s188
    %p200 = scmp.eq.s32.totalorder %s31, 1
    %p201 = por %p199, %p200
    %p203 = scmp.ne.s32.totalorder %s188, %s202
    %p204 = scmp.eq.s32.totalorder %s31, 0
    %p205 = por %p203, %p204
    %s207 = sadd.s32 %s206, 1
    %p210 = scmp.eq.s32.totalorder %s25, 1
    %p211 = scmp.ne.s32.totalorder %s206, %s208
    %p212 = scmp.eq.s32.totalorder %s25, 0
    %p213 = por %p211, %p212
    %p214 = scmp.ne.s32.totalorder %s206, %s208
    %p215 = scmp.eq.s32.totalorder %s30, 1
    %p216 = por %p214, %p215
    %p217 = scmp.ne.s32.totalorder %s208, %s209
    %p218 = scmp.eq.s32.totalorder %s30, 0
    %p219 = por %p217, %p218
    %p220 = scmp.ne.s32.totalorder %s208, %s209
    %p221 = scmp.eq.s32.totalorder %s31, 1
    %p222 = por %p220, %p221
    %p224 = scmp.ne.s32.totalorder %s209, %s223
    %p225 = scmp.eq.s32.totalorder %s31, 0
    %p226 = por %p224, %p225
    %s228 = sadd.s32 %s227, 1
    %p231 = scmp.eq.s32.totalorder %s25, 1
    %p232 = scmp.ne.s32.totalorder %s227, %s229
    %p233 = scmp.eq.s32.totalorder %s25, 0
    %p234 = por %p232, %p233
    %p235 = scmp.ne.s32.totalorder %s227, %s229
    %p236 = scmp.eq.s32.totalorder %s30, 1
    %p237 = por %p235, %p236
    %p238 = scmp.ne.s32.totalorder %s229, %s230
    %p239 = scmp.eq.s32.totalorder %s30, 0
    %p240 = por %p238, %p239
    %p241 = scmp.ne.s32.totalorder %s229, %s230
    %p242 = scmp.eq.s32.totalorder %s31, 1
    %p243 = por %p241, %p242
    %p245 = scmp.ne.s32.totalorder %s230, %s244
    %p246 = scmp.eq.s32.totalorder %s31, 0
    %p247 = por %p245, %p246
    %s249 = sadd.s32 %s248, 1
    %p252 = scmp.eq.s32.totalorder %s25, 1
    %p253 = scmp.ne.s32.totalorder %s248, %s250
    %p254 = scmp.eq.s32.totalorder %s25, 0
    %p255 = por %p253, %p254
    %p256 = scmp.ne.s32.totalorder %s248, %s250
    %p257 = scmp.eq.s32.totalorder %s30, 1
    %p258 = por %p256, %p257
    %p259 = scmp.ne.s32.totalorder %s250, %s251
    %p260 = scmp.eq.s32.totalorder %s30, 0
    %p261 = por %p259, %p260
    %p262 = scmp.ne.s32.totalorder %s250, %s251
    %p263 = scmp.eq.s32.totalorder %s31, 1
    %p264 = por %p262, %p263
    %p266 = scmp.ne.s32.totalorder %s251, %s265
    %p267 = scmp.eq.s32.totalorder %s31, 0
    %p268 = por %p266, %p267
    %s270 = sadd.s32 %s269, 1
    %p273 = scmp.eq.s32.totalorder %s25, 1
    %p274 = scmp.ne.s32.totalorder %s269, %s271
    %p275 = scmp.eq.s32.totalorder %s25, 0
    %p276 = por %p274, %p275
    %p277 = scmp.ne.s32.totalorder %s269, %s271
    %p278 = scmp.eq.s32.totalorder %s30, 1
    %p279 = por %p277, %p278
    %p280 = scmp.ne.s32.totalorder %s271, %s272
    %p281 = scmp.eq.s32.totalorder %s30, 0
    %p282 = por %p280, %p281
    %p283 = scmp.ne.s32.totalorder %s271, %s272
    %p284 = scmp.eq.s32.totalorder %s31, 1
    %p285 = por %p283, %p284
    %p287 = scmp.ne.s32.totalorder %s272, %s286
    %p288 = scmp.eq.s32.totalorder %s31, 0
    %p289 = por %p287, %p288
    %s291 = sadd.s32 %s290, 1
    %p294 = scmp.eq.s32.totalorder %s25, 1
    %p295 = scmp.ne.s32.totalorder %s290, %s292
    %p296 = scmp.eq.s32.totalorder %s25, 0
    %p297 = por %p295, %p296
    %p298 = scmp.ne.s32.totalorder %s290, %s292
    %p299 = scmp.eq.s32.totalorder %s30, 1
    %p300 = por %p298, %p299
    %p301 = scmp.ne.s32.totalorder %s292, %s293
    %p302 = scmp.eq.s32.totalorder %s30, 0
    %p303 = por %p301, %p302
    %p304 = scmp.ne.s32.totalorder %s292, %s293
    %p305 = scmp.eq.s32.totalorder %s31, 1
    %p306 = por %p304, %p305
    %p308 = scmp.ne.s32.totalorder %s293, %s307
    %p309 = scmp.eq.s32.totalorder %s31, 0
    %p310 = por %p308, %p309
    %s312 = sadd.s32 %s311, 1
    %p315 = scmp.eq.s32.totalorder %s25, 1
    %p316 = scmp.ne.s32.totalorder %s311, %s313
    %p317 = scmp.eq.s32.totalorder %s25, 0
    %p318 = por %p316, %p317
    %p319 = scmp.ne.s32.totalorder %s311, %s313
    %p320 = scmp.eq.s32.totalorder %s30, 1
    %p321 = por %p319, %p320
    %p322 = scmp.ne.s32.totalorder %s313, %s314
    %p323 = scmp.eq.s32.totalorder %s30, 0
    %p324 = por %p322, %p323
    %p325 = scmp.ne.s32.totalorder %s313, %s314
    %p326 = scmp.eq.s32.totalorder %s31, 1
    %p327 = por %p325, %p326
    %p329 = scmp.ne.s32.totalorder %s314, %s328
    %p330 = scmp.eq.s32.totalorder %s31, 0
    %p331 = por %p329, %p330
    %s333 = sadd.s32 %s332, 1
    %p336 = scmp.eq.s32.totalorder %s25, 1
    %p337 = scmp.ne.s32.totalorder %s332, %s334
    %p338 = scmp.eq.s32.totalorder %s25, 0
    %p339 = por %p337, %p338
    %p340 = scmp.ne.s32.totalorder %s332, %s334
    %p341 = scmp.eq.s32.totalorder %s30, 1
    %p342 = por %p340, %p341
    %p343 = scmp.ne.s32.totalorder %s334, %s335
    %p344 = scmp.eq.s32.totalorder %s30, 0
    %p345 = por %p343, %p344
    %p346 = scmp.ne.s32.totalorder %s334, %s335
    %p347 = scmp.eq.s32.totalorder %s31, 1
    %p348 = por %p346, %p347
    %p350 = scmp.ne.s32.totalorder %s335, %s349
    %p351 = scmp.eq.s32.totalorder %s31, 0
    %p352 = por %p350, %p351
    %s354 = sadd.s32 %s353, 1
    %p357 = scmp.eq.s32.totalorder %s25, 1
    %p358 = scmp.ne.s32.totalorder %s353, %s355
    %p359 = scmp.eq.s32.totalorder %s25, 0
    %p360 = por %p358, %p359
    %p361 = scmp.ne.s32.totalorder %s353, %s355
    %p362 = scmp.eq.s32.totalorder %s30, 1
    %p363 = por %p361, %p362
    %p364 = scmp.ne.s32.totalorder %s355, %s356
    %p365 = scmp.eq.s32.totalorder %s30, 0
    %p366 = por %p364, %p365
    %p367 = scmp.ne.s32.totalorder %s355, %s356
    %p368 = scmp.eq.s32.totalorder %s31, 1
    %p369 = por %p367, %p368
    %p371 = scmp.ne.s32.totalorder %s356, %s370
    %p372 = scmp.eq.s32.totalorder %s31, 0
    %p373 = por %p371, %p372
    %s375 = sadd.s32 %s374, 1
    %p378 = scmp.eq.s32.totalorder %s25, 1
    %p379 = scmp.ne.s32.totalorder %s374, %s376
    %p380 = scmp.eq.s32.totalorder %s25, 0
    %p381 = por %p379, %p380
    %p382 = scmp.ne.s32.totalorder %s374, %s376
    %p383 = scmp.eq.s32.totalorder %s30, 1
    %p384 = por %p382, %p383
    %p385 = scmp.ne.s32.totalorder %s376, %s377
    %p386 = scmp.eq.s32.totalorder %s30, 0
    %p387 = por %p385, %p386
    %p388 = scmp.ne.s32.totalorder %s376, %s377
    %p389 = scmp.eq.s32.totalorder %s31, 1
    %p390 = por %p388, %p389
    %p392 = scmp.ne.s32.totalorder %s377, %s391
    %p393 = scmp.eq.s32.totalorder %s31, 0
    %p394 = por %p392, %p393
    %s396 = sadd.s32 %s395, 1
    %p399 = scmp.eq.s32.totalorder %s25, 1
    %p400 = scmp.ne.s32.totalorder %s395, %s397
    %p401 = scmp.eq.s32.totalorder %s25, 0
    %p402 = por %p400, %p401
    %p403 = scmp.ne.s32.totalorder %s395, %s397
    %p404 = scmp.eq.s32.totalorder %s30, 1
    %p405 = por %p403, %p404
    %p406 = scmp.ne.s32.totalorder %s397, %s398
    %p407 = scmp.eq.s32.totalorder %s30, 0
    %p408 = por %p406, %p407
    %p409 = scmp.ne.s32.totalorder %s397, %s398
    %p410 = scmp.eq.s32.totalorder %s31, 1
    %p411 = por %p409, %p410
    %p413 = scmp.ne.s32.totalorder %s398, %s412
    %p414 = scmp.eq.s32.totalorder %s31, 0
    %p415 = por %p413, %p414
    %s417 = sadd.s32 %s416, 1
    %p420 = scmp.eq.s32.totalorder %s25, 1
    %p421 = scmp.ne.s32.totalorder %s416, %s418
    %p422 = scmp.eq.s32.totalorder %s25, 0
    %p423 = por %p421, %p422
    %p424 = scmp.ne.s32.totalorder %s416, %s418
    %p425 = scmp.eq.s32.totalorder %s30, 1
    %p426 = por %p424, %p425
    %p427 = scmp.ne.s32.totalorder %s418, %s419
    %p428 = scmp.eq.s32.totalorder %s30, 0
    %p429 = por %p427, %p428
    %p430 = scmp.ne.s32.totalorder %s418, %s419
    %p431 = scmp.eq.s32.totalorder %s31, 1
    %p432 = por %p430, %p431
    %p434 = scmp.ne.s32.totalorder %s419, %s433
    %p435 = scmp.eq.s32.totalorder %s31, 0
    %p436 = por %p434, %p435
    %s437 = ssub.s32 %s25, %s32
    %p438 = scmp.eq.s32.totalorder %s437, 0
    %s440 = sadd.s32 %s439, 1
    %s441 = scalar_select %p438, %s439, %s440
    %p444 = pneg %p438
    %p445 = scmp.eq.s32.totalorder %s25, 1
    %p446 = por %p444, %p445
    %p447 = scmp.ne.s32.totalorder %s439, %s442
    %p448 = scmp.eq.s32.totalorder %s25, 0
    %p449 = por %p447, %p448
    %p450 = scmp.ne.s32.totalorder %s439, %s442
    %p451 = scmp.eq.s32.totalorder %s30, 1
    %p452 = por %p450, %p451
    %p453 = scmp.ne.s32.totalorder %s442, %s443
    %p454 = scmp.eq.s32.totalorder %s30, 0
    %p455 = por %p453, %p454
    %p456 = scmp.ne.s32.totalorder %s442, %s443
    %p457 = scmp.eq.s32.totalorder %s31, 1
    %p458 = por %p456, %p457
    %p460 = scmp.ne.s32.totalorder %s443, %s459
    %p461 = scmp.eq.s32.totalorder %s31, 0
    %p462 = por %p460, %p461
    %p463 = scmp.le.s32.totalorder 1, %s25
    %p464 = scmp.lt.s32.totalorder %s25, 3
    %p465 = pnand %p463, %p464
    %p466 = pneg %p465
    // Predicated region
    $region9: #{_forward_impl.1} parent=5 // pred_check
      _
    $region10: #{_forward_impl.1} parent=5 // pred_check_branch
      %468 = sbr.rel (%p465) target = $region12
    $region11: #{_forward_impl.1} parent=5 // pred_region
      %s469 = ssub.s32 %s25, 1
      // Predicated region
      $region13: #{_forward_impl.1} parent=11 // pred_check
        %p470 = pneg %p72
      $region14: #{_forward_impl.1} parent=11 // pred_check_branch
        %472 = sbr.rel (%p470) target = $region16
      $region15: #{_forward_impl.1} parent=11 // pred_region
        _
      $region16: #{_forward_impl.1} parent=11 // pred_fallthru
        _
      // Predicated region
      $region17: #{_forward_impl.1} parent=11 // pred_check
        %p473 = pneg %p93
      $region18: #{_forward_impl.1} parent=11 // pred_check_branch
        %475 = sbr.rel (%p473) target = $region20
      $region19: #{_forward_impl.1} parent=11 // pred_region
        _
      $region20: #{_forward_impl.1} parent=11 // pred_fallthru
        _
      // Predicated region
      $region21: #{_forward_impl.1} parent=11 // pred_check
        %p476 = pneg %p114
      $region22: #{_forward_impl.1} parent=11 // pred_check_branch
        %478 = sbr.rel (%p476) target = $region24
      $region23: #{_forward_impl.1} parent=11 // pred_region
        _
      $region24: #{_forward_impl.1} parent=11 // pred_fallthru
        _
      // Predicated region
      $region25: #{_forward_impl.1} parent=11 // pred_check
        %p479 = pneg %p135
      $region26: #{_forward_impl.1} parent=11 // pred_check_branch
        %481 = sbr.rel (%p479) target = $region28
      $region27: #{_forward_impl.1} parent=11 // pred_region
        _
      $region28: #{_forward_impl.1} parent=11 // pred_fallthru
        _
      // Predicated region
      $region29: #{_forward_impl.1} parent=11 // pred_check
        %p482 = pneg %p156
      $region30: #{_forward_impl.1} parent=11 // pred_check_branch
        %484 = sbr.rel (%p482) target = $region32
      $region31: #{_forward_impl.1} parent=11 // pred_region
        _
      $region32: #{_forward_impl.1} parent=11 // pred_fallthru
        _
      // Predicated region
      $region33: #{_forward_impl.1} parent=11 // pred_check
        %p485 = pneg %p177
      $region34: #{_forward_impl.1} parent=11 // pred_check_branch
        %487 = sbr.rel (%p485) target = $region36
      $region35: #{_forward_impl.1} parent=11 // pred_region
        _
      $region36: #{_forward_impl.1} parent=11 // pred_fallthru
        _
      // Predicated region
      $region37: #{_forward_impl.1} parent=11 // pred_check
        %p488 = pneg %p198
      $region38: #{_forward_impl.1} parent=11 // pred_check_branch
        %490 = sbr.rel (%p488) target = $region40
      $region39: #{_forward_impl.1} parent=11 // pred_region
        _
      $region40: #{_forward_impl.1} parent=11 // pred_fallthru
        _
      // Predicated region
      $region41: #{_forward_impl.1} parent=11 // pred_check
        %p491 = pneg %p219
      $region42: #{_forward_impl.1} parent=11 // pred_check_branch
        %493 = sbr.rel (%p491) target = $region44
      $region43: #{_forward_impl.1} parent=11 // pred_region
        _
      $region44: #{_forward_impl.1} parent=11 // pred_fallthru
        _
      // Predicated region
      $region45: #{_forward_impl.1} parent=11 // pred_check
        %p494 = pneg %p240
      $region46: #{_forward_impl.1} parent=11 // pred_check_branch
        %496 = sbr.rel (%p494) target = $region48
      $region47: #{_forward_impl.1} parent=11 // pred_region
        _
      $region48: #{_forward_impl.1} parent=11 // pred_fallthru
        _
      // Predicated region
      $region49: #{_forward_impl.1} parent=11 // pred_check
        %p497 = pneg %p261
      $region50: #{_forward_impl.1} parent=11 // pred_check_branch
        %499 = sbr.rel (%p497) target = $region52
      $region51: #{_forward_impl.1} parent=11 // pred_region
        _
      $region52: #{_forward_impl.1} parent=11 // pred_fallthru
        _
      // Predicated region
      $region53: #{_forward_impl.1} parent=11 // pred_check
        %p500 = pneg %p282
      $region54: #{_forward_impl.1} parent=11 // pred_check_branch
        %502 = sbr.rel (%p500) target = $region56
      $region55: #{_forward_impl.1} parent=11 // pred_region
        _
      $region56: #{_forward_impl.1} parent=11 // pred_fallthru
        _
      // Predicated region
      $region57: #{_forward_impl.1} parent=11 // pred_check
        %p503 = pneg %p303
      $region58: #{_forward_impl.1} parent=11 // pred_check_branch
        %505 = sbr.rel (%p503) target = $region60
      $region59: #{_forward_impl.1} parent=11 // pred_region
        _
      $region60: #{_forward_impl.1} parent=11 // pred_fallthru
        _
      // Predicated region
      $region61: #{_forward_impl.1} parent=11 // pred_check
        %p506 = pneg %p324
      $region62: #{_forward_impl.1} parent=11 // pred_check_branch
        %508 = sbr.rel (%p506) target = $region64
      $region63: #{_forward_impl.1} parent=11 // pred_region
        _
      $region64: #{_forward_impl.1} parent=11 // pred_fallthru
        _
      // Predicated region
      $region65: #{_forward_impl.1} parent=11 // pred_check
        %p509 = pneg %p345
      $region66: #{_forward_impl.1} parent=11 // pred_check_branch
        %511 = sbr.rel (%p509) target = $region68
      $region67: #{_forward_impl.1} parent=11 // pred_region
        _
      $region68: #{_forward_impl.1} parent=11 // pred_fallthru
        _
      // Predicated region
      $region69: #{_forward_impl.1} parent=11 // pred_check
        %p512 = pneg %p366
      $region70: #{_forward_impl.1} parent=11 // pred_check_branch
        %514 = sbr.rel (%p512) target = $region72
      $region71: #{_forward_impl.1} parent=11 // pred_region
        _
      $region72: #{_forward_impl.1} parent=11 // pred_fallthru
        _
      // Predicated region
      $region73: #{_forward_impl.1} parent=11 // pred_check
        %p515 = pneg %p387
      $region74: #{_forward_impl.1} parent=11 // pred_check_branch
        %517 = sbr.rel (%p515) target = $region76
      $region75: #{_forward_impl.1} parent=11 // pred_region
        _
      $region76: #{_forward_impl.1} parent=11 // pred_fallthru
        _
      // Predicated region
      $region77: #{_forward_impl.1} parent=11 // pred_check
        %p518 = pneg %p408
      $region78: #{_forward_impl.1} parent=11 // pred_check_branch
        %520 = sbr.rel (%p518) target = $region80
      $region79: #{_forward_impl.1} parent=11 // pred_region
        _
      $region80: #{_forward_impl.1} parent=11 // pred_fallthru
        _
      // Predicated region
      $region81: #{_forward_impl.1} parent=11 // pred_check
        %p521 = pneg %p429
      $region82: #{_forward_impl.1} parent=11 // pred_check_branch
        %523 = sbr.rel (%p521) target = $region84
      $region83: #{_forward_impl.1} parent=11 // pred_region
        _
      $region84: #{_forward_impl.1} parent=11 // pred_fallthru
        _
    $region12: #{_forward_impl.1} parent=5 // pred_fallthru
      _
    %p524 = scmp.lt.s32.totalorder %s25, 2
    // Predicated region
    $region85: #{_forward_impl.1} parent=5 // pred_check
      %p525 = pneg %p524
    $region86: #{_forward_impl.1} parent=5 // pred_check_branch
      %527 = sbr.rel (%p525) target = $region88
    $region87: #{_forward_impl.1} parent=5 // pred_region
      // Predicated region
      $region89: #{_forward_impl.1} parent=87 // pred_check
        %p528 = pneg %p45
      $region90: #{_forward_impl.1} parent=87 // pred_check_branch
        %530 = sbr.rel (%p528) target = $region92
      $region91: #{_forward_impl.1} parent=87 // pred_region
        %p531 = scmp.lt.s32.totalorder %s25, 1
        %s532 = scalar_select %p531, %s25, 1
        %s533 = smul.addr %s532, 32
        %s534 = smul.addr %s533, 8
        %s535 = scalar_lea.vmem %s0, %s534
      $region92: #{_forward_impl.1} parent=87 // pred_fallthru
        _
    $region88: #{_forward_impl.1} parent=5 // pred_fallthru
      _
    %p536 = scmp.le.s32.totalorder 1, %s25
    %p537 = scmp.lt.s32.totalorder %s25, 3
    %p538 = pnand %p536, %p537
    %p539 = pneg %p538
    // Predicated region
    $region93: #{_forward_impl.1} parent=5 // pred_check
      _
    $region94: #{_forward_impl.1} parent=5 // pred_check_branch
      %541 = sbr.rel (%p538) target = $region96
    $region95: #{_forward_impl.1} parent=5 // pred_region
      %s542 = ssub.s32 %s25, 1
      %p543 = scmp.lt.s32.totalorder %s30, 1
      %s544 = scalar_select %p543, %s30, 1
      %s545 = smul.addr %s544, 32
      %s546 = smul.addr %s545, 8
      %s547 = scalar_lea.vmem %s0, %s546
      %p548 = pneg %p51
      %p549 = pneg %p48
      %p550 = pneg %p72
      %p551 = pneg %p69
      %p552 = pneg %p93
      %p553 = pneg %p90
      %p554 = pneg %p114
      %p555 = pneg %p111
      %p556 = pneg %p135
      %p557 = pneg %p132
      %p558 = pneg %p156
      %p559 = pneg %p153
      %p560 = pneg %p177
      %p561 = pneg %p174
      %p562 = pneg %p198
      %p563 = pneg %p195
      %p564 = pneg %p219
      %p565 = pneg %p216
      %p566 = pneg %p240
      %p567 = pneg %p237
      %p568 = pneg %p261
      %p569 = pneg %p258
      %p570 = pneg %p282
      %p571 = pneg %p279
      %p572 = pneg %p303
      %p573 = pneg %p300
      %p574 = pneg %p324
      %p575 = pneg %p321
      %p576 = pneg %p345
      %p577 = pneg %p342
      %p578 = pneg %p366
      %p579 = pneg %p363
      %p580 = pneg %p387
      %p581 = pneg %p384
      %p582 = pneg %p408
      %p583 = pneg %p405
      %p584 = pneg %p429
      %p585 = pneg %p426
      %p586 = pneg %p455
      %p587 = pneg %p452
      %p588 = scmp.lt.s32.totalorder %s30, 1
      %s589 = scalar_select %p588, %s30, 1
      %s590 = smul.addr %s589, 32
      %s591 = smul.addr %s590, 8
      %s592 = scalar_lea.vmem %s19, %s591
      %p593 = scmp.lt.s32.totalorder %s30, 1
      %s594 = scalar_select %p593, %s30, 1
      %s595 = smul.addr %s594, 32
      %s596 = smul.addr %s595, 8
      %s597 = scalar_lea.vmem %s0, %s596
      %p598 = scmp.lt.s32.totalorder %s30, 1
      %s599 = scalar_select %p598, %s30, 1
      %s600 = smul.addr %s599, 32
      %s601 = smul.addr %s600, 8
      %s602 = scalar_lea.vmem %s19, %s601
      %v603 = vld [vmem:[%s597] sm:$0xff]
      %v604 = vld [vmem:[%s597 + $0x8] sm:$0xff]
      %v605 = vld [vmem:[%s597 + $0x10] sm:$0xff]
      %v606 = vld [vmem:[%s597 + $0x18] sm:$0xff]
      %v607 = vld [vmem:[%s597 + $0x20] sm:$0xff]
      %v608 = vld [vmem:[%s597 + $0x28] sm:$0xff]
      %v609 = vld [vmem:[%s597 + $0x30] sm:$0xff]
      %v610 = vld [vmem:[%s597 + $0x38] sm:$0xff]
      %v611 = vld [vmem:[%s597 + $0x40] sm:$0xff]
      %v612 = vld [vmem:[%s597 + $0x48] sm:$0xff]
      %v613 = vld [vmem:[%s597 + $0x50] sm:$0xff]
      %v614 = vld [vmem:[%s597 + $0x58] sm:$0xff]
      %v615 = vld [vmem:[%s597 + $0x60] sm:$0xff]
      %v616 = vld [vmem:[%s597 + $0x68] sm:$0xff]
      %v617 = vld [vmem:[%s597 + $0x70] sm:$0xff]
      %v618 = vld [vmem:[%s597 + $0x78] sm:$0xff]
      %v619 = vld [vmem:[%s597 + $0x80] sm:$0xff]
      %v620 = vld [vmem:[%s597 + $0x88] sm:$0xff]
      %v621 = vld [vmem:[%s597 + $0x90] sm:$0xff]
      %v622 = vld [vmem:[%s597 + $0x98] sm:$0xff]
      %v623 = vld [vmem:[%s597 + $0xa0] sm:$0xff]
      %v624 = vld [vmem:[%s597 + $0xa8] sm:$0xff]
      %v625 = vld [vmem:[%s597 + $0xb0] sm:$0xff]
      %v626 = vld [vmem:[%s597 + $0xb8] sm:$0xff]
      %v627 = vld [vmem:[%s597 + $0xc0] sm:$0xff]
      %v628 = vld [vmem:[%s597 + $0xc8] sm:$0xff]
      %v629 = vld [vmem:[%s597 + $0xd0] sm:$0xff]
      %v630 = vld [vmem:[%s597 + $0xd8] sm:$0xff]
      %v631 = vld [vmem:[%s597 + $0xe0] sm:$0xff]
      %v632 = vld [vmem:[%s597 + $0xe8] sm:$0xff]
      %v633 = vld [vmem:[%s597 + $0xf0] sm:$0xff]
      %v634 = vld [vmem:[%s597 + $0xf8] sm:$0xff]
      %v635 = vld [vmem:[%s1] sm:$0xff]
      %v636 = vld [vmem:[%s1 + $0x8] sm:$0xff]
      %v637 = vld [vmem:[%s1 + $0x10] sm:$0xff]
      %v638 = vld [vmem:[%s1 + $0x18] sm:$0xff]
      %v639 = vld [vmem:[%s1 + $0x20] sm:$0xff]
      %v640 = vld [vmem:[%s1 + $0x28] sm:$0xff]
      %v641 = vld [vmem:[%s1 + $0x30] sm:$0xff]
      %v642 = vld [vmem:[%s1 + $0x38] sm:$0xff]
      %v643 = vld [vmem:[%s1 + $0x40] sm:$0xff]
      %v644 = vld [vmem:[%s1 + $0x48] sm:$0xff]
      %v645 = vld [vmem:[%s1 + $0x50] sm:$0xff]
      %v646 = vld [vmem:[%s1 + $0x58] sm:$0xff]
      %v647 = vld [vmem:[%s1 + $0x60] sm:$0xff]
      %v648 = vld [vmem:[%s1 + $0x68] sm:$0xff]
      %v649 = vld [vmem:[%s1 + $0x70] sm:$0xff]
      %v650 = vld [vmem:[%s1 + $0x78] sm:$0xff]
      %v651 = vld [vmem:[%s1 + $0x80] sm:$0xff]
      %v652 = vld [vmem:[%s1 + $0x88] sm:$0xff]
      %v653 = vld [vmem:[%s1 + $0x90] sm:$0xff]
      %v654 = vld [vmem:[%s1 + $0x98] sm:$0xff]
      %v655 = vld [vmem:[%s1 + $0xa0] sm:$0xff]
      %v656 = vld [vmem:[%s1 + $0xa8] sm:$0xff]
      %v657 = vld [vmem:[%s1 + $0xb0] sm:$0xff]
      %v658 = vld [vmem:[%s1 + $0xb8] sm:$0xff]
      %v659 = vld [vmem:[%s1 + $0xc0] sm:$0xff]
      %v660 = vld [vmem:[%s1 + $0xc8] sm:$0xff]
      %v661 = vld [vmem:[%s1 + $0xd0] sm:$0xff]
      %v662 = vld [vmem:[%s1 + $0xd8] sm:$0xff]
      %v663 = vld [vmem:[%s1 + $0xe0] sm:$0xff]
      %v664 = vld [vmem:[%s1 + $0xe8] sm:$0xff]
      %v665 = vld [vmem:[%s1 + $0xf0] sm:$0xff]
      %v666 = vld [vmem:[%s1 + $0xf8] sm:$0xff]
      %v667 = vld [vmem:[%s1 + $0x100] sm:$0xff]
      %v668 = vld [vmem:[%s1 + $0x108] sm:$0xff]
      %v669 = vld [vmem:[%s1 + $0x110] sm:$0xff]
      %v670 = vld [vmem:[%s1 + $0x118] sm:$0xff]
      %v671 = vld [vmem:[%s1 + $0x120] sm:$0xff]
      %v672 = vld [vmem:[%s1 + $0x128] sm:$0xff]
      %v673 = vld [vmem:[%s1 + $0x130] sm:$0xff]
      %v674 = vld [vmem:[%s1 + $0x138] sm:$0xff]
      %v675 = vld [vmem:[%s1 + $0x140] sm:$0xff]
      %v676 = vld [vmem:[%s1 + $0x148] sm:$0xff]
      %v677 = vld [vmem:[%s1 + $0x150] sm:$0xff]
      %v678 = vld [vmem:[%s1 + $0x158] sm:$0xff]
      %v679 = vld [vmem:[%s1 + $0x160] sm:$0xff]
      %v680 = vld [vmem:[%s1 + $0x168] sm:$0xff]
      %v681 = vld [vmem:[%s1 + $0x170] sm:$0xff]
      %v682 = vld [vmem:[%s1 + $0x178] sm:$0xff]
      %v683 = vld [vmem:[%s1 + $0x180] sm:$0xff]
      %v684 = vld [vmem:[%s1 + $0x188] sm:$0xff]
      %v685 = vld [vmem:[%s1 + $0x190] sm:$0xff]
      %v686 = vld [vmem:[%s1 + $0x198] sm:$0xff]
      %v687 = vld [vmem:[%s1 + $0x1a0] sm:$0xff]
      %v688 = vld [vmem:[%s1 + $0x1a8] sm:$0xff]
      %v689 = vld [vmem:[%s1 + $0x1b0] sm:$0xff]
      %v690 = vld [vmem:[%s1 + $0x1b8] sm:$0xff]
      %v691 = vld [vmem:[%s1 + $0x1c0] sm:$0xff]
      %v692 = vld [vmem:[%s1 + $0x1c8] sm:$0xff]
      %v693 = vld [vmem:[%s1 + $0x1d0] sm:$0xff]
      %v694 = vld [vmem:[%s1 + $0x1d8] sm:$0xff]
      %v695 = vld [vmem:[%s1 + $0x1e0] sm:$0xff]
      %v696 = vld [vmem:[%s1 + $0x1e8] sm:$0xff]
      %v697 = vld [vmem:[%s1 + $0x1f0] sm:$0xff]
      %v698 = vld [vmem:[%s1 + $0x1f8] sm:$0xff]
      %v699 = vld [vmem:[%s1 + $0x200] sm:$0xff]
      %v700 = vld [vmem:[%s1 + $0x208] sm:$0xff]
      %v701 = vld [vmem:[%s1 + $0x210] sm:$0xff]
      %v702 = vld [vmem:[%s1 + $0x218] sm:$0xff]
      %v703 = vld [vmem:[%s1 + $0x220] sm:$0xff]
      %v704 = vld [vmem:[%s1 + $0x228] sm:$0xff]
      %v705 = vld [vmem:[%s1 + $0x230] sm:$0xff]
      %v706 = vld [vmem:[%s1 + $0x238] sm:$0xff]
      %v707 = vld [vmem:[%s1 + $0x240] sm:$0xff]
      %v708 = vld [vmem:[%s1 + $0x248] sm:$0xff]
      %v709 = vld [vmem:[%s1 + $0x250] sm:$0xff]
      %v710 = vld [vmem:[%s1 + $0x258] sm:$0xff]
      %v711 = vld [vmem:[%s1 + $0x260] sm:$0xff]
      %v712 = vld [vmem:[%s1 + $0x268] sm:$0xff]
      %v713 = vld [vmem:[%s1 + $0x270] sm:$0xff]
      %v714 = vld [vmem:[%s1 + $0x278] sm:$0xff]
      %v715 = vld [vmem:[%s1 + $0x280] sm:$0xff]
      %v716 = vld [vmem:[%s1 + $0x288] sm:$0xff]
      %v717 = vld [vmem:[%s1 + $0x290] sm:$0xff]
      %v718 = vld [vmem:[%s1 + $0x298] sm:$0xff]
      %v719 = vld [vmem:[%s1 + $0x2a0] sm:$0xff]
      %v720 = vld [vmem:[%s1 + $0x2a8] sm:$0xff]
      %v721 = vld [vmem:[%s1 + $0x2b0] sm:$0xff]
      %v722 = vld [vmem:[%s1 + $0x2b8] sm:$0xff]
      %v723 = vld [vmem:[%s1 + $0x2c0] sm:$0xff]
      %v724 = vld [vmem:[%s1 + $0x2c8] sm:$0xff]
      %v725 = vld [vmem:[%s1 + $0x2d0] sm:$0xff]
      %v726 = vld [vmem:[%s1 + $0x2d8] sm:$0xff]
      %v727 = vld [vmem:[%s1 + $0x2e0] sm:$0xff]
      %v728 = vld [vmem:[%s1 + $0x2e8] sm:$0xff]
      %v729 = vld [vmem:[%s1 + $0x2f0] sm:$0xff]
      %v730 = vld [vmem:[%s1 + $0x2f8] sm:$0xff]
      %v731 = vld [vmem:[%s1 + $0x300] sm:$0xff]
      %v732 = vld [vmem:[%s1 + $0x308] sm:$0xff]
      %v733 = vld [vmem:[%s1 + $0x310] sm:$0xff]
      %v734 = vld [vmem:[%s1 + $0x318] sm:$0xff]
      %v735 = vld [vmem:[%s1 + $0x320] sm:$0xff]
      %v736 = vld [vmem:[%s1 + $0x328] sm:$0xff]
      %v737 = vld [vmem:[%s1 + $0x330] sm:$0xff]
      %v738 = vld [vmem:[%s1 + $0x338] sm:$0xff]
      %v739 = vld [vmem:[%s1 + $0x340] sm:$0xff]
      %v740 = vld [vmem:[%s1 + $0x348] sm:$0xff]
      %v741 = vld [vmem:[%s1 + $0x350] sm:$0xff]
      %v742 = vld [vmem:[%s1 + $0x358] sm:$0xff]
      %v743 = vld [vmem:[%s1 + $0x360] sm:$0xff]
      %v744 = vld [vmem:[%s1 + $0x368] sm:$0xff]
      %v745 = vld [vmem:[%s1 + $0x370] sm:$0xff]
      %v746 = vld [vmem:[%s1 + $0x378] sm:$0xff]
      %v747 = vld [vmem:[%s1 + $0x380] sm:$0xff]
      %v748 = vld [vmem:[%s1 + $0x388] sm:$0xff]
      %v749 = vld [vmem:[%s1 + $0x390] sm:$0xff]
      %v750 = vld [vmem:[%s1 + $0x398] sm:$0xff]
      %v751 = vld [vmem:[%s1 + $0x3a0] sm:$0xff]
      %v752 = vld [vmem:[%s1 + $0x3a8] sm:$0xff]
      %v753 = vld [vmem:[%s1 + $0x3b0] sm:$0xff]
      %v754 = vld [vmem:[%s1 + $0x3b8] sm:$0xff]
      %v755 = vld [vmem:[%s1 + $0x3c0] sm:$0xff]
      %v756 = vld [vmem:[%s1 + $0x3c8] sm:$0xff]
      %v757 = vld [vmem:[%s1 + $0x3d0] sm:$0xff]
      %v758 = vld [vmem:[%s1 + $0x3d8] sm:$0xff]
      %v759 = vld [vmem:[%s1 + $0x3e0] sm:$0xff]
      %v760 = vld [vmem:[%s1 + $0x3e8] sm:$0xff]
      %v761 = vld [vmem:[%s1 + $0x3f0] sm:$0xff]
      %v762 = vld [vmem:[%s1 + $0x3f8] sm:$0xff]
      %v763 = vld [vmem:[%s1 + $0x400] sm:$0xff]
      %v764 = vld [vmem:[%s1 + $0x408] sm:$0xff]
      %v765 = vld [vmem:[%s1 + $0x410] sm:$0xff]
      %v766 = vld [vmem:[%s1 + $0x418] sm:$0xff]
      %v767 = vld [vmem:[%s1 + $0x420] sm:$0xff]
      %v768 = vld [vmem:[%s1 + $0x428] sm:$0xff]
      %v769 = vld [vmem:[%s1 + $0x430] sm:$0xff]
      %v770 = vld [vmem:[%s1 + $0x438] sm:$0xff]
      %v771 = vld [vmem:[%s1 + $0x440] sm:$0xff]
      %v772 = vld [vmem:[%s1 + $0x448] sm:$0xff]
      %v773 = vld [vmem:[%s1 + $0x450] sm:$0xff]
      %v774 = vld [vmem:[%s1 + $0x458] sm:$0xff]
      %v775 = vld [vmem:[%s1 + $0x460] sm:$0xff]
      %v776 = vld [vmem:[%s1 + $0x468] sm:$0xff]
      %v777 = vld [vmem:[%s1 + $0x470] sm:$0xff]
      %v778 = vld [vmem:[%s1 + $0x478] sm:$0xff]
      %779 = vmatpush.msra.mxu0 %v618
      %780 = vmatpush.msra.mxu0 %v617
      %781 = vmatpush.msra.mxu0 %v616
      %782 = vmatpush.msra.mxu0 %v615
      %783 = vmatpush.msra.mxu0 %v614
      %784 = vmatpush.msra.mxu0 %v613
      %785 = vmatpush.msra.mxu0 %v612
      %786 = vmatpush.msra.mxu0 %v611
      %787 = vmatpush.msra.mxu0 %v610
      %788 = vmatpush.msra.mxu0 %v609
      %789 = vmatpush.msra.mxu0 %v608
      %790 = vmatpush.msra.mxu0 %v607
      %791 = vmatpush.msra.mxu0 %v606
      %792 = vmatpush.msra.mxu0 %v605
      %793 = vmatpush.msra.mxu0 %v604
      %794 = vmatpush.msra.mxu0 %v603
      %795 = vmatmul.f32.gmra.mxu0 %v635
      %v796 = vpop.f32.mrf.mxu0
      %v797 = vadd.f32 0.0, %v796
      %798 = vmatmul.f32.gmra.mxu0 %v637
      %v799 = vpop.f32.mrf.mxu0
      %v800 = vadd.f32 0.0, %v799
      %801 = vmatmul.f32.gmra.mxu0 %v639
      %v802 = vpop.f32.mrf.mxu0
      %v803 = vadd.f32 0.0, %v802
      %804 = vmatmul.f32.gmra.mxu0 %v641
      %v805 = vpop.f32.mrf.mxu0
      %v806 = vadd.f32 0.0, %v805
      %807 = vmatmul.f32.gmra.mxu0 %v643
      %v808 = vpop.f32.mrf.mxu0
      %v809 = vadd.f32 0.0, %v808
      %810 = vmatmul.f32.gmra.mxu0 %v645
      %v811 = vpop.f32.mrf.mxu0
      %v812 = vadd.f32 0.0, %v811
      %813 = vmatmul.f32.gmra.mxu0 %v647
      %v814 = vpop.f32.mrf.mxu0
      %v815 = vadd.f32 0.0, %v814
      %816 = vmatmul.f32.gmra.mxu0 %v649
      %v817 = vpop.f32.mrf.mxu0
      %v818 = vadd.f32 0.0, %v817
      %819 = vmatmul.f32.gmra.mxu0 %v651
      %v820 = vpop.f32.mrf.mxu0
      %v821 = vadd.f32 0.0, %v820
      %822 = vmatmul.f32.gmra.mxu0 %v653
      %v823 = vpop.f32.mrf.mxu0
      %v824 = vadd.f32 0.0, %v823
      %825 = vmatmul.f32.gmra.mxu0 %v655
      %v826 = vpop.f32.mrf.mxu0
      %v827 = vadd.f32 0.0, %v826
      %828 = vmatmul.f32.gmra.mxu0 %v657
      %v829 = vpop.f32.mrf.mxu0
      %v830 = vadd.f32 0.0, %v829
      %831 = vmatmul.f32.gmra.mxu0 %v659
      %v832 = vpop.f32.mrf.mxu0
      %v833 = vadd.f32 0.0, %v832
      %834 = vmatmul.f32.gmra.mxu0 %v661
      %v835 = vpop.f32.mrf.mxu0
      %v836 = vadd.f32 0.0, %v835
      %837 = vmatmul.f32.gmra.mxu0 %v663
      %v838 = vpop.f32.mrf.mxu0
      %v839 = vadd.f32 0.0, %v838
      %840 = vmatmul.f32.gmra.mxu0 %v665
      %v841 = vpop.f32.mrf.mxu0
      %v842 = vadd.f32 0.0, %v841
      %843 = vmatmul.f32.gmra.mxu0 %v667
      %v844 = vpop.f32.mrf.mxu0
      %v845 = vadd.f32 0.0, %v844
      %846 = vmatmul.f32.gmra.mxu0 %v669
      %v847 = vpop.f32.mrf.mxu0
      %v848 = vadd.f32 0.0, %v847
      %849 = vmatmul.f32.gmra.mxu0 %v671
      %v850 = vpop.f32.mrf.mxu0
      %v851 = vadd.f32 0.0, %v850
      %852 = vmatmul.f32.gmra.mxu0 %v673
      %v853 = vpop.f32.mrf.mxu0
      %v854 = vadd.f32 0.0, %v853
      %855 = vmatmul.f32.gmra.mxu0 %v675
      %v856 = vpop.f32.mrf.mxu0
      %v857 = vadd.f32 0.0, %v856
      %858 = vmatmul.f32.gmra.mxu0 %v677
      %v859 = vpop.f32.mrf.mxu0
      %v860 = vadd.f32 0.0, %v859
      %861 = vmatmul.f32.gmra.mxu0 %v679
      %v862 = vpop.f32.mrf.mxu0
      %v863 = vadd.f32 0.0, %v862
      %864 = vmatmul.f32.gmra.mxu0 %v681
      %v865 = vpop.f32.mrf.mxu0
      %v866 = vadd.f32 0.0, %v865
      %867 = vmatmul.f32.gmra.mxu0 %v683
      %v868 = vpop.f32.mrf.mxu0
      %v869 = vadd.f32 0.0, %v868
      %870 = vmatmul.f32.gmra.mxu0 %v685
      %v871 = vpop.f32.mrf.mxu0
      %v872 = vadd.f32 0.0, %v871
      %873 = vmatmul.f32.gmra.mxu0 %v687
      %v874 = vpop.f32.mrf.mxu0
      %v875 = vadd.f32 0.0, %v874
      %876 = vmatmul.f32.gmra.mxu0 %v689
      %v877 = vpop.f32.mrf.mxu0
      %v878 = vadd.f32 0.0, %v877
      %879 = vmatmul.f32.gmra.mxu0 %v691
      %v880 = vpop.f32.mrf.mxu0
      %v881 = vadd.f32 0.0, %v880
      %882 = vmatmul.f32.gmra.mxu0 %v693
      %v883 = vpop.f32.mrf.mxu0
      %v884 = vadd.f32 0.0, %v883
      %885 = vmatmul.f32.gmra.mxu0 %v695
      %v886 = vpop.f32.mrf.mxu0
      %v887 = vadd.f32 0.0, %v886
      %888 = vmatmul.f32.gmra.mxu0 %v697
      %v889 = vpop.f32.mrf.mxu0
      %v890 = vadd.f32 0.0, %v889
      %891 = vmatmul.f32.gmra.mxu0 %v699
      %v892 = vpop.f32.mrf.mxu0
      %v893 = vadd.f32 0.0, %v892
      %894 = vmatmul.f32.gmra.mxu0 %v701
      %v895 = vpop.f32.mrf.mxu0
      %v896 = vadd.f32 0.0, %v895
      %897 = vmatmul.f32.gmra.mxu0 %v703
      %v898 = vpop.f32.mrf.mxu0
      %v899 = vadd.f32 0.0, %v898
      %900 = vmatmul.f32.gmra.mxu0 %v705
      %v901 = vpop.f32.mrf.mxu0
      %v902 = vadd.f32 0.0, %v901
      %903 = vmatmul.f32.gmra.mxu0 %v707
      %v904 = vpop.f32.mrf.mxu0
      %v905 = vadd.f32 0.0, %v904
      %906 = vmatmul.f32.gmra.mxu0 %v709
      %v907 = vpop.f32.mrf.mxu0
      %v908 = vadd.f32 0.0, %v907
      %909 = vmatmul.f32.gmra.mxu0 %v711
      %v910 = vpop.f32.mrf.mxu0
      %v911 = vadd.f32 0.0, %v910
      %912 = vmatmul.f32.gmra.mxu0 %v713
      %v913 = vpop.f32.mrf.mxu0
      %v914 = vadd.f32 0.0, %v913
      %915 = vmatmul.f32.gmra.mxu0 %v715
      %v916 = vpop.f32.mrf.mxu0
      %v917 = vadd.f32 0.0, %v916
      %918 = vmatmul.f32.gmra.mxu0 %v717
      %v919 = vpop.f32.mrf.mxu0
      %v920 = vadd.f32 0.0, %v919
      %921 = vmatmul.f32.gmra.mxu0 %v719
      %v922 = vpop.f32.mrf.mxu0
      %v923 = vadd.f32 0.0, %v922
      %924 = vmatmul.f32.gmra.mxu0 %v721
      %v925 = vpop.f32.mrf.mxu0
      %v926 = vadd.f32 0.0, %v925
      %927 = vmatmul.f32.gmra.mxu0 %v723
      %v928 = vpop.f32.mrf.mxu0
      %v929 = vadd.f32 0.0, %v928
      %930 = vmatmul.f32.gmra.mxu0 %v725
      %v931 = vpop.f32.mrf.mxu0
      %v932 = vadd.f32 0.0, %v931
      %933 = vmatmul.f32.gmra.mxu0 %v727
      %v934 = vpop.f32.mrf.mxu0
      %v935 = vadd.f32 0.0, %v934
      %936 = vmatmul.f32.gmra.mxu0 %v729
      %v937 = vpop.f32.mrf.mxu0
      %v938 = vadd.f32 0.0, %v937
      %939 = vmatmul.f32.gmra.mxu0 %v731
      %v940 = vpop.f32.mrf.mxu0
      %v941 = vadd.f32 0.0, %v940
      %942 = vmatmul.f32.gmra.mxu0 %v733
      %v943 = vpop.f32.mrf.mxu0
      %v944 = vadd.f32 0.0, %v943
      %945 = vmatmul.f32.gmra.mxu0 %v735
      %v946 = vpop.f32.mrf.mxu0
      %v947 = vadd.f32 0.0, %v946
      %948 = vmatmul.f32.gmra.mxu0 %v737
      %v949 = vpop.f32.mrf.mxu0
      %v950 = vadd.f32 0.0, %v949
      %951 = vmatmul.f32.gmra.mxu0 %v739
      %v952 = vpop.f32.mrf.mxu0
      %v953 = vadd.f32 0.0, %v952
      %954 = vmatmul.f32.gmra.mxu0 %v741
      %v955 = vpop.f32.mrf.mxu0
      %v956 = vadd.f32 0.0, %v955
      %957 = vmatmul.f32.gmra.mxu0 %v743
      %v958 = vpop.f32.mrf.mxu0
      %v959 = vadd.f32 0.0, %v958
      %960 = vmatmul.f32.gmra.mxu0 %v745
      %v961 = vpop.f32.mrf.mxu0
      %v962 = vadd.f32 0.0, %v961
      %963 = vmatmul.f32.gmra.mxu0 %v747
      %v964 = vpop.f32.mrf.mxu0
      %v965 = vadd.f32 0.0, %v964
      %966 = vmatmul.f32.gmra.mxu0 %v749
      %v967 = vpop.f32.mrf.mxu0
      %v968 = vadd.f32 0.0, %v967
      %969 = vmatmul.f32.gmra.mxu0 %v751
      %v970 = vpop.f32.mrf.mxu0
      %v971 = vadd.f32 0.0, %v970
      %972 = vmatmul.f32.gmra.mxu0 %v753
      %v973 = vpop.f32.mrf.mxu0
      %v974 = vadd.f32 0.0, %v973
      %975 = vmatmul.f32.gmra.mxu0 %v755
      %v976 = vpop.f32.mrf.mxu0
      %v977 = vadd.f32 0.0, %v976
      %978 = vmatmul.f32.gmra.mxu0 %v757
      %v979 = vpop.f32.mrf.mxu0
      %v980 = vadd.f32 0.0, %v979
      %981 = vmatmul.f32.gmra.mxu0 %v759
      %v982 = vpop.f32.mrf.mxu0
      %v983 = vadd.f32 0.0, %v982
      %984 = vmatmul.f32.gmra.mxu0 %v761
      %v985 = vpop.f32.mrf.mxu0
      %v986 = vadd.f32 0.0, %v985
      %987 = vmatmul.f32.gmra.mxu0 %v763
      %v988 = vpop.f32.mrf.mxu0
      %v989 = vadd.f32 0.0, %v988
      %990 = vmatmul.f32.gmra.mxu0 %v765
      %v991 = vpop.f32.mrf.mxu0
      %v992 = vadd.f32 0.0, %v991
      %993 = vmatmul.f32.gmra.mxu0 %v767
      %v994 = vpop.f32.mrf.mxu0
      %v995 = vadd.f32 0.0, %v994
      %996 = vmatmul.f32.gmra.mxu0 %v769
      %v997 = vpop.f32.mrf.mxu0
      %v998 = vadd.f32 0.0, %v997
      %999 = vmatmul.f32.gmra.mxu0 %v771
      %v1000 = vpop.f32.mrf.mxu0
      %v1001 = vadd.f32 0.0, %v1000
      %1002 = vmatmul.f32.gmra.mxu0 %v773
      %v1003 = vpop.f32.mrf.mxu0
      %v1004 = vadd.f32 0.0, %v1003
      %1005 = vmatmul.f32.gmra.mxu0 %v775
      %v1006 = vpop.f32.mrf.mxu0
      %v1007 = vadd.f32 0.0, %v1006
      %1008 = vmatmul.f32.gmra.mxu0 %v777
      %v1009 = vpop.f32.mrf.mxu0
      %v1010 = vadd.f32 0.0, %v1009
      %1011 = vdwg.mxu0
      %1012 = vmatpush.msra.mxu0 %v634
      %1013 = vmatpush.msra.mxu0 %v633
      %1014 = vmatpush.msra.mxu0 %v632
      %1015 = vmatpush.msra.mxu0 %v631
      %1016 = vmatpush.msra.mxu0 %v630
      %1017 = vmatpush.msra.mxu0 %v629
      %1018 = vmatpush.msra.mxu0 %v628
      %1019 = vmatpush.msra.mxu0 %v627
      %1020 = vmatpush.msra.mxu0 %v626
      %1021 = vmatpush.msra.mxu0 %v625
      %1022 = vmatpush.msra.mxu0 %v624
      %1023 = vmatpush.msra.mxu0 %v623
      %1024 = vmatpush.msra.mxu0 %v622
      %1025 = vmatpush.msra.mxu0 %v621
      %1026 = vmatpush.msra.mxu0 %v620
      %1027 = vmatpush.msra.mxu0 %v619
      %1028 = vmatmul.f32.gmra.mxu0 %v636
      %v1029 = vpop.f32.mrf.mxu0
      %v1030 = vadd.f32 %v797, %v1029
      %1031 = vmatmul.f32.gmra.mxu0 %v638
      %v1032 = vpop.f32.mrf.mxu0
      %v1033 = vadd.f32 %v800, %v1032
      %1034 = vmatmul.f32.gmra.mxu0 %v640
      %v1035 = vpop.f32.mrf.mxu0
      %v1036 = vadd.f32 %v803, %v1035
      %1037 = vmatmul.f32.gmra.mxu0 %v642
      %v1038 = vpop.f32.mrf.mxu0
      %v1039 = vadd.f32 %v806, %v1038
      %1040 = vmatmul.f32.gmra.mxu0 %v644
      %v1041 = vpop.f32.mrf.mxu0
      %v1042 = vadd.f32 %v809, %v1041
      %1043 = vmatmul.f32.gmra.mxu0 %v646
      %v1044 = vpop.f32.mrf.mxu0
      %v1045 = vadd.f32 %v812, %v1044
      %1046 = vmatmul.f32.gmra.mxu0 %v648
      %v1047 = vpop.f32.mrf.mxu0
      %v1048 = vadd.f32 %v815, %v1047
      %1049 = vmatmul.f32.gmra.mxu0 %v650
      %v1050 = vpop.f32.mrf.mxu0
      %v1051 = vadd.f32 %v818, %v1050
      %1052 = vmatmul.f32.gmra.mxu0 %v652
      %v1053 = vpop.f32.mrf.mxu0
      %v1054 = vadd.f32 %v821, %v1053
      %1055 = vmatmul.f32.gmra.mxu0 %v654
      %v1056 = vpop.f32.mrf.mxu0
      %v1057 = vadd.f32 %v824, %v1056
      %1058 = vmatmul.f32.gmra.mxu0 %v656
      %v1059 = vpop.f32.mrf.mxu0
      %v1060 = vadd.f32 %v827, %v1059
      %1061 = vmatmul.f32.gmra.mxu0 %v658
      %v1062 = vpop.f32.mrf.mxu0
      %v1063 = vadd.f32 %v830, %v1062
      %1064 = vmatmul.f32.gmra.mxu0 %v660
      %v1065 = vpop.f32.mrf.mxu0
      %v1066 = vadd.f32 %v833, %v1065
      %1067 = vmatmul.f32.gmra.mxu0 %v662
      %v1068 = vpop.f32.mrf.mxu0
      %v1069 = vadd.f32 %v836, %v1068
      %1070 = vmatmul.f32.gmra.mxu0 %v664
      %v1071 = vpop.f32.mrf.mxu0
      %v1072 = vadd.f32 %v839, %v1071
      %1073 = vmatmul.f32.gmra.mxu0 %v666
      %v1074 = vpop.f32.mrf.mxu0
      %v1075 = vadd.f32 %v842, %v1074
      %1076 = vmatmul.f32.gmra.mxu0 %v668
      %v1077 = vpop.f32.mrf.mxu0
      %v1078 = vadd.f32 %v845, %v1077
      %1079 = vmatmul.f32.gmra.mxu0 %v670
      %v1080 = vpop.f32.mrf.mxu0
      %v1081 = vadd.f32 %v848, %v1080
      %1082 = vmatmul.f32.gmra.mxu0 %v672
      %v1083 = vpop.f32.mrf.mxu0
      %v1084 = vadd.f32 %v851, %v1083
      %1085 = vmatmul.f32.gmra.mxu0 %v674
      %v1086 = vpop.f32.mrf.mxu0
      %v1087 = vadd.f32 %v854, %v1086
      %1088 = vmatmul.f32.gmra.mxu0 %v676
      %v1089 = vpop.f32.mrf.mxu0
      %v1090 = vadd.f32 %v857, %v1089
      %1091 = vmatmul.f32.gmra.mxu0 %v678
      %v1092 = vpop.f32.mrf.mxu0
      %v1093 = vadd.f32 %v860, %v1092
      %1094 = vmatmul.f32.gmra.mxu0 %v680
      %v1095 = vpop.f32.mrf.mxu0
      %v1096 = vadd.f32 %v863, %v1095
      %1097 = vmatmul.f32.gmra.mxu0 %v682
      %v1098 = vpop.f32.mrf.mxu0
      %v1099 = vadd.f32 %v866, %v1098
      %1100 = vmatmul.f32.gmra.mxu0 %v684
      %v1101 = vpop.f32.mrf.mxu0
      %v1102 = vadd.f32 %v869, %v1101
      %1103 = vmatmul.f32.gmra.mxu0 %v686
      %v1104 = vpop.f32.mrf.mxu0
      %v1105 = vadd.f32 %v872, %v1104
      %1106 = vmatmul.f32.gmra.mxu0 %v688
      %v1107 = vpop.f32.mrf.mxu0
      %v1108 = vadd.f32 %v875, %v1107
      %1109 = vmatmul.f32.gmra.mxu0 %v690
      %v1110 = vpop.f32.mrf.mxu0
      %v1111 = vadd.f32 %v878, %v1110
      %1112 = vmatmul.f32.gmra.mxu0 %v692
      %v1113 = vpop.f32.mrf.mxu0
      %v1114 = vadd.f32 %v881, %v1113
      %1115 = vmatmul.f32.gmra.mxu0 %v694
      %v1116 = vpop.f32.mrf.mxu0
      %v1117 = vadd.f32 %v884, %v1116
      %1118 = vmatmul.f32.gmra.mxu0 %v696
      %v1119 = vpop.f32.mrf.mxu0
      %v1120 = vadd.f32 %v887, %v1119
      %1121 = vmatmul.f32.gmra.mxu0 %v698
      %v1122 = vpop.f32.mrf.mxu0
      %v1123 = vadd.f32 %v890, %v1122
      %1124 = vmatmul.f32.gmra.mxu0 %v700
      %v1125 = vpop.f32.mrf.mxu0
      %v1126 = vadd.f32 %v893, %v1125
      %1127 = vmatmul.f32.gmra.mxu0 %v702
      %v1128 = vpop.f32.mrf.mxu0
      %v1129 = vadd.f32 %v896, %v1128
      %1130 = vmatmul.f32.gmra.mxu0 %v704
      %v1131 = vpop.f32.mrf.mxu0
      %v1132 = vadd.f32 %v899, %v1131
      %1133 = vmatmul.f32.gmra.mxu0 %v706
      %v1134 = vpop.f32.mrf.mxu0
      %v1135 = vadd.f32 %v902, %v1134
      %1136 = vmatmul.f32.gmra.mxu0 %v708
      %v1137 = vpop.f32.mrf.mxu0
      %v1138 = vadd.f32 %v905, %v1137
      %1139 = vmatmul.f32.gmra.mxu0 %v710
      %v1140 = vpop.f32.mrf.mxu0
      %v1141 = vadd.f32 %v908, %v1140
      %1142 = vmatmul.f32.gmra.mxu0 %v712
      %v1143 = vpop.f32.mrf.mxu0
      %v1144 = vadd.f32 %v911, %v1143
      %1145 = vmatmul.f32.gmra.mxu0 %v714
      %v1146 = vpop.f32.mrf.mxu0
      %v1147 = vadd.f32 %v914, %v1146
      %1148 = vmatmul.f32.gmra.mxu0 %v716
      %v1149 = vpop.f32.mrf.mxu0
      %v1150 = vadd.f32 %v917, %v1149
      %1151 = vmatmul.f32.gmra.mxu0 %v718
      %v1152 = vpop.f32.mrf.mxu0
      %v1153 = vadd.f32 %v920, %v1152
      %1154 = vmatmul.f32.gmra.mxu0 %v720
      %v1155 = vpop.f32.mrf.mxu0
      %v1156 = vadd.f32 %v923, %v1155
      %1157 = vmatmul.f32.gmra.mxu0 %v722
      %v1158 = vpop.f32.mrf.mxu0
      %v1159 = vadd.f32 %v926, %v1158
      %1160 = vmatmul.f32.gmra.mxu0 %v724
      %v1161 = vpop.f32.mrf.mxu0
      %v1162 = vadd.f32 %v929, %v1161
      %1163 = vmatmul.f32.gmra.mxu0 %v726
      %v1164 = vpop.f32.mrf.mxu0
      %v1165 = vadd.f32 %v932, %v1164
      %1166 = vmatmul.f32.gmra.mxu0 %v728
      %v1167 = vpop.f32.mrf.mxu0
      %v1168 = vadd.f32 %v935, %v1167
      %1169 = vmatmul.f32.gmra.mxu0 %v730
      %v1170 = vpop.f32.mrf.mxu0
      %v1171 = vadd.f32 %v938, %v1170
      %1172 = vmatmul.f32.gmra.mxu0 %v732
      %v1173 = vpop.f32.mrf.mxu0
      %v1174 = vadd.f32 %v941, %v1173
      %1175 = vmatmul.f32.gmra.mxu0 %v734
      %v1176 = vpop.f32.mrf.mxu0
      %v1177 = vadd.f32 %v944, %v1176
      %1178 = vmatmul.f32.gmra.mxu0 %v736
      %v1179 = vpop.f32.mrf.mxu0
      %v1180 = vadd.f32 %v947, %v1179
      %1181 = vmatmul.f32.gmra.mxu0 %v738
      %v1182 = vpop.f32.mrf.mxu0
      %v1183 = vadd.f32 %v950, %v1182
      %1184 = vmatmul.f32.gmra.mxu0 %v740
      %v1185 = vpop.f32.mrf.mxu0
      %v1186 = vadd.f32 %v953, %v1185
      %1187 = vmatmul.f32.gmra.mxu0 %v742
      %v1188 = vpop.f32.mrf.mxu0
      %v1189 = vadd.f32 %v956, %v1188
      %1190 = vmatmul.f32.gmra.mxu0 %v744
      %v1191 = vpop.f32.mrf.mxu0
      %v1192 = vadd.f32 %v959, %v1191
      %1193 = vmatmul.f32.gmra.mxu0 %v746
      %v1194 = vpop.f32.mrf.mxu0
      %v1195 = vadd.f32 %v962, %v1194
      %1196 = vmatmul.f32.gmra.mxu0 %v748
      %v1197 = vpop.f32.mrf.mxu0
      %v1198 = vadd.f32 %v965, %v1197
      %1199 = vmatmul.f32.gmra.mxu0 %v750
      %v1200 = vpop.f32.mrf.mxu0
      %v1201 = vadd.f32 %v968, %v1200
      %1202 = vmatmul.f32.gmra.mxu0 %v752
      %v1203 = vpop.f32.mrf.mxu0
      %v1204 = vadd.f32 %v971, %v1203
      %1205 = vmatmul.f32.gmra.mxu0 %v754
      %v1206 = vpop.f32.mrf.mxu0
      %v1207 = vadd.f32 %v974, %v1206
      %1208 = vmatmul.f32.gmra.mxu0 %v756
      %v1209 = vpop.f32.mrf.mxu0
      %v1210 = vadd.f32 %v977, %v1209
      %1211 = vmatmul.f32.gmra.mxu0 %v758
      %v1212 = vpop.f32.mrf.mxu0
      %v1213 = vadd.f32 %v980, %v1212
      %1214 = vmatmul.f32.gmra.mxu0 %v760
      %v1215 = vpop.f32.mrf.mxu0
      %v1216 = vadd.f32 %v983, %v1215
      %1217 = vmatmul.f32.gmra.mxu0 %v762
      %v1218 = vpop.f32.mrf.mxu0
      %v1219 = vadd.f32 %v986, %v1218
      %1220 = vmatmul.f32.gmra.mxu0 %v764
      %v1221 = vpop.f32.mrf.mxu0
      %v1222 = vadd.f32 %v989, %v1221
      %1223 = vmatmul.f32.gmra.mxu0 %v766
      %v1224 = vpop.f32.mrf.mxu0
      %v1225 = vadd.f32 %v992, %v1224
      %1226 = vmatmul.f32.gmra.mxu0 %v768
      %v1227 = vpop.f32.mrf.mxu0
      %v1228 = vadd.f32 %v995, %v1227
      %1229 = vmatmul.f32.gmra.mxu0 %v770
      %v1230 = vpop.f32.mrf.mxu0
      %v1231 = vadd.f32 %v998, %v1230
      %1232 = vmatmul.f32.gmra.mxu0 %v772
      %v1233 = vpop.f32.mrf.mxu0
      %v1234 = vadd.f32 %v1001, %v1233
      %1235 = vmatmul.f32.gmra.mxu0 %v774
      %v1236 = vpop.f32.mrf.mxu0
      %v1237 = vadd.f32 %v1004, %v1236
      %1238 = vmatmul.f32.gmra.mxu0 %v776
      %v1239 = vpop.f32.mrf.mxu0
      %v1240 = vadd.f32 %v1007, %v1239
      %1241 = vmatmul.f32.gmra.mxu0 %v778
      %v1242 = vpop.f32.mrf.mxu0
      %v1243 = vadd.f32 %v1010, %v1242
      %1244 = vdwg.mxu0
      %v1245 = vld [vmem:[%s2] sm:$0xff]
      %v1246 = vld [vmem:[%s2 + $0x8] sm:$0xff]
      %v1247 = vld [vmem:[%s2 + $0x10] sm:$0xff]
      %v1248 = vld [vmem:[%s2 + $0x18] sm:$0xff]
      %v1249 = vld [vmem:[%s2 + $0x20] sm:$0xff]
      %v1250 = vld [vmem:[%s2 + $0x28] sm:$0xff]
      %v1251 = vld [vmem:[%s2 + $0x30] sm:$0xff]
      %v1252 = vld [vmem:[%s2 + $0x38] sm:$0xff]
      %v1253 = vld [vmem:[%s2 + $0x40] sm:$0xff]
      %vm1254 = vcmask 64512
      %v1256 = vsel %vm1254, %v1054, 0
      %v1259 = vsel %vm1254, %v1057, 0
      %v1262 = vsel %vm1254, %v1060, 0
      %v1265 = vsel %vm1254, %v1063, 0
      %v1268 = vsel %vm1254, %v1066, 0
      %v1271 = vsel %vm1254, %v1069, 0
      %v1274 = vsel %vm1254, %v1072, 0
      %v1277 = vsel %vm1254, %v1075, 0
      %1279 = vmatpush.msra.mxu0 0.0
      %1280 = vmatpush.msra.mxu0 0.0
      %1281 = vmatpush.msra.mxu0 0.0
      %1282 = vmatpush.msra.mxu0 0.0
      %1283 = vmatpush.msra.mxu0 0.0
      %1284 = vmatpush.msra.mxu0 0.0
      %1285 = vmatpush.msra.mxu0 0.0
      %1286 = vmatpush.msra.mxu0 0.0
      %1287 = vmatpush.msra.mxu0 0.0
      %1288 = vmatpush.msra.mxu0 0.0
      %1289 = vmatpush.msra.mxu0 0.0
      %1290 = vmatpush.msra.mxu0 0.0
      %1291 = vmatpush.msra.mxu0 0.0
      %1292 = vmatpush.msra.mxu0 0.0
      %1293 = vmatpush.msra.mxu0 0.0
      %1294 = vmatpush.msra.mxu0 %v1246
      %1295 = vmatmul.f32.gmra.mxu0 %v1256
      %v1296 = vpop.f32.mrf.mxu0
      %v1297 = vadd.f32 0.0, %v1296
      %1298 = vmatmul.f32.gmra.mxu0 %v1259
      %v1299 = vpop.f32.mrf.mxu0
      %v1300 = vadd.f32 0.0, %v1299
      %1301 = vmatmul.f32.gmra.mxu0 %v1262
      %v1302 = vpop.f32.mrf.mxu0
      %v1303 = vadd.f32 0.0, %v1302
      %1304 = vmatmul.f32.gmra.mxu0 %v1265
      %v1305 = vpop.f32.mrf.mxu0
      %v1306 = vadd.f32 0.0, %v1305
      %1307 = vmatmul.f32.gmra.mxu0 %v1268
      %v1308 = vpop.f32.mrf.mxu0
      %v1309 = vadd.f32 0.0, %v1308
      %1310 = vmatmul.f32.gmra.mxu0 %v1271
      %v1311 = vpop.f32.mrf.mxu0
      %v1312 = vadd.f32 0.0, %v1311
      %1313 = vmatmul.f32.gmra.mxu0 %v1274
      %v1314 = vpop.f32.mrf.mxu0
      %v1315 = vadd.f32 0.0, %v1314
      %1316 = vmatmul.f32.gmra.mxu0 %v1277
      %v1317 = vpop.f32.mrf.mxu0
      %v1318 = vadd.f32 0.0, %v1317
      %1319 = vdwg.mxu0
      %v1321 = vsel %vm1254, %v1030, 0
      %v1324 = vsel %vm1254, %v1033, 0
      %v1327 = vsel %vm1254, %v1036, 0
      %v1330 = vsel %vm1254, %v1039, 0
      %v1333 = vsel %vm1254, %v1042, 0
      %v1336 = vsel %vm1254, %v1045, 0
      %v1339 = vsel %vm1254, %v1048, 0
      %v1342 = vsel %vm1254, %v1051, 0
      %1344 = vmatpush.msra.mxu0 0.0
      %1345 = vmatpush.msra.mxu0 0.0
      %1346 = vmatpush.msra.mxu0 0.0
      %1347 = vmatpush.msra.mxu0 0.0
      %1348 = vmatpush.msra.mxu0 0.0
      %1349 = vmatpush.msra.mxu0 0.0
      %1350 = vmatpush.msra.mxu0 0.0
      %1351 = vmatpush.msra.mxu0 0.0
      %1352 = vmatpush.msra.mxu0 0.0
      %1353 = vmatpush.msra.mxu0 0.0
      %1354 = vmatpush.msra.mxu0 0.0
      %1355 = vmatpush.msra.mxu0 0.0
      %1356 = vmatpush.msra.mxu0 0.0
      %1357 = vmatpush.msra.mxu0 0.0
      %1358 = vmatpush.msra.mxu0 0.0
      %1359 = vmatpush.msra.mxu0 %v1245
      %1360 = vmatmul.f32.gmra.mxu0 %v1321
      %v1361 = vpop.f32.mrf.mxu0
      %v1362 = vadd.f32 %v1297, %v1361
      %1363 = vmatmul.f32.gmra.mxu0 %v1324
      %v1364 = vpop.f32.mrf.mxu0
      %v1365 = vadd.f32 %v1300, %v1364
      %1366 = vmatmul.f32.gmra.mxu0 %v1327
      %v1367 = vpop.f32.mrf.mxu0
      %v1368 = vadd.f32 %v1303, %v1367
      %1369 = vmatmul.f32.gmra.mxu0 %v1330
      %v1370 = vpop.f32.mrf.mxu0
      %v1371 = vadd.f32 %v1306, %v1370
      %1372 = vmatmul.f32.gmra.mxu0 %v1333
      %v1373 = vpop.f32.mrf.mxu0
      %v1374 = vadd.f32 %v1309, %v1373
      %1375 = vmatmul.f32.gmra.mxu0 %v1336
      %v1376 = vpop.f32.mrf.mxu0
      %v1377 = vadd.f32 %v1312, %v1376
      %1378 = vmatmul.f32.gmra.mxu0 %v1339
      %v1379 = vpop.f32.mrf.mxu0
      %v1380 = vadd.f32 %v1315, %v1379
      %1381 = vmatmul.f32.gmra.mxu0 %v1342
      %v1382 = vpop.f32.mrf.mxu0
      %v1383 = vadd.f32 %v1318, %v1382
      %1384 = vdwg.mxu0
      %v1386 = vsel %vm1254, %v1078, 0
      %v1389 = vsel %vm1254, %v1081, 0
      %v1392 = vsel %vm1254, %v1084, 0
      %v1395 = vsel %vm1254, %v1087, 0
      %v1398 = vsel %vm1254, %v1090, 0
      %v1401 = vsel %vm1254, %v1093, 0
      %v1404 = vsel %vm1254, %v1096, 0
      %v1407 = vsel %vm1254, %v1099, 0
      %1409 = vmatpush.msra.mxu0 0.0
      %1410 = vmatpush.msra.mxu0 0.0
      %1411 = vmatpush.msra.mxu0 0.0
      %1412 = vmatpush.msra.mxu0 0.0
      %1413 = vmatpush.msra.mxu0 0.0
      %1414 = vmatpush.msra.mxu0 0.0
      %1415 = vmatpush.msra.mxu0 0.0
      %1416 = vmatpush.msra.mxu0 0.0
      %1417 = vmatpush.msra.mxu0 0.0
      %1418 = vmatpush.msra.mxu0 0.0
      %1419 = vmatpush.msra.mxu0 0.0
      %1420 = vmatpush.msra.mxu0 0.0
      %1421 = vmatpush.msra.mxu0 0.0
      %1422 = vmatpush.msra.mxu0 0.0
      %1423 = vmatpush.msra.mxu0 0.0
      %1424 = vmatpush.msra.mxu0 %v1247
      %1425 = vmatmul.f32.gmra.mxu0 %v1386
      %v1426 = vpop.f32.mrf.mxu0
      %v1427 = vadd.f32 0.0, %v1426
      %1428 = vmatmul.f32.gmra.mxu0 %v1389
      %v1429 = vpop.f32.mrf.mxu0
      %v1430 = vadd.f32 0.0, %v1429
      %1431 = vmatmul.f32.gmra.mxu0 %v1392
      %v1432 = vpop.f32.mrf.mxu0
      %v1433 = vadd.f32 0.0, %v1432
      %1434 = vmatmul.f32.gmra.mxu0 %v1395
      %v1435 = vpop.f32.mrf.mxu0
      %v1436 = vadd.f32 0.0, %v1435
      %1437 = vmatmul.f32.gmra.mxu0 %v1398
      %v1438 = vpop.f32.mrf.mxu0
      %v1439 = vadd.f32 0.0, %v1438
      %1440 = vmatmul.f32.gmra.mxu0 %v1401
      %v1441 = vpop.f32.mrf.mxu0
      %v1442 = vadd.f32 0.0, %v1441
      %1443 = vmatmul.f32.gmra.mxu0 %v1404
      %v1444 = vpop.f32.mrf.mxu0
      %v1445 = vadd.f32 0.0, %v1444
      %1446 = vmatmul.f32.gmra.mxu0 %v1407
      %v1447 = vpop.f32.mrf.mxu0
      %v1448 = vadd.f32 0.0, %v1447
      %1449 = vdwg.mxu0
      %v1450 = vadd.f32 %v1362, %v1427
      %v1451 = vadd.f32 %v1365, %v1430
      %v1452 = vadd.f32 %v1368, %v1433
      %v1453 = vadd.f32 %v1371, %v1436
      %v1454 = vadd.f32 %v1374, %v1439
      %v1455 = vadd.f32 %v1377, %v1442
      %v1456 = vadd.f32 %v1380, %v1445
      %v1457 = vadd.f32 %v1383, %v1448
      %v1459 = vsel %vm1254, %v1102, 0
      %v1462 = vsel %vm1254, %v1105, 0
      %v1465 = vsel %vm1254, %v1108, 0
      %v1468 = vsel %vm1254, %v1111, 0
      %v1471 = vsel %vm1254, %v1114, 0
      %v1474 = vsel %vm1254, %v1117, 0
      %v1477 = vsel %vm1254, %v1120, 0
      %v1480 = vsel %vm1254, %v1123, 0
      %1482 = vmatpush.msra.mxu0 0.0
      %1483 = vmatpush.msra.mxu0 0.0
      %1484 = vmatpush.msra.mxu0 0.0
      %1485 = vmatpush.msra.mxu0 0.0
      %1486 = vmatpush.msra.mxu0 0.0
      %1487 = vmatpush.msra.mxu0 0.0
      %1488 = vmatpush.msra.mxu0 0.0
      %1489 = vmatpush.msra.mxu0 0.0
      %1490 = vmatpush.msra.mxu0 0.0
      %1491 = vmatpush.msra.mxu0 0.0
      %1492 = vmatpush.msra.mxu0 0.0
      %1493 = vmatpush.msra.mxu0 0.0
      %1494 = vmatpush.msra.mxu0 0.0
      %1495 = vmatpush.msra.mxu0 0.0
      %1496 = vmatpush.msra.mxu0 0.0
      %1497 = vmatpush.msra.mxu0 %v1248
      %1498 = vmatmul.f32.gmra.mxu0 %v1459
      %v1499 = vpop.f32.mrf.mxu0
      %v1500 = vadd.f32 0.0, %v1499
      %1501 = vmatmul.f32.gmra.mxu0 %v1462
      %v1502 = vpop.f32.mrf.mxu0
      %v1503 = vadd.f32 0.0, %v1502
      %1504 = vmatmul.f32.gmra.mxu0 %v1465
      %v1505 = vpop.f32.mrf.mxu0
      %v1506 = vadd.f32 0.0, %v1505
      %1507 = vmatmul.f32.gmra.mxu0 %v1468
      %v1508 = vpop.f32.mrf.mxu0
      %v1509 = vadd.f32 0.0, %v1508
      %1510 = vmatmul.f32.gmra.mxu0 %v1471
      %v1511 = vpop.f32.mrf.mxu0
      %v1512 = vadd.f32 0.0, %v1511
      %1513 = vmatmul.f32.gmra.mxu0 %v1474
      %v1514 = vpop.f32.mrf.mxu0
      %v1515 = vadd.f32 0.0, %v1514
      %1516 = vmatmul.f32.gmra.mxu0 %v1477
      %v1517 = vpop.f32.mrf.mxu0
      %v1518 = vadd.f32 0.0, %v1517
      %1519 = vmatmul.f32.gmra.mxu0 %v1480
      %v1520 = vpop.f32.mrf.mxu0
      %v1521 = vadd.f32 0.0, %v1520
      %1522 = vdwg.mxu0
      %v1523 = vadd.f32 %v1450, %v1500
      %v1524 = vadd.f32 %v1451, %v1503
      %v1525 = vadd.f32 %v1452, %v1506
      %v1526 = vadd.f32 %v1453, %v1509
      %v1527 = vadd.f32 %v1454, %v1512
      %v1528 = vadd.f32 %v1455, %v1515
      %v1529 = vadd.f32 %v1456, %v1518
      %v1530 = vadd.f32 %v1457, %v1521
      %v1532 = vsel %vm1254, %v1126, 0
      %v1535 = vsel %vm1254, %v1129, 0
      %v1538 = vsel %vm1254, %v1132, 0
      %v1541 = vsel %vm1254, %v1135, 0
      %v1544 = vsel %vm1254, %v1138, 0
      %v1547 = vsel %vm1254, %v1141, 0
      %v1550 = vsel %vm1254, %v1144, 0
      %v1553 = vsel %vm1254, %v1147, 0
      %1555 = vmatpush.msra.mxu0 0.0
      %1556 = vmatpush.msra.mxu0 0.0
      %1557 = vmatpush.msra.mxu0 0.0
      %1558 = vmatpush.msra.mxu0 0.0
      %1559 = vmatpush.msra.mxu0 0.0
      %1560 = vmatpush.msra.mxu0 0.0
      %1561 = vmatpush.msra.mxu0 0.0
      %1562 = vmatpush.msra.mxu0 0.0
      %1563 = vmatpush.msra.mxu0 0.0
      %1564 = vmatpush.msra.mxu0 0.0
      %1565 = vmatpush.msra.mxu0 0.0
      %1566 = vmatpush.msra.mxu0 0.0
      %1567 = vmatpush.msra.mxu0 0.0
      %1568 = vmatpush.msra.mxu0 0.0
      %1569 = vmatpush.msra.mxu0 0.0
      %1570 = vmatpush.msra.mxu0 %v1249
      %1571 = vmatmul.f32.gmra.mxu0 %v1532
      %v1572 = vpop.f32.mrf.mxu0
      %v1573 = vadd.f32 0.0, %v1572
      %1574 = vmatmul.f32.gmra.mxu0 %v1535
      %v1575 = vpop.f32.mrf.mxu0
      %v1576 = vadd.f32 0.0, %v1575
      %1577 = vmatmul.f32.gmra.mxu0 %v1538
      %v1578 = vpop.f32.mrf.mxu0
      %v1579 = vadd.f32 0.0, %v1578
      %1580 = vmatmul.f32.gmra.mxu0 %v1541
      %v1581 = vpop.f32.mrf.mxu0
      %v1582 = vadd.f32 0.0, %v1581
      %1583 = vmatmul.f32.gmra.mxu0 %v1544
      %v1584 = vpop.f32.mrf.mxu0
      %v1585 = vadd.f32 0.0, %v1584
      %1586 = vmatmul.f32.gmra.mxu0 %v1547
      %v1587 = vpop.f32.mrf.mxu0
      %v1588 = vadd.f32 0.0, %v1587
      %1589 = vmatmul.f32.gmra.mxu0 %v1550
      %v1590 = vpop.f32.mrf.mxu0
      %v1591 = vadd.f32 0.0, %v1590
      %1592 = vmatmul.f32.gmra.mxu0 %v1553
      %v1593 = vpop.f32.mrf.mxu0
      %v1594 = vadd.f32 0.0, %v1593
      %1595 = vdwg.mxu0
      %v1596 = vadd.f32 %v1523, %v1573
      %v1597 = vadd.f32 %v1524, %v1576
      %v1598 = vadd.f32 %v1525, %v1579
      %v1599 = vadd.f32 %v1526, %v1582
      %v1600 = vadd.f32 %v1527, %v1585
      %v1601 = vadd.f32 %v1528, %v1588
      %v1602 = vadd.f32 %v1529, %v1591
      %v1603 = vadd.f32 %v1530, %v1594
      %v1605 = vsel %vm1254, %v1150, 0
      %v1608 = vsel %vm1254, %v1153, 0
      %v1611 = vsel %vm1254, %v1156, 0
      %v1614 = vsel %vm1254, %v1159, 0
      %v1617 = vsel %vm1254, %v1162, 0
      %v1620 = vsel %vm1254, %v1165, 0
      %v1623 = vsel %vm1254, %v1168, 0
      %v1626 = vsel %vm1254, %v1171, 0
      %1628 = vmatpush.msra.mxu0 0.0
      %1629 = vmatpush.msra.mxu0 0.0
      %1630 = vmatpush.msra.mxu0 0.0
      %1631 = vmatpush.msra.mxu0 0.0
      %1632 = vmatpush.msra.mxu0 0.0
      %1633 = vmatpush.msra.mxu0 0.0
      %1634 = vmatpush.msra.mxu0 0.0
      %1635 = vmatpush.msra.mxu0 0.0
      %1636 = vmatpush.msra.mxu0 0.0
      %1637 = vmatpush.msra.mxu0 0.0
      %1638 = vmatpush.msra.mxu0 0.0
      %1639 = vmatpush.msra.mxu0 0.0
      %1640 = vmatpush.msra.mxu0 0.0
      %1641 = vmatpush.msra.mxu0 0.0
      %1642 = vmatpush.msra.mxu0 0.0
      %1643 = vmatpush.msra.mxu0 %v1250
      %1644 = vmatmul.f32.gmra.mxu0 %v1605
      %v1645 = vpop.f32.mrf.mxu0
      %v1646 = vadd.f32 0.0, %v1645
      %1647 = vmatmul.f32.gmra.mxu0 %v1608
      %v1648 = vpop.f32.mrf.mxu0
      %v1649 = vadd.f32 0.0, %v1648
      %1650 = vmatmul.f32.gmra.mxu0 %v1611
      %v1651 = vpop.f32.mrf.mxu0
      %v1652 = vadd.f32 0.0, %v1651
      %1653 = vmatmul.f32.gmra.mxu0 %v1614
      %v1654 = vpop.f32.mrf.mxu0
      %v1655 = vadd.f32 0.0, %v1654
      %1656 = vmatmul.f32.gmra.mxu0 %v1617
      %v1657 = vpop.f32.mrf.mxu0
      %v1658 = vadd.f32 0.0, %v1657
      %1659 = vmatmul.f32.gmra.mxu0 %v1620
      %v1660 = vpop.f32.mrf.mxu0
      %v1661 = vadd.f32 0.0, %v1660
      %1662 = vmatmul.f32.gmra.mxu0 %v1623
      %v1663 = vpop.f32.mrf.mxu0
      %v1664 = vadd.f32 0.0, %v1663
      %1665 = vmatmul.f32.gmra.mxu0 %v1626
      %v1666 = vpop.f32.mrf.mxu0
      %v1667 = vadd.f32 0.0, %v1666
      %1668 = vdwg.mxu0
      %v1669 = vadd.f32 %v1596, %v1646
      %v1670 = vadd.f32 %v1597, %v1649
      %v1671 = vadd.f32 %v1598, %v1652
      %v1672 = vadd.f32 %v1599, %v1655
      %v1673 = vadd.f32 %v1600, %v1658
      %v1674 = vadd.f32 %v1601, %v1661
      %v1675 = vadd.f32 %v1602, %v1664
      %v1676 = vadd.f32 %v1603, %v1667
      %v1678 = vsel %vm1254, %v1174, 0
      %v1681 = vsel %vm1254, %v1177, 0
      %v1684 = vsel %vm1254, %v1180, 0
      %v1687 = vsel %vm1254, %v1183, 0
      %v1690 = vsel %vm1254, %v1186, 0
      %v1693 = vsel %vm1254, %v1189, 0
      %v1696 = vsel %vm1254, %v1192, 0
      %v1699 = vsel %vm1254, %v1195, 0
      %1701 = vmatpush.msra.mxu0 0.0
      %1702 = vmatpush.msra.mxu0 0.0
      %1703 = vmatpush.msra.mxu0 0.0
      %1704 = vmatpush.msra.mxu0 0.0
      %1705 = vmatpush.msra.mxu0 0.0
      %1706 = vmatpush.msra.mxu0 0.0
      %1707 = vmatpush.msra.mxu0 0.0
      %1708 = vmatpush.msra.mxu0 0.0
      %1709 = vmatpush.msra.mxu0 0.0
      %1710 = vmatpush.msra.mxu0 0.0
      %1711 = vmatpush.msra.mxu0 0.0
      %1712 = vmatpush.msra.mxu0 0.0
      %1713 = vmatpush.msra.mxu0 0.0
      %1714 = vmatpush.msra.mxu0 0.0
      %1715 = vmatpush.msra.mxu0 0.0
      %1716 = vmatpush.msra.mxu0 %v1251
      %1717 = vmatmul.f32.gmra.mxu0 %v1678
      %v1718 = vpop.f32.mrf.mxu0
      %v1719 = vadd.f32 0.0, %v1718
      %1720 = vmatmul.f32.gmra.mxu0 %v1681
      %v1721 = vpop.f32.mrf.mxu0
      %v1722 = vadd.f32 0.0, %v1721
      %1723 = vmatmul.f32.gmra.mxu0 %v1684
      %v1724 = vpop.f32.mrf.mxu0
      %v1725 = vadd.f32 0.0, %v1724
      %1726 = vmatmul.f32.gmra.mxu0 %v1687
      %v1727 = vpop.f32.mrf.mxu0
      %v1728 = vadd.f32 0.0, %v1727
      %1729 = vmatmul.f32.gmra.mxu0 %v1690
      %v1730 = vpop.f32.mrf.mxu0
      %v1731 = vadd.f32 0.0, %v1730
      %1732 = vmatmul.f32.gmra.mxu0 %v1693
      %v1733 = vpop.f32.mrf.mxu0
      %v1734 = vadd.f32 0.0, %v1733
      %1735 = vmatmul.f32.gmra.mxu0 %v1696
      %v1736 = vpop.f32.mrf.mxu0
      %v1737 = vadd.f32 0.0, %v1736
      %1738 = vmatmul.f32.gmra.mxu0 %v1699
      %v1739 = vpop.f32.mrf.mxu0
      %v1740 = vadd.f32 0.0, %v1739
      %1741 = vdwg.mxu0
      %v1742 = vadd.f32 %v1669, %v1719
      %v1743 = vadd.f32 %v1670, %v1722
      %v1744 = vadd.f32 %v1671, %v1725
      %v1745 = vadd.f32 %v1672, %v1728
      %v1746 = vadd.f32 %v1673, %v1731
      %v1747 = vadd.f32 %v1674, %v1734
      %v1748 = vadd.f32 %v1675, %v1737
      %v1749 = vadd.f32 %v1676, %v1740
      %v1751 = vsel %vm1254, %v1198, 0
      %v1754 = vsel %vm1254, %v1201, 0
      %v1757 = vsel %vm1254, %v1204, 0
      %v1760 = vsel %vm1254, %v1207, 0
      %v1763 = vsel %vm1254, %v1210, 0
      %v1766 = vsel %vm1254, %v1213, 0
      %v1769 = vsel %vm1254, %v1216, 0
      %v1772 = vsel %vm1254, %v1219, 0
      %1774 = vmatpush.msra.mxu0 0.0
      %1775 = vmatpush.msra.mxu0 0.0
      %1776 = vmatpush.msra.mxu0 0.0
      %1777 = vmatpush.msra.mxu0 0.0
      %1778 = vmatpush.msra.mxu0 0.0
      %1779 = vmatpush.msra.mxu0 0.0
      %1780 = vmatpush.msra.mxu0 0.0
      %1781 = vmatpush.msra.mxu0 0.0
      %1782 = vmatpush.msra.mxu0 0.0
      %1783 = vmatpush.msra.mxu0 0.0
      %1784 = vmatpush.msra.mxu0 0.0
      %1785 = vmatpush.msra.mxu0 0.0
      %1786 = vmatpush.msra.mxu0 0.0
      %1787 = vmatpush.msra.mxu0 0.0
      %1788 = vmatpush.msra.mxu0 0.0
      %1789 = vmatpush.msra.mxu0 %v1252
      %1790 = vmatmul.f32.gmra.mxu0 %v1751
      %v1791 = vpop.f32.mrf.mxu0
      %v1792 = vadd.f32 0.0, %v1791
      %1793 = vmatmul.f32.gmra.mxu0 %v1754
      %v1794 = vpop.f32.mrf.mxu0
      %v1795 = vadd.f32 0.0, %v1794
      %1796 = vmatmul.f32.gmra.mxu0 %v1757
      %v1797 = vpop.f32.mrf.mxu0
      %v1798 = vadd.f32 0.0, %v1797
      %1799 = vmatmul.f32.gmra.mxu0 %v1760
      %v1800 = vpop.f32.mrf.mxu0
      %v1801 = vadd.f32 0.0, %v1800
      %1802 = vmatmul.f32.gmra.mxu0 %v1763
      %v1803 = vpop.f32.mrf.mxu0
      %v1804 = vadd.f32 0.0, %v1803
      %1805 = vmatmul.f32.gmra.mxu0 %v1766
      %v1806 = vpop.f32.mrf.mxu0
      %v1807 = vadd.f32 0.0, %v1806
      %1808 = vmatmul.f32.gmra.mxu0 %v1769
      %v1809 = vpop.f32.mrf.mxu0
      %v1810 = vadd.f32 0.0, %v1809
      %1811 = vmatmul.f32.gmra.mxu0 %v1772
      %v1812 = vpop.f32.mrf.mxu0
      %v1813 = vadd.f32 0.0, %v1812
      %1814 = vdwg.mxu0
      %v1815 = vadd.f32 %v1742, %v1792
      %v1816 = vadd.f32 %v1743, %v1795
      %v1817 = vadd.f32 %v1744, %v1798
      %v1818 = vadd.f32 %v1745, %v1801
      %v1819 = vadd.f32 %v1746, %v1804
      %v1820 = vadd.f32 %v1747, %v1807
      %v1821 = vadd.f32 %v1748, %v1810
      %v1822 = vadd.f32 %v1749, %v1813
      %v1824 = vsel %vm1254, %v1222, 0
      %v1827 = vsel %vm1254, %v1225, 0
      %v1830 = vsel %vm1254, %v1228, 0
      %v1833 = vsel %vm1254, %v1231, 0
      %v1836 = vsel %vm1254, %v1234, 0
      %v1839 = vsel %vm1254, %v1237, 0
      %v1842 = vsel %vm1254, %v1240, 0
      %v1845 = vsel %vm1254, %v1243, 0
      %1847 = vmatpush.msra.mxu0 0.0
      %1848 = vmatpush.msra.mxu0 0.0
      %1849 = vmatpush.msra.mxu0 0.0
      %1850 = vmatpush.msra.mxu0 0.0
      %1851 = vmatpush.msra.mxu0 0.0
      %1852 = vmatpush.msra.mxu0 0.0
      %1853 = vmatpush.msra.mxu0 0.0
      %1854 = vmatpush.msra.mxu0 0.0
      %1855 = vmatpush.msra.mxu0 0.0
      %1856 = vmatpush.msra.mxu0 0.0
      %1857 = vmatpush.msra.mxu0 0.0
      %1858 = vmatpush.msra.mxu0 0.0
      %1859 = vmatpush.msra.mxu0 0.0
      %1860 = vmatpush.msra.mxu0 0.0
      %1861 = vmatpush.msra.mxu0 0.0
      %1862 = vmatpush.msra.mxu0 %v1253
      %1863 = vmatmul.f32.gmra.mxu0 %v1824
      %v1864 = vpop.f32.mrf.mxu0
      %v1865 = vadd.f32 0.0, %v1864
      %1866 = vmatmul.f32.gmra.mxu0 %v1827
      %v1867 = vpop.f32.mrf.mxu0
      %v1868 = vadd.f32 0.0, %v1867
      %1869 = vmatmul.f32.gmra.mxu0 %v1830
      %v1870 = vpop.f32.mrf.mxu0
      %v1871 = vadd.f32 0.0, %v1870
      %1872 = vmatmul.f32.gmra.mxu0 %v1833
      %v1873 = vpop.f32.mrf.mxu0
      %v1874 = vadd.f32 0.0, %v1873
      %1875 = vmatmul.f32.gmra.mxu0 %v1836
      %v1876 = vpop.f32.mrf.mxu0
      %v1877 = vadd.f32 0.0, %v1876
      %1878 = vmatmul.f32.gmra.mxu0 %v1839
      %v1879 = vpop.f32.mrf.mxu0
      %v1880 = vadd.f32 0.0, %v1879
      %1881 = vmatmul.f32.gmra.mxu0 %v1842
      %v1882 = vpop.f32.mrf.mxu0
      %v1883 = vadd.f32 0.0, %v1882
      %1884 = vmatmul.f32.gmra.mxu0 %v1845
      %v1885 = vpop.f32.mrf.mxu0
      %v1886 = vadd.f32 0.0, %v1885
      %1887 = vdwg.mxu0
      %v1888 = vadd.f32 %v1815, %v1865
      %v1889 = vadd.f32 %v1816, %v1868
      %v1890 = vadd.f32 %v1817, %v1871
      %v1891 = vadd.f32 %v1818, %v1874
      %v1892 = vadd.f32 %v1819, %v1877
      %v1893 = vadd.f32 %v1820, %v1880
      %v1894 = vadd.f32 %v1821, %v1883
      %v1895 = vadd.f32 %v1822, %v1886
      %v1896 = vld [vmem:[%s3] sm:$0x1]
      %v1898 = vperm.slane %v1896, 0
      %v1900 = vadd.f32 %v1888, %v1898
      %v1901 = vadd.f32 %v1889, %v1898
      %v1902 = vadd.f32 %v1890, %v1898
      %v1903 = vadd.f32 %v1891, %v1898
      %v1904 = vadd.f32 %v1892, %v1898
      %v1905 = vadd.f32 %v1893, %v1898
      %v1906 = vadd.f32 %v1894, %v1898
      %v1907 = vadd.f32 %v1895, %v1898
      %v1908 = vmax.f32 %v1900, 0.0
      %v1909 = vmax.f32 %v1901, 0.0
      %v1910 = vmax.f32 %v1902, 0.0
      %v1911 = vmax.f32 %v1903, 0.0
      %v1912 = vmax.f32 %v1904, 0.0
      %v1913 = vmax.f32 %v1905, 0.0
      %v1914 = vmax.f32 %v1906, 0.0
      %v1915 = vmax.f32 %v1907, 0.0
      %v1916 = vld [vmem:[%s4] sm:$0xff]
      %v1917 = vld [vmem:[%s4 + $0x8] sm:$0xff]
      %v1918 = vld [vmem:[%s4 + $0x10] sm:$0xff]
      %v1919 = vld [vmem:[%s4 + $0x18] sm:$0xff]
      %v1920 = vld [vmem:[%s4 + $0x20] sm:$0xff]
      %v1921 = vld [vmem:[%s4 + $0x28] sm:$0xff]
      %v1922 = vld [vmem:[%s4 + $0x30] sm:$0xff]
      %v1923 = vld [vmem:[%s4 + $0x38] sm:$0xff]
      %v1924 = vld [vmem:[%s4 + $0x40] sm:$0xff]
      %v1925 = vld [vmem:[%s4 + $0x48] sm:$0xff]
      %v1926 = vld [vmem:[%s4 + $0x50] sm:$0xff]
      %v1927 = vld [vmem:[%s4 + $0x58] sm:$0xff]
      %v1928 = vld [vmem:[%s4 + $0x60] sm:$0xff]
      %v1929 = vld [vmem:[%s4 + $0x68] sm:$0xff]
      %v1930 = vld [vmem:[%s4 + $0x70] sm:$0xff]
      %v1931 = vld [vmem:[%s4 + $0x78] sm:$0xff]
      %v1932 = vld [vmem:[%s4 + $0x80] sm:$0xff]
      %v1933 = vld [vmem:[%s4 + $0x88] sm:$0xff]
      %vm1934 = vcmask 523264
      %v1936 = vsel %vm1934, %v1916, 0
      %v1939 = vsel %vm1934, %v1917, 0
      %v1942 = vsel %vm1934, %v1918, 0
      %v1945 = vsel %vm1934, %v1919, 0
      %v1948 = vsel %vm1934, %v1920, 0
      %v1951 = vsel %vm1934, %v1921, 0
      %v1954 = vsel %vm1934, %v1922, 0
      %v1957 = vsel %vm1934, %v1923, 0
      %v1960 = vsel %vm1934, %v1924, 0
      %v1963 = vsel %vm1934, %v1925, 0
      %v1966 = vsel %vm1934, %v1926, 0
      %v1969 = vsel %vm1934, %v1927, 0
      %v1972 = vsel %vm1934, %v1928, 0
      %v1975 = vsel %vm1934, %v1929, 0
      %v1978 = vsel %vm1934, %v1930, 0
      %v1981 = vsel %vm1934, %v1931, 0
      %v1984 = vsel %vm1934, %v1932, 0
      %v1987 = vsel %vm1934, %v1933, 0
      %1989 = vmatpush.msra.mxu0 0.0
      %1990 = vmatpush.msra.mxu0 0.0
      %1991 = vmatpush.msra.mxu0 0.0
      %1992 = vmatpush.msra.mxu0 0.0
      %1993 = vmatpush.msra.mxu0 0.0
      %1994 = vmatpush.msra.mxu0 0.0
      %1995 = vmatpush.msra.mxu0 0.0
      %1996 = vmatpush.msra.mxu0 0.0
      %1997 = vmatpush.msra.mxu0 %v1915
      %1998 = vmatpush.msra.mxu0 %v1914
      %1999 = vmatpush.msra.mxu0 %v1913
      %2000 = vmatpush.msra.mxu0 %v1912
      %2001 = vmatpush.msra.mxu0 %v1911
      %2002 = vmatpush.msra.mxu0 %v1910
      %2003 = vmatpush.msra.mxu0 %v1909
      %2004 = vmatpush.msra.mxu0 %v1908
      %2005 = vmatmul.f32.gmra.mxu0 %v1936
      %v2006 = vpop.f32.mrf.mxu0
      %v2007 = vadd.f32 0.0, %v2006
      %2008 = vmatmul.f32.gmra.mxu0 %v1939
      %v2009 = vpop.f32.mrf.mxu0
      %v2010 = vadd.f32 0.0, %v2009
      %2011 = vmatmul.f32.gmra.mxu0 %v1942
      %v2012 = vpop.f32.mrf.mxu0
      %v2013 = vadd.f32 0.0, %v2012
      %2014 = vmatmul.f32.gmra.mxu0 %v1945
      %v2015 = vpop.f32.mrf.mxu0
      %v2016 = vadd.f32 0.0, %v2015
      %2017 = vmatmul.f32.gmra.mxu0 %v1948
      %v2018 = vpop.f32.mrf.mxu0
      %v2019 = vadd.f32 0.0, %v2018
      %2020 = vmatmul.f32.gmra.mxu0 %v1951
      %v2021 = vpop.f32.mrf.mxu0
      %v2022 = vadd.f32 0.0, %v2021
      %2023 = vmatmul.f32.gmra.mxu0 %v1954
      %v2024 = vpop.f32.mrf.mxu0
      %v2025 = vadd.f32 0.0, %v2024
      %2026 = vmatmul.f32.gmra.mxu0 %v1957
      %v2027 = vpop.f32.mrf.mxu0
      %v2028 = vadd.f32 0.0, %v2027
      %2029 = vmatmul.f32.gmra.mxu0 %v1960
      %v2030 = vpop.f32.mrf.mxu0
      %v2031 = vadd.f32 0.0, %v2030
      %2032 = vmatmul.f32.gmra.mxu0 %v1963
      %v2033 = vpop.f32.mrf.mxu0
      %v2034 = vadd.f32 0.0, %v2033
      %2035 = vmatmul.f32.gmra.mxu0 %v1966
      %v2036 = vpop.f32.mrf.mxu0
      %v2037 = vadd.f32 0.0, %v2036
      %2038 = vmatmul.f32.gmra.mxu0 %v1969
      %v2039 = vpop.f32.mrf.mxu0
      %v2040 = vadd.f32 0.0, %v2039
      %2041 = vmatmul.f32.gmra.mxu0 %v1972
      %v2042 = vpop.f32.mrf.mxu0
      %v2043 = vadd.f32 0.0, %v2042
      %2044 = vmatmul.f32.gmra.mxu0 %v1975
      %v2045 = vpop.f32.mrf.mxu0
      %v2046 = vadd.f32 0.0, %v2045
      %2047 = vmatmul.f32.gmra.mxu0 %v1978
      %v2048 = vpop.f32.mrf.mxu0
      %v2049 = vadd.f32 0.0, %v2048
      %2050 = vmatmul.f32.gmra.mxu0 %v1981
      %v2051 = vpop.f32.mrf.mxu0
      %v2052 = vadd.f32 0.0, %v2051
      %2053 = vmatmul.f32.gmra.mxu0 %v1984
      %v2054 = vpop.f32.mrf.mxu0
      %v2055 = vadd.f32 0.0, %v2054
      %2056 = vmatmul.f32.gmra.mxu0 %v1987
      %v2057 = vpop.f32.mrf.mxu0
      %v2058 = vadd.f32 0.0, %v2057
      %2059 = vdwg.mxu0
      %v2060 = vld [vmem:[%s5] sm:$0xff]
      %v2061 = vld [vmem:[%s5 + $0x8] sm:$0xff]
      %v2062 = vld [vmem:[%s5 + $0x10] sm:$0xff]
      %v2063 = vld [vmem:[%s5 + $0x18] sm:$0xff]
      %v2064 = vld [vmem:[%s5 + $0x20] sm:$0xff]
      %v2065 = vld [vmem:[%s5 + $0x28] sm:$0xff]
      %v2066 = vld [vmem:[%s5 + $0x30] sm:$0xff]
      %v2067 = vld [vmem:[%s5 + $0x38] sm:$0xff]
      %v2068 = vld [vmem:[%s5 + $0x40] sm:$0xff]
      %v2069 = vld [vmem:[%s5 + $0x48] sm:$0xff]
      %v2070 = vld [vmem:[%s5 + $0x50] sm:$0xff]
      %v2071 = vld [vmem:[%s5 + $0x58] sm:$0xff]
      %v2072 = vld [vmem:[%s5 + $0x60] sm:$0xff]
      %v2073 = vld [vmem:[%s5 + $0x68] sm:$0xff]
      %v2074 = vld [vmem:[%s5 + $0x70] sm:$0xff]
      %v2075 = vld [vmem:[%s5 + $0x78] sm:$0xff]
      %v2076 = vld [vmem:[%s5 + $0x80] sm:$0xff]
      %v2077 = vld [vmem:[%s5 + $0x88] sm:$0xff]
      %v2078 = vld [vmem:[%s5 + $0x90] sm:$0xff]
      %v2079 = vld [vmem:[%s5 + $0x98] sm:$0xff]
      %v2080 = vld [vmem:[%s5 + $0xa0] sm:$0xff]
      %v2081 = vld [vmem:[%s5 + $0xa8] sm:$0xff]
      %v2082 = vld [vmem:[%s5 + $0xb0] sm:$0xff]
      %v2083 = vld [vmem:[%s5 + $0xb8] sm:$0xff]
      %v2084 = vld [vmem:[%s5 + $0xc0] sm:$0xff]
      %v2085 = vld [vmem:[%s5 + $0xc8] sm:$0xff]
      %v2086 = vld [vmem:[%s5 + $0xd0] sm:$0xff]
      %v2087 = vld [vmem:[%s5 + $0xd8] sm:$0xff]
      %v2088 = vld [vmem:[%s5 + $0xe0] sm:$0xff]
      %v2089 = vld [vmem:[%s5 + $0xe8] sm:$0xff]
      %v2090 = vld [vmem:[%s5 + $0xf0] sm:$0xff]
      %v2091 = vld [vmem:[%s5 + $0xf8] sm:$0xff]
      %v2092 = vld [vmem:[%s5 + $0x100] sm:$0xff]
      %v2093 = vld [vmem:[%s5 + $0x108] sm:$0xff]
      %v2094 = vld [vmem:[%s5 + $0x110] sm:$0xff]
      %v2095 = vld [vmem:[%s5 + $0x118] sm:$0xff]
      %v2096 = vld [vmem:[%s5 + $0x120] sm:$0xff]
      %v2097 = vld [vmem:[%s5 + $0x128] sm:$0xff]
      %v2098 = vld [vmem:[%s5 + $0x130] sm:$0xff]
      %v2099 = vld [vmem:[%s5 + $0x138] sm:$0xff]
      %v2100 = vld [vmem:[%s5 + $0x140] sm:$0xff]
      %v2101 = vld [vmem:[%s5 + $0x148] sm:$0xff]
      %v2102 = vld [vmem:[%s5 + $0x150] sm:$0xff]
      %v2103 = vld [vmem:[%s5 + $0x158] sm:$0xff]
      %v2104 = vld [vmem:[%s5 + $0x160] sm:$0xff]
      %v2105 = vld [vmem:[%s5 + $0x168] sm:$0xff]
      %v2106 = vld [vmem:[%s5 + $0x170] sm:$0xff]
      %v2107 = vld [vmem:[%s5 + $0x178] sm:$0xff]
      %v2108 = vld [vmem:[%s5 + $0x180] sm:$0xff]
      %v2109 = vld [vmem:[%s5 + $0x188] sm:$0xff]
      %v2110 = vld [vmem:[%s5 + $0x190] sm:$0xff]
      %v2111 = vld [vmem:[%s5 + $0x198] sm:$0xff]
      %v2112 = vld [vmem:[%s5 + $0x1a0] sm:$0xff]
      %v2113 = vld [vmem:[%s5 + $0x1a8] sm:$0xff]
      %v2114 = vld [vmem:[%s5 + $0x1b0] sm:$0xff]
      %v2115 = vld [vmem:[%s5 + $0x1b8] sm:$0xff]
      %v2116 = vld [vmem:[%s5 + $0x1c0] sm:$0xff]
      %v2117 = vld [vmem:[%s5 + $0x1c8] sm:$0xff]
      %v2118 = vld [vmem:[%s5 + $0x1d0] sm:$0xff]
      %v2119 = vld [vmem:[%s5 + $0x1d8] sm:$0xff]
      %v2120 = vld [vmem:[%s5 + $0x1e0] sm:$0xff]
      %v2121 = vld [vmem:[%s5 + $0x1e8] sm:$0xff]
      %v2122 = vld [vmem:[%s5 + $0x1f0] sm:$0xff]
      %v2123 = vld [vmem:[%s5 + $0x1f8] sm:$0xff]
      %v2124 = vld [vmem:[%s5 + $0x200] sm:$0xff]
      %v2125 = vld [vmem:[%s5 + $0x208] sm:$0xff]
      %v2126 = vld [vmem:[%s5 + $0x210] sm:$0xff]
      %v2127 = vld [vmem:[%s5 + $0x218] sm:$0xff]
      %v2128 = vld [vmem:[%s5 + $0x220] sm:$0xff]
      %v2129 = vld [vmem:[%s5 + $0x228] sm:$0xff]
      %v2130 = vld [vmem:[%s5 + $0x230] sm:$0xff]
      %v2131 = vld [vmem:[%s5 + $0x238] sm:$0xff]
      %v2132 = vld [vmem:[%s5 + $0x240] sm:$0xff]
      %v2133 = vld [vmem:[%s5 + $0x248] sm:$0xff]
      %v2134 = vld [vmem:[%s5 + $0x250] sm:$0xff]
      %v2135 = vld [vmem:[%s5 + $0x258] sm:$0xff]
      %v2136 = vld [vmem:[%s5 + $0x260] sm:$0xff]
      %v2137 = vld [vmem:[%s5 + $0x268] sm:$0xff]
      %v2138 = vld [vmem:[%s5 + $0x270] sm:$0xff]
      %v2139 = vld [vmem:[%s5 + $0x278] sm:$0xff]
      %v2140 = vld [vmem:[%s5 + $0x280] sm:$0xff]
      %v2141 = vld [vmem:[%s5 + $0x288] sm:$0xff]
      %v2142 = vld [vmem:[%s5 + $0x290] sm:$0xff]
      %v2143 = vld [vmem:[%s5 + $0x298] sm:$0xff]
      %v2144 = vld [vmem:[%s5 + $0x2a0] sm:$0xff]
      %v2145 = vld [vmem:[%s5 + $0x2a8] sm:$0xff]
      %v2146 = vld [vmem:[%s5 + $0x2b0] sm:$0xff]
      %v2147 = vld [vmem:[%s5 + $0x2b8] sm:$0xff]
      %v2148 = vld [vmem:[%s5 + $0x2c0] sm:$0xff]
      %v2149 = vld [vmem:[%s5 + $0x2c8] sm:$0xff]
      %v2150 = vld [vmem:[%s5 + $0x2d0] sm:$0xff]
      %v2151 = vld [vmem:[%s5 + $0x2d8] sm:$0xff]
      %v2152 = vld [vmem:[%s5 + $0x2e0] sm:$0xff]
      %v2153 = vld [vmem:[%s5 + $0x2e8] sm:$0xff]
      %v2154 = vld [vmem:[%s5 + $0x2f0] sm:$0xff]
      %v2155 = vld [vmem:[%s5 + $0x2f8] sm:$0xff]
      %v2156 = vld [vmem:[%s5 + $0x300] sm:$0xff]
      %v2157 = vld [vmem:[%s5 + $0x308] sm:$0xff]
      %v2158 = vld [vmem:[%s5 + $0x310] sm:$0xff]
      %v2159 = vld [vmem:[%s5 + $0x318] sm:$0xff]
      %v2160 = vld [vmem:[%s5 + $0x320] sm:$0xff]
      %v2161 = vld [vmem:[%s5 + $0x328] sm:$0xff]
      %v2162 = vld [vmem:[%s5 + $0x330] sm:$0xff]
      %v2163 = vld [vmem:[%s5 + $0x338] sm:$0xff]
      %v2164 = vld [vmem:[%s5 + $0x340] sm:$0xff]
      %v2165 = vld [vmem:[%s5 + $0x348] sm:$0xff]
      %v2166 = vld [vmem:[%s5 + $0x350] sm:$0xff]
      %v2167 = vld [vmem:[%s5 + $0x358] sm:$0xff]
      %v2168 = vld [vmem:[%s5 + $0x360] sm:$0xff]
      %v2169 = vld [vmem:[%s5 + $0x368] sm:$0xff]
      %v2170 = vld [vmem:[%s5 + $0x370] sm:$0xff]
      %v2171 = vld [vmem:[%s5 + $0x378] sm:$0xff]
      %v2172 = vld [vmem:[%s5 + $0x380] sm:$0xff]
      %v2173 = vld [vmem:[%s5 + $0x388] sm:$0xff]
      %v2174 = vld [vmem:[%s5 + $0x390] sm:$0xff]
      %v2175 = vld [vmem:[%s5 + $0x398] sm:$0xff]
      %v2176 = vld [vmem:[%s5 + $0x3a0] sm:$0xff]
      %v2177 = vld [vmem:[%s5 + $0x3a8] sm:$0xff]
      %v2178 = vld [vmem:[%s5 + $0x3b0] sm:$0xff]
      %v2179 = vld [vmem:[%s5 + $0x3b8] sm:$0xff]
      %v2180 = vld [vmem:[%s5 + $0x3c0] sm:$0xff]
      %v2181 = vld [vmem:[%s5 + $0x3c8] sm:$0xff]
      %v2182 = vld [vmem:[%s5 + $0x3d0] sm:$0xff]
      %v2183 = vld [vmem:[%s5 + $0x3d8] sm:$0xff]
      %v2184 = vld [vmem:[%s5 + $0x3e0] sm:$0xff]
      %v2185 = vld [vmem:[%s5 + $0x3e8] sm:$0xff]
      %v2186 = vld [vmem:[%s5 + $0x3f0] sm:$0xff]
      %v2187 = vld [vmem:[%s5 + $0x3f8] sm:$0xff]
      %v2188 = vld [vmem:[%s5 + $0x400] sm:$0xff]
      %v2189 = vld [vmem:[%s5 + $0x408] sm:$0xff]
      %v2190 = vld [vmem:[%s5 + $0x410] sm:$0xff]
      %v2191 = vld [vmem:[%s5 + $0x418] sm:$0xff]
      %v2192 = vld [vmem:[%s5 + $0x420] sm:$0xff]
      %v2193 = vld [vmem:[%s5 + $0x428] sm:$0xff]
      %v2194 = vld [vmem:[%s5 + $0x430] sm:$0xff]
      %v2195 = vld [vmem:[%s5 + $0x438] sm:$0xff]
      %v2196 = vld [vmem:[%s5 + $0x440] sm:$0xff]
      %v2197 = vld [vmem:[%s5 + $0x448] sm:$0xff]
      %v2198 = vld [vmem:[%s5 + $0x450] sm:$0xff]
      %v2199 = vld [vmem:[%s5 + $0x458] sm:$0xff]
      %v2200 = vld [vmem:[%s5 + $0x460] sm:$0xff]
      %v2201 = vld [vmem:[%s5 + $0x468] sm:$0xff]
      %v2202 = vld [vmem:[%s5 + $0x470] sm:$0xff]
      %v2203 = vld [vmem:[%s5 + $0x478] sm:$0xff]
      %2204 = vmatpush.msra.mxu0 %v2091
      %2205 = vmatpush.msra.mxu0 %v2090
      %2206 = vmatpush.msra.mxu0 %v2089
      %2207 = vmatpush.msra.mxu0 %v2088
      %2208 = vmatpush.msra.mxu0 %v2087
      %2209 = vmatpush.msra.mxu0 %v2086
      %2210 = vmatpush.msra.mxu0 %v2085
      %2211 = vmatpush.msra.mxu0 %v2084
      %2212 = vmatpush.msra.mxu0 %v2083
      %2213 = vmatpush.msra.mxu0 %v2082
      %2214 = vmatpush.msra.mxu0 %v2081
      %2215 = vmatpush.msra.mxu0 %v2080
      %2216 = vmatpush.msra.mxu0 %v2079
      %2217 = vmatpush.msra.mxu0 %v2078
      %2218 = vmatpush.msra.mxu0 %v2077
      %2219 = vmatpush.msra.mxu0 %v2076
      %2220 = vmatmul.f32.gmra.mxu0 %v2013
      %v2221 = vpop.f32.mrf.mxu0
      %v2222 = vadd.f32 0.0, %v2221
      %2223 = vmatmul.f32.gmra.mxu0 %v2016
      %v2224 = vpop.f32.mrf.mxu0
      %v2225 = vadd.f32 0.0, %v2224
      %2226 = vdwg.mxu0
      %2227 = vmatpush.msra.mxu0 %v2075
      %2228 = vmatpush.msra.mxu0 %v2074
      %2229 = vmatpush.msra.mxu0 %v2073
      %2230 = vmatpush.msra.mxu0 %v2072
      %2231 = vmatpush.msra.mxu0 %v2071
      %2232 = vmatpush.msra.mxu0 %v2070
      %2233 = vmatpush.msra.mxu0 %v2069
      %2234 = vmatpush.msra.mxu0 %v2068
      %2235 = vmatpush.msra.mxu0 %v2067
      %2236 = vmatpush.msra.mxu0 %v2066
      %2237 = vmatpush.msra.mxu0 %v2065
      %2238 = vmatpush.msra.mxu0 %v2064
      %2239 = vmatpush.msra.mxu0 %v2063
      %2240 = vmatpush.msra.mxu0 %v2062
      %2241 = vmatpush.msra.mxu0 %v2061
      %2242 = vmatpush.msra.mxu0 %v2060
      %2243 = vmatmul.f32.gmra.mxu0 %v2007
      %v2244 = vpop.f32.mrf.mxu0
      %v2245 = vadd.f32 %v2222, %v2244
      %2246 = vmatmul.f32.gmra.mxu0 %v2010
      %v2247 = vpop.f32.mrf.mxu0
      %v2248 = vadd.f32 %v2225, %v2247
      %2249 = vdwg.mxu0
      %2250 = vmatpush.msra.mxu0 %v2107
      %2251 = vmatpush.msra.mxu0 %v2106
      %2252 = vmatpush.msra.mxu0 %v2105
      %2253 = vmatpush.msra.mxu0 %v2104
      %2254 = vmatpush.msra.mxu0 %v2103
      %2255 = vmatpush.msra.mxu0 %v2102
      %2256 = vmatpush.msra.mxu0 %v2101
      %2257 = vmatpush.msra.mxu0 %v2100
      %2258 = vmatpush.msra.mxu0 %v2099
      %2259 = vmatpush.msra.mxu0 %v2098
      %2260 = vmatpush.msra.mxu0 %v2097
      %2261 = vmatpush.msra.mxu0 %v2096
      %2262 = vmatpush.msra.mxu0 %v2095
      %2263 = vmatpush.msra.mxu0 %v2094
      %2264 = vmatpush.msra.mxu0 %v2093
      %2265 = vmatpush.msra.mxu0 %v2092
      %2266 = vmatmul.f32.gmra.mxu0 %v2019
      %v2267 = vpop.f32.mrf.mxu0
      %v2268 = vadd.f32 0.0, %v2267
      %2269 = vmatmul.f32.gmra.mxu0 %v2022
      %v2270 = vpop.f32.mrf.mxu0
      %v2271 = vadd.f32 0.0, %v2270
      %2272 = vdwg.mxu0
      %v2273 = vadd.f32 %v2245, %v2268
      %v2274 = vadd.f32 %v2248, %v2271
      %2275 = vmatpush.msra.mxu0 %v2123
      %2276 = vmatpush.msra.mxu0 %v2122
      %2277 = vmatpush.msra.mxu0 %v2121
      %2278 = vmatpush.msra.mxu0 %v2120
      %2279 = vmatpush.msra.mxu0 %v2119
      %2280 = vmatpush.msra.mxu0 %v2118
      %2281 = vmatpush.msra.mxu0 %v2117
      %2282 = vmatpush.msra.mxu0 %v2116
      %2283 = vmatpush.msra.mxu0 %v2115
      %2284 = vmatpush.msra.mxu0 %v2114
      %2285 = vmatpush.msra.mxu0 %v2113
      %2286 = vmatpush.msra.mxu0 %v2112
      %2287 = vmatpush.msra.mxu0 %v2111
      %2288 = vmatpush.msra.mxu0 %v2110
      %2289 = vmatpush.msra.mxu0 %v2109
      %2290 = vmatpush.msra.mxu0 %v2108
      %2291 = vmatmul.f32.gmra.mxu0 %v2025
      %v2292 = vpop.f32.mrf.mxu0
      %v2293 = vadd.f32 0.0, %v2292
      %2294 = vmatmul.f32.gmra.mxu0 %v2028
      %v2295 = vpop.f32.mrf.mxu0
      %v2296 = vadd.f32 0.0, %v2295
      %2297 = vdwg.mxu0
      %v2298 = vadd.f32 %v2273, %v2293
      %v2299 = vadd.f32 %v2274, %v2296
      %2300 = vmatpush.msra.mxu0 %v2139
      %2301 = vmatpush.msra.mxu0 %v2138
      %2302 = vmatpush.msra.mxu0 %v2137
      %2303 = vmatpush.msra.mxu0 %v2136
      %2304 = vmatpush.msra.mxu0 %v2135
      %2305 = vmatpush.msra.mxu0 %v2134
      %2306 = vmatpush.msra.mxu0 %v2133
      %2307 = vmatpush.msra.mxu0 %v2132
      %2308 = vmatpush.msra.mxu0 %v2131
      %2309 = vmatpush.msra.mxu0 %v2130
      %2310 = vmatpush.msra.mxu0 %v2129
      %2311 = vmatpush.msra.mxu0 %v2128
      %2312 = vmatpush.msra.mxu0 %v2127
      %2313 = vmatpush.msra.mxu0 %v2126
      %2314 = vmatpush.msra.mxu0 %v2125
      %2315 = vmatpush.msra.mxu0 %v2124
      %2316 = vmatmul.f32.gmra.mxu0 %v2031
      %v2317 = vpop.f32.mrf.mxu0
      %v2318 = vadd.f32 0.0, %v2317
      %2319 = vmatmul.f32.gmra.mxu0 %v2034
      %v2320 = vpop.f32.mrf.mxu0
      %v2321 = vadd.f32 0.0, %v2320
      %2322 = vdwg.mxu0
      %v2323 = vadd.f32 %v2298, %v2318
      %v2324 = vadd.f32 %v2299, %v2321
      %2325 = vmatpush.msra.mxu0 %v2155
      %2326 = vmatpush.msra.mxu0 %v2154
      %2327 = vmatpush.msra.mxu0 %v2153
      %2328 = vmatpush.msra.mxu0 %v2152
      %2329 = vmatpush.msra.mxu0 %v2151
      %2330 = vmatpush.msra.mxu0 %v2150
      %2331 = vmatpush.msra.mxu0 %v2149
      %2332 = vmatpush.msra.mxu0 %v2148
      %2333 = vmatpush.msra.mxu0 %v2147
      %2334 = vmatpush.msra.mxu0 %v2146
      %2335 = vmatpush.msra.mxu0 %v2145
      %2336 = vmatpush.msra.mxu0 %v2144
      %2337 = vmatpush.msra.mxu0 %v2143
      %2338 = vmatpush.msra.mxu0 %v2142
      %2339 = vmatpush.msra.mxu0 %v2141
      %2340 = vmatpush.msra.mxu0 %v2140
      %2341 = vmatmul.f32.gmra.mxu0 %v2037
      %v2342 = vpop.f32.mrf.mxu0
      %v2343 = vadd.f32 0.0, %v2342
      %2344 = vmatmul.f32.gmra.mxu0 %v2040
      %v2345 = vpop.f32.mrf.mxu0
      %v2346 = vadd.f32 0.0, %v2345
      %2347 = vdwg.mxu0
      %v2348 = vadd.f32 %v2323, %v2343
      %v2349 = vadd.f32 %v2324, %v2346
      %2350 = vmatpush.msra.mxu0 %v2171
      %2351 = vmatpush.msra.mxu0 %v2170
      %2352 = vmatpush.msra.mxu0 %v2169
      %2353 = vmatpush.msra.mxu0 %v2168
      %2354 = vmatpush.msra.mxu0 %v2167
      %2355 = vmatpush.msra.mxu0 %v2166
      %2356 = vmatpush.msra.mxu0 %v2165
      %2357 = vmatpush.msra.mxu0 %v2164
      %2358 = vmatpush.msra.mxu0 %v2163
      %2359 = vmatpush.msra.mxu0 %v2162
      %2360 = vmatpush.msra.mxu0 %v2161
      %2361 = vmatpush.msra.mxu0 %v2160
      %2362 = vmatpush.msra.mxu0 %v2159
      %2363 = vmatpush.msra.mxu0 %v2158
      %2364 = vmatpush.msra.mxu0 %v2157
      %2365 = vmatpush.msra.mxu0 %v2156
      %2366 = vmatmul.f32.gmra.mxu0 %v2043
      %v2367 = vpop.f32.mrf.mxu0
      %v2368 = vadd.f32 0.0, %v2367
      %2369 = vmatmul.f32.gmra.mxu0 %v2046
      %v2370 = vpop.f32.mrf.mxu0
      %v2371 = vadd.f32 0.0, %v2370
      %2372 = vdwg.mxu0
      %v2373 = vadd.f32 %v2348, %v2368
      %v2374 = vadd.f32 %v2349, %v2371
      %2375 = vmatpush.msra.mxu0 %v2187
      %2376 = vmatpush.msra.mxu0 %v2186
      %2377 = vmatpush.msra.mxu0 %v2185
      %2378 = vmatpush.msra.mxu0 %v2184
      %2379 = vmatpush.msra.mxu0 %v2183
      %2380 = vmatpush.msra.mxu0 %v2182
      %2381 = vmatpush.msra.mxu0 %v2181
      %2382 = vmatpush.msra.mxu0 %v2180
      %2383 = vmatpush.msra.mxu0 %v2179
      %2384 = vmatpush.msra.mxu0 %v2178
      %2385 = vmatpush.msra.mxu0 %v2177
      %2386 = vmatpush.msra.mxu0 %v2176
      %2387 = vmatpush.msra.mxu0 %v2175
      %2388 = vmatpush.msra.mxu0 %v2174
      %2389 = vmatpush.msra.mxu0 %v2173
      %2390 = vmatpush.msra.mxu0 %v2172
      %2391 = vmatmul.f32.gmra.mxu0 %v2049
      %v2392 = vpop.f32.mrf.mxu0
      %v2393 = vadd.f32 0.0, %v2392
      %2394 = vmatmul.f32.gmra.mxu0 %v2052
      %v2395 = vpop.f32.mrf.mxu0
      %v2396 = vadd.f32 0.0, %v2395
      %2397 = vdwg.mxu0
      %v2398 = vadd.f32 %v2373, %v2393
      %v2399 = vadd.f32 %v2374, %v2396
      %2400 = vmatpush.msra.mxu0 %v2203
      %2401 = vmatpush.msra.mxu0 %v2202
      %2402 = vmatpush.msra.mxu0 %v2201
      %2403 = vmatpush.msra.mxu0 %v2200
      %2404 = vmatpush.msra.mxu0 %v2199
      %2405 = vmatpush.msra.mxu0 %v2198
      %2406 = vmatpush.msra.mxu0 %v2197
      %2407 = vmatpush.msra.mxu0 %v2196
      %2408 = vmatpush.msra.mxu0 %v2195
      %2409 = vmatpush.msra.mxu0 %v2194
      %2410 = vmatpush.msra.mxu0 %v2193
      %2411 = vmatpush.msra.mxu0 %v2192
      %2412 = vmatpush.msra.mxu0 %v2191
      %2413 = vmatpush.msra.mxu0 %v2190
      %2414 = vmatpush.msra.mxu0 %v2189
      %2415 = vmatpush.msra.mxu0 %v2188
      %2416 = vmatmul.f32.gmra.mxu0 %v2055
      %v2417 = vpop.f32.mrf.mxu0
      %v2418 = vadd.f32 0.0, %v2417
      %2419 = vmatmul.f32.gmra.mxu0 %v2058
      %v2420 = vpop.f32.mrf.mxu0
      %v2421 = vadd.f32 0.0, %v2420
      %2422 = vdwg.mxu0
      %v2423 = vadd.f32 %v2398, %v2418
      %v2424 = vadd.f32 %v2399, %v2421
      %v2425 = vld [vmem:[%s6] sm:$0x1]
      %v2427 = vperm.slane %v2425, 0
      %v2429 = vadd.f32 %v2423, %v2427
      %v2430 = vadd.f32 %v2424, %v2427
      %v2431 = vmax.f32 %v2429, 0.0
      %v2432 = vmax.f32 %v2430, 0.0
      %v2433 = vld [vmem:[%s7] sm:$0xff]
      %v2434 = vld [vmem:[%s7 + $0x8] sm:$0xff]
      %v2435 = vld [vmem:[%s7 + $0x10] sm:$0xff]
      %v2436 = vld [vmem:[%s7 + $0x18] sm:$0xff]
      %v2437 = vld [vmem:[%s7 + $0x20] sm:$0xf]
      %vm2438 = vcmask 130048
      %v2440 = vsel %vm2438, %v2433, 0
      %v2443 = vsel %vm2438, %v2434, 0
      %v2446 = vsel %vm2438, %v2435, 0
      %v2449 = vsel %vm2438, %v2436, 0
      %v2452 = vsel %vm2438, %v2437, 0
      %2454 = vmatpush.msra.mxu0 0.0
      %2455 = vmatpush.msra.mxu0 0.0
      %2456 = vmatpush.msra.mxu0 0.0
      %2457 = vmatpush.msra.mxu0 0.0
      %2458 = vmatpush.msra.mxu0 0.0
      %2459 = vmatpush.msra.mxu0 0.0
      %2460 = vmatpush.msra.mxu0 0.0
      %2461 = vmatpush.msra.mxu0 0.0
      %2462 = vmatpush.msra.mxu0 0.0
      %2463 = vmatpush.msra.mxu0 0.0
      %2464 = vmatpush.msra.mxu0 0.0
      %2465 = vmatpush.msra.mxu0 0.0
      %2466 = vmatpush.msra.mxu0 0.0
      %2467 = vmatpush.msra.mxu0 0.0
      %2468 = vmatpush.msra.mxu0 %v2432
      %2469 = vmatpush.msra.mxu0 %v2431
      %2470 = vmatmul.f32.gmra.mxu0 %v2440
      %v2471 = vpop.f32.mrf.mxu0
      %v2472 = vadd.f32 0.0, %v2471
      %2473 = vmatmul.f32.gmra.mxu0 %v2443
      %v2474 = vpop.f32.mrf.mxu0
      %v2475 = vadd.f32 0.0, %v2474
      %2476 = vmatmul.f32.gmra.mxu0 %v2446
      %v2477 = vpop.f32.mrf.mxu0
      %v2478 = vadd.f32 0.0, %v2477
      %2479 = vmatmul.f32.gmra.mxu0 %v2449
      %v2480 = vpop.f32.mrf.mxu0
      %v2481 = vadd.f32 0.0, %v2480
      %2482 = vmatmul.f32.gmra.mxu0 %v2452
      %v2483 = vpop.f32.mrf.mxu0
      %v2484 = vadd.f32 0.0, %v2483
      %2485 = vdwg.mxu0
      %v2486 = vld [vmem:[%s8] sm:$0xff]
      %v2487 = vld [vmem:[%s8 + $0x8] sm:$0xff]
      %v2488 = vld [vmem:[%s8 + $0x10] sm:$0xff]
      %v2489 = vld [vmem:[%s8 + $0x18] sm:$0xff]
      %v2490 = vld [vmem:[%s8 + $0x20] sm:$0xff]
      %v2491 = vld [vmem:[%s8 + $0x28] sm:$0xff]
      %v2492 = vld [vmem:[%s8 + $0x30] sm:$0xff]
      %v2493 = vld [vmem:[%s8 + $0x38] sm:$0xff]
      %v2494 = vld [vmem:[%s8 + $0x40] sm:$0xff]
      %v2495 = vld [vmem:[%s8 + $0x48] sm:$0xff]
      %v2496 = vld [vmem:[%s8 + $0x50] sm:$0xff]
      %v2497 = vld [vmem:[%s8 + $0x58] sm:$0xff]
      %v2498 = vld [vmem:[%s8 + $0x60] sm:$0xff]
      %v2499 = vld [vmem:[%s8 + $0x68] sm:$0xff]
      %v2500 = vld [vmem:[%s8 + $0x70] sm:$0xff]
      %v2501 = vld [vmem:[%s8 + $0x78] sm:$0xff]
      %v2502 = vld [vmem:[%s8 + $0x80] sm:$0xff]
      %v2503 = vld [vmem:[%s8 + $0x88] sm:$0xff]
      %v2504 = vld [vmem:[%s8 + $0x90] sm:$0xff]
      %v2505 = vld [vmem:[%s8 + $0x98] sm:$0xff]
      %v2506 = vld [vmem:[%s8 + $0xa0] sm:$0xff]
      %v2507 = vld [vmem:[%s8 + $0xa8] sm:$0xff]
      %v2508 = vld [vmem:[%s8 + $0xb0] sm:$0xff]
      %v2509 = vld [vmem:[%s8 + $0xb8] sm:$0xff]
      %v2510 = vld [vmem:[%s8 + $0xc0] sm:$0xff]
      %v2511 = vld [vmem:[%s8 + $0xc8] sm:$0xff]
      %v2512 = vld [vmem:[%s8 + $0xd0] sm:$0xff]
      %v2513 = vld [vmem:[%s8 + $0xd8] sm:$0xff]
      %v2514 = vld [vmem:[%s8 + $0xe0] sm:$0xff]
      %v2515 = vld [vmem:[%s8 + $0xe8] sm:$0xff]
      %v2516 = vld [vmem:[%s8 + $0xf0] sm:$0xff]
      %v2517 = vld [vmem:[%s8 + $0xf8] sm:$0xff]
      %v2518 = vld [vmem:[%s8 + $0x100] sm:$0xff]
      %v2519 = vld [vmem:[%s8 + $0x108] sm:$0xff]
      %v2520 = vld [vmem:[%s8 + $0x110] sm:$0xff]
      %v2521 = vld [vmem:[%s8 + $0x118] sm:$0xff]
      %v2522 = vld [vmem:[%s8 + $0x120] sm:$0xff]
      %v2523 = vld [vmem:[%s8 + $0x128] sm:$0xff]
      %v2524 = vld [vmem:[%s8 + $0x130] sm:$0xff]
      %v2525 = vld [vmem:[%s8 + $0x138] sm:$0xff]
      %v2526 = vld [vmem:[%s8 + $0x140] sm:$0xff]
      %v2527 = vld [vmem:[%s8 + $0x148] sm:$0xff]
      %v2528 = vld [vmem:[%s8 + $0x150] sm:$0xff]
      %v2529 = vld [vmem:[%s8 + $0x158] sm:$0xff]
      %v2530 = vld [vmem:[%s8 + $0x160] sm:$0xff]
      %v2531 = vld [vmem:[%s8 + $0x168] sm:$0xff]
      %v2532 = vld [vmem:[%s8 + $0x170] sm:$0xff]
      %v2533 = vld [vmem:[%s8 + $0x178] sm:$0xff]
      %v2534 = vld [vmem:[%s8 + $0x180] sm:$0xff]
      %v2535 = vld [vmem:[%s8 + $0x188] sm:$0xff]
      %v2536 = vld [vmem:[%s8 + $0x190] sm:$0xff]
      %v2537 = vld [vmem:[%s8 + $0x198] sm:$0xff]
      %v2538 = vld [vmem:[%s8 + $0x1a0] sm:$0xff]
      %v2539 = vld [vmem:[%s8 + $0x1a8] sm:$0xff]
      %v2540 = vld [vmem:[%s8 + $0x1b0] sm:$0xff]
      %v2541 = vld [vmem:[%s8 + $0x1b8] sm:$0xff]
      %v2542 = vld [vmem:[%s8 + $0x1c0] sm:$0xff]
      %v2543 = vld [vmem:[%s8 + $0x1c8] sm:$0xff]
      %v2544 = vld [vmem:[%s8 + $0x1d0] sm:$0xff]
      %v2545 = vld [vmem:[%s8 + $0x1d8] sm:$0xff]
      %v2546 = vld [vmem:[%s8 + $0x1e0] sm:$0xff]
      %v2547 = vld [vmem:[%s8 + $0x1e8] sm:$0xff]
      %v2548 = vld [vmem:[%s8 + $0x1f0] sm:$0xff]
      %v2549 = vld [vmem:[%s8 + $0x1f8] sm:$0xff]
      %v2550 = vld [vmem:[%s8 + $0x200] sm:$0xff]
      %v2551 = vld [vmem:[%s8 + $0x208] sm:$0xff]
      %v2552 = vld [vmem:[%s8 + $0x210] sm:$0xff]
      %v2553 = vld [vmem:[%s8 + $0x218] sm:$0xff]
      %v2554 = vld [vmem:[%s8 + $0x220] sm:$0xff]
      %v2555 = vld [vmem:[%s8 + $0x228] sm:$0xff]
      %v2556 = vld [vmem:[%s8 + $0x230] sm:$0xff]
      %v2557 = vld [vmem:[%s8 + $0x238] sm:$0xff]
      %v2558 = vld [vmem:[%s8 + $0x240] sm:$0xff]
      %v2559 = vld [vmem:[%s8 + $0x248] sm:$0xff]
      %v2560 = vld [vmem:[%s8 + $0x250] sm:$0xff]
      %v2561 = vld [vmem:[%s8 + $0x258] sm:$0xff]
      %v2562 = vld [vmem:[%s8 + $0x260] sm:$0xff]
      %v2563 = vld [vmem:[%s8 + $0x268] sm:$0xff]
      %v2564 = vld [vmem:[%s8 + $0x270] sm:$0xff]
      %v2565 = vld [vmem:[%s8 + $0x278] sm:$0xff]
      %v2566 = vld [vmem:[%s8 + $0x280] sm:$0xff]
      %v2567 = vld [vmem:[%s8 + $0x288] sm:$0xff]
      %v2568 = vld [vmem:[%s8 + $0x290] sm:$0xff]
      %v2569 = vld [vmem:[%s8 + $0x298] sm:$0xff]
      %v2570 = vld [vmem:[%s8 + $0x2a0] sm:$0xff]
      %v2571 = vld [vmem:[%s8 + $0x2a8] sm:$0xff]
      %v2572 = vld [vmem:[%s8 + $0x2b0] sm:$0xff]
      %v2573 = vld [vmem:[%s8 + $0x2b8] sm:$0xff]
      %v2574 = vld [vmem:[%s8 + $0x2c0] sm:$0xff]
      %v2575 = vld [vmem:[%s8 + $0x2c8] sm:$0xff]
      %v2576 = vld [vmem:[%s8 + $0x2d0] sm:$0xff]
      %v2577 = vld [vmem:[%s8 + $0x2d8] sm:$0xff]
      %v2578 = vld [vmem:[%s8 + $0x2e0] sm:$0xff]
      %v2579 = vld [vmem:[%s8 + $0x2e8] sm:$0xff]
      %v2580 = vld [vmem:[%s8 + $0x2f0] sm:$0xff]
      %v2581 = vld [vmem:[%s8 + $0x2f8] sm:$0xff]
      %v2582 = vld [vmem:[%s8 + $0x300] sm:$0xff]
      %v2583 = vld [vmem:[%s8 + $0x308] sm:$0xff]
      %v2584 = vld [vmem:[%s8 + $0x310] sm:$0xff]
      %v2585 = vld [vmem:[%s8 + $0x318] sm:$0xff]
      %v2586 = vld [vmem:[%s8 + $0x320] sm:$0xff]
      %v2587 = vld [vmem:[%s8 + $0x328] sm:$0xff]
      %v2588 = vld [vmem:[%s8 + $0x330] sm:$0xff]
      %v2589 = vld [vmem:[%s8 + $0x338] sm:$0xff]
      %v2590 = vld [vmem:[%s8 + $0x340] sm:$0xff]
      %v2591 = vld [vmem:[%s8 + $0x348] sm:$0xff]
      %v2592 = vld [vmem:[%s8 + $0x350] sm:$0xff]
      %v2593 = vld [vmem:[%s8 + $0x358] sm:$0xff]
      %v2594 = vld [vmem:[%s8 + $0x360] sm:$0xff]
      %v2595 = vld [vmem:[%s8 + $0x368] sm:$0xff]
      %v2596 = vld [vmem:[%s8 + $0x370] sm:$0xff]
      %v2597 = vld [vmem:[%s8 + $0x378] sm:$0xff]
      %v2598 = vld [vmem:[%s8 + $0x380] sm:$0xff]
      %v2599 = vld [vmem:[%s8 + $0x388] sm:$0xff]
      %v2600 = vld [vmem:[%s8 + $0x390] sm:$0xff]
      %v2601 = vld [vmem:[%s8 + $0x398] sm:$0xff]
      %v2602 = vld [vmem:[%s8 + $0x3a0] sm:$0xff]
      %v2603 = vld [vmem:[%s8 + $0x3a8] sm:$0xff]
      %v2604 = vld [vmem:[%s8 + $0x3b0] sm:$0xff]
      %v2605 = vld [vmem:[%s8 + $0x3b8] sm:$0xff]
      %v2606 = vld [vmem:[%s8 + $0x3c0] sm:$0xff]
      %v2607 = vld [vmem:[%s8 + $0x3c8] sm:$0xff]
      %v2608 = vld [vmem:[%s8 + $0x3d0] sm:$0xff]
      %v2609 = vld [vmem:[%s8 + $0x3d8] sm:$0xff]
      %v2610 = vld [vmem:[%s8 + $0x3e0] sm:$0xff]
      %v2611 = vld [vmem:[%s8 + $0x3e8] sm:$0xff]
      %v2612 = vld [vmem:[%s8 + $0x3f0] sm:$0xff]
      %v2613 = vld [vmem:[%s8 + $0x3f8] sm:$0xff]
      %v2614 = vld [vmem:[%s8 + $0x400] sm:$0xff]
      %v2615 = vld [vmem:[%s8 + $0x408] sm:$0xff]
      %v2616 = vld [vmem:[%s8 + $0x410] sm:$0xff]
      %v2617 = vld [vmem:[%s8 + $0x418] sm:$0xff]
      %v2618 = vld [vmem:[%s8 + $0x420] sm:$0xff]
      %v2619 = vld [vmem:[%s8 + $0x428] sm:$0xff]
      %v2620 = vld [vmem:[%s8 + $0x430] sm:$0xff]
      %v2621 = vld [vmem:[%s8 + $0x438] sm:$0xff]
      %v2622 = vld [vmem:[%s8 + $0x440] sm:$0xff]
      %v2623 = vld [vmem:[%s8 + $0x448] sm:$0xff]
      %v2624 = vld [vmem:[%s8 + $0x450] sm:$0xff]
      %v2625 = vld [vmem:[%s8 + $0x458] sm:$0xff]
      %v2626 = vld [vmem:[%s8 + $0x460] sm:$0xff]
      %v2627 = vld [vmem:[%s8 + $0x468] sm:$0xff]
      %v2628 = vld [vmem:[%s8 + $0x470] sm:$0xff]
      %v2629 = vld [vmem:[%s8 + $0x478] sm:$0xff]
      %v2631 = vrot.slane %v2472, 4
      %2633 = vmatpush.msra.mxu0 %v2517
      %2634 = vmatpush.msra.mxu0 %v2516
      %2635 = vmatpush.msra.mxu0 %v2515
      %2636 = vmatpush.msra.mxu0 %v2514
      %2637 = vmatpush.msra.mxu0 %v2513
      %2638 = vmatpush.msra.mxu0 %v2512
      %2639 = vmatpush.msra.mxu0 %v2511
      %2640 = vmatpush.msra.mxu0 %v2510
      %2641 = vmatpush.msra.mxu0 %v2509
      %2642 = vmatpush.msra.mxu0 %v2508
      %2643 = vmatpush.msra.mxu0 %v2507
      %2644 = vmatpush.msra.mxu0 %v2506
      %2645 = vmatpush.msra.mxu0 %v2505
      %2646 = vmatpush.msra.mxu0 %v2504
      %2647 = vmatpush.msra.mxu0 %v2503
      %2648 = vmatpush.msra.mxu0 %v2502
      %2649 = vmatmul.f32.gmra.mxu0 %v2631
      %v2650 = vpop.f32.mrf.mxu0
      %v2651 = vadd.f32 0.0, %v2650
      %2652 = vdwg.mxu0
      %2653 = vmatpush.msra.mxu0 %v2501
      %2654 = vmatpush.msra.mxu0 %v2500
      %2655 = vmatpush.msra.mxu0 %v2499
      %2656 = vmatpush.msra.mxu0 %v2498
      %2657 = vmatpush.msra.mxu0 %v2497
      %2658 = vmatpush.msra.mxu0 %v2496
      %2659 = vmatpush.msra.mxu0 %v2495
      %2660 = vmatpush.msra.mxu0 %v2494
      %2661 = vmatpush.msra.mxu0 %v2493
      %2662 = vmatpush.msra.mxu0 %v2492
      %2663 = vmatpush.msra.mxu0 %v2491
      %2664 = vmatpush.msra.mxu0 %v2490
      %2665 = vmatpush.msra.mxu0 %v2489
      %2666 = vmatpush.msra.mxu0 %v2488
      %2667 = vmatpush.msra.mxu0 %v2487
      %2668 = vmatpush.msra.mxu0 %v2486
      %2669 = vmatmul.f32.gmra.mxu0 %v2472
      %v2670 = vpop.f32.mrf.mxu0
      %v2671 = vadd.f32 %v2651, %v2670
      %2672 = vdwg.mxu0
      %2673 = vmatpush.msra.mxu0 %v2533
      %2674 = vmatpush.msra.mxu0 %v2532
      %2675 = vmatpush.msra.mxu0 %v2531
      %2676 = vmatpush.msra.mxu0 %v2530
      %2677 = vmatpush.msra.mxu0 %v2529
      %2678 = vmatpush.msra.mxu0 %v2528
      %2679 = vmatpush.msra.mxu0 %v2527
      %2680 = vmatpush.msra.mxu0 %v2526
      %2681 = vmatpush.msra.mxu0 %v2525
      %2682 = vmatpush.msra.mxu0 %v2524
      %2683 = vmatpush.msra.mxu0 %v2523
      %2684 = vmatpush.msra.mxu0 %v2522
      %2685 = vmatpush.msra.mxu0 %v2521
      %2686 = vmatpush.msra.mxu0 %v2520
      %2687 = vmatpush.msra.mxu0 %v2519
      %2688 = vmatpush.msra.mxu0 %v2518
      %2689 = vmatmul.f32.gmra.mxu0 %v2475
      %v2690 = vpop.f32.mrf.mxu0
      %v2691 = vadd.f32 0.0, %v2690
      %2692 = vdwg.mxu0
      %v2693 = vadd.f32 %v2671, %v2691
      %v2695 = vrot.slane %v2475, 4
      %2697 = vmatpush.msra.mxu0 %v2549
      %2698 = vmatpush.msra.mxu0 %v2548
      %2699 = vmatpush.msra.mxu0 %v2547
      %2700 = vmatpush.msra.mxu0 %v2546
      %2701 = vmatpush.msra.mxu0 %v2545
      %2702 = vmatpush.msra.mxu0 %v2544
      %2703 = vmatpush.msra.mxu0 %v2543
      %2704 = vmatpush.msra.mxu0 %v2542
      %2705 = vmatpush.msra.mxu0 %v2541
      %2706 = vmatpush.msra.mxu0 %v2540
      %2707 = vmatpush.msra.mxu0 %v2539
      %2708 = vmatpush.msra.mxu0 %v2538
      %2709 = vmatpush.msra.mxu0 %v2537
      %2710 = vmatpush.msra.mxu0 %v2536
      %2711 = vmatpush.msra.mxu0 %v2535
      %2712 = vmatpush.msra.mxu0 %v2534
      %2713 = vmatmul.f32.gmra.mxu0 %v2695
      %v2714 = vpop.f32.mrf.mxu0
      %v2715 = vadd.f32 0.0, %v2714
      %2716 = vdwg.mxu0
      %v2717 = vadd.f32 %v2693, %v2715
      %2718 = vmatpush.msra.mxu0 %v2565
      %2719 = vmatpush.msra.mxu0 %v2564
      %2720 = vmatpush.msra.mxu0 %v2563
      %2721 = vmatpush.msra.mxu0 %v2562
      %2722 = vmatpush.msra.mxu0 %v2561
      %2723 = vmatpush.msra.mxu0 %v2560
      %2724 = vmatpush.msra.mxu0 %v2559
      %2725 = vmatpush.msra.mxu0 %v2558
      %2726 = vmatpush.msra.mxu0 %v2557
      %2727 = vmatpush.msra.mxu0 %v2556
      %2728 = vmatpush.msra.mxu0 %v2555
      %2729 = vmatpush.msra.mxu0 %v2554
      %2730 = vmatpush.msra.mxu0 %v2553
      %2731 = vmatpush.msra.mxu0 %v2552
      %2732 = vmatpush.msra.mxu0 %v2551
      %2733 = vmatpush.msra.mxu0 %v2550
      %2734 = vmatmul.f32.gmra.mxu0 %v2478
      %v2735 = vpop.f32.mrf.mxu0
      %v2736 = vadd.f32 0.0, %v2735
      %2737 = vdwg.mxu0
      %v2738 = vadd.f32 %v2717, %v2736
      %v2740 = vrot.slane %v2478, 4
      %2742 = vmatpush.msra.mxu0 %v2581
      %2743 = vmatpush.msra.mxu0 %v2580
      %2744 = vmatpush.msra.mxu0 %v2579
      %2745 = vmatpush.msra.mxu0 %v2578
      %2746 = vmatpush.msra.mxu0 %v2577
      %2747 = vmatpush.msra.mxu0 %v2576
      %2748 = vmatpush.msra.mxu0 %v2575
      %2749 = vmatpush.msra.mxu0 %v2574
      %2750 = vmatpush.msra.mxu0 %v2573
      %2751 = vmatpush.msra.mxu0 %v2572
      %2752 = vmatpush.msra.mxu0 %v2571
      %2753 = vmatpush.msra.mxu0 %v2570
      %2754 = vmatpush.msra.mxu0 %v2569
      %2755 = vmatpush.msra.mxu0 %v2568
      %2756 = vmatpush.msra.mxu0 %v2567
      %2757 = vmatpush.msra.mxu0 %v2566
      %2758 = vmatmul.f32.gmra.mxu0 %v2740
      %v2759 = vpop.f32.mrf.mxu0
      %v2760 = vadd.f32 0.0, %v2759
      %2761 = vdwg.mxu0
      %v2762 = vadd.f32 %v2738, %v2760
      %2763 = vmatpush.msra.mxu0 %v2597
      %2764 = vmatpush.msra.mxu0 %v2596
      %2765 = vmatpush.msra.mxu0 %v2595
      %2766 = vmatpush.msra.mxu0 %v2594
      %2767 = vmatpush.msra.mxu0 %v2593
      %2768 = vmatpush.msra.mxu0 %v2592
      %2769 = vmatpush.msra.mxu0 %v2591
      %2770 = vmatpush.msra.mxu0 %v2590
      %2771 = vmatpush.msra.mxu0 %v2589
      %2772 = vmatpush.msra.mxu0 %v2588
      %2773 = vmatpush.msra.mxu0 %v2587
      %2774 = vmatpush.msra.mxu0 %v2586
      %2775 = vmatpush.msra.mxu0 %v2585
      %2776 = vmatpush.msra.mxu0 %v2584
      %2777 = vmatpush.msra.mxu0 %v2583
      %2778 = vmatpush.msra.mxu0 %v2582
      %2779 = vmatmul.f32.gmra.mxu0 %v2481
      %v2780 = vpop.f32.mrf.mxu0
      %v2781 = vadd.f32 0.0, %v2780
      %2782 = vdwg.mxu0
      %v2783 = vadd.f32 %v2762, %v2781
      %v2785 = vrot.slane %v2481, 4
      %2787 = vmatpush.msra.mxu0 %v2613
      %2788 = vmatpush.msra.mxu0 %v2612
      %2789 = vmatpush.msra.mxu0 %v2611
      %2790 = vmatpush.msra.mxu0 %v2610
      %2791 = vmatpush.msra.mxu0 %v2609
      %2792 = vmatpush.msra.mxu0 %v2608
      %2793 = vmatpush.msra.mxu0 %v2607
      %2794 = vmatpush.msra.mxu0 %v2606
      %2795 = vmatpush.msra.mxu0 %v2605
      %2796 = vmatpush.msra.mxu0 %v2604
      %2797 = vmatpush.msra.mxu0 %v2603
      %2798 = vmatpush.msra.mxu0 %v2602
      %2799 = vmatpush.msra.mxu0 %v2601
      %2800 = vmatpush.msra.mxu0 %v2600
      %2801 = vmatpush.msra.mxu0 %v2599
      %2802 = vmatpush.msra.mxu0 %v2598
      %2803 = vmatmul.f32.gmra.mxu0 %v2785
      %v2804 = vpop.f32.mrf.mxu0
      %v2805 = vadd.f32 0.0, %v2804
      %2806 = vdwg.mxu0
      %v2807 = vadd.f32 %v2783, %v2805
      %2808 = vmatpush.msra.mxu0 %v2629
      %2809 = vmatpush.msra.mxu0 %v2628
      %2810 = vmatpush.msra.mxu0 %v2627
      %2811 = vmatpush.msra.mxu0 %v2626
      %2812 = vmatpush.msra.mxu0 %v2625
      %2813 = vmatpush.msra.mxu0 %v2624
      %2814 = vmatpush.msra.mxu0 %v2623
      %2815 = vmatpush.msra.mxu0 %v2622
      %2816 = vmatpush.msra.mxu0 %v2621
      %2817 = vmatpush.msra.mxu0 %v2620
      %2818 = vmatpush.msra.mxu0 %v2619
      %2819 = vmatpush.msra.mxu0 %v2618
      %2820 = vmatpush.msra.mxu0 %v2617
      %2821 = vmatpush.msra.mxu0 %v2616
      %2822 = vmatpush.msra.mxu0 %v2615
      %2823 = vmatpush.msra.mxu0 %v2614
      %2824 = vmatmul.f32.gmra.mxu0 %v2484
      %v2825 = vpop.f32.mrf.mxu0
      %v2826 = vadd.f32 0.0, %v2825
      %2827 = vdwg.mxu0
      %v2828 = vadd.f32 %v2807, %v2826
      %v2829 = vld [vmem:[%s9] sm:$0x1]
      %v2831 = vperm.slane %v2829, 0
      %v2833 = vadd.f32 %v2828, %v2831
      %v2834 = vmax.f32 %v2833, 0.0
      %v2835 = vld [vmem:[%s10] sm:$0xff]
      %v2836 = vld [vmem:[%s10 + $0x8] sm:$0xff]
      %v2837 = vld [vmem:[%s10 + $0x10] sm:$0xff]
      %v2838 = vld [vmem:[%s10 + $0x18] sm:$0xff]
      %v2839 = vld [vmem:[%s10 + $0x20] sm:$0xff]
      %v2840 = vld [vmem:[%s10 + $0x28] sm:$0xff]
      %v2841 = vld [vmem:[%s10 + $0x30] sm:$0xff]
      %v2842 = vld [vmem:[%s10 + $0x38] sm:$0xff]
      %v2843 = vld [vmem:[%s10 + $0x40] sm:$0xff]
      %v2844 = vld [vmem:[%s10 + $0x48] sm:$0xff]
      %v2845 = vld [vmem:[%s10 + $0x50] sm:$0xff]
      %v2846 = vld [vmem:[%s10 + $0x58] sm:$0xff]
      %v2847 = vld [vmem:[%s10 + $0x60] sm:$0xff]
      %v2848 = vld [vmem:[%s10 + $0x68] sm:$0xff]
      %v2849 = vld [vmem:[%s10 + $0x70] sm:$0xff]
      %v2850 = vld [vmem:[%s10 + $0x78] sm:$0xff]
      %v2851 = vld [vmem:[%s10 + $0x80] sm:$0xff]
      %v2852 = vld [vmem:[%s10 + $0x88] sm:$0xff]
      %vm2853 = vcmask 31744
      %v2855 = vsel %vm2853, %v2835, 0
      %v2858 = vsel %vm2853, %v2836, 0
      %v2861 = vsel %vm2853, %v2837, 0
      %v2864 = vsel %vm2853, %v2838, 0
      %v2867 = vsel %vm2853, %v2839, 0
      %v2870 = vsel %vm2853, %v2840, 0
      %v2873 = vsel %vm2853, %v2841, 0
      %v2876 = vsel %vm2853, %v2842, 0
      %v2879 = vsel %vm2853, %v2843, 0
      %v2882 = vsel %vm2853, %v2844, 0
      %v2885 = vsel %vm2853, %v2845, 0
      %v2888 = vsel %vm2853, %v2846, 0
      %v2891 = vsel %vm2853, %v2847, 0
      %v2894 = vsel %vm2853, %v2848, 0
      %v2897 = vsel %vm2853, %v2849, 0
      %v2900 = vsel %vm2853, %v2850, 0
      %v2903 = vsel %vm2853, %v2851, 0
      %v2906 = vsel %vm2853, %v2852, 0
      %vm2908 = vcmask 1043456
      %v2910 = vsel %vm2908, %v2834, 0
      %2912 = vmatpush.msra.mxu0 0.0
      %2913 = vmatpush.msra.mxu0 0.0
      %2914 = vmatpush.msra.mxu0 0.0
      %2915 = vmatpush.msra.mxu0 0.0
      %2916 = vmatpush.msra.mxu0 0.0
      %2917 = vmatpush.msra.mxu0 0.0
      %2918 = vmatpush.msra.mxu0 0.0
      %2919 = vmatpush.msra.mxu0 0.0
      %2920 = vmatpush.msra.mxu0 0.0
      %2921 = vmatpush.msra.mxu0 0.0
      %2922 = vmatpush.msra.mxu0 0.0
      %2923 = vmatpush.msra.mxu0 0.0
      %2924 = vmatpush.msra.mxu0 0.0
      %2925 = vmatpush.msra.mxu0 0.0
      %2926 = vmatpush.msra.mxu0 0.0
      %2927 = vmatpush.msra.mxu0 %v2910
      %2928 = vmatmul.f32.gmra.mxu0 %v2855
      %v2929 = vpop.f32.mrf.mxu0
      %v2930 = vadd.f32 0.0, %v2929
      %2931 = vmatmul.f32.gmra.mxu0 %v2858
      %v2932 = vpop.f32.mrf.mxu0
      %v2933 = vadd.f32 0.0, %v2932
      %2934 = vmatmul.f32.gmra.mxu0 %v2861
      %v2935 = vpop.f32.mrf.mxu0
      %v2936 = vadd.f32 0.0, %v2935
      %2937 = vmatmul.f32.gmra.mxu0 %v2864
      %v2938 = vpop.f32.mrf.mxu0
      %v2939 = vadd.f32 0.0, %v2938
      %2940 = vmatmul.f32.gmra.mxu0 %v2867
      %v2941 = vpop.f32.mrf.mxu0
      %v2942 = vadd.f32 0.0, %v2941
      %2943 = vmatmul.f32.gmra.mxu0 %v2870
      %v2944 = vpop.f32.mrf.mxu0
      %v2945 = vadd.f32 0.0, %v2944
      %2946 = vmatmul.f32.gmra.mxu0 %v2873
      %v2947 = vpop.f32.mrf.mxu0
      %v2948 = vadd.f32 0.0, %v2947
      %2949 = vmatmul.f32.gmra.mxu0 %v2876
      %v2950 = vpop.f32.mrf.mxu0
      %v2951 = vadd.f32 0.0, %v2950
      %2952 = vmatmul.f32.gmra.mxu0 %v2879
      %v2953 = vpop.f32.mrf.mxu0
      %v2954 = vadd.f32 0.0, %v2953
      %2955 = vmatmul.f32.gmra.mxu0 %v2882
      %v2956 = vpop.f32.mrf.mxu0
      %v2957 = vadd.f32 0.0, %v2956
      %2958 = vmatmul.f32.gmra.mxu0 %v2885
      %v2959 = vpop.f32.mrf.mxu0
      %v2960 = vadd.f32 0.0, %v2959
      %2961 = vmatmul.f32.gmra.mxu0 %v2888
      %v2962 = vpop.f32.mrf.mxu0
      %v2963 = vadd.f32 0.0, %v2962
      %2964 = vmatmul.f32.gmra.mxu0 %v2891
      %v2965 = vpop.f32.mrf.mxu0
      %v2966 = vadd.f32 0.0, %v2965
      %2967 = vmatmul.f32.gmra.mxu0 %v2894
      %v2968 = vpop.f32.mrf.mxu0
      %v2969 = vadd.f32 0.0, %v2968
      %2970 = vmatmul.f32.gmra.mxu0 %v2897
      %v2971 = vpop.f32.mrf.mxu0
      %v2972 = vadd.f32 0.0, %v2971
      %2973 = vmatmul.f32.gmra.mxu0 %v2900
      %v2974 = vpop.f32.mrf.mxu0
      %v2975 = vadd.f32 0.0, %v2974
      %2976 = vmatmul.f32.gmra.mxu0 %v2903
      %v2977 = vpop.f32.mrf.mxu0
      %v2978 = vadd.f32 0.0, %v2977
      %2979 = vmatmul.f32.gmra.mxu0 %v2906
      %v2980 = vpop.f32.mrf.mxu0
      %v2981 = vadd.f32 0.0, %v2980
      %2982 = vdwg.mxu0
      %v2983 = vld [vmem:[%s11] sm:$0xff]
      %v2984 = vld [vmem:[%s11 + $0x8] sm:$0xff]
      %v2985 = vld [vmem:[%s11 + $0x10] sm:$0xff]
      %v2986 = vld [vmem:[%s11 + $0x18] sm:$0xff]
      %v2987 = vld [vmem:[%s11 + $0x20] sm:$0xff]
      %v2988 = vld [vmem:[%s11 + $0x28] sm:$0xff]
      %v2989 = vld [vmem:[%s11 + $0x30] sm:$0xff]
      %v2990 = vld [vmem:[%s11 + $0x38] sm:$0xff]
      %v2991 = vld [vmem:[%s11 + $0x40] sm:$0xff]
      %v2992 = vld [vmem:[%s11 + $0x48] sm:$0xff]
      %v2993 = vld [vmem:[%s11 + $0x50] sm:$0xff]
      %v2994 = vld [vmem:[%s11 + $0x58] sm:$0xff]
      %v2995 = vld [vmem:[%s11 + $0x60] sm:$0xff]
      %v2996 = vld [vmem:[%s11 + $0x68] sm:$0xff]
      %v2997 = vld [vmem:[%s11 + $0x70] sm:$0xff]
      %v2998 = vld [vmem:[%s11 + $0x78] sm:$0xff]
      %v2999 = vld [vmem:[%s11 + $0x80] sm:$0xff]
      %v3000 = vld [vmem:[%s11 + $0x88] sm:$0xff]
      %v3001 = vld [vmem:[%s11 + $0x90] sm:$0xff]
      %v3002 = vld [vmem:[%s11 + $0x98] sm:$0xff]
      %v3003 = vld [vmem:[%s11 + $0xa0] sm:$0xff]
      %v3004 = vld [vmem:[%s11 + $0xa8] sm:$0xff]
      %v3005 = vld [vmem:[%s11 + $0xb0] sm:$0xff]
      %v3006 = vld [vmem:[%s11 + $0xb8] sm:$0xff]
      %v3007 = vld [vmem:[%s11 + $0xc0] sm:$0xff]
      %v3008 = vld [vmem:[%s11 + $0xc8] sm:$0xff]
      %v3009 = vld [vmem:[%s11 + $0xd0] sm:$0xff]
      %v3010 = vld [vmem:[%s11 + $0xd8] sm:$0xff]
      %v3011 = vld [vmem:[%s11 + $0xe0] sm:$0xff]
      %v3012 = vld [vmem:[%s11 + $0xe8] sm:$0xff]
      %v3013 = vld [vmem:[%s11 + $0xf0] sm:$0xff]
      %v3014 = vld [vmem:[%s11 + $0xf8] sm:$0xff]
      %v3015 = vld [vmem:[%s11 + $0x100] sm:$0xff]
      %v3016 = vld [vmem:[%s11 + $0x108] sm:$0xff]
      %v3017 = vld [vmem:[%s11 + $0x110] sm:$0xff]
      %v3018 = vld [vmem:[%s11 + $0x118] sm:$0xff]
      %v3019 = vld [vmem:[%s11 + $0x120] sm:$0xff]
      %v3020 = vld [vmem:[%s11 + $0x128] sm:$0xff]
      %v3021 = vld [vmem:[%s11 + $0x130] sm:$0xff]
      %v3022 = vld [vmem:[%s11 + $0x138] sm:$0xff]
      %v3023 = vld [vmem:[%s11 + $0x140] sm:$0xff]
      %v3024 = vld [vmem:[%s11 + $0x148] sm:$0xff]
      %v3025 = vld [vmem:[%s11 + $0x150] sm:$0xff]
      %v3026 = vld [vmem:[%s11 + $0x158] sm:$0xff]
      %v3027 = vld [vmem:[%s11 + $0x160] sm:$0xff]
      %v3028 = vld [vmem:[%s11 + $0x168] sm:$0xff]
      %v3029 = vld [vmem:[%s11 + $0x170] sm:$0xff]
      %v3030 = vld [vmem:[%s11 + $0x178] sm:$0xff]
      %v3031 = vld [vmem:[%s11 + $0x180] sm:$0xff]
      %v3032 = vld [vmem:[%s11 + $0x188] sm:$0xff]
      %v3033 = vld [vmem:[%s11 + $0x190] sm:$0xff]
      %v3034 = vld [vmem:[%s11 + $0x198] sm:$0xff]
      %v3035 = vld [vmem:[%s11 + $0x1a0] sm:$0xff]
      %v3036 = vld [vmem:[%s11 + $0x1a8] sm:$0xff]
      %v3037 = vld [vmem:[%s11 + $0x1b0] sm:$0xff]
      %v3038 = vld [vmem:[%s11 + $0x1b8] sm:$0xff]
      %v3039 = vld [vmem:[%s11 + $0x1c0] sm:$0xff]
      %v3040 = vld [vmem:[%s11 + $0x1c8] sm:$0xff]
      %v3041 = vld [vmem:[%s11 + $0x1d0] sm:$0xff]
      %v3042 = vld [vmem:[%s11 + $0x1d8] sm:$0xff]
      %v3043 = vld [vmem:[%s11 + $0x1e0] sm:$0xff]
      %v3044 = vld [vmem:[%s11 + $0x1e8] sm:$0xff]
      %v3045 = vld [vmem:[%s11 + $0x1f0] sm:$0xff]
      %v3046 = vld [vmem:[%s11 + $0x1f8] sm:$0xff]
      %v3047 = vld [vmem:[%s11 + $0x200] sm:$0xff]
      %v3048 = vld [vmem:[%s11 + $0x208] sm:$0xff]
      %v3049 = vld [vmem:[%s11 + $0x210] sm:$0xff]
      %v3050 = vld [vmem:[%s11 + $0x218] sm:$0xff]
      %v3051 = vld [vmem:[%s11 + $0x220] sm:$0xff]
      %v3052 = vld [vmem:[%s11 + $0x228] sm:$0xff]
      %v3053 = vld [vmem:[%s11 + $0x230] sm:$0xff]
      %v3054 = vld [vmem:[%s11 + $0x238] sm:$0xff]
      %v3055 = vld [vmem:[%s11 + $0x240] sm:$0xff]
      %v3056 = vld [vmem:[%s11 + $0x248] sm:$0xff]
      %v3057 = vld [vmem:[%s11 + $0x250] sm:$0xff]
      %v3058 = vld [vmem:[%s11 + $0x258] sm:$0xff]
      %v3059 = vld [vmem:[%s11 + $0x260] sm:$0xff]
      %v3060 = vld [vmem:[%s11 + $0x268] sm:$0xff]
      %v3061 = vld [vmem:[%s11 + $0x270] sm:$0xff]
      %v3062 = vld [vmem:[%s11 + $0x278] sm:$0xff]
      %v3063 = vld [vmem:[%s11 + $0x280] sm:$0xff]
      %v3064 = vld [vmem:[%s11 + $0x288] sm:$0xff]
      %v3065 = vld [vmem:[%s11 + $0x290] sm:$0xff]
      %v3066 = vld [vmem:[%s11 + $0x298] sm:$0xff]
      %v3067 = vld [vmem:[%s11 + $0x2a0] sm:$0xff]
      %v3068 = vld [vmem:[%s11 + $0x2a8] sm:$0xff]
      %v3069 = vld [vmem:[%s11 + $0x2b0] sm:$0xff]
      %v3070 = vld [vmem:[%s11 + $0x2b8] sm:$0xff]
      %v3071 = vld [vmem:[%s11 + $0x2c0] sm:$0xff]
      %v3072 = vld [vmem:[%s11 + $0x2c8] sm:$0xff]
      %v3073 = vld [vmem:[%s11 + $0x2d0] sm:$0xff]
      %v3074 = vld [vmem:[%s11 + $0x2d8] sm:$0xff]
      %v3075 = vld [vmem:[%s11 + $0x2e0] sm:$0xff]
      %v3076 = vld [vmem:[%s11 + $0x2e8] sm:$0xff]
      %v3077 = vld [vmem:[%s11 + $0x2f0] sm:$0xff]
      %v3078 = vld [vmem:[%s11 + $0x2f8] sm:$0xff]
      %v3079 = vld [vmem:[%s11 + $0x300] sm:$0xff]
      %v3080 = vld [vmem:[%s11 + $0x308] sm:$0xff]
      %v3081 = vld [vmem:[%s11 + $0x310] sm:$0xff]
      %v3082 = vld [vmem:[%s11 + $0x318] sm:$0xff]
      %v3083 = vld [vmem:[%s11 + $0x320] sm:$0xff]
      %v3084 = vld [vmem:[%s11 + $0x328] sm:$0xff]
      %v3085 = vld [vmem:[%s11 + $0x330] sm:$0xff]
      %v3086 = vld [vmem:[%s11 + $0x338] sm:$0xff]
      %v3087 = vld [vmem:[%s11 + $0x340] sm:$0xff]
      %v3088 = vld [vmem:[%s11 + $0x348] sm:$0xff]
      %v3089 = vld [vmem:[%s11 + $0x350] sm:$0xff]
      %v3090 = vld [vmem:[%s11 + $0x358] sm:$0xff]
      %v3091 = vld [vmem:[%s11 + $0x360] sm:$0xff]
      %v3092 = vld [vmem:[%s11 + $0x368] sm:$0xff]
      %v3093 = vld [vmem:[%s11 + $0x370] sm:$0xff]
      %v3094 = vld [vmem:[%s11 + $0x378] sm:$0xff]
      %v3095 = vld [vmem:[%s11 + $0x380] sm:$0xff]
      %v3096 = vld [vmem:[%s11 + $0x388] sm:$0xff]
      %v3097 = vld [vmem:[%s11 + $0x390] sm:$0xff]
      %v3098 = vld [vmem:[%s11 + $0x398] sm:$0xff]
      %v3099 = vld [vmem:[%s11 + $0x3a0] sm:$0xff]
      %v3100 = vld [vmem:[%s11 + $0x3a8] sm:$0xff]
      %v3101 = vld [vmem:[%s11 + $0x3b0] sm:$0xff]
      %v3102 = vld [vmem:[%s11 + $0x3b8] sm:$0xff]
      %v3103 = vld [vmem:[%s11 + $0x3c0] sm:$0xff]
      %v3104 = vld [vmem:[%s11 + $0x3c8] sm:$0xff]
      %v3105 = vld [vmem:[%s11 + $0x3d0] sm:$0xff]
      %v3106 = vld [vmem:[%s11 + $0x3d8] sm:$0xff]
      %v3107 = vld [vmem:[%s11 + $0x3e0] sm:$0xff]
      %v3108 = vld [vmem:[%s11 + $0x3e8] sm:$0xff]
      %v3109 = vld [vmem:[%s11 + $0x3f0] sm:$0xff]
      %v3110 = vld [vmem:[%s11 + $0x3f8] sm:$0xff]
      %v3111 = vld [vmem:[%s11 + $0x400] sm:$0xff]
      %v3112 = vld [vmem:[%s11 + $0x408] sm:$0xff]
      %v3113 = vld [vmem:[%s11 + $0x410] sm:$0xff]
      %v3114 = vld [vmem:[%s11 + $0x418] sm:$0xff]
      %v3115 = vld [vmem:[%s11 + $0x420] sm:$0xff]
      %v3116 = vld [vmem:[%s11 + $0x428] sm:$0xff]
      %v3117 = vld [vmem:[%s11 + $0x430] sm:$0xff]
      %v3118 = vld [vmem:[%s11 + $0x438] sm:$0xff]
      %v3119 = vld [vmem:[%s11 + $0x440] sm:$0xff]
      %v3120 = vld [vmem:[%s11 + $0x448] sm:$0xff]
      %v3121 = vld [vmem:[%s11 + $0x450] sm:$0xff]
      %v3122 = vld [vmem:[%s11 + $0x458] sm:$0xff]
      %v3123 = vld [vmem:[%s11 + $0x460] sm:$0xff]
      %v3124 = vld [vmem:[%s11 + $0x468] sm:$0xff]
      %v3125 = vld [vmem:[%s11 + $0x470] sm:$0xff]
      %v3126 = vld [vmem:[%s11 + $0x478] sm:$0xff]
      %3127 = vmatpush.msra.mxu0 %v3014
      %3128 = vmatpush.msra.mxu0 %v3013
      %3129 = vmatpush.msra.mxu0 %v3012
      %3130 = vmatpush.msra.mxu0 %v3011
      %3131 = vmatpush.msra.mxu0 %v3010
      %3132 = vmatpush.msra.mxu0 %v3009
      %3133 = vmatpush.msra.mxu0 %v3008
      %3134 = vmatpush.msra.mxu0 %v3007
      %3135 = vmatpush.msra.mxu0 %v3006
      %3136 = vmatpush.msra.mxu0 %v3005
      %3137 = vmatpush.msra.mxu0 %v3004
      %3138 = vmatpush.msra.mxu0 %v3003
      %3139 = vmatpush.msra.mxu0 %v3002
      %3140 = vmatpush.msra.mxu0 %v3001
      %3141 = vmatpush.msra.mxu0 %v3000
      %3142 = vmatpush.msra.mxu0 %v2999
      %3143 = vmatmul.f32.gmra.mxu0 %v2936
      %v3144 = vpop.f32.mrf.mxu0
      %v3145 = vadd.f32 0.0, %v3144
      %3146 = vmatmul.f32.gmra.mxu0 %v2939
      %v3147 = vpop.f32.mrf.mxu0
      %v3148 = vadd.f32 0.0, %v3147
      %3149 = vdwg.mxu0
      %3150 = vmatpush.msra.mxu0 %v2998
      %3151 = vmatpush.msra.mxu0 %v2997
      %3152 = vmatpush.msra.mxu0 %v2996
      %3153 = vmatpush.msra.mxu0 %v2995
      %3154 = vmatpush.msra.mxu0 %v2994
      %3155 = vmatpush.msra.mxu0 %v2993
      %3156 = vmatpush.msra.mxu0 %v2992
      %3157 = vmatpush.msra.mxu0 %v2991
      %3158 = vmatpush.msra.mxu0 %v2990
      %3159 = vmatpush.msra.mxu0 %v2989
      %3160 = vmatpush.msra.mxu0 %v2988
      %3161 = vmatpush.msra.mxu0 %v2987
      %3162 = vmatpush.msra.mxu0 %v2986
      %3163 = vmatpush.msra.mxu0 %v2985
      %3164 = vmatpush.msra.mxu0 %v2984
      %3165 = vmatpush.msra.mxu0 %v2983
      %3166 = vmatmul.f32.gmra.mxu0 %v2930
      %v3167 = vpop.f32.mrf.mxu0
      %v3168 = vadd.f32 %v3145, %v3167
      %3169 = vmatmul.f32.gmra.mxu0 %v2933
      %v3170 = vpop.f32.mrf.mxu0
      %v3171 = vadd.f32 %v3148, %v3170
      %3172 = vdwg.mxu0
      %3173 = vmatpush.msra.mxu0 %v3030
      %3174 = vmatpush.msra.mxu0 %v3029
      %3175 = vmatpush.msra.mxu0 %v3028
      %3176 = vmatpush.msra.mxu0 %v3027
      %3177 = vmatpush.msra.mxu0 %v3026
      %3178 = vmatpush.msra.mxu0 %v3025
      %3179 = vmatpush.msra.mxu0 %v3024
      %3180 = vmatpush.msra.mxu0 %v3023
      %3181 = vmatpush.msra.mxu0 %v3022
      %3182 = vmatpush.msra.mxu0 %v3021
      %3183 = vmatpush.msra.mxu0 %v3020
      %3184 = vmatpush.msra.mxu0 %v3019
      %3185 = vmatpush.msra.mxu0 %v3018
      %3186 = vmatpush.msra.mxu0 %v3017
      %3187 = vmatpush.msra.mxu0 %v3016
      %3188 = vmatpush.msra.mxu0 %v3015
      %3189 = vmatmul.f32.gmra.mxu0 %v2942
      %v3190 = vpop.f32.mrf.mxu0
      %v3191 = vadd.f32 0.0, %v3190
      %3192 = vmatmul.f32.gmra.mxu0 %v2945
      %v3193 = vpop.f32.mrf.mxu0
      %v3194 = vadd.f32 0.0, %v3193
      %3195 = vdwg.mxu0
      %v3196 = vadd.f32 %v3168, %v3191
      %v3197 = vadd.f32 %v3171, %v3194
      %3198 = vmatpush.msra.mxu0 %v3046
      %3199 = vmatpush.msra.mxu0 %v3045
      %3200 = vmatpush.msra.mxu0 %v3044
      %3201 = vmatpush.msra.mxu0 %v3043
      %3202 = vmatpush.msra.mxu0 %v3042
      %3203 = vmatpush.msra.mxu0 %v3041
      %3204 = vmatpush.msra.mxu0 %v3040
      %3205 = vmatpush.msra.mxu0 %v3039
      %3206 = vmatpush.msra.mxu0 %v3038
      %3207 = vmatpush.msra.mxu0 %v3037
      %3208 = vmatpush.msra.mxu0 %v3036
      %3209 = vmatpush.msra.mxu0 %v3035
      %3210 = vmatpush.msra.mxu0 %v3034
      %3211 = vmatpush.msra.mxu0 %v3033
      %3212 = vmatpush.msra.mxu0 %v3032
      %3213 = vmatpush.msra.mxu0 %v3031
      %3214 = vmatmul.f32.gmra.mxu0 %v2948
      %v3215 = vpop.f32.mrf.mxu0
      %v3216 = vadd.f32 0.0, %v3215
      %3217 = vmatmul.f32.gmra.mxu0 %v2951
      %v3218 = vpop.f32.mrf.mxu0
      %v3219 = vadd.f32 0.0, %v3218
      %3220 = vdwg.mxu0
      %v3221 = vadd.f32 %v3196, %v3216
      %v3222 = vadd.f32 %v3197, %v3219
      %3223 = vmatpush.msra.mxu0 %v3062
      %3224 = vmatpush.msra.mxu0 %v3061
      %3225 = vmatpush.msra.mxu0 %v3060
      %3226 = vmatpush.msra.mxu0 %v3059
      %3227 = vmatpush.msra.mxu0 %v3058
      %3228 = vmatpush.msra.mxu0 %v3057
      %3229 = vmatpush.msra.mxu0 %v3056
      %3230 = vmatpush.msra.mxu0 %v3055
      %3231 = vmatpush.msra.mxu0 %v3054
      %3232 = vmatpush.msra.mxu0 %v3053
      %3233 = vmatpush.msra.mxu0 %v3052
      %3234 = vmatpush.msra.mxu0 %v3051
      %3235 = vmatpush.msra.mxu0 %v3050
      %3236 = vmatpush.msra.mxu0 %v3049
      %3237 = vmatpush.msra.mxu0 %v3048
      %3238 = vmatpush.msra.mxu0 %v3047
      %3239 = vmatmul.f32.gmra.mxu0 %v2954
      %v3240 = vpop.f32.mrf.mxu0
      %v3241 = vadd.f32 0.0, %v3240
      %3242 = vmatmul.f32.gmra.mxu0 %v2957
      %v3243 = vpop.f32.mrf.mxu0
      %v3244 = vadd.f32 0.0, %v3243
      %3245 = vdwg.mxu0
      %v3246 = vadd.f32 %v3221, %v3241
      %v3247 = vadd.f32 %v3222, %v3244
      %3248 = vmatpush.msra.mxu0 %v3078
      %3249 = vmatpush.msra.mxu0 %v3077
      %3250 = vmatpush.msra.mxu0 %v3076
      %3251 = vmatpush.msra.mxu0 %v3075
      %3252 = vmatpush.msra.mxu0 %v3074
      %3253 = vmatpush.msra.mxu0 %v3073
      %3254 = vmatpush.msra.mxu0 %v3072
      %3255 = vmatpush.msra.mxu0 %v3071
      %3256 = vmatpush.msra.mxu0 %v3070
      %3257 = vmatpush.msra.mxu0 %v3069
      %3258 = vmatpush.msra.mxu0 %v3068
      %3259 = vmatpush.msra.mxu0 %v3067
      %3260 = vmatpush.msra.mxu0 %v3066
      %3261 = vmatpush.msra.mxu0 %v3065
      %3262 = vmatpush.msra.mxu0 %v3064
      %3263 = vmatpush.msra.mxu0 %v3063
      %3264 = vmatmul.f32.gmra.mxu0 %v2960
      %v3265 = vpop.f32.mrf.mxu0
      %v3266 = vadd.f32 0.0, %v3265
      %3267 = vmatmul.f32.gmra.mxu0 %v2963
      %v3268 = vpop.f32.mrf.mxu0
      %v3269 = vadd.f32 0.0, %v3268
      %3270 = vdwg.mxu0
      %v3271 = vadd.f32 %v3246, %v3266
      %v3272 = vadd.f32 %v3247, %v3269
      %3273 = vmatpush.msra.mxu0 %v3094
      %3274 = vmatpush.msra.mxu0 %v3093
      %3275 = vmatpush.msra.mxu0 %v3092
      %3276 = vmatpush.msra.mxu0 %v3091
      %3277 = vmatpush.msra.mxu0 %v3090
      %3278 = vmatpush.msra.mxu0 %v3089
      %3279 = vmatpush.msra.mxu0 %v3088
      %3280 = vmatpush.msra.mxu0 %v3087
      %3281 = vmatpush.msra.mxu0 %v3086
      %3282 = vmatpush.msra.mxu0 %v3085
      %3283 = vmatpush.msra.mxu0 %v3084
      %3284 = vmatpush.msra.mxu0 %v3083
      %3285 = vmatpush.msra.mxu0 %v3082
      %3286 = vmatpush.msra.mxu0 %v3081
      %3287 = vmatpush.msra.mxu0 %v3080
      %3288 = vmatpush.msra.mxu0 %v3079
      %3289 = vmatmul.f32.gmra.mxu0 %v2966
      %v3290 = vpop.f32.mrf.mxu0
      %v3291 = vadd.f32 0.0, %v3290
      %3292 = vmatmul.f32.gmra.mxu0 %v2969
      %v3293 = vpop.f32.mrf.mxu0
      %v3294 = vadd.f32 0.0, %v3293
      %3295 = vdwg.mxu0
      %v3296 = vadd.f32 %v3271, %v3291
      %v3297 = vadd.f32 %v3272, %v3294
      %3298 = vmatpush.msra.mxu0 %v3110
      %3299 = vmatpush.msra.mxu0 %v3109
      %3300 = vmatpush.msra.mxu0 %v3108
      %3301 = vmatpush.msra.mxu0 %v3107
      %3302 = vmatpush.msra.mxu0 %v3106
      %3303 = vmatpush.msra.mxu0 %v3105
      %3304 = vmatpush.msra.mxu0 %v3104
      %3305 = vmatpush.msra.mxu0 %v3103
      %3306 = vmatpush.msra.mxu0 %v3102
      %3307 = vmatpush.msra.mxu0 %v3101
      %3308 = vmatpush.msra.mxu0 %v3100
      %3309 = vmatpush.msra.mxu0 %v3099
      %3310 = vmatpush.msra.mxu0 %v3098
      %3311 = vmatpush.msra.mxu0 %v3097
      %3312 = vmatpush.msra.mxu0 %v3096
      %3313 = vmatpush.msra.mxu0 %v3095
      %3314 = vmatmul.f32.gmra.mxu0 %v2972
      %v3315 = vpop.f32.mrf.mxu0
      %v3316 = vadd.f32 0.0, %v3315
      %3317 = vmatmul.f32.gmra.mxu0 %v2975
      %v3318 = vpop.f32.mrf.mxu0
      %v3319 = vadd.f32 0.0, %v3318
      %3320 = vdwg.mxu0
      %v3321 = vadd.f32 %v3296, %v3316
      %v3322 = vadd.f32 %v3297, %v3319
      %3323 = vmatpush.msra.mxu0 %v3126
      %3324 = vmatpush.msra.mxu0 %v3125
      %3325 = vmatpush.msra.mxu0 %v3124
      %3326 = vmatpush.msra.mxu0 %v3123
      %3327 = vmatpush.msra.mxu0 %v3122
      %3328 = vmatpush.msra.mxu0 %v3121
      %3329 = vmatpush.msra.mxu0 %v3120
      %3330 = vmatpush.msra.mxu0 %v3119
      %3331 = vmatpush.msra.mxu0 %v3118
      %3332 = vmatpush.msra.mxu0 %v3117
      %3333 = vmatpush.msra.mxu0 %v3116
      %3334 = vmatpush.msra.mxu0 %v3115
      %3335 = vmatpush.msra.mxu0 %v3114
      %3336 = vmatpush.msra.mxu0 %v3113
      %3337 = vmatpush.msra.mxu0 %v3112
      %3338 = vmatpush.msra.mxu0 %v3111
      %3339 = vmatmul.f32.gmra.mxu0 %v2978
      %v3340 = vpop.f32.mrf.mxu0
      %v3341 = vadd.f32 0.0, %v3340
      %3342 = vmatmul.f32.gmra.mxu0 %v2981
      %v3343 = vpop.f32.mrf.mxu0
      %v3344 = vadd.f32 0.0, %v3343
      %3345 = vdwg.mxu0
      %v3346 = vadd.f32 %v3321, %v3341
      %v3347 = vadd.f32 %v3322, %v3344
      %v3348 = vld [vmem:[%s12] sm:$0x1]
      %v3350 = vperm.slane %v3348, 0
      %v3352 = vadd.f32 %v3346, %v3350
      %v3353 = vadd.f32 %v3347, %v3350
      %v3354 = vmax.f32 %v3352, 0.0
      %v3355 = vmax.f32 %v3353, 0.0
      %v3356 = vld [vmem:[%s13] sm:$0xff]
      %v3357 = vld [vmem:[%s13 + $0x8] sm:$0xff]
      %v3358 = vld [vmem:[%s13 + $0x10] sm:$0xff]
      %v3359 = vld [vmem:[%s13 + $0x18] sm:$0xff]
      %v3360 = vld [vmem:[%s13 + $0x20] sm:$0xff]
      %v3361 = vld [vmem:[%s13 + $0x28] sm:$0xff]
      %v3362 = vld [vmem:[%s13 + $0x30] sm:$0xff]
      %v3363 = vld [vmem:[%s13 + $0x38] sm:$0xff]
      %v3364 = vld [vmem:[%s13 + $0x40] sm:$0xff]
      %v3365 = vld [vmem:[%s13 + $0x48] sm:$0xff]
      %v3366 = vld [vmem:[%s13 + $0x50] sm:$0xff]
      %v3367 = vld [vmem:[%s13 + $0x58] sm:$0xff]
      %v3368 = vld [vmem:[%s13 + $0x60] sm:$0xff]
      %v3369 = vld [vmem:[%s13 + $0x68] sm:$0xff]
      %v3370 = vld [vmem:[%s13 + $0x70] sm:$0xff]
      %v3371 = vld [vmem:[%s13 + $0x78] sm:$0xff]
      %v3372 = vld [vmem:[%s13 + $0x80] sm:$0xff]
      %v3373 = vld [vmem:[%s13 + $0x88] sm:$0xff]
      %v3374 = vld [vmem:[%s13 + $0x90] sm:$0xff]
      %v3375 = vld [vmem:[%s13 + $0x98] sm:$0xff]
      %v3376 = vld [vmem:[%s13 + $0xa0] sm:$0xff]
      %v3377 = vld [vmem:[%s13 + $0xa8] sm:$0xff]
      %v3378 = vld [vmem:[%s13 + $0xb0] sm:$0xff]
      %v3379 = vld [vmem:[%s13 + $0xb8] sm:$0xff]
      %v3380 = vld [vmem:[%s13 + $0xc0] sm:$0xff]
      %v3381 = vld [vmem:[%s13 + $0xc8] sm:$0xff]
      %v3382 = vld [vmem:[%s13 + $0xd0] sm:$0xff]
      %v3383 = vld [vmem:[%s13 + $0xd8] sm:$0xff]
      %v3384 = vld [vmem:[%s13 + $0xe0] sm:$0xff]
      %v3385 = vld [vmem:[%s13 + $0xe8] sm:$0xff]
      %v3386 = vld [vmem:[%s13 + $0xf0] sm:$0xff]
      %v3387 = vld [vmem:[%s13 + $0xf8] sm:$0xff]
      %v3388 = vld [vmem:[%s13 + $0x100] sm:$0xff]
      %v3389 = vld [vmem:[%s13 + $0x108] sm:$0xff]
      %v3390 = vld [vmem:[%s13 + $0x110] sm:$0xff]
      %v3391 = vld [vmem:[%s13 + $0x118] sm:$0xff]
      %v3392 = vld [vmem:[%s13 + $0x120] sm:$0xff]
      %v3393 = vld [vmem:[%s13 + $0x128] sm:$0xff]
      %v3394 = vld [vmem:[%s13 + $0x130] sm:$0xff]
      %v3395 = vld [vmem:[%s13 + $0x138] sm:$0xff]
      %v3396 = vld [vmem:[%s13 + $0x140] sm:$0xff]
      %v3397 = vld [vmem:[%s13 + $0x148] sm:$0xff]
      %v3398 = vld [vmem:[%s13 + $0x150] sm:$0xff]
      %v3399 = vld [vmem:[%s13 + $0x158] sm:$0xff]
      %v3400 = vld [vmem:[%s13 + $0x160] sm:$0xff]
      %v3401 = vld [vmem:[%s13 + $0x168] sm:$0xff]
      %v3402 = vld [vmem:[%s13 + $0x170] sm:$0xff]
      %v3403 = vld [vmem:[%s13 + $0x178] sm:$0xff]
      %v3404 = vld [vmem:[%s13 + $0x180] sm:$0xff]
      %v3405 = vld [vmem:[%s13 + $0x188] sm:$0xff]
      %v3406 = vld [vmem:[%s13 + $0x190] sm:$0xff]
      %v3407 = vld [vmem:[%s13 + $0x198] sm:$0xff]
      %v3408 = vld [vmem:[%s13 + $0x1a0] sm:$0xff]
      %v3409 = vld [vmem:[%s13 + $0x1a8] sm:$0xff]
      %v3410 = vld [vmem:[%s13 + $0x1b0] sm:$0xff]
      %v3411 = vld [vmem:[%s13 + $0x1b8] sm:$0xff]
      %v3412 = vld [vmem:[%s13 + $0x1c0] sm:$0xff]
      %v3413 = vld [vmem:[%s13 + $0x1c8] sm:$0xff]
      %v3414 = vld [vmem:[%s13 + $0x1d0] sm:$0xff]
      %v3415 = vld [vmem:[%s13 + $0x1d8] sm:$0xff]
      %v3416 = vld [vmem:[%s13 + $0x1e0] sm:$0xff]
      %v3417 = vld [vmem:[%s13 + $0x1e8] sm:$0xff]
      %v3418 = vld [vmem:[%s13 + $0x1f0] sm:$0xff]
      %v3419 = vld [vmem:[%s13 + $0x1f8] sm:$0xff]
      %v3420 = vld [vmem:[%s13 + $0x200] sm:$0xff]
      %v3421 = vld [vmem:[%s13 + $0x208] sm:$0xff]
      %v3422 = vld [vmem:[%s13 + $0x210] sm:$0xff]
      %v3423 = vld [vmem:[%s13 + $0x218] sm:$0xff]
      %v3424 = vld [vmem:[%s13 + $0x220] sm:$0xff]
      %v3425 = vld [vmem:[%s13 + $0x228] sm:$0xff]
      %v3426 = vld [vmem:[%s13 + $0x230] sm:$0xff]
      %v3427 = vld [vmem:[%s13 + $0x238] sm:$0xff]
      %v3429 = vsel %vm2438, %v3356, 0
      %v3432 = vsel %vm2438, %v3357, 0
      %v3435 = vsel %vm2438, %v3358, 0
      %v3438 = vsel %vm2438, %v3359, 0
      %v3441 = vsel %vm2438, %v3360, 0
      %v3444 = vsel %vm2438, %v3361, 0
      %v3447 = vsel %vm2438, %v3362, 0
      %v3450 = vsel %vm2438, %v3363, 0
      %v3453 = vsel %vm2438, %v3364, 0
      %v3456 = vsel %vm2438, %v3365, 0
      %v3459 = vsel %vm2438, %v3366, 0
      %v3462 = vsel %vm2438, %v3367, 0
      %v3465 = vsel %vm2438, %v3368, 0
      %v3468 = vsel %vm2438, %v3369, 0
      %v3471 = vsel %vm2438, %v3370, 0
      %v3474 = vsel %vm2438, %v3371, 0
      %v3477 = vsel %vm2438, %v3372, 0
      %v3480 = vsel %vm2438, %v3373, 0
      %v3483 = vsel %vm2438, %v3374, 0
      %v3486 = vsel %vm2438, %v3375, 0
      %v3489 = vsel %vm2438, %v3376, 0
      %v3492 = vsel %vm2438, %v3377, 0
      %v3495 = vsel %vm2438, %v3378, 0
      %v3498 = vsel %vm2438, %v3379, 0
      %v3501 = vsel %vm2438, %v3380, 0
      %v3504 = vsel %vm2438, %v3381, 0
      %v3507 = vsel %vm2438, %v3382, 0
      %v3510 = vsel %vm2438, %v3383, 0
      %v3513 = vsel %vm2438, %v3384, 0
      %v3516 = vsel %vm2438, %v3385, 0
      %v3519 = vsel %vm2438, %v3386, 0
      %v3522 = vsel %vm2438, %v3387, 0
      %v3525 = vsel %vm2438, %v3388, 0
      %v3528 = vsel %vm2438, %v3389, 0
      %v3531 = vsel %vm2438, %v3390, 0
      %v3534 = vsel %vm2438, %v3391, 0
      %v3537 = vsel %vm2438, %v3392, 0
      %v3540 = vsel %vm2438, %v3393, 0
      %v3543 = vsel %vm2438, %v3394, 0
      %v3546 = vsel %vm2438, %v3395, 0
      %v3549 = vsel %vm2438, %v3396, 0
      %v3552 = vsel %vm2438, %v3397, 0
      %v3555 = vsel %vm2438, %v3398, 0
      %v3558 = vsel %vm2438, %v3399, 0
      %v3561 = vsel %vm2438, %v3400, 0
      %v3564 = vsel %vm2438, %v3401, 0
      %v3567 = vsel %vm2438, %v3402, 0
      %v3570 = vsel %vm2438, %v3403, 0
      %v3573 = vsel %vm2438, %v3404, 0
      %v3576 = vsel %vm2438, %v3405, 0
      %v3579 = vsel %vm2438, %v3406, 0
      %v3582 = vsel %vm2438, %v3407, 0
      %v3585 = vsel %vm2438, %v3408, 0
      %v3588 = vsel %vm2438, %v3409, 0
      %v3591 = vsel %vm2438, %v3410, 0
      %v3594 = vsel %vm2438, %v3411, 0
      %v3597 = vsel %vm2438, %v3412, 0
      %v3600 = vsel %vm2438, %v3413, 0
      %v3603 = vsel %vm2438, %v3414, 0
      %v3606 = vsel %vm2438, %v3415, 0
      %v3609 = vsel %vm2438, %v3416, 0
      %v3612 = vsel %vm2438, %v3417, 0
      %v3615 = vsel %vm2438, %v3418, 0
      %v3618 = vsel %vm2438, %v3419, 0
      %v3621 = vsel %vm2438, %v3420, 0
      %v3624 = vsel %vm2438, %v3421, 0
      %v3627 = vsel %vm2438, %v3422, 0
      %v3630 = vsel %vm2438, %v3423, 0
      %v3633 = vsel %vm2438, %v3424, 0
      %v3636 = vsel %vm2438, %v3425, 0
      %v3639 = vsel %vm2438, %v3426, 0
      %v3642 = vsel %vm2438, %v3427, 0
      %3644 = vmatpush.msra.mxu0 0.0
      %3645 = vmatpush.msra.mxu0 0.0
      %3646 = vmatpush.msra.mxu0 0.0
      %3647 = vmatpush.msra.mxu0 0.0
      %3648 = vmatpush.msra.mxu0 0.0
      %3649 = vmatpush.msra.mxu0 0.0
      %3650 = vmatpush.msra.mxu0 0.0
      %3651 = vmatpush.msra.mxu0 0.0
      %3652 = vmatpush.msra.mxu0 0.0
      %3653 = vmatpush.msra.mxu0 0.0
      %3654 = vmatpush.msra.mxu0 0.0
      %3655 = vmatpush.msra.mxu0 0.0
      %3656 = vmatpush.msra.mxu0 0.0
      %3657 = vmatpush.msra.mxu0 0.0
      %3658 = vmatpush.msra.mxu0 %v3355
      %3659 = vmatpush.msra.mxu0 %v3354
      %3660 = vmatmul.f32.gmra.mxu0 %v3429
      %v3661 = vpop.f32.mrf.mxu0
      %v3662 = vadd.f32 0.0, %v3661
      %3663 = vmatmul.f32.gmra.mxu0 %v3432
      %v3664 = vpop.f32.mrf.mxu0
      %v3665 = vadd.f32 0.0, %v3664
      %3666 = vmatmul.f32.gmra.mxu0 %v3435
      %v3667 = vpop.f32.mrf.mxu0
      %v3668 = vadd.f32 0.0, %v3667
      %3669 = vmatmul.f32.gmra.mxu0 %v3438
      %v3670 = vpop.f32.mrf.mxu0
      %v3671 = vadd.f32 0.0, %v3670
      %3672 = vmatmul.f32.gmra.mxu0 %v3441
      %v3673 = vpop.f32.mrf.mxu0
      %v3674 = vadd.f32 0.0, %v3673
      %3675 = vmatmul.f32.gmra.mxu0 %v3444
      %v3676 = vpop.f32.mrf.mxu0
      %v3677 = vadd.f32 0.0, %v3676
      %3678 = vmatmul.f32.gmra.mxu0 %v3447
      %v3679 = vpop.f32.mrf.mxu0
      %v3680 = vadd.f32 0.0, %v3679
      %3681 = vmatmul.f32.gmra.mxu0 %v3450
      %v3682 = vpop.f32.mrf.mxu0
      %v3683 = vadd.f32 0.0, %v3682
      %3684 = vmatmul.f32.gmra.mxu0 %v3453
      %v3685 = vpop.f32.mrf.mxu0
      %v3686 = vadd.f32 0.0, %v3685
      %3687 = vmatmul.f32.gmra.mxu0 %v3456
      %v3688 = vpop.f32.mrf.mxu0
      %v3689 = vadd.f32 0.0, %v3688
      %3690 = vmatmul.f32.gmra.mxu0 %v3459
      %v3691 = vpop.f32.mrf.mxu0
      %v3692 = vadd.f32 0.0, %v3691
      %3693 = vmatmul.f32.gmra.mxu0 %v3462
      %v3694 = vpop.f32.mrf.mxu0
      %v3695 = vadd.f32 0.0, %v3694
      %3696 = vmatmul.f32.gmra.mxu0 %v3465
      %v3697 = vpop.f32.mrf.mxu0
      %v3698 = vadd.f32 0.0, %v3697
      %3699 = vmatmul.f32.gmra.mxu0 %v3468
      %v3700 = vpop.f32.mrf.mxu0
      %v3701 = vadd.f32 0.0, %v3700
      %3702 = vmatmul.f32.gmra.mxu0 %v3471
      %v3703 = vpop.f32.mrf.mxu0
      %v3704 = vadd.f32 0.0, %v3703
      %3705 = vmatmul.f32.gmra.mxu0 %v3474
      %v3706 = vpop.f32.mrf.mxu0
      %v3707 = vadd.f32 0.0, %v3706
      %3708 = vmatmul.f32.gmra.mxu0 %v3477
      %v3709 = vpop.f32.mrf.mxu0
      %v3710 = vadd.f32 0.0, %v3709
      %3711 = vmatmul.f32.gmra.mxu0 %v3480
      %v3712 = vpop.f32.mrf.mxu0
      %v3713 = vadd.f32 0.0, %v3712
      %3714 = vmatmul.f32.gmra.mxu0 %v3483
      %v3715 = vpop.f32.mrf.mxu0
      %v3716 = vadd.f32 0.0, %v3715
      %3717 = vmatmul.f32.gmra.mxu0 %v3486
      %v3718 = vpop.f32.mrf.mxu0
      %v3719 = vadd.f32 0.0, %v3718
      %3720 = vmatmul.f32.gmra.mxu0 %v3489
      %v3721 = vpop.f32.mrf.mxu0
      %v3722 = vadd.f32 0.0, %v3721
      %3723 = vmatmul.f32.gmra.mxu0 %v3492
      %v3724 = vpop.f32.mrf.mxu0
      %v3725 = vadd.f32 0.0, %v3724
      %3726 = vmatmul.f32.gmra.mxu0 %v3495
      %v3727 = vpop.f32.mrf.mxu0
      %v3728 = vadd.f32 0.0, %v3727
      %3729 = vmatmul.f32.gmra.mxu0 %v3498
      %v3730 = vpop.f32.mrf.mxu0
      %v3731 = vadd.f32 0.0, %v3730
      %3732 = vmatmul.f32.gmra.mxu0 %v3501
      %v3733 = vpop.f32.mrf.mxu0
      %v3734 = vadd.f32 0.0, %v3733
      %3735 = vmatmul.f32.gmra.mxu0 %v3504
      %v3736 = vpop.f32.mrf.mxu0
      %v3737 = vadd.f32 0.0, %v3736
      %3738 = vmatmul.f32.gmra.mxu0 %v3507
      %v3739 = vpop.f32.mrf.mxu0
      %v3740 = vadd.f32 0.0, %v3739
      %3741 = vmatmul.f32.gmra.mxu0 %v3510
      %v3742 = vpop.f32.mrf.mxu0
      %v3743 = vadd.f32 0.0, %v3742
      %3744 = vmatmul.f32.gmra.mxu0 %v3513
      %v3745 = vpop.f32.mrf.mxu0
      %v3746 = vadd.f32 0.0, %v3745
      %3747 = vmatmul.f32.gmra.mxu0 %v3516
      %v3748 = vpop.f32.mrf.mxu0
      %v3749 = vadd.f32 0.0, %v3748
      %3750 = vmatmul.f32.gmra.mxu0 %v3519
      %v3751 = vpop.f32.mrf.mxu0
      %v3752 = vadd.f32 0.0, %v3751
      %3753 = vmatmul.f32.gmra.mxu0 %v3522
      %v3754 = vpop.f32.mrf.mxu0
      %v3755 = vadd.f32 0.0, %v3754
      %3756 = vmatmul.f32.gmra.mxu0 %v3525
      %v3757 = vpop.f32.mrf.mxu0
      %v3758 = vadd.f32 0.0, %v3757
      %3759 = vmatmul.f32.gmra.mxu0 %v3528
      %v3760 = vpop.f32.mrf.mxu0
      %v3761 = vadd.f32 0.0, %v3760
      %3762 = vmatmul.f32.gmra.mxu0 %v3531
      %v3763 = vpop.f32.mrf.mxu0
      %v3764 = vadd.f32 0.0, %v3763
      %3765 = vmatmul.f32.gmra.mxu0 %v3534
      %v3766 = vpop.f32.mrf.mxu0
      %v3767 = vadd.f32 0.0, %v3766
      %3768 = vmatmul.f32.gmra.mxu0 %v3537
      %v3769 = vpop.f32.mrf.mxu0
      %v3770 = vadd.f32 0.0, %v3769
      %3771 = vmatmul.f32.gmra.mxu0 %v3540
      %v3772 = vpop.f32.mrf.mxu0
      %v3773 = vadd.f32 0.0, %v3772
      %3774 = vmatmul.f32.gmra.mxu0 %v3543
      %v3775 = vpop.f32.mrf.mxu0
      %v3776 = vadd.f32 0.0, %v3775
      %3777 = vmatmul.f32.gmra.mxu0 %v3546
      %v3778 = vpop.f32.mrf.mxu0
      %v3779 = vadd.f32 0.0, %v3778
      %3780 = vmatmul.f32.gmra.mxu0 %v3549
      %v3781 = vpop.f32.mrf.mxu0
      %v3782 = vadd.f32 0.0, %v3781
      %3783 = vmatmul.f32.gmra.mxu0 %v3552
      %v3784 = vpop.f32.mrf.mxu0
      %v3785 = vadd.f32 0.0, %v3784
      %3786 = vmatmul.f32.gmra.mxu0 %v3555
      %v3787 = vpop.f32.mrf.mxu0
      %v3788 = vadd.f32 0.0, %v3787
      %3789 = vmatmul.f32.gmra.mxu0 %v3558
      %v3790 = vpop.f32.mrf.mxu0
      %v3791 = vadd.f32 0.0, %v3790
      %3792 = vmatmul.f32.gmra.mxu0 %v3561
      %v3793 = vpop.f32.mrf.mxu0
      %v3794 = vadd.f32 0.0, %v3793
      %3795 = vmatmul.f32.gmra.mxu0 %v3564
      %v3796 = vpop.f32.mrf.mxu0
      %v3797 = vadd.f32 0.0, %v3796
      %3798 = vmatmul.f32.gmra.mxu0 %v3567
      %v3799 = vpop.f32.mrf.mxu0
      %v3800 = vadd.f32 0.0, %v3799
      %3801 = vmatmul.f32.gmra.mxu0 %v3570
      %v3802 = vpop.f32.mrf.mxu0
      %v3803 = vadd.f32 0.0, %v3802
      %3804 = vmatmul.f32.gmra.mxu0 %v3573
      %v3805 = vpop.f32.mrf.mxu0
      %v3806 = vadd.f32 0.0, %v3805
      %3807 = vmatmul.f32.gmra.mxu0 %v3576
      %v3808 = vpop.f32.mrf.mxu0
      %v3809 = vadd.f32 0.0, %v3808
      %3810 = vmatmul.f32.gmra.mxu0 %v3579
      %v3811 = vpop.f32.mrf.mxu0
      %v3812 = vadd.f32 0.0, %v3811
      %3813 = vmatmul.f32.gmra.mxu0 %v3582
      %v3814 = vpop.f32.mrf.mxu0
      %v3815 = vadd.f32 0.0, %v3814
      %3816 = vmatmul.f32.gmra.mxu0 %v3585
      %v3817 = vpop.f32.mrf.mxu0
      %v3818 = vadd.f32 0.0, %v3817
      %3819 = vmatmul.f32.gmra.mxu0 %v3588
      %v3820 = vpop.f32.mrf.mxu0
      %v3821 = vadd.f32 0.0, %v3820
      %3822 = vmatmul.f32.gmra.mxu0 %v3591
      %v3823 = vpop.f32.mrf.mxu0
      %v3824 = vadd.f32 0.0, %v3823
      %3825 = vmatmul.f32.gmra.mxu0 %v3594
      %v3826 = vpop.f32.mrf.mxu0
      %v3827 = vadd.f32 0.0, %v3826
      %3828 = vmatmul.f32.gmra.mxu0 %v3597
      %v3829 = vpop.f32.mrf.mxu0
      %v3830 = vadd.f32 0.0, %v3829
      %3831 = vmatmul.f32.gmra.mxu0 %v3600
      %v3832 = vpop.f32.mrf.mxu0
      %v3833 = vadd.f32 0.0, %v3832
      %3834 = vmatmul.f32.gmra.mxu0 %v3603
      %v3835 = vpop.f32.mrf.mxu0
      %v3836 = vadd.f32 0.0, %v3835
      %3837 = vmatmul.f32.gmra.mxu0 %v3606
      %v3838 = vpop.f32.mrf.mxu0
      %v3839 = vadd.f32 0.0, %v3838
      %3840 = vmatmul.f32.gmra.mxu0 %v3609
      %v3841 = vpop.f32.mrf.mxu0
      %v3842 = vadd.f32 0.0, %v3841
      %3843 = vmatmul.f32.gmra.mxu0 %v3612
      %v3844 = vpop.f32.mrf.mxu0
      %v3845 = vadd.f32 0.0, %v3844
      %3846 = vmatmul.f32.gmra.mxu0 %v3615
      %v3847 = vpop.f32.mrf.mxu0
      %v3848 = vadd.f32 0.0, %v3847
      %3849 = vmatmul.f32.gmra.mxu0 %v3618
      %v3850 = vpop.f32.mrf.mxu0
      %v3851 = vadd.f32 0.0, %v3850
      %3852 = vmatmul.f32.gmra.mxu0 %v3621
      %v3853 = vpop.f32.mrf.mxu0
      %v3854 = vadd.f32 0.0, %v3853
      %3855 = vmatmul.f32.gmra.mxu0 %v3624
      %v3856 = vpop.f32.mrf.mxu0
      %v3857 = vadd.f32 0.0, %v3856
      %3858 = vmatmul.f32.gmra.mxu0 %v3627
      %v3859 = vpop.f32.mrf.mxu0
      %v3860 = vadd.f32 0.0, %v3859
      %3861 = vmatmul.f32.gmra.mxu0 %v3630
      %v3862 = vpop.f32.mrf.mxu0
      %v3863 = vadd.f32 0.0, %v3862
      %3864 = vmatmul.f32.gmra.mxu0 %v3633
      %v3865 = vpop.f32.mrf.mxu0
      %v3866 = vadd.f32 0.0, %v3865
      %3867 = vmatmul.f32.gmra.mxu0 %v3636
      %v3868 = vpop.f32.mrf.mxu0
      %v3869 = vadd.f32 0.0, %v3868
      %3870 = vmatmul.f32.gmra.mxu0 %v3639
      %v3871 = vpop.f32.mrf.mxu0
      %v3872 = vadd.f32 0.0, %v3871
      %3873 = vmatmul.f32.gmra.mxu0 %v3642
      %v3874 = vpop.f32.mrf.mxu0
      %v3875 = vadd.f32 0.0, %v3874
      %3876 = vdwg.mxu0
      %v3877 = vld [vmem:[%s14] sm:$0xff]
      %v3878 = vld [vmem:[%s14 + $0x8] sm:$0xff]
      %v3879 = vld [vmem:[%s14 + $0x10] sm:$0xff]
      %v3880 = vld [vmem:[%s14 + $0x18] sm:$0xff]
      %v3881 = vld [vmem:[%s14 + $0x20] sm:$0xff]
      %v3882 = vld [vmem:[%s14 + $0x28] sm:$0xff]
      %v3883 = vld [vmem:[%s14 + $0x30] sm:$0xff]
      %v3884 = vld [vmem:[%s14 + $0x38] sm:$0xff]
      %v3885 = vld [vmem:[%s14 + $0x40] sm:$0xff]
      %v3886 = vld [vmem:[%s14 + $0x48] sm:$0xff]
      %v3887 = vld [vmem:[%s14 + $0x50] sm:$0xff]
      %v3888 = vld [vmem:[%s14 + $0x58] sm:$0xff]
      %v3889 = vld [vmem:[%s14 + $0x60] sm:$0xff]
      %v3890 = vld [vmem:[%s14 + $0x68] sm:$0xff]
      %v3891 = vld [vmem:[%s14 + $0x70] sm:$0xff]
      %v3892 = vld [vmem:[%s14 + $0x78] sm:$0xff]
      %v3893 = vld [vmem:[%s14 + $0x80] sm:$0xff]
      %v3894 = vld [vmem:[%s14 + $0x88] sm:$0xff]
      %v3895 = vld [vmem:[%s14 + $0x90] sm:$0xff]
      %v3896 = vld [vmem:[%s14 + $0x98] sm:$0xff]
      %v3897 = vld [vmem:[%s14 + $0xa0] sm:$0xff]
      %v3898 = vld [vmem:[%s14 + $0xa8] sm:$0xff]
      %v3899 = vld [vmem:[%s14 + $0xb0] sm:$0xff]
      %v3900 = vld [vmem:[%s14 + $0xb8] sm:$0xff]
      %v3901 = vld [vmem:[%s14 + $0xc0] sm:$0xff]
      %v3902 = vld [vmem:[%s14 + $0xc8] sm:$0xff]
      %v3903 = vld [vmem:[%s14 + $0xd0] sm:$0xff]
      %v3904 = vld [vmem:[%s14 + $0xd8] sm:$0xff]
      %v3905 = vld [vmem:[%s14 + $0xe0] sm:$0xff]
      %v3906 = vld [vmem:[%s14 + $0xe8] sm:$0xff]
      %v3907 = vld [vmem:[%s14 + $0xf0] sm:$0xff]
      %v3908 = vld [vmem:[%s14 + $0xf8] sm:$0xff]
      %v3909 = vld [vmem:[%s14 + $0x100] sm:$0xff]
      %v3910 = vld [vmem:[%s14 + $0x108] sm:$0xff]
      %v3911 = vld [vmem:[%s14 + $0x110] sm:$0xff]
      %v3912 = vld [vmem:[%s14 + $0x118] sm:$0xff]
      %v3913 = vld [vmem:[%s14 + $0x120] sm:$0xff]
      %v3914 = vld [vmem:[%s14 + $0x128] sm:$0xff]
      %v3915 = vld [vmem:[%s14 + $0x130] sm:$0xff]
      %v3916 = vld [vmem:[%s14 + $0x138] sm:$0xff]
      %v3917 = vld [vmem:[%s14 + $0x140] sm:$0xff]
      %v3918 = vld [vmem:[%s14 + $0x148] sm:$0xff]
      %v3919 = vld [vmem:[%s14 + $0x150] sm:$0xff]
      %v3920 = vld [vmem:[%s14 + $0x158] sm:$0xff]
      %v3921 = vld [vmem:[%s14 + $0x160] sm:$0xff]
      %v3922 = vld [vmem:[%s14 + $0x168] sm:$0xff]
      %v3923 = vld [vmem:[%s14 + $0x170] sm:$0xff]
      %v3924 = vld [vmem:[%s14 + $0x178] sm:$0xff]
      %v3925 = vld [vmem:[%s14 + $0x180] sm:$0xff]
      %v3926 = vld [vmem:[%s14 + $0x188] sm:$0xff]
      %v3927 = vld [vmem:[%s14 + $0x190] sm:$0xff]
      %v3928 = vld [vmem:[%s14 + $0x198] sm:$0xff]
      %v3929 = vld [vmem:[%s14 + $0x1a0] sm:$0xff]
      %v3930 = vld [vmem:[%s14 + $0x1a8] sm:$0xff]
      %v3931 = vld [vmem:[%s14 + $0x1b0] sm:$0xff]
      %v3932 = vld [vmem:[%s14 + $0x1b8] sm:$0xff]
      %v3933 = vld [vmem:[%s14 + $0x1c0] sm:$0xff]
      %v3934 = vld [vmem:[%s14 + $0x1c8] sm:$0xff]
      %v3935 = vld [vmem:[%s14 + $0x1d0] sm:$0xff]
      %v3936 = vld [vmem:[%s14 + $0x1d8] sm:$0xff]
      %v3937 = vld [vmem:[%s14 + $0x1e0] sm:$0xff]
      %v3938 = vld [vmem:[%s14 + $0x1e8] sm:$0xff]
      %v3939 = vld [vmem:[%s14 + $0x1f0] sm:$0xff]
      %v3940 = vld [vmem:[%s14 + $0x1f8] sm:$0xff]
      %v3941 = vld [vmem:[%s14 + $0x200] sm:$0xff]
      %v3942 = vld [vmem:[%s14 + $0x208] sm:$0xff]
      %v3943 = vld [vmem:[%s14 + $0x210] sm:$0xff]
      %v3944 = vld [vmem:[%s14 + $0x218] sm:$0xff]
      %v3945 = vld [vmem:[%s14 + $0x220] sm:$0xff]
      %v3946 = vld [vmem:[%s14 + $0x228] sm:$0xff]
      %v3947 = vld [vmem:[%s14 + $0x230] sm:$0xff]
      %v3948 = vld [vmem:[%s14 + $0x238] sm:$0xff]
      %v3949 = vld [vmem:[%s14 + $0x240] sm:$0xff]
      %v3950 = vld [vmem:[%s14 + $0x248] sm:$0xff]
      %v3951 = vld [vmem:[%s14 + $0x250] sm:$0xff]
      %v3952 = vld [vmem:[%s14 + $0x258] sm:$0xff]
      %v3953 = vld [vmem:[%s14 + $0x260] sm:$0xff]
      %v3954 = vld [vmem:[%s14 + $0x268] sm:$0xff]
      %v3955 = vld [vmem:[%s14 + $0x270] sm:$0xff]
      %v3956 = vld [vmem:[%s14 + $0x278] sm:$0xff]
      %v3957 = vld [vmem:[%s14 + $0x280] sm:$0xff]
      %v3958 = vld [vmem:[%s14 + $0x288] sm:$0xff]
      %v3959 = vld [vmem:[%s14 + $0x290] sm:$0xff]
      %v3960 = vld [vmem:[%s14 + $0x298] sm:$0xff]
      %v3961 = vld [vmem:[%s14 + $0x2a0] sm:$0xff]
      %v3962 = vld [vmem:[%s14 + $0x2a8] sm:$0xff]
      %v3963 = vld [vmem:[%s14 + $0x2b0] sm:$0xff]
      %v3964 = vld [vmem:[%s14 + $0x2b8] sm:$0xff]
      %v3965 = vld [vmem:[%s14 + $0x2c0] sm:$0xff]
      %v3966 = vld [vmem:[%s14 + $0x2c8] sm:$0xff]
      %v3967 = vld [vmem:[%s14 + $0x2d0] sm:$0xff]
      %v3968 = vld [vmem:[%s14 + $0x2d8] sm:$0xff]
      %v3969 = vld [vmem:[%s14 + $0x2e0] sm:$0xff]
      %v3970 = vld [vmem:[%s14 + $0x2e8] sm:$0xff]
      %v3971 = vld [vmem:[%s14 + $0x2f0] sm:$0xff]
      %v3972 = vld [vmem:[%s14 + $0x2f8] sm:$0xff]
      %v3973 = vld [vmem:[%s14 + $0x300] sm:$0xff]
      %v3974 = vld [vmem:[%s14 + $0x308] sm:$0xff]
      %v3975 = vld [vmem:[%s14 + $0x310] sm:$0xff]
      %v3976 = vld [vmem:[%s14 + $0x318] sm:$0xff]
      %v3977 = vld [vmem:[%s14 + $0x320] sm:$0xff]
      %v3978 = vld [vmem:[%s14 + $0x328] sm:$0xff]
      %v3979 = vld [vmem:[%s14 + $0x330] sm:$0xff]
      %v3980 = vld [vmem:[%s14 + $0x338] sm:$0xff]
      %v3981 = vld [vmem:[%s14 + $0x340] sm:$0xff]
      %v3982 = vld [vmem:[%s14 + $0x348] sm:$0xff]
      %v3983 = vld [vmem:[%s14 + $0x350] sm:$0xff]
      %v3984 = vld [vmem:[%s14 + $0x358] sm:$0xff]
      %v3985 = vld [vmem:[%s14 + $0x360] sm:$0xff]
      %v3986 = vld [vmem:[%s14 + $0x368] sm:$0xff]
      %v3987 = vld [vmem:[%s14 + $0x370] sm:$0xff]
      %v3988 = vld [vmem:[%s14 + $0x378] sm:$0xff]
      %v3989 = vld [vmem:[%s14 + $0x380] sm:$0xff]
      %v3990 = vld [vmem:[%s14 + $0x388] sm:$0xff]
      %v3991 = vld [vmem:[%s14 + $0x390] sm:$0xff]
      %v3992 = vld [vmem:[%s14 + $0x398] sm:$0xff]
      %v3993 = vld [vmem:[%s14 + $0x3a0] sm:$0xff]
      %v3994 = vld [vmem:[%s14 + $0x3a8] sm:$0xff]
      %v3995 = vld [vmem:[%s14 + $0x3b0] sm:$0xff]
      %v3996 = vld [vmem:[%s14 + $0x3b8] sm:$0xff]
      %v3997 = vld [vmem:[%s14 + $0x3c0] sm:$0xff]
      %v3998 = vld [vmem:[%s14 + $0x3c8] sm:$0xff]
      %v3999 = vld [vmem:[%s14 + $0x3d0] sm:$0xff]
      %v4000 = vld [vmem:[%s14 + $0x3d8] sm:$0xff]
      %v4001 = vld [vmem:[%s14 + $0x3e0] sm:$0xff]
      %v4002 = vld [vmem:[%s14 + $0x3e8] sm:$0xff]
      %v4003 = vld [vmem:[%s14 + $0x3f0] sm:$0xff]
      %v4004 = vld [vmem:[%s14 + $0x3f8] sm:$0xff]
      %v4005 = vld [vmem:[%s14 + $0x400] sm:$0xff]
      %v4006 = vld [vmem:[%s14 + $0x408] sm:$0xff]
      %v4007 = vld [vmem:[%s14 + $0x410] sm:$0xff]
      %v4008 = vld [vmem:[%s14 + $0x418] sm:$0xff]
      %v4009 = vld [vmem:[%s14 + $0x420] sm:$0xff]
      %v4010 = vld [vmem:[%s14 + $0x428] sm:$0xff]
      %v4011 = vld [vmem:[%s14 + $0x430] sm:$0xff]
      %v4012 = vld [vmem:[%s14 + $0x438] sm:$0xff]
      %v4013 = vld [vmem:[%s14 + $0x440] sm:$0xff]
      %v4014 = vld [vmem:[%s14 + $0x448] sm:$0xff]
      %v4015 = vld [vmem:[%s14 + $0x450] sm:$0xff]
      %v4016 = vld [vmem:[%s14 + $0x458] sm:$0xff]
      %v4017 = vld [vmem:[%s14 + $0x460] sm:$0xff]
      %v4018 = vld [vmem:[%s14 + $0x468] sm:$0xff]
      %v4019 = vld [vmem:[%s14 + $0x470] sm:$0xff]
      %v4020 = vld [vmem:[%s14 + $0x478] sm:$0xff]
      %4021 = vmatpush.msra.mxu0 %v3908
      %4022 = vmatpush.msra.mxu0 %v3907
      %4023 = vmatpush.msra.mxu0 %v3906
      %4024 = vmatpush.msra.mxu0 %v3905
      %4025 = vmatpush.msra.mxu0 %v3904
      %4026 = vmatpush.msra.mxu0 %v3903
      %4027 = vmatpush.msra.mxu0 %v3902
      %4028 = vmatpush.msra.mxu0 %v3901
      %4029 = vmatpush.msra.mxu0 %v3900
      %4030 = vmatpush.msra.mxu0 %v3899
      %4031 = vmatpush.msra.mxu0 %v3898
      %4032 = vmatpush.msra.mxu0 %v3897
      %4033 = vmatpush.msra.mxu0 %v3896
      %4034 = vmatpush.msra.mxu0 %v3895
      %4035 = vmatpush.msra.mxu0 %v3894
      %4036 = vmatpush.msra.mxu0 %v3893
      %4037 = vmatmul.f32.gmra.mxu0 %v3686
      %v4038 = vpop.f32.mrf.mxu0
      %v4039 = vadd.f32 0.0, %v4038
      %4040 = vmatmul.f32.gmra.mxu0 %v3689
      %v4041 = vpop.f32.mrf.mxu0
      %v4042 = vadd.f32 0.0, %v4041
      %4043 = vmatmul.f32.gmra.mxu0 %v3692
      %v4044 = vpop.f32.mrf.mxu0
      %v4045 = vadd.f32 0.0, %v4044
      %4046 = vmatmul.f32.gmra.mxu0 %v3695
      %v4047 = vpop.f32.mrf.mxu0
      %v4048 = vadd.f32 0.0, %v4047
      %4049 = vmatmul.f32.gmra.mxu0 %v3698
      %v4050 = vpop.f32.mrf.mxu0
      %v4051 = vadd.f32 0.0, %v4050
      %4052 = vmatmul.f32.gmra.mxu0 %v3701
      %v4053 = vpop.f32.mrf.mxu0
      %v4054 = vadd.f32 0.0, %v4053
      %4055 = vmatmul.f32.gmra.mxu0 %v3704
      %v4056 = vpop.f32.mrf.mxu0
      %v4057 = vadd.f32 0.0, %v4056
      %4058 = vmatmul.f32.gmra.mxu0 %v3707
      %v4059 = vpop.f32.mrf.mxu0
      %v4060 = vadd.f32 0.0, %v4059
      %4061 = vdwg.mxu0
      %4062 = vmatpush.msra.mxu0 %v3892
      %4063 = vmatpush.msra.mxu0 %v3891
      %4064 = vmatpush.msra.mxu0 %v3890
      %4065 = vmatpush.msra.mxu0 %v3889
      %4066 = vmatpush.msra.mxu0 %v3888
      %4067 = vmatpush.msra.mxu0 %v3887
      %4068 = vmatpush.msra.mxu0 %v3886
      %4069 = vmatpush.msra.mxu0 %v3885
      %4070 = vmatpush.msra.mxu0 %v3884
      %4071 = vmatpush.msra.mxu0 %v3883
      %4072 = vmatpush.msra.mxu0 %v3882
      %4073 = vmatpush.msra.mxu0 %v3881
      %4074 = vmatpush.msra.mxu0 %v3880
      %4075 = vmatpush.msra.mxu0 %v3879
      %4076 = vmatpush.msra.mxu0 %v3878
      %4077 = vmatpush.msra.mxu0 %v3877
      %4078 = vmatmul.f32.gmra.mxu0 %v3662
      %v4079 = vpop.f32.mrf.mxu0
      %v4080 = vadd.f32 %v4039, %v4079
      %4081 = vmatmul.f32.gmra.mxu0 %v3665
      %v4082 = vpop.f32.mrf.mxu0
      %v4083 = vadd.f32 %v4042, %v4082
      %4084 = vmatmul.f32.gmra.mxu0 %v3668
      %v4085 = vpop.f32.mrf.mxu0
      %v4086 = vadd.f32 %v4045, %v4085
      %4087 = vmatmul.f32.gmra.mxu0 %v3671
      %v4088 = vpop.f32.mrf.mxu0
      %v4089 = vadd.f32 %v4048, %v4088
      %4090 = vmatmul.f32.gmra.mxu0 %v3674
      %v4091 = vpop.f32.mrf.mxu0
      %v4092 = vadd.f32 %v4051, %v4091
      %4093 = vmatmul.f32.gmra.mxu0 %v3677
      %v4094 = vpop.f32.mrf.mxu0
      %v4095 = vadd.f32 %v4054, %v4094
      %4096 = vmatmul.f32.gmra.mxu0 %v3680
      %v4097 = vpop.f32.mrf.mxu0
      %v4098 = vadd.f32 %v4057, %v4097
      %4099 = vmatmul.f32.gmra.mxu0 %v3683
      %v4100 = vpop.f32.mrf.mxu0
      %v4101 = vadd.f32 %v4060, %v4100
      %4102 = vdwg.mxu0
      %4103 = vmatpush.msra.mxu0 %v3924
      %4104 = vmatpush.msra.mxu0 %v3923
      %4105 = vmatpush.msra.mxu0 %v3922
      %4106 = vmatpush.msra.mxu0 %v3921
      %4107 = vmatpush.msra.mxu0 %v3920
      %4108 = vmatpush.msra.mxu0 %v3919
      %4109 = vmatpush.msra.mxu0 %v3918
      %4110 = vmatpush.msra.mxu0 %v3917
      %4111 = vmatpush.msra.mxu0 %v3916
      %4112 = vmatpush.msra.mxu0 %v3915
      %4113 = vmatpush.msra.mxu0 %v3914
      %4114 = vmatpush.msra.mxu0 %v3913
      %4115 = vmatpush.msra.mxu0 %v3912
      %4116 = vmatpush.msra.mxu0 %v3911
      %4117 = vmatpush.msra.mxu0 %v3910
      %4118 = vmatpush.msra.mxu0 %v3909
      %4119 = vmatmul.f32.gmra.mxu0 %v3710
      %v4120 = vpop.f32.mrf.mxu0
      %v4121 = vadd.f32 0.0, %v4120
      %4122 = vmatmul.f32.gmra.mxu0 %v3713
      %v4123 = vpop.f32.mrf.mxu0
      %v4124 = vadd.f32 0.0, %v4123
      %4125 = vmatmul.f32.gmra.mxu0 %v3716
      %v4126 = vpop.f32.mrf.mxu0
      %v4127 = vadd.f32 0.0, %v4126
      %4128 = vmatmul.f32.gmra.mxu0 %v3719
      %v4129 = vpop.f32.mrf.mxu0
      %v4130 = vadd.f32 0.0, %v4129
      %4131 = vmatmul.f32.gmra.mxu0 %v3722
      %v4132 = vpop.f32.mrf.mxu0
      %v4133 = vadd.f32 0.0, %v4132
      %4134 = vmatmul.f32.gmra.mxu0 %v3725
      %v4135 = vpop.f32.mrf.mxu0
      %v4136 = vadd.f32 0.0, %v4135
      %4137 = vmatmul.f32.gmra.mxu0 %v3728
      %v4138 = vpop.f32.mrf.mxu0
      %v4139 = vadd.f32 0.0, %v4138
      %4140 = vmatmul.f32.gmra.mxu0 %v3731
      %v4141 = vpop.f32.mrf.mxu0
      %v4142 = vadd.f32 0.0, %v4141
      %4143 = vdwg.mxu0
      %v4144 = vadd.f32 %v4080, %v4121
      %v4145 = vadd.f32 %v4083, %v4124
      %v4146 = vadd.f32 %v4086, %v4127
      %v4147 = vadd.f32 %v4089, %v4130
      %v4148 = vadd.f32 %v4092, %v4133
      %v4149 = vadd.f32 %v4095, %v4136
      %v4150 = vadd.f32 %v4098, %v4139
      %v4151 = vadd.f32 %v4101, %v4142
      %4152 = vmatpush.msra.mxu0 %v3940
      %4153 = vmatpush.msra.mxu0 %v3939
      %4154 = vmatpush.msra.mxu0 %v3938
      %4155 = vmatpush.msra.mxu0 %v3937
      %4156 = vmatpush.msra.mxu0 %v3936
      %4157 = vmatpush.msra.mxu0 %v3935
      %4158 = vmatpush.msra.mxu0 %v3934
      %4159 = vmatpush.msra.mxu0 %v3933
      %4160 = vmatpush.msra.mxu0 %v3932
      %4161 = vmatpush.msra.mxu0 %v3931
      %4162 = vmatpush.msra.mxu0 %v3930
      %4163 = vmatpush.msra.mxu0 %v3929
      %4164 = vmatpush.msra.mxu0 %v3928
      %4165 = vmatpush.msra.mxu0 %v3927
      %4166 = vmatpush.msra.mxu0 %v3926
      %4167 = vmatpush.msra.mxu0 %v3925
      %4168 = vmatmul.f32.gmra.mxu0 %v3734
      %v4169 = vpop.f32.mrf.mxu0
      %v4170 = vadd.f32 0.0, %v4169
      %4171 = vmatmul.f32.gmra.mxu0 %v3737
      %v4172 = vpop.f32.mrf.mxu0
      %v4173 = vadd.f32 0.0, %v4172
      %4174 = vmatmul.f32.gmra.mxu0 %v3740
      %v4175 = vpop.f32.mrf.mxu0
      %v4176 = vadd.f32 0.0, %v4175
      %4177 = vmatmul.f32.gmra.mxu0 %v3743
      %v4178 = vpop.f32.mrf.mxu0
      %v4179 = vadd.f32 0.0, %v4178
      %4180 = vmatmul.f32.gmra.mxu0 %v3746
      %v4181 = vpop.f32.mrf.mxu0
      %v4182 = vadd.f32 0.0, %v4181
      %4183 = vmatmul.f32.gmra.mxu0 %v3749
      %v4184 = vpop.f32.mrf.mxu0
      %v4185 = vadd.f32 0.0, %v4184
      %4186 = vmatmul.f32.gmra.mxu0 %v3752
      %v4187 = vpop.f32.mrf.mxu0
      %v4188 = vadd.f32 0.0, %v4187
      %4189 = vmatmul.f32.gmra.mxu0 %v3755
      %v4190 = vpop.f32.mrf.mxu0
      %v4191 = vadd.f32 0.0, %v4190
      %4192 = vdwg.mxu0
      %v4193 = vadd.f32 %v4144, %v4170
      %v4194 = vadd.f32 %v4145, %v4173
      %v4195 = vadd.f32 %v4146, %v4176
      %v4196 = vadd.f32 %v4147, %v4179
      %v4197 = vadd.f32 %v4148, %v4182
      %v4198 = vadd.f32 %v4149, %v4185
      %v4199 = vadd.f32 %v4150, %v4188
      %v4200 = vadd.f32 %v4151, %v4191
      %4201 = vmatpush.msra.mxu0 %v3956
      %4202 = vmatpush.msra.mxu0 %v3955
      %4203 = vmatpush.msra.mxu0 %v3954
      %4204 = vmatpush.msra.mxu0 %v3953
      %4205 = vmatpush.msra.mxu0 %v3952
      %4206 = vmatpush.msra.mxu0 %v3951
      %4207 = vmatpush.msra.mxu0 %v3950
      %4208 = vmatpush.msra.mxu0 %v3949
      %4209 = vmatpush.msra.mxu0 %v3948
      %4210 = vmatpush.msra.mxu0 %v3947
      %4211 = vmatpush.msra.mxu0 %v3946
      %4212 = vmatpush.msra.mxu0 %v3945
      %4213 = vmatpush.msra.mxu0 %v3944
      %4214 = vmatpush.msra.mxu0 %v3943
      %4215 = vmatpush.msra.mxu0 %v3942
      %4216 = vmatpush.msra.mxu0 %v3941
      %4217 = vmatmul.f32.gmra.mxu0 %v3758
      %v4218 = vpop.f32.mrf.mxu0
      %v4219 = vadd.f32 0.0, %v4218
      %4220 = vmatmul.f32.gmra.mxu0 %v3761
      %v4221 = vpop.f32.mrf.mxu0
      %v4222 = vadd.f32 0.0, %v4221
      %4223 = vmatmul.f32.gmra.mxu0 %v3764
      %v4224 = vpop.f32.mrf.mxu0
      %v4225 = vadd.f32 0.0, %v4224
      %4226 = vmatmul.f32.gmra.mxu0 %v3767
      %v4227 = vpop.f32.mrf.mxu0
      %v4228 = vadd.f32 0.0, %v4227
      %4229 = vmatmul.f32.gmra.mxu0 %v3770
      %v4230 = vpop.f32.mrf.mxu0
      %v4231 = vadd.f32 0.0, %v4230
      %4232 = vmatmul.f32.gmra.mxu0 %v3773
      %v4233 = vpop.f32.mrf.mxu0
      %v4234 = vadd.f32 0.0, %v4233
      %4235 = vmatmul.f32.gmra.mxu0 %v3776
      %v4236 = vpop.f32.mrf.mxu0
      %v4237 = vadd.f32 0.0, %v4236
      %4238 = vmatmul.f32.gmra.mxu0 %v3779
      %v4239 = vpop.f32.mrf.mxu0
      %v4240 = vadd.f32 0.0, %v4239
      %4241 = vdwg.mxu0
      %v4242 = vadd.f32 %v4193, %v4219
      %v4243 = vadd.f32 %v4194, %v4222
      %v4244 = vadd.f32 %v4195, %v4225
      %v4245 = vadd.f32 %v4196, %v4228
      %v4246 = vadd.f32 %v4197, %v4231
      %v4247 = vadd.f32 %v4198, %v4234
      %v4248 = vadd.f32 %v4199, %v4237
      %v4249 = vadd.f32 %v4200, %v4240
      %4250 = vmatpush.msra.mxu0 %v3972
      %4251 = vmatpush.msra.mxu0 %v3971
      %4252 = vmatpush.msra.mxu0 %v3970
      %4253 = vmatpush.msra.mxu0 %v3969
      %4254 = vmatpush.msra.mxu0 %v3968
      %4255 = vmatpush.msra.mxu0 %v3967
      %4256 = vmatpush.msra.mxu0 %v3966
      %4257 = vmatpush.msra.mxu0 %v3965
      %4258 = vmatpush.msra.mxu0 %v3964
      %4259 = vmatpush.msra.mxu0 %v3963
      %4260 = vmatpush.msra.mxu0 %v3962
      %4261 = vmatpush.msra.mxu0 %v3961
      %4262 = vmatpush.msra.mxu0 %v3960
      %4263 = vmatpush.msra.mxu0 %v3959
      %4264 = vmatpush.msra.mxu0 %v3958
      %4265 = vmatpush.msra.mxu0 %v3957
      %4266 = vmatmul.f32.gmra.mxu0 %v3782
      %v4267 = vpop.f32.mrf.mxu0
      %v4268 = vadd.f32 0.0, %v4267
      %4269 = vmatmul.f32.gmra.mxu0 %v3785
      %v4270 = vpop.f32.mrf.mxu0
      %v4271 = vadd.f32 0.0, %v4270
      %4272 = vmatmul.f32.gmra.mxu0 %v3788
      %v4273 = vpop.f32.mrf.mxu0
      %v4274 = vadd.f32 0.0, %v4273
      %4275 = vmatmul.f32.gmra.mxu0 %v3791
      %v4276 = vpop.f32.mrf.mxu0
      %v4277 = vadd.f32 0.0, %v4276
      %4278 = vmatmul.f32.gmra.mxu0 %v3794
      %v4279 = vpop.f32.mrf.mxu0
      %v4280 = vadd.f32 0.0, %v4279
      %4281 = vmatmul.f32.gmra.mxu0 %v3797
      %v4282 = vpop.f32.mrf.mxu0
      %v4283 = vadd.f32 0.0, %v4282
      %4284 = vmatmul.f32.gmra.mxu0 %v3800
      %v4285 = vpop.f32.mrf.mxu0
      %v4286 = vadd.f32 0.0, %v4285
      %4287 = vmatmul.f32.gmra.mxu0 %v3803
      %v4288 = vpop.f32.mrf.mxu0
      %v4289 = vadd.f32 0.0, %v4288
      %4290 = vdwg.mxu0
      %v4291 = vadd.f32 %v4242, %v4268
      %v4292 = vadd.f32 %v4243, %v4271
      %v4293 = vadd.f32 %v4244, %v4274
      %v4294 = vadd.f32 %v4245, %v4277
      %v4295 = vadd.f32 %v4246, %v4280
      %v4296 = vadd.f32 %v4247, %v4283
      %v4297 = vadd.f32 %v4248, %v4286
      %v4298 = vadd.f32 %v4249, %v4289
      %4299 = vmatpush.msra.mxu0 %v3988
      %4300 = vmatpush.msra.mxu0 %v3987
      %4301 = vmatpush.msra.mxu0 %v3986
      %4302 = vmatpush.msra.mxu0 %v3985
      %4303 = vmatpush.msra.mxu0 %v3984
      %4304 = vmatpush.msra.mxu0 %v3983
      %4305 = vmatpush.msra.mxu0 %v3982
      %4306 = vmatpush.msra.mxu0 %v3981
      %4307 = vmatpush.msra.mxu0 %v3980
      %4308 = vmatpush.msra.mxu0 %v3979
      %4309 = vmatpush.msra.mxu0 %v3978
      %4310 = vmatpush.msra.mxu0 %v3977
      %4311 = vmatpush.msra.mxu0 %v3976
      %4312 = vmatpush.msra.mxu0 %v3975
      %4313 = vmatpush.msra.mxu0 %v3974
      %4314 = vmatpush.msra.mxu0 %v3973
      %4315 = vmatmul.f32.gmra.mxu0 %v3806
      %v4316 = vpop.f32.mrf.mxu0
      %v4317 = vadd.f32 0.0, %v4316
      %4318 = vmatmul.f32.gmra.mxu0 %v3809
      %v4319 = vpop.f32.mrf.mxu0
      %v4320 = vadd.f32 0.0, %v4319
      %4321 = vmatmul.f32.gmra.mxu0 %v3812
      %v4322 = vpop.f32.mrf.mxu0
      %v4323 = vadd.f32 0.0, %v4322
      %4324 = vmatmul.f32.gmra.mxu0 %v3815
      %v4325 = vpop.f32.mrf.mxu0
      %v4326 = vadd.f32 0.0, %v4325
      %4327 = vmatmul.f32.gmra.mxu0 %v3818
      %v4328 = vpop.f32.mrf.mxu0
      %v4329 = vadd.f32 0.0, %v4328
      %4330 = vmatmul.f32.gmra.mxu0 %v3821
      %v4331 = vpop.f32.mrf.mxu0
      %v4332 = vadd.f32 0.0, %v4331
      %4333 = vmatmul.f32.gmra.mxu0 %v3824
      %v4334 = vpop.f32.mrf.mxu0
      %v4335 = vadd.f32 0.0, %v4334
      %4336 = vmatmul.f32.gmra.mxu0 %v3827
      %v4337 = vpop.f32.mrf.mxu0
      %v4338 = vadd.f32 0.0, %v4337
      %4339 = vdwg.mxu0
      %v4340 = vadd.f32 %v4291, %v4317
      %v4341 = vadd.f32 %v4292, %v4320
      %v4342 = vadd.f32 %v4293, %v4323
      %v4343 = vadd.f32 %v4294, %v4326
      %v4344 = vadd.f32 %v4295, %v4329
      %v4345 = vadd.f32 %v4296, %v4332
      %v4346 = vadd.f32 %v4297, %v4335
      %v4347 = vadd.f32 %v4298, %v4338
      %4348 = vmatpush.msra.mxu0 %v4004
      %4349 = vmatpush.msra.mxu0 %v4003
      %4350 = vmatpush.msra.mxu0 %v4002
      %4351 = vmatpush.msra.mxu0 %v4001
      %4352 = vmatpush.msra.mxu0 %v4000
      %4353 = vmatpush.msra.mxu0 %v3999
      %4354 = vmatpush.msra.mxu0 %v3998
      %4355 = vmatpush.msra.mxu0 %v3997
      %4356 = vmatpush.msra.mxu0 %v3996
      %4357 = vmatpush.msra.mxu0 %v3995
      %4358 = vmatpush.msra.mxu0 %v3994
      %4359 = vmatpush.msra.mxu0 %v3993
      %4360 = vmatpush.msra.mxu0 %v3992
      %4361 = vmatpush.msra.mxu0 %v3991
      %4362 = vmatpush.msra.mxu0 %v3990
      %4363 = vmatpush.msra.mxu0 %v3989
      %4364 = vmatmul.f32.gmra.mxu0 %v3830
      %v4365 = vpop.f32.mrf.mxu0
      %v4366 = vadd.f32 0.0, %v4365
      %4367 = vmatmul.f32.gmra.mxu0 %v3833
      %v4368 = vpop.f32.mrf.mxu0
      %v4369 = vadd.f32 0.0, %v4368
      %4370 = vmatmul.f32.gmra.mxu0 %v3836
      %v4371 = vpop.f32.mrf.mxu0
      %v4372 = vadd.f32 0.0, %v4371
      %4373 = vmatmul.f32.gmra.mxu0 %v3839
      %v4374 = vpop.f32.mrf.mxu0
      %v4375 = vadd.f32 0.0, %v4374
      %4376 = vmatmul.f32.gmra.mxu0 %v3842
      %v4377 = vpop.f32.mrf.mxu0
      %v4378 = vadd.f32 0.0, %v4377
      %4379 = vmatmul.f32.gmra.mxu0 %v3845
      %v4380 = vpop.f32.mrf.mxu0
      %v4381 = vadd.f32 0.0, %v4380
      %4382 = vmatmul.f32.gmra.mxu0 %v3848
      %v4383 = vpop.f32.mrf.mxu0
      %v4384 = vadd.f32 0.0, %v4383
      %4385 = vmatmul.f32.gmra.mxu0 %v3851
      %v4386 = vpop.f32.mrf.mxu0
      %v4387 = vadd.f32 0.0, %v4386
      %4388 = vdwg.mxu0
      %v4389 = vadd.f32 %v4340, %v4366
      %v4390 = vadd.f32 %v4341, %v4369
      %v4391 = vadd.f32 %v4342, %v4372
      %v4392 = vadd.f32 %v4343, %v4375
      %v4393 = vadd.f32 %v4344, %v4378
      %v4394 = vadd.f32 %v4345, %v4381
      %v4395 = vadd.f32 %v4346, %v4384
      %v4396 = vadd.f32 %v4347, %v4387
      %4397 = vmatpush.msra.mxu0 %v4020
      %4398 = vmatpush.msra.mxu0 %v4019
      %4399 = vmatpush.msra.mxu0 %v4018
      %4400 = vmatpush.msra.mxu0 %v4017
      %4401 = vmatpush.msra.mxu0 %v4016
      %4402 = vmatpush.msra.mxu0 %v4015
      %4403 = vmatpush.msra.mxu0 %v4014
      %4404 = vmatpush.msra.mxu0 %v4013
      %4405 = vmatpush.msra.mxu0 %v4012
      %4406 = vmatpush.msra.mxu0 %v4011
      %4407 = vmatpush.msra.mxu0 %v4010
      %4408 = vmatpush.msra.mxu0 %v4009
      %4409 = vmatpush.msra.mxu0 %v4008
      %4410 = vmatpush.msra.mxu0 %v4007
      %4411 = vmatpush.msra.mxu0 %v4006
      %4412 = vmatpush.msra.mxu0 %v4005
      %4413 = vmatmul.f32.gmra.mxu0 %v3854
      %v4414 = vpop.f32.mrf.mxu0
      %v4415 = vadd.f32 0.0, %v4414
      %4416 = vmatmul.f32.gmra.mxu0 %v3857
      %v4417 = vpop.f32.mrf.mxu0
      %v4418 = vadd.f32 0.0, %v4417
      %4419 = vmatmul.f32.gmra.mxu0 %v3860
      %v4420 = vpop.f32.mrf.mxu0
      %v4421 = vadd.f32 0.0, %v4420
      %4422 = vmatmul.f32.gmra.mxu0 %v3863
      %v4423 = vpop.f32.mrf.mxu0
      %v4424 = vadd.f32 0.0, %v4423
      %4425 = vmatmul.f32.gmra.mxu0 %v3866
      %v4426 = vpop.f32.mrf.mxu0
      %v4427 = vadd.f32 0.0, %v4426
      %4428 = vmatmul.f32.gmra.mxu0 %v3869
      %v4429 = vpop.f32.mrf.mxu0
      %v4430 = vadd.f32 0.0, %v4429
      %4431 = vmatmul.f32.gmra.mxu0 %v3872
      %v4432 = vpop.f32.mrf.mxu0
      %v4433 = vadd.f32 0.0, %v4432
      %4434 = vmatmul.f32.gmra.mxu0 %v3875
      %v4435 = vpop.f32.mrf.mxu0
      %v4436 = vadd.f32 0.0, %v4435
      %4437 = vdwg.mxu0
      %v4438 = vadd.f32 %v4389, %v4415
      %v4439 = vadd.f32 %v4390, %v4418
      %v4440 = vadd.f32 %v4391, %v4421
      %v4441 = vadd.f32 %v4392, %v4424
      %v4442 = vadd.f32 %v4393, %v4427
      %v4443 = vadd.f32 %v4394, %v4430
      %v4444 = vadd.f32 %v4395, %v4433
      %v4445 = vadd.f32 %v4396, %v4436
      %v4446 = vld [vmem:[%s15] sm:$0x1]
      %v4448 = vperm.slane %v4446, 0
      %v4450 = vadd.f32 %v4438, %v4448
      %v4451 = vadd.f32 %v4439, %v4448
      %v4452 = vadd.f32 %v4440, %v4448
      %v4453 = vadd.f32 %v4441, %v4448
      %v4454 = vadd.f32 %v4442, %v4448
      %v4455 = vadd.f32 %v4443, %v4448
      %v4456 = vadd.f32 %v4444, %v4448
      %v4457 = vadd.f32 %v4445, %v4448
      %v4458 = vmax.f32 %v4450, 0.0
      %v4459 = vmax.f32 %v4451, 0.0
      %v4460 = vmax.f32 %v4452, 0.0
      %v4461 = vmax.f32 %v4453, 0.0
      %v4462 = vmax.f32 %v4454, 0.0
      %v4463 = vmax.f32 %v4455, 0.0
      %v4464 = vmax.f32 %v4456, 0.0
      %v4465 = vmax.f32 %v4457, 0.0
      %v4466 = vld [vmem:[%s16] sm:$0xff]
      %v4467 = vld [vmem:[%s16 + $0x8] sm:$0xff]
      %v4468 = vld [vmem:[%s16 + $0x10] sm:$0xff]
      %v4469 = vld [vmem:[%s16 + $0x18] sm:$0xff]
      %v4470 = vld [vmem:[%s16 + $0x20] sm:$0xff]
      %v4471 = vld [vmem:[%s16 + $0x28] sm:$0xff]
      %v4472 = vld [vmem:[%s16 + $0x30] sm:$0xff]
      %v4473 = vld [vmem:[%s16 + $0x38] sm:$0xff]
      %v4474 = vld [vmem:[%s16 + $0x40] sm:$0xff]
      %v4475 = vld [vmem:[%s16 + $0x48] sm:$0xff]
      %v4476 = vld [vmem:[%s16 + $0x50] sm:$0xff]
      %v4477 = vld [vmem:[%s16 + $0x58] sm:$0xff]
      %v4478 = vld [vmem:[%s16 + $0x60] sm:$0xff]
      %v4479 = vld [vmem:[%s16 + $0x68] sm:$0xff]
      %v4480 = vld [vmem:[%s16 + $0x70] sm:$0xff]
      %v4481 = vld [vmem:[%s16 + $0x78] sm:$0xff]
      %v4482 = vld [vmem:[%s16 + $0x80] sm:$0xff]
      %v4483 = vld [vmem:[%s16 + $0x88] sm:$0xff]
      %v4484 = vld [vmem:[%s16 + $0x90] sm:$0xff]
      %v4485 = vld [vmem:[%s16 + $0x98] sm:$0xff]
      %v4486 = vld [vmem:[%s16 + $0xa0] sm:$0xff]
      %v4487 = vld [vmem:[%s16 + $0xa8] sm:$0xff]
      %v4488 = vld [vmem:[%s16 + $0xb0] sm:$0xff]
      %v4489 = vld [vmem:[%s16 + $0xb8] sm:$0xff]
      %v4490 = vld [vmem:[%s16 + $0xc0] sm:$0xff]
      %v4491 = vld [vmem:[%s16 + $0xc8] sm:$0xff]
      %v4492 = vld [vmem:[%s16 + $0xd0] sm:$0xff]
      %v4493 = vld [vmem:[%s16 + $0xd8] sm:$0xff]
      %v4494 = vld [vmem:[%s16 + $0xe0] sm:$0xff]
      %v4495 = vld [vmem:[%s16 + $0xe8] sm:$0xff]
      %v4496 = vld [vmem:[%s16 + $0xf0] sm:$0xff]
      %v4497 = vld [vmem:[%s16 + $0xf8] sm:$0xff]
      %v4498 = vld [vmem:[%s16 + $0x100] sm:$0xff]
      %v4499 = vld [vmem:[%s16 + $0x108] sm:$0xff]
      %v4500 = vld [vmem:[%s16 + $0x110] sm:$0xff]
      %v4501 = vld [vmem:[%s16 + $0x118] sm:$0xff]
      %v4502 = vld [vmem:[%s16 + $0x120] sm:$0xff]
      %v4503 = vld [vmem:[%s16 + $0x128] sm:$0xff]
      %v4504 = vld [vmem:[%s16 + $0x130] sm:$0xff]
      %v4505 = vld [vmem:[%s16 + $0x138] sm:$0xff]
      %v4506 = vld [vmem:[%s16 + $0x140] sm:$0xff]
      %v4507 = vld [vmem:[%s16 + $0x148] sm:$0xff]
      %v4508 = vld [vmem:[%s16 + $0x150] sm:$0xff]
      %v4509 = vld [vmem:[%s16 + $0x158] sm:$0xff]
      %v4510 = vld [vmem:[%s16 + $0x160] sm:$0xff]
      %v4511 = vld [vmem:[%s16 + $0x168] sm:$0xff]
      %v4512 = vld [vmem:[%s16 + $0x170] sm:$0xff]
      %v4513 = vld [vmem:[%s16 + $0x178] sm:$0xff]
      %v4514 = vld [vmem:[%s16 + $0x180] sm:$0xff]
      %v4515 = vld [vmem:[%s16 + $0x188] sm:$0xff]
      %v4516 = vld [vmem:[%s16 + $0x190] sm:$0xff]
      %v4517 = vld [vmem:[%s16 + $0x198] sm:$0xff]
      %v4518 = vld [vmem:[%s16 + $0x1a0] sm:$0xff]
      %v4519 = vld [vmem:[%s16 + $0x1a8] sm:$0xff]
      %v4520 = vld [vmem:[%s16 + $0x1b0] sm:$0xff]
      %v4521 = vld [vmem:[%s16 + $0x1b8] sm:$0xff]
      %v4522 = vld [vmem:[%s16 + $0x1c0] sm:$0xff]
      %v4523 = vld [vmem:[%s16 + $0x1c8] sm:$0xff]
      %v4524 = vld [vmem:[%s16 + $0x1d0] sm:$0xff]
      %v4525 = vld [vmem:[%s16 + $0x1d8] sm:$0xff]
      %v4526 = vld [vmem:[%s16 + $0x1e0] sm:$0xff]
      %v4527 = vld [vmem:[%s16 + $0x1e8] sm:$0xff]
      %v4528 = vld [vmem:[%s16 + $0x1f0] sm:$0xff]
      %v4529 = vld [vmem:[%s16 + $0x1f8] sm:$0xff]
      %v4530 = vld [vmem:[%s16 + $0x200] sm:$0xff]
      %v4531 = vld [vmem:[%s16 + $0x208] sm:$0xff]
      %v4532 = vld [vmem:[%s16 + $0x210] sm:$0xff]
      %v4533 = vld [vmem:[%s16 + $0x218] sm:$0xff]
      %v4534 = vld [vmem:[%s16 + $0x220] sm:$0xff]
      %v4535 = vld [vmem:[%s16 + $0x228] sm:$0xff]
      %v4536 = vld [vmem:[%s16 + $0x230] sm:$0xff]
      %v4537 = vld [vmem:[%s16 + $0x238] sm:$0xff]
      %v4538 = vld [vmem:[%s16 + $0x240] sm:$0xff]
      %v4539 = vld [vmem:[%s16 + $0x248] sm:$0xff]
      %v4540 = vld [vmem:[%s16 + $0x250] sm:$0xff]
      %v4541 = vld [vmem:[%s16 + $0x258] sm:$0xff]
      %v4542 = vld [vmem:[%s16 + $0x260] sm:$0xff]
      %v4543 = vld [vmem:[%s16 + $0x268] sm:$0xff]
      %v4544 = vld [vmem:[%s16 + $0x270] sm:$0xff]
      %v4545 = vld [vmem:[%s16 + $0x278] sm:$0xff]
      %v4546 = vld [vmem:[%s16 + $0x280] sm:$0xff]
      %v4547 = vld [vmem:[%s16 + $0x288] sm:$0xff]
      %v4548 = vld [vmem:[%s16 + $0x290] sm:$0xff]
      %v4549 = vld [vmem:[%s16 + $0x298] sm:$0xff]
      %v4550 = vld [vmem:[%s16 + $0x2a0] sm:$0xff]
      %v4551 = vld [vmem:[%s16 + $0x2a8] sm:$0xff]
      %v4552 = vld [vmem:[%s16 + $0x2b0] sm:$0xff]
      %v4553 = vld [vmem:[%s16 + $0x2b8] sm:$0xff]
      %v4554 = vld [vmem:[%s16 + $0x2c0] sm:$0xff]
      %v4555 = vld [vmem:[%s16 + $0x2c8] sm:$0xff]
      %v4556 = vld [vmem:[%s16 + $0x2d0] sm:$0xff]
      %v4557 = vld [vmem:[%s16 + $0x2d8] sm:$0xff]
      %v4558 = vld [vmem:[%s16 + $0x2e0] sm:$0xff]
      %v4559 = vld [vmem:[%s16 + $0x2e8] sm:$0xff]
      %v4560 = vld [vmem:[%s16 + $0x2f0] sm:$0xff]
      %v4561 = vld [vmem:[%s16 + $0x2f8] sm:$0xff]
      %v4562 = vld [vmem:[%s16 + $0x300] sm:$0xff]
      %v4563 = vld [vmem:[%s16 + $0x308] sm:$0xff]
      %v4564 = vld [vmem:[%s16 + $0x310] sm:$0xff]
      %v4565 = vld [vmem:[%s16 + $0x318] sm:$0xff]
      %v4566 = vld [vmem:[%s16 + $0x320] sm:$0xff]
      %v4567 = vld [vmem:[%s16 + $0x328] sm:$0xff]
      %v4568 = vld [vmem:[%s16 + $0x330] sm:$0xff]
      %v4569 = vld [vmem:[%s16 + $0x338] sm:$0xff]
      %v4570 = vld [vmem:[%s16 + $0x340] sm:$0xff]
      %v4571 = vld [vmem:[%s16 + $0x348] sm:$0xff]
      %v4572 = vld [vmem:[%s16 + $0x350] sm:$0xff]
      %v4573 = vld [vmem:[%s16 + $0x358] sm:$0xff]
      %v4574 = vld [vmem:[%s16 + $0x360] sm:$0xff]
      %v4575 = vld [vmem:[%s16 + $0x368] sm:$0xff]
      %v4576 = vld [vmem:[%s16 + $0x370] sm:$0xff]
      %v4577 = vld [vmem:[%s16 + $0x378] sm:$0xff]
      %v4578 = vld [vmem:[%s16 + $0x380] sm:$0xff]
      %v4579 = vld [vmem:[%s16 + $0x388] sm:$0xff]
      %v4580 = vld [vmem:[%s16 + $0x390] sm:$0xff]
      %v4581 = vld [vmem:[%s16 + $0x398] sm:$0xff]
      %v4582 = vld [vmem:[%s16 + $0x3a0] sm:$0xff]
      %v4583 = vld [vmem:[%s16 + $0x3a8] sm:$0xff]
      %v4584 = vld [vmem:[%s16 + $0x3b0] sm:$0xff]
      %v4585 = vld [vmem:[%s16 + $0x3b8] sm:$0xff]
      %v4586 = vld [vmem:[%s16 + $0x3c0] sm:$0xff]
      %v4587 = vld [vmem:[%s16 + $0x3c8] sm:$0xff]
      %v4588 = vld [vmem:[%s16 + $0x3d0] sm:$0xff]
      %v4589 = vld [vmem:[%s16 + $0x3d8] sm:$0xff]
      %v4590 = vld [vmem:[%s16 + $0x3e0] sm:$0xff]
      %v4591 = vld [vmem:[%s16 + $0x3e8] sm:$0xff]
      %v4592 = vld [vmem:[%s16 + $0x3f0] sm:$0xff]
      %v4593 = vld [vmem:[%s16 + $0x3f8] sm:$0xff]
      %v4594 = vld [vmem:[%s16 + $0x400] sm:$0xff]
      %v4595 = vld [vmem:[%s16 + $0x408] sm:$0xff]
      %v4596 = vld [vmem:[%s16 + $0x410] sm:$0xff]
      %v4597 = vld [vmem:[%s16 + $0x418] sm:$0xff]
      %v4598 = vld [vmem:[%s16 + $0x420] sm:$0xff]
      %v4599 = vld [vmem:[%s16 + $0x428] sm:$0xff]
      %v4600 = vld [vmem:[%s16 + $0x430] sm:$0xff]
      %v4601 = vld [vmem:[%s16 + $0x438] sm:$0xff]
      %v4602 = vld [vmem:[%s16 + $0x440] sm:$0xff]
      %v4603 = vld [vmem:[%s16 + $0x448] sm:$0xff]
      %v4604 = vld [vmem:[%s16 + $0x450] sm:$0xff]
      %v4605 = vld [vmem:[%s16 + $0x458] sm:$0xff]
      %v4606 = vld [vmem:[%s16 + $0x460] sm:$0xff]
      %v4607 = vld [vmem:[%s16 + $0x468] sm:$0xff]
      %v4608 = vld [vmem:[%s16 + $0x470] sm:$0xff]
      %v4609 = vld [vmem:[%s16 + $0x478] sm:$0xff]
      %v4610 = vld [vmem:[%s16 + $0x480] sm:$0xff]
      %v4611 = vld [vmem:[%s16 + $0x488] sm:$0xff]
      %v4612 = vld [vmem:[%s16 + $0x490] sm:$0xff]
      %v4613 = vld [vmem:[%s16 + $0x498] sm:$0xff]
      %v4614 = vld [vmem:[%s16 + $0x4a0] sm:$0xff]
      %v4615 = vld [vmem:[%s16 + $0x4a8] sm:$0xff]
      %v4616 = vld [vmem:[%s16 + $0x4b0] sm:$0xff]
      %v4617 = vld [vmem:[%s16 + $0x4b8] sm:$0xff]
      %v4618 = vld [vmem:[%s16 + $0x4c0] sm:$0xff]
      %v4619 = vld [vmem:[%s16 + $0x4c8] sm:$0xff]
      %v4620 = vld [vmem:[%s16 + $0x4d0] sm:$0xff]
      %v4621 = vld [vmem:[%s16 + $0x4d8] sm:$0xff]
      %v4622 = vld [vmem:[%s16 + $0x4e0] sm:$0xff]
      %v4623 = vld [vmem:[%s16 + $0x4e8] sm:$0xff]
      %v4624 = vld [vmem:[%s16 + $0x4f0] sm:$0xff]
      %v4625 = vld [vmem:[%s16 + $0x4f8] sm:$0xff]
      %v4626 = vld [vmem:[%s16 + $0x500] sm:$0xff]
      %v4627 = vld [vmem:[%s16 + $0x508] sm:$0xff]
      %v4628 = vld [vmem:[%s16 + $0x510] sm:$0xff]
      %v4629 = vld [vmem:[%s16 + $0x518] sm:$0xff]
      %v4630 = vld [vmem:[%s16 + $0x520] sm:$0xff]
      %v4631 = vld [vmem:[%s16 + $0x528] sm:$0xff]
      %v4632 = vld [vmem:[%s16 + $0x530] sm:$0xff]
      %v4633 = vld [vmem:[%s16 + $0x538] sm:$0xff]
      %v4634 = vld [vmem:[%s16 + $0x540] sm:$0xff]
      %v4635 = vld [vmem:[%s16 + $0x548] sm:$0xff]
      %v4636 = vld [vmem:[%s16 + $0x550] sm:$0xff]
      %v4637 = vld [vmem:[%s16 + $0x558] sm:$0xff]
      %v4638 = vld [vmem:[%s16 + $0x560] sm:$0xff]
      %v4639 = vld [vmem:[%s16 + $0x568] sm:$0xff]
      %v4640 = vld [vmem:[%s16 + $0x570] sm:$0xff]
      %v4641 = vld [vmem:[%s16 + $0x578] sm:$0xff]
      %v4642 = vld [vmem:[%s16 + $0x580] sm:$0xff]
      %v4643 = vld [vmem:[%s16 + $0x588] sm:$0xff]
      %v4644 = vld [vmem:[%s16 + $0x590] sm:$0xff]
      %v4645 = vld [vmem:[%s16 + $0x598] sm:$0xff]
      %v4646 = vld [vmem:[%s16 + $0x5a0] sm:$0xff]
      %v4647 = vld [vmem:[%s16 + $0x5a8] sm:$0xff]
      %v4648 = vld [vmem:[%s16 + $0x5b0] sm:$0xff]
      %v4649 = vld [vmem:[%s16 + $0x5b8] sm:$0xff]
      %v4650 = vld [vmem:[%s16 + $0x5c0] sm:$0xff]
      %v4651 = vld [vmem:[%s16 + $0x5c8] sm:$0xff]
      %v4652 = vld [vmem:[%s16 + $0x5d0] sm:$0xff]
      %v4653 = vld [vmem:[%s16 + $0x5d8] sm:$0xff]
      %v4654 = vld [vmem:[%s16 + $0x5e0] sm:$0xff]
      %v4655 = vld [vmem:[%s16 + $0x5e8] sm:$0xff]
      %v4656 = vld [vmem:[%s16 + $0x5f0] sm:$0xff]
      %v4657 = vld [vmem:[%s16 + $0x5f8] sm:$0xff]
      %v4658 = vld [vmem:[%s16 + $0x600] sm:$0xff]
      %v4659 = vld [vmem:[%s16 + $0x608] sm:$0xff]
      %v4660 = vld [vmem:[%s16 + $0x610] sm:$0xff]
      %v4661 = vld [vmem:[%s16 + $0x618] sm:$0xff]
      %v4662 = vld [vmem:[%s16 + $0x620] sm:$0xff]
      %v4663 = vld [vmem:[%s16 + $0x628] sm:$0xff]
      %v4664 = vld [vmem:[%s16 + $0x630] sm:$0xff]
      %v4665 = vld [vmem:[%s16 + $0x638] sm:$0xff]
      %v4666 = vld [vmem:[%s16 + $0x640] sm:$0xff]
      %v4667 = vld [vmem:[%s16 + $0x648] sm:$0xff]
      %v4668 = vld [vmem:[%s16 + $0x650] sm:$0xff]
      %v4669 = vld [vmem:[%s16 + $0x658] sm:$0xff]
      %v4670 = vld [vmem:[%s16 + $0x660] sm:$0xff]
      %v4671 = vld [vmem:[%s16 + $0x668] sm:$0xff]
      %v4672 = vld [vmem:[%s16 + $0x670] sm:$0xff]
      %v4673 = vld [vmem:[%s16 + $0x678] sm:$0xff]
      %v4674 = vld [vmem:[%s16 + $0x680] sm:$0xff]
      %v4675 = vld [vmem:[%s16 + $0x688] sm:$0xff]
      %v4676 = vld [vmem:[%s16 + $0x690] sm:$0xff]
      %v4677 = vld [vmem:[%s16 + $0x698] sm:$0xff]
      %v4678 = vld [vmem:[%s16 + $0x6a0] sm:$0xff]
      %v4679 = vld [vmem:[%s16 + $0x6a8] sm:$0xff]
      %v4680 = vld [vmem:[%s16 + $0x6b0] sm:$0xff]
      %v4681 = vld [vmem:[%s16 + $0x6b8] sm:$0xff]
      %v4682 = vld [vmem:[%s16 + $0x6c0] sm:$0xff]
      %v4683 = vld [vmem:[%s16 + $0x6c8] sm:$0xff]
      %v4684 = vld [vmem:[%s16 + $0x6d0] sm:$0xff]
      %v4685 = vld [vmem:[%s16 + $0x6d8] sm:$0xff]
      %v4686 = vld [vmem:[%s16 + $0x6e0] sm:$0xff]
      %v4687 = vld [vmem:[%s16 + $0x6e8] sm:$0xff]
      %v4688 = vld [vmem:[%s16 + $0x6f0] sm:$0xff]
      %v4689 = vld [vmem:[%s16 + $0x6f8] sm:$0xff]
      %v4690 = vld [vmem:[%s16 + $0x700] sm:$0xff]
      %v4691 = vld [vmem:[%s16 + $0x708] sm:$0xff]
      %v4692 = vld [vmem:[%s16 + $0x710] sm:$0xff]
      %v4693 = vld [vmem:[%s16 + $0x718] sm:$0xff]
      %v4694 = vld [vmem:[%s16 + $0x720] sm:$0xff]
      %v4695 = vld [vmem:[%s16 + $0x728] sm:$0xff]
      %v4696 = vld [vmem:[%s16 + $0x730] sm:$0xff]
      %v4697 = vld [vmem:[%s16 + $0x738] sm:$0xff]
      %v4698 = vld [vmem:[%s16 + $0x740] sm:$0xff]
      %v4699 = vld [vmem:[%s16 + $0x748] sm:$0xff]
      %v4700 = vld [vmem:[%s16 + $0x750] sm:$0xff]
      %v4701 = vld [vmem:[%s16 + $0x758] sm:$0xff]
      %v4702 = vld [vmem:[%s16 + $0x760] sm:$0xff]
      %v4703 = vld [vmem:[%s16 + $0x768] sm:$0xff]
      %v4704 = vld [vmem:[%s16 + $0x770] sm:$0xff]
      %v4705 = vld [vmem:[%s16 + $0x778] sm:$0xff]
      %v4706 = vld [vmem:[%s16 + $0x780] sm:$0xff]
      %v4707 = vld [vmem:[%s16 + $0x788] sm:$0xff]
      %v4708 = vld [vmem:[%s16 + $0x790] sm:$0xff]
      %v4709 = vld [vmem:[%s16 + $0x798] sm:$0xff]
      %v4710 = vld [vmem:[%s16 + $0x7a0] sm:$0xff]
      %v4711 = vld [vmem:[%s16 + $0x7a8] sm:$0xff]
      %v4712 = vld [vmem:[%s16 + $0x7b0] sm:$0xff]
      %v4713 = vld [vmem:[%s16 + $0x7b8] sm:$0xff]
      %v4714 = vld [vmem:[%s16 + $0x7c0] sm:$0xff]
      %v4715 = vld [vmem:[%s16 + $0x7c8] sm:$0xff]
      %v4716 = vld [vmem:[%s16 + $0x7d0] sm:$0xff]
      %v4717 = vld [vmem:[%s16 + $0x7d8] sm:$0xff]
      %v4718 = vld [vmem:[%s16 + $0x7e0] sm:$0xff]
      %v4719 = vld [vmem:[%s16 + $0x7e8] sm:$0xff]
      %v4720 = vld [vmem:[%s16 + $0x7f0] sm:$0xff]
      %v4721 = vld [vmem:[%s16 + $0x7f8] sm:$0xff]
      %v4722 = vld [vmem:[%s16 + $0x800] sm:$0xff]
      %v4723 = vld [vmem:[%s16 + $0x808] sm:$0xff]
      %v4724 = vld [vmem:[%s16 + $0x810] sm:$0xff]
      %v4725 = vld [vmem:[%s16 + $0x818] sm:$0xff]
      %v4726 = vld [vmem:[%s16 + $0x820] sm:$0xff]
      %v4727 = vld [vmem:[%s16 + $0x828] sm:$0xff]
      %v4728 = vld [vmem:[%s16 + $0x830] sm:$0xff]
      %v4729 = vld [vmem:[%s16 + $0x838] sm:$0xff]
      %v4730 = vld [vmem:[%s16 + $0x840] sm:$0xff]
      %v4731 = vld [vmem:[%s16 + $0x848] sm:$0xff]
      %v4732 = vld [vmem:[%s16 + $0x850] sm:$0xff]
      %v4733 = vld [vmem:[%s16 + $0x858] sm:$0xff]
      %v4734 = vld [vmem:[%s16 + $0x860] sm:$0xff]
      %v4735 = vld [vmem:[%s16 + $0x868] sm:$0xff]
      %v4736 = vld [vmem:[%s16 + $0x870] sm:$0xff]
      %v4737 = vld [vmem:[%s16 + $0x878] sm:$0xff]
      %v4738 = vld [vmem:[%s16 + $0x880] sm:$0xff]
      %v4739 = vld [vmem:[%s16 + $0x888] sm:$0xff]
      %v4740 = vld [vmem:[%s16 + $0x890] sm:$0xff]
      %v4741 = vld [vmem:[%s16 + $0x898] sm:$0xff]
      %v4742 = vld [vmem:[%s16 + $0x8a0] sm:$0xff]
      %v4743 = vld [vmem:[%s16 + $0x8a8] sm:$0xff]
      %v4744 = vld [vmem:[%s16 + $0x8b0] sm:$0xff]
      %v4745 = vld [vmem:[%s16 + $0x8b8] sm:$0xff]
      %v4746 = vld [vmem:[%s16 + $0x8c0] sm:$0xff]
      %v4747 = vld [vmem:[%s16 + $0x8c8] sm:$0xff]
      %v4748 = vld [vmem:[%s16 + $0x8d0] sm:$0xff]
      %v4749 = vld [vmem:[%s16 + $0x8d8] sm:$0xff]
      %v4750 = vld [vmem:[%s16 + $0x8e0] sm:$0xff]
      %v4751 = vld [vmem:[%s16 + $0x8e8] sm:$0xff]
      %v4752 = vld [vmem:[%s16 + $0x8f0] sm:$0xff]
      %v4753 = vld [vmem:[%s16 + $0x8f8] sm:$0xff]
      %v4755 = vsel %vm1934, %v4466, 0
      %v4758 = vsel %vm1934, %v4467, 0
      %v4761 = vsel %vm1934, %v4468, 0
      %v4764 = vsel %vm1934, %v4469, 0
      %v4767 = vsel %vm1934, %v4470, 0
      %v4770 = vsel %vm1934, %v4471, 0
      %v4773 = vsel %vm1934, %v4472, 0
      %v4776 = vsel %vm1934, %v4473, 0
      %v4779 = vsel %vm1934, %v4474, 0
      %v4782 = vsel %vm1934, %v4475, 0
      %v4785 = vsel %vm1934, %v4476, 0
      %v4788 = vsel %vm1934, %v4477, 0
      %v4791 = vsel %vm1934, %v4478, 0
      %v4794 = vsel %vm1934, %v4479, 0
      %v4797 = vsel %vm1934, %v4480, 0
      %v4800 = vsel %vm1934, %v4481, 0
      %v4803 = vsel %vm1934, %v4482, 0
      %v4806 = vsel %vm1934, %v4483, 0
      %v4809 = vsel %vm1934, %v4484, 0
      %v4812 = vsel %vm1934, %v4485, 0
      %v4815 = vsel %vm1934, %v4486, 0
      %v4818 = vsel %vm1934, %v4487, 0
      %v4821 = vsel %vm1934, %v4488, 0
      %v4824 = vsel %vm1934, %v4489, 0
      %v4827 = vsel %vm1934, %v4490, 0
      %v4830 = vsel %vm1934, %v4491, 0
      %v4833 = vsel %vm1934, %v4492, 0
      %v4836 = vsel %vm1934, %v4493, 0
      %v4839 = vsel %vm1934, %v4494, 0
      %v4842 = vsel %vm1934, %v4495, 0
      %v4845 = vsel %vm1934, %v4496, 0
      %v4848 = vsel %vm1934, %v4497, 0
      %v4851 = vsel %vm1934, %v4498, 0
      %v4854 = vsel %vm1934, %v4499, 0
      %v4857 = vsel %vm1934, %v4500, 0
      %v4860 = vsel %vm1934, %v4501, 0
      %v4863 = vsel %vm1934, %v4502, 0
      %v4866 = vsel %vm1934, %v4503, 0
      %v4869 = vsel %vm1934, %v4504, 0
      %v4872 = vsel %vm1934, %v4505, 0
      %v4875 = vsel %vm1934, %v4506, 0
      %v4878 = vsel %vm1934, %v4507, 0
      %v4881 = vsel %vm1934, %v4508, 0
      %v4884 = vsel %vm1934, %v4509, 0
      %v4887 = vsel %vm1934, %v4510, 0
      %v4890 = vsel %vm1934, %v4511, 0
      %v4893 = vsel %vm1934, %v4512, 0
      %v4896 = vsel %vm1934, %v4513, 0
      %v4899 = vsel %vm1934, %v4514, 0
      %v4902 = vsel %vm1934, %v4515, 0
      %v4905 = vsel %vm1934, %v4516, 0
      %v4908 = vsel %vm1934, %v4517, 0
      %v4911 = vsel %vm1934, %v4518, 0
      %v4914 = vsel %vm1934, %v4519, 0
      %v4917 = vsel %vm1934, %v4520, 0
      %v4920 = vsel %vm1934, %v4521, 0
      %v4923 = vsel %vm1934, %v4522, 0
      %v4926 = vsel %vm1934, %v4523, 0
      %v4929 = vsel %vm1934, %v4524, 0
      %v4932 = vsel %vm1934, %v4525, 0
      %v4935 = vsel %vm1934, %v4526, 0
      %v4938 = vsel %vm1934, %v4527, 0
      %v4941 = vsel %vm1934, %v4528, 0
      %v4944 = vsel %vm1934, %v4529, 0
      %v4947 = vsel %vm1934, %v4530, 0
      %v4950 = vsel %vm1934, %v4531, 0
      %v4953 = vsel %vm1934, %v4532, 0
      %v4956 = vsel %vm1934, %v4533, 0
      %v4959 = vsel %vm1934, %v4534, 0
      %v4962 = vsel %vm1934, %v4535, 0
      %v4965 = vsel %vm1934, %v4536, 0
      %v4968 = vsel %vm1934, %v4537, 0
      %v4971 = vsel %vm1934, %v4538, 0
      %v4974 = vsel %vm1934, %v4539, 0
      %v4977 = vsel %vm1934, %v4540, 0
      %v4980 = vsel %vm1934, %v4541, 0
      %v4983 = vsel %vm1934, %v4542, 0
      %v4986 = vsel %vm1934, %v4543, 0
      %v4989 = vsel %vm1934, %v4544, 0
      %v4992 = vsel %vm1934, %v4545, 0
      %v4995 = vsel %vm1934, %v4546, 0
      %v4998 = vsel %vm1934, %v4547, 0
      %v5001 = vsel %vm1934, %v4548, 0
      %v5004 = vsel %vm1934, %v4549, 0
      %v5007 = vsel %vm1934, %v4550, 0
      %v5010 = vsel %vm1934, %v4551, 0
      %v5013 = vsel %vm1934, %v4552, 0
      %v5016 = vsel %vm1934, %v4553, 0
      %v5019 = vsel %vm1934, %v4554, 0
      %v5022 = vsel %vm1934, %v4555, 0
      %v5025 = vsel %vm1934, %v4556, 0
      %v5028 = vsel %vm1934, %v4557, 0
      %v5031 = vsel %vm1934, %v4558, 0
      %v5034 = vsel %vm1934, %v4559, 0
      %v5037 = vsel %vm1934, %v4560, 0
      %v5040 = vsel %vm1934, %v4561, 0
      %v5043 = vsel %vm1934, %v4562, 0
      %v5046 = vsel %vm1934, %v4563, 0
      %v5049 = vsel %vm1934, %v4564, 0
      %v5052 = vsel %vm1934, %v4565, 0
      %v5055 = vsel %vm1934, %v4566, 0
      %v5058 = vsel %vm1934, %v4567, 0
      %v5061 = vsel %vm1934, %v4568, 0
      %v5064 = vsel %vm1934, %v4569, 0
      %v5067 = vsel %vm1934, %v4570, 0
      %v5070 = vsel %vm1934, %v4571, 0
      %v5073 = vsel %vm1934, %v4572, 0
      %v5076 = vsel %vm1934, %v4573, 0
      %v5079 = vsel %vm1934, %v4574, 0
      %v5082 = vsel %vm1934, %v4575, 0
      %v5085 = vsel %vm1934, %v4576, 0
      %v5088 = vsel %vm1934, %v4577, 0
      %v5091 = vsel %vm1934, %v4578, 0
      %v5094 = vsel %vm1934, %v4579, 0
      %v5097 = vsel %vm1934, %v4580, 0
      %v5100 = vsel %vm1934, %v4581, 0
      %v5103 = vsel %vm1934, %v4582, 0
      %v5106 = vsel %vm1934, %v4583, 0
      %v5109 = vsel %vm1934, %v4584, 0
      %v5112 = vsel %vm1934, %v4585, 0
      %v5115 = vsel %vm1934, %v4586, 0
      %v5118 = vsel %vm1934, %v4587, 0
      %v5121 = vsel %vm1934, %v4588, 0
      %v5124 = vsel %vm1934, %v4589, 0
      %v5127 = vsel %vm1934, %v4590, 0
      %v5130 = vsel %vm1934, %v4591, 0
      %v5133 = vsel %vm1934, %v4592, 0
      %v5136 = vsel %vm1934, %v4593, 0
      %v5139 = vsel %vm1934, %v4594, 0
      %v5142 = vsel %vm1934, %v4595, 0
      %v5145 = vsel %vm1934, %v4596, 0
      %v5148 = vsel %vm1934, %v4597, 0
      %v5151 = vsel %vm1934, %v4598, 0
      %v5154 = vsel %vm1934, %v4599, 0
      %v5157 = vsel %vm1934, %v4600, 0
      %v5160 = vsel %vm1934, %v4601, 0
      %v5163 = vsel %vm1934, %v4602, 0
      %v5166 = vsel %vm1934, %v4603, 0
      %v5169 = vsel %vm1934, %v4604, 0
      %v5172 = vsel %vm1934, %v4605, 0
      %v5175 = vsel %vm1934, %v4606, 0
      %v5178 = vsel %vm1934, %v4607, 0
      %v5181 = vsel %vm1934, %v4608, 0
      %v5184 = vsel %vm1934, %v4609, 0
      %v5187 = vsel %vm1934, %v4610, 0
      %v5190 = vsel %vm1934, %v4611, 0
      %v5193 = vsel %vm1934, %v4612, 0
      %v5196 = vsel %vm1934, %v4613, 0
      %v5199 = vsel %vm1934, %v4614, 0
      %v5202 = vsel %vm1934, %v4615, 0
      %v5205 = vsel %vm1934, %v4616, 0
      %v5208 = vsel %vm1934, %v4617, 0
      %v5211 = vsel %vm1934, %v4618, 0
      %v5214 = vsel %vm1934, %v4619, 0
      %v5217 = vsel %vm1934, %v4620, 0
      %v5220 = vsel %vm1934, %v4621, 0
      %v5223 = vsel %vm1934, %v4622, 0
      %v5226 = vsel %vm1934, %v4623, 0
      %v5229 = vsel %vm1934, %v4624, 0
      %v5232 = vsel %vm1934, %v4625, 0
      %v5235 = vsel %vm1934, %v4626, 0
      %v5238 = vsel %vm1934, %v4627, 0
      %v5241 = vsel %vm1934, %v4628, 0
      %v5244 = vsel %vm1934, %v4629, 0
      %v5247 = vsel %vm1934, %v4630, 0
      %v5250 = vsel %vm1934, %v4631, 0
      %v5253 = vsel %vm1934, %v4632, 0
      %v5256 = vsel %vm1934, %v4633, 0
      %v5259 = vsel %vm1934, %v4634, 0
      %v5262 = vsel %vm1934, %v4635, 0
      %v5265 = vsel %vm1934, %v4636, 0
      %v5268 = vsel %vm1934, %v4637, 0
      %v5271 = vsel %vm1934, %v4638, 0
      %v5274 = vsel %vm1934, %v4639, 0
      %v5277 = vsel %vm1934, %v4640, 0
      %v5280 = vsel %vm1934, %v4641, 0
      %v5283 = vsel %vm1934, %v4642, 0
      %v5286 = vsel %vm1934, %v4643, 0
      %v5289 = vsel %vm1934, %v4644, 0
      %v5292 = vsel %vm1934, %v4645, 0
      %v5295 = vsel %vm1934, %v4646, 0
      %v5298 = vsel %vm1934, %v4647, 0
      %v5301 = vsel %vm1934, %v4648, 0
      %v5304 = vsel %vm1934, %v4649, 0
      %v5307 = vsel %vm1934, %v4650, 0
      %v5310 = vsel %vm1934, %v4651, 0
      %v5313 = vsel %vm1934, %v4652, 0
      %v5316 = vsel %vm1934, %v4653, 0
      %v5319 = vsel %vm1934, %v4654, 0
      %v5322 = vsel %vm1934, %v4655, 0
      %v5325 = vsel %vm1934, %v4656, 0
      %v5328 = vsel %vm1934, %v4657, 0
      %v5331 = vsel %vm1934, %v4658, 0
      %v5334 = vsel %vm1934, %v4659, 0
      %v5337 = vsel %vm1934, %v4660, 0
      %v5340 = vsel %vm1934, %v4661, 0
      %v5343 = vsel %vm1934, %v4662, 0
      %v5346 = vsel %vm1934, %v4663, 0
      %v5349 = vsel %vm1934, %v4664, 0
      %v5352 = vsel %vm1934, %v4665, 0
      %v5355 = vsel %vm1934, %v4666, 0
      %v5358 = vsel %vm1934, %v4667, 0
      %v5361 = vsel %vm1934, %v4668, 0
      %v5364 = vsel %vm1934, %v4669, 0
      %v5367 = vsel %vm1934, %v4670, 0
      %v5370 = vsel %vm1934, %v4671, 0
      %v5373 = vsel %vm1934, %v4672, 0
      %v5376 = vsel %vm1934, %v4673, 0
      %v5379 = vsel %vm1934, %v4674, 0
      %v5382 = vsel %vm1934, %v4675, 0
      %v5385 = vsel %vm1934, %v4676, 0
      %v5388 = vsel %vm1934, %v4677, 0
      %v5391 = vsel %vm1934, %v4678, 0
      %v5394 = vsel %vm1934, %v4679, 0
      %v5397 = vsel %vm1934, %v4680, 0
      %v5400 = vsel %vm1934, %v4681, 0
      %v5403 = vsel %vm1934, %v4682, 0
      %v5406 = vsel %vm1934, %v4683, 0
      %v5409 = vsel %vm1934, %v4684, 0
      %v5412 = vsel %vm1934, %v4685, 0
      %v5415 = vsel %vm1934, %v4686, 0
      %v5418 = vsel %vm1934, %v4687, 0
      %v5421 = vsel %vm1934, %v4688, 0
      %v5424 = vsel %vm1934, %v4689, 0
      %v5427 = vsel %vm1934, %v4690, 0
      %v5430 = vsel %vm1934, %v4691, 0
      %v5433 = vsel %vm1934, %v4692, 0
      %v5436 = vsel %vm1934, %v4693, 0
      %v5439 = vsel %vm1934, %v4694, 0
      %v5442 = vsel %vm1934, %v4695, 0
      %v5445 = vsel %vm1934, %v4696, 0
      %v5448 = vsel %vm1934, %v4697, 0
      %v5451 = vsel %vm1934, %v4698, 0
      %v5454 = vsel %vm1934, %v4699, 0
      %v5457 = vsel %vm1934, %v4700, 0
      %v5460 = vsel %vm1934, %v4701, 0
      %v5463 = vsel %vm1934, %v4702, 0
      %v5466 = vsel %vm1934, %v4703, 0
      %v5469 = vsel %vm1934, %v4704, 0
      %v5472 = vsel %vm1934, %v4705, 0
      %v5475 = vsel %vm1934, %v4706, 0
      %v5478 = vsel %vm1934, %v4707, 0
      %v5481 = vsel %vm1934, %v4708, 0
      %v5484 = vsel %vm1934, %v4709, 0
      %v5487 = vsel %vm1934, %v4710, 0
      %v5490 = vsel %vm1934, %v4711, 0
      %v5493 = vsel %vm1934, %v4712, 0
      %v5496 = vsel %vm1934, %v4713, 0
      %v5499 = vsel %vm1934, %v4714, 0
      %v5502 = vsel %vm1934, %v4715, 0
      %v5505 = vsel %vm1934, %v4716, 0
      %v5508 = vsel %vm1934, %v4717, 0
      %v5511 = vsel %vm1934, %v4718, 0
      %v5514 = vsel %vm1934, %v4719, 0
      %v5517 = vsel %vm1934, %v4720, 0
      %v5520 = vsel %vm1934, %v4721, 0
      %v5523 = vsel %vm1934, %v4722, 0
      %v5526 = vsel %vm1934, %v4723, 0
      %v5529 = vsel %vm1934, %v4724, 0
      %v5532 = vsel %vm1934, %v4725, 0
      %v5535 = vsel %vm1934, %v4726, 0
      %v5538 = vsel %vm1934, %v4727, 0
      %v5541 = vsel %vm1934, %v4728, 0
      %v5544 = vsel %vm1934, %v4729, 0
      %v5547 = vsel %vm1934, %v4730, 0
      %v5550 = vsel %vm1934, %v4731, 0
      %v5553 = vsel %vm1934, %v4732, 0
      %v5556 = vsel %vm1934, %v4733, 0
      %v5559 = vsel %vm1934, %v4734, 0
      %v5562 = vsel %vm1934, %v4735, 0
      %v5565 = vsel %vm1934, %v4736, 0
      %v5568 = vsel %vm1934, %v4737, 0
      %v5571 = vsel %vm1934, %v4738, 0
      %v5574 = vsel %vm1934, %v4739, 0
      %v5577 = vsel %vm1934, %v4740, 0
      %v5580 = vsel %vm1934, %v4741, 0
      %v5583 = vsel %vm1934, %v4742, 0
      %v5586 = vsel %vm1934, %v4743, 0
      %v5589 = vsel %vm1934, %v4744, 0
      %v5592 = vsel %vm1934, %v4745, 0
      %v5595 = vsel %vm1934, %v4746, 0
      %v5598 = vsel %vm1934, %v4747, 0
      %v5601 = vsel %vm1934, %v4748, 0
      %v5604 = vsel %vm1934, %v4749, 0
      %v5607 = vsel %vm1934, %v4750, 0
      %v5610 = vsel %vm1934, %v4751, 0
      %v5613 = vsel %vm1934, %v4752, 0
      %v5616 = vsel %vm1934, %v4753, 0
      %5618 = vmatpush.msra.mxu0 0.0
      %5619 = vmatpush.msra.mxu0 0.0
      %5620 = vmatpush.msra.mxu0 0.0
      %5621 = vmatpush.msra.mxu0 0.0
      %5622 = vmatpush.msra.mxu0 0.0
      %5623 = vmatpush.msra.mxu0 0.0
      %5624 = vmatpush.msra.mxu0 0.0
      %5625 = vmatpush.msra.mxu0 0.0
      %5626 = vmatpush.msra.mxu0 %v4465
      %5627 = vmatpush.msra.mxu0 %v4464
      %5628 = vmatpush.msra.mxu0 %v4463
      %5629 = vmatpush.msra.mxu0 %v4462
      %5630 = vmatpush.msra.mxu0 %v4461
      %5631 = vmatpush.msra.mxu0 %v4460
      %5632 = vmatpush.msra.mxu0 %v4459
      %5633 = vmatpush.msra.mxu0 %v4458
      %5634 = vmatmul.f32.gmra.mxu0 %v4755
      %v5635 = vpop.f32.mrf.mxu0
      %v5636 = vadd.f32 0.0, %v5635
      %5637 = vmatmul.f32.gmra.mxu0 %v4758
      %v5638 = vpop.f32.mrf.mxu0
      %v5639 = vadd.f32 0.0, %v5638
      %5640 = vmatmul.f32.gmra.mxu0 %v4761
      %v5641 = vpop.f32.mrf.mxu0
      %v5642 = vadd.f32 0.0, %v5641
      %5643 = vmatmul.f32.gmra.mxu0 %v4764
      %v5644 = vpop.f32.mrf.mxu0
      %v5645 = vadd.f32 0.0, %v5644
      %5646 = vmatmul.f32.gmra.mxu0 %v4767
      %v5647 = vpop.f32.mrf.mxu0
      %v5648 = vadd.f32 0.0, %v5647
      %5649 = vmatmul.f32.gmra.mxu0 %v4770
      %v5650 = vpop.f32.mrf.mxu0
      %v5651 = vadd.f32 0.0, %v5650
      %5652 = vmatmul.f32.gmra.mxu0 %v4773
      %v5653 = vpop.f32.mrf.mxu0
      %v5654 = vadd.f32 0.0, %v5653
      %5655 = vmatmul.f32.gmra.mxu0 %v4776
      %v5656 = vpop.f32.mrf.mxu0
      %v5657 = vadd.f32 0.0, %v5656
      %5658 = vmatmul.f32.gmra.mxu0 %v4779
      %v5659 = vpop.f32.mrf.mxu0
      %v5660 = vadd.f32 0.0, %v5659
      %5661 = vmatmul.f32.gmra.mxu0 %v4782
      %v5662 = vpop.f32.mrf.mxu0
      %v5663 = vadd.f32 0.0, %v5662
      %5664 = vmatmul.f32.gmra.mxu0 %v4785
      %v5665 = vpop.f32.mrf.mxu0
      %v5666 = vadd.f32 0.0, %v5665
      %5667 = vmatmul.f32.gmra.mxu0 %v4788
      %v5668 = vpop.f32.mrf.mxu0
      %v5669 = vadd.f32 0.0, %v5668
      %5670 = vmatmul.f32.gmra.mxu0 %v4791
      %v5671 = vpop.f32.mrf.mxu0
      %v5672 = vadd.f32 0.0, %v5671
      %5673 = vmatmul.f32.gmra.mxu0 %v4794
      %v5674 = vpop.f32.mrf.mxu0
      %v5675 = vadd.f32 0.0, %v5674
      %5676 = vmatmul.f32.gmra.mxu0 %v4797
      %v5677 = vpop.f32.mrf.mxu0
      %v5678 = vadd.f32 0.0, %v5677
      %5679 = vmatmul.f32.gmra.mxu0 %v4800
      %v5680 = vpop.f32.mrf.mxu0
      %v5681 = vadd.f32 0.0, %v5680
      %5682 = vmatmul.f32.gmra.mxu0 %v4803
      %v5683 = vpop.f32.mrf.mxu0
      %v5684 = vadd.f32 0.0, %v5683
      %5685 = vmatmul.f32.gmra.mxu0 %v4806
      %v5686 = vpop.f32.mrf.mxu0
      %v5687 = vadd.f32 0.0, %v5686
      %5688 = vmatmul.f32.gmra.mxu0 %v4809
      %v5689 = vpop.f32.mrf.mxu0
      %v5690 = vadd.f32 0.0, %v5689
      %5691 = vmatmul.f32.gmra.mxu0 %v4812
      %v5692 = vpop.f32.mrf.mxu0
      %v5693 = vadd.f32 0.0, %v5692
      %5694 = vmatmul.f32.gmra.mxu0 %v4815
      %v5695 = vpop.f32.mrf.mxu0
      %v5696 = vadd.f32 0.0, %v5695
      %5697 = vmatmul.f32.gmra.mxu0 %v4818
      %v5698 = vpop.f32.mrf.mxu0
      %v5699 = vadd.f32 0.0, %v5698
      %5700 = vmatmul.f32.gmra.mxu0 %v4821
      %v5701 = vpop.f32.mrf.mxu0
      %v5702 = vadd.f32 0.0, %v5701
      %5703 = vmatmul.f32.gmra.mxu0 %v4824
      %v5704 = vpop.f32.mrf.mxu0
      %v5705 = vadd.f32 0.0, %v5704
      %5706 = vmatmul.f32.gmra.mxu0 %v4827
      %v5707 = vpop.f32.mrf.mxu0
      %v5708 = vadd.f32 0.0, %v5707
      %5709 = vmatmul.f32.gmra.mxu0 %v4830
      %v5710 = vpop.f32.mrf.mxu0
      %v5711 = vadd.f32 0.0, %v5710
      %5712 = vmatmul.f32.gmra.mxu0 %v4833
      %v5713 = vpop.f32.mrf.mxu0
      %v5714 = vadd.f32 0.0, %v5713
      %5715 = vmatmul.f32.gmra.mxu0 %v4836
      %v5716 = vpop.f32.mrf.mxu0
      %v5717 = vadd.f32 0.0, %v5716
      %5718 = vmatmul.f32.gmra.mxu0 %v4839
      %v5719 = vpop.f32.mrf.mxu0
      %v5720 = vadd.f32 0.0, %v5719
      %5721 = vmatmul.f32.gmra.mxu0 %v4842
      %v5722 = vpop.f32.mrf.mxu0
      %v5723 = vadd.f32 0.0, %v5722
      %5724 = vmatmul.f32.gmra.mxu0 %v4845
      %v5725 = vpop.f32.mrf.mxu0
      %v5726 = vadd.f32 0.0, %v5725
      %5727 = vmatmul.f32.gmra.mxu0 %v4848
      %v5728 = vpop.f32.mrf.mxu0
      %v5729 = vadd.f32 0.0, %v5728
      %5730 = vmatmul.f32.gmra.mxu0 %v4851
      %v5731 = vpop.f32.mrf.mxu0
      %v5732 = vadd.f32 0.0, %v5731
      %5733 = vmatmul.f32.gmra.mxu0 %v4854
      %v5734 = vpop.f32.mrf.mxu0
      %v5735 = vadd.f32 0.0, %v5734
      %5736 = vmatmul.f32.gmra.mxu0 %v4857
      %v5737 = vpop.f32.mrf.mxu0
      %v5738 = vadd.f32 0.0, %v5737
      %5739 = vmatmul.f32.gmra.mxu0 %v4860
      %v5740 = vpop.f32.mrf.mxu0
      %v5741 = vadd.f32 0.0, %v5740
      %5742 = vmatmul.f32.gmra.mxu0 %v4863
      %v5743 = vpop.f32.mrf.mxu0
      %v5744 = vadd.f32 0.0, %v5743
      %5745 = vmatmul.f32.gmra.mxu0 %v4866
      %v5746 = vpop.f32.mrf.mxu0
      %v5747 = vadd.f32 0.0, %v5746
      %5748 = vmatmul.f32.gmra.mxu0 %v4869
      %v5749 = vpop.f32.mrf.mxu0
      %v5750 = vadd.f32 0.0, %v5749
      %5751 = vmatmul.f32.gmra.mxu0 %v4872
      %v5752 = vpop.f32.mrf.mxu0
      %v5753 = vadd.f32 0.0, %v5752
      %5754 = vmatmul.f32.gmra.mxu0 %v4875
      %v5755 = vpop.f32.mrf.mxu0
      %v5756 = vadd.f32 0.0, %v5755
      %5757 = vmatmul.f32.gmra.mxu0 %v4878
      %v5758 = vpop.f32.mrf.mxu0
      %v5759 = vadd.f32 0.0, %v5758
      %5760 = vmatmul.f32.gmra.mxu0 %v4881
      %v5761 = vpop.f32.mrf.mxu0
      %v5762 = vadd.f32 0.0, %v5761
      %5763 = vmatmul.f32.gmra.mxu0 %v4884
      %v5764 = vpop.f32.mrf.mxu0
      %v5765 = vadd.f32 0.0, %v5764
      %5766 = vmatmul.f32.gmra.mxu0 %v4887
      %v5767 = vpop.f32.mrf.mxu0
      %v5768 = vadd.f32 0.0, %v5767
      %5769 = vmatmul.f32.gmra.mxu0 %v4890
      %v5770 = vpop.f32.mrf.mxu0
      %v5771 = vadd.f32 0.0, %v5770
      %5772 = vmatmul.f32.gmra.mxu0 %v4893
      %v5773 = vpop.f32.mrf.mxu0
      %v5774 = vadd.f32 0.0, %v5773
      %5775 = vmatmul.f32.gmra.mxu0 %v4896
      %v5776 = vpop.f32.mrf.mxu0
      %v5777 = vadd.f32 0.0, %v5776
      %5778 = vmatmul.f32.gmra.mxu0 %v4899
      %v5779 = vpop.f32.mrf.mxu0
      %v5780 = vadd.f32 0.0, %v5779
      %5781 = vmatmul.f32.gmra.mxu0 %v4902
      %v5782 = vpop.f32.mrf.mxu0
      %v5783 = vadd.f32 0.0, %v5782
      %5784 = vmatmul.f32.gmra.mxu0 %v4905
      %v5785 = vpop.f32.mrf.mxu0
      %v5786 = vadd.f32 0.0, %v5785
      %5787 = vmatmul.f32.gmra.mxu0 %v4908
      %v5788 = vpop.f32.mrf.mxu0
      %v5789 = vadd.f32 0.0, %v5788
      %5790 = vmatmul.f32.gmra.mxu0 %v4911
      %v5791 = vpop.f32.mrf.mxu0
      %v5792 = vadd.f32 0.0, %v5791
      %5793 = vmatmul.f32.gmra.mxu0 %v4914
      %v5794 = vpop.f32.mrf.mxu0
      %v5795 = vadd.f32 0.0, %v5794
      %5796 = vmatmul.f32.gmra.mxu0 %v4917
      %v5797 = vpop.f32.mrf.mxu0
      %v5798 = vadd.f32 0.0, %v5797
      %5799 = vmatmul.f32.gmra.mxu0 %v4920
      %v5800 = vpop.f32.mrf.mxu0
      %v5801 = vadd.f32 0.0, %v5800
      %5802 = vmatmul.f32.gmra.mxu0 %v4923
      %v5803 = vpop.f32.mrf.mxu0
      %v5804 = vadd.f32 0.0, %v5803
      %5805 = vmatmul.f32.gmra.mxu0 %v4926
      %v5806 = vpop.f32.mrf.mxu0
      %v5807 = vadd.f32 0.0, %v5806
      %5808 = vmatmul.f32.gmra.mxu0 %v4929
      %v5809 = vpop.f32.mrf.mxu0
      %v5810 = vadd.f32 0.0, %v5809
      %5811 = vmatmul.f32.gmra.mxu0 %v4932
      %v5812 = vpop.f32.mrf.mxu0
      %v5813 = vadd.f32 0.0, %v5812
      %5814 = vmatmul.f32.gmra.mxu0 %v4935
      %v5815 = vpop.f32.mrf.mxu0
      %v5816 = vadd.f32 0.0, %v5815
      %5817 = vmatmul.f32.gmra.mxu0 %v4938
      %v5818 = vpop.f32.mrf.mxu0
      %v5819 = vadd.f32 0.0, %v5818
      %5820 = vmatmul.f32.gmra.mxu0 %v4941
      %v5821 = vpop.f32.mrf.mxu0
      %v5822 = vadd.f32 0.0, %v5821
      %5823 = vmatmul.f32.gmra.mxu0 %v4944
      %v5824 = vpop.f32.mrf.mxu0
      %v5825 = vadd.f32 0.0, %v5824
      %5826 = vmatmul.f32.gmra.mxu0 %v4947
      %v5827 = vpop.f32.mrf.mxu0
      %v5828 = vadd.f32 0.0, %v5827
      %5829 = vmatmul.f32.gmra.mxu0 %v4950
      %v5830 = vpop.f32.mrf.mxu0
      %v5831 = vadd.f32 0.0, %v5830
      %5832 = vmatmul.f32.gmra.mxu0 %v4953
      %v5833 = vpop.f32.mrf.mxu0
      %v5834 = vadd.f32 0.0, %v5833
      %5835 = vmatmul.f32.gmra.mxu0 %v4956
      %v5836 = vpop.f32.mrf.mxu0
      %v5837 = vadd.f32 0.0, %v5836
      %5838 = vmatmul.f32.gmra.mxu0 %v4959
      %v5839 = vpop.f32.mrf.mxu0
      %v5840 = vadd.f32 0.0, %v5839
      %5841 = vmatmul.f32.gmra.mxu0 %v4962
      %v5842 = vpop.f32.mrf.mxu0
      %v5843 = vadd.f32 0.0, %v5842
      %5844 = vmatmul.f32.gmra.mxu0 %v4965
      %v5845 = vpop.f32.mrf.mxu0
      %v5846 = vadd.f32 0.0, %v5845
      %5847 = vmatmul.f32.gmra.mxu0 %v4968
      %v5848 = vpop.f32.mrf.mxu0
      %v5849 = vadd.f32 0.0, %v5848
      %5850 = vmatmul.f32.gmra.mxu0 %v4971
      %v5851 = vpop.f32.mrf.mxu0
      %v5852 = vadd.f32 0.0, %v5851
      %5853 = vmatmul.f32.gmra.mxu0 %v4974
      %v5854 = vpop.f32.mrf.mxu0
      %v5855 = vadd.f32 0.0, %v5854
      %5856 = vmatmul.f32.gmra.mxu0 %v4977
      %v5857 = vpop.f32.mrf.mxu0
      %v5858 = vadd.f32 0.0, %v5857
      %5859 = vmatmul.f32.gmra.mxu0 %v4980
      %v5860 = vpop.f32.mrf.mxu0
      %v5861 = vadd.f32 0.0, %v5860
      %5862 = vmatmul.f32.gmra.mxu0 %v4983
      %v5863 = vpop.f32.mrf.mxu0
      %v5864 = vadd.f32 0.0, %v5863
      %5865 = vmatmul.f32.gmra.mxu0 %v4986
      %v5866 = vpop.f32.mrf.mxu0
      %v5867 = vadd.f32 0.0, %v5866
      %5868 = vmatmul.f32.gmra.mxu0 %v4989
      %v5869 = vpop.f32.mrf.mxu0
      %v5870 = vadd.f32 0.0, %v5869
      %5871 = vmatmul.f32.gmra.mxu0 %v4992
      %v5872 = vpop.f32.mrf.mxu0
      %v5873 = vadd.f32 0.0, %v5872
      %5874 = vmatmul.f32.gmra.mxu0 %v4995
      %v5875 = vpop.f32.mrf.mxu0
      %v5876 = vadd.f32 0.0, %v5875
      %5877 = vmatmul.f32.gmra.mxu0 %v4998
      %v5878 = vpop.f32.mrf.mxu0
      %v5879 = vadd.f32 0.0, %v5878
      %5880 = vmatmul.f32.gmra.mxu0 %v5001
      %v5881 = vpop.f32.mrf.mxu0
      %v5882 = vadd.f32 0.0, %v5881
      %5883 = vmatmul.f32.gmra.mxu0 %v5004
      %v5884 = vpop.f32.mrf.mxu0
      %v5885 = vadd.f32 0.0, %v5884
      %5886 = vmatmul.f32.gmra.mxu0 %v5007
      %v5887 = vpop.f32.mrf.mxu0
      %v5888 = vadd.f32 0.0, %v5887
      %5889 = vmatmul.f32.gmra.mxu0 %v5010
      %v5890 = vpop.f32.mrf.mxu0
      %v5891 = vadd.f32 0.0, %v5890
      %5892 = vmatmul.f32.gmra.mxu0 %v5013
      %v5893 = vpop.f32.mrf.mxu0
      %v5894 = vadd.f32 0.0, %v5893
      %5895 = vmatmul.f32.gmra.mxu0 %v5016
      %v5896 = vpop.f32.mrf.mxu0
      %v5897 = vadd.f32 0.0, %v5896
      %5898 = vmatmul.f32.gmra.mxu0 %v5019
      %v5899 = vpop.f32.mrf.mxu0
      %v5900 = vadd.f32 0.0, %v5899
      %5901 = vmatmul.f32.gmra.mxu0 %v5022
      %v5902 = vpop.f32.mrf.mxu0
      %v5903 = vadd.f32 0.0, %v5902
      %5904 = vmatmul.f32.gmra.mxu0 %v5025
      %v5905 = vpop.f32.mrf.mxu0
      %v5906 = vadd.f32 0.0, %v5905
      %5907 = vmatmul.f32.gmra.mxu0 %v5028
      %v5908 = vpop.f32.mrf.mxu0
      %v5909 = vadd.f32 0.0, %v5908
      %5910 = vmatmul.f32.gmra.mxu0 %v5031
      %v5911 = vpop.f32.mrf.mxu0
      %v5912 = vadd.f32 0.0, %v5911
      %5913 = vmatmul.f32.gmra.mxu0 %v5034
      %v5914 = vpop.f32.mrf.mxu0
      %v5915 = vadd.f32 0.0, %v5914
      %5916 = vmatmul.f32.gmra.mxu0 %v5037
      %v5917 = vpop.f32.mrf.mxu0
      %v5918 = vadd.f32 0.0, %v5917
      %5919 = vmatmul.f32.gmra.mxu0 %v5040
      %v5920 = vpop.f32.mrf.mxu0
      %v5921 = vadd.f32 0.0, %v5920
      %5922 = vmatmul.f32.gmra.mxu0 %v5043
      %v5923 = vpop.f32.mrf.mxu0
      %v5924 = vadd.f32 0.0, %v5923
      %5925 = vmatmul.f32.gmra.mxu0 %v5046
      %v5926 = vpop.f32.mrf.mxu0
      %v5927 = vadd.f32 0.0, %v5926
      %5928 = vmatmul.f32.gmra.mxu0 %v5049
      %v5929 = vpop.f32.mrf.mxu0
      %v5930 = vadd.f32 0.0, %v5929
      %5931 = vmatmul.f32.gmra.mxu0 %v5052
      %v5932 = vpop.f32.mrf.mxu0
      %v5933 = vadd.f32 0.0, %v5932
      %5934 = vmatmul.f32.gmra.mxu0 %v5055
      %v5935 = vpop.f32.mrf.mxu0
      %v5936 = vadd.f32 0.0, %v5935
      %5937 = vmatmul.f32.gmra.mxu0 %v5058
      %v5938 = vpop.f32.mrf.mxu0
      %v5939 = vadd.f32 0.0, %v5938
      %5940 = vmatmul.f32.gmra.mxu0 %v5061
      %v5941 = vpop.f32.mrf.mxu0
      %v5942 = vadd.f32 0.0, %v5941
      %5943 = vmatmul.f32.gmra.mxu0 %v5064
      %v5944 = vpop.f32.mrf.mxu0
      %v5945 = vadd.f32 0.0, %v5944
      %5946 = vmatmul.f32.gmra.mxu0 %v5067
      %v5947 = vpop.f32.mrf.mxu0
      %v5948 = vadd.f32 0.0, %v5947
      %5949 = vmatmul.f32.gmra.mxu0 %v5070
      %v5950 = vpop.f32.mrf.mxu0
      %v5951 = vadd.f32 0.0, %v5950
      %5952 = vmatmul.f32.gmra.mxu0 %v5073
      %v5953 = vpop.f32.mrf.mxu0
      %v5954 = vadd.f32 0.0, %v5953
      %5955 = vmatmul.f32.gmra.mxu0 %v5076
      %v5956 = vpop.f32.mrf.mxu0
      %v5957 = vadd.f32 0.0, %v5956
      %5958 = vmatmul.f32.gmra.mxu0 %v5079
      %v5959 = vpop.f32.mrf.mxu0
      %v5960 = vadd.f32 0.0, %v5959
      %5961 = vmatmul.f32.gmra.mxu0 %v5082
      %v5962 = vpop.f32.mrf.mxu0
      %v5963 = vadd.f32 0.0, %v5962
      %5964 = vmatmul.f32.gmra.mxu0 %v5085
      %v5965 = vpop.f32.mrf.mxu0
      %v5966 = vadd.f32 0.0, %v5965
      %5967 = vmatmul.f32.gmra.mxu0 %v5088
      %v5968 = vpop.f32.mrf.mxu0
      %v5969 = vadd.f32 0.0, %v5968
      %5970 = vmatmul.f32.gmra.mxu0 %v5091
      %v5971 = vpop.f32.mrf.mxu0
      %v5972 = vadd.f32 0.0, %v5971
      %5973 = vmatmul.f32.gmra.mxu0 %v5094
      %v5974 = vpop.f32.mrf.mxu0
      %v5975 = vadd.f32 0.0, %v5974
      %5976 = vmatmul.f32.gmra.mxu0 %v5097
      %v5977 = vpop.f32.mrf.mxu0
      %v5978 = vadd.f32 0.0, %v5977
      %5979 = vmatmul.f32.gmra.mxu0 %v5100
      %v5980 = vpop.f32.mrf.mxu0
      %v5981 = vadd.f32 0.0, %v5980
      %5982 = vmatmul.f32.gmra.mxu0 %v5103
      %v5983 = vpop.f32.mrf.mxu0
      %v5984 = vadd.f32 0.0, %v5983
      %5985 = vmatmul.f32.gmra.mxu0 %v5106
      %v5986 = vpop.f32.mrf.mxu0
      %v5987 = vadd.f32 0.0, %v5986
      %5988 = vmatmul.f32.gmra.mxu0 %v5109
      %v5989 = vpop.f32.mrf.mxu0
      %v5990 = vadd.f32 0.0, %v5989
      %5991 = vmatmul.f32.gmra.mxu0 %v5112
      %v5992 = vpop.f32.mrf.mxu0
      %v5993 = vadd.f32 0.0, %v5992
      %5994 = vmatmul.f32.gmra.mxu0 %v5115
      %v5995 = vpop.f32.mrf.mxu0
      %v5996 = vadd.f32 0.0, %v5995
      %5997 = vmatmul.f32.gmra.mxu0 %v5118
      %v5998 = vpop.f32.mrf.mxu0
      %v5999 = vadd.f32 0.0, %v5998
      %6000 = vmatmul.f32.gmra.mxu0 %v5121
      %v6001 = vpop.f32.mrf.mxu0
      %v6002 = vadd.f32 0.0, %v6001
      %6003 = vmatmul.f32.gmra.mxu0 %v5124
      %v6004 = vpop.f32.mrf.mxu0
      %v6005 = vadd.f32 0.0, %v6004
      %6006 = vmatmul.f32.gmra.mxu0 %v5127
      %v6007 = vpop.f32.mrf.mxu0
      %v6008 = vadd.f32 0.0, %v6007
      %6009 = vmatmul.f32.gmra.mxu0 %v5130
      %v6010 = vpop.f32.mrf.mxu0
      %v6011 = vadd.f32 0.0, %v6010
      %6012 = vmatmul.f32.gmra.mxu0 %v5133
      %v6013 = vpop.f32.mrf.mxu0
      %v6014 = vadd.f32 0.0, %v6013
      %6015 = vmatmul.f32.gmra.mxu0 %v5136
      %v6016 = vpop.f32.mrf.mxu0
      %v6017 = vadd.f32 0.0, %v6016
      %6018 = vmatmul.f32.gmra.mxu0 %v5139
      %v6019 = vpop.f32.mrf.mxu0
      %v6020 = vadd.f32 0.0, %v6019
      %6021 = vmatmul.f32.gmra.mxu0 %v5142
      %v6022 = vpop.f32.mrf.mxu0
      %v6023 = vadd.f32 0.0, %v6022
      %6024 = vmatmul.f32.gmra.mxu0 %v5145
      %v6025 = vpop.f32.mrf.mxu0
      %v6026 = vadd.f32 0.0, %v6025
      %6027 = vmatmul.f32.gmra.mxu0 %v5148
      %v6028 = vpop.f32.mrf.mxu0
      %v6029 = vadd.f32 0.0, %v6028
      %6030 = vmatmul.f32.gmra.mxu0 %v5151
      %v6031 = vpop.f32.mrf.mxu0
      %v6032 = vadd.f32 0.0, %v6031
      %6033 = vmatmul.f32.gmra.mxu0 %v5154
      %v6034 = vpop.f32.mrf.mxu0
      %v6035 = vadd.f32 0.0, %v6034
      %6036 = vmatmul.f32.gmra.mxu0 %v5157
      %v6037 = vpop.f32.mrf.mxu0
      %v6038 = vadd.f32 0.0, %v6037
      %6039 = vmatmul.f32.gmra.mxu0 %v5160
      %v6040 = vpop.f32.mrf.mxu0
      %v6041 = vadd.f32 0.0, %v6040
      %6042 = vmatmul.f32.gmra.mxu0 %v5163
      %v6043 = vpop.f32.mrf.mxu0
      %v6044 = vadd.f32 0.0, %v6043
      %6045 = vmatmul.f32.gmra.mxu0 %v5166
      %v6046 = vpop.f32.mrf.mxu0
      %v6047 = vadd.f32 0.0, %v6046
      %6048 = vmatmul.f32.gmra.mxu0 %v5169
      %v6049 = vpop.f32.mrf.mxu0
      %v6050 = vadd.f32 0.0, %v6049
      %6051 = vmatmul.f32.gmra.mxu0 %v5172
      %v6052 = vpop.f32.mrf.mxu0
      %v6053 = vadd.f32 0.0, %v6052
      %6054 = vmatmul.f32.gmra.mxu0 %v5175
      %v6055 = vpop.f32.mrf.mxu0
      %v6056 = vadd.f32 0.0, %v6055
      %6057 = vmatmul.f32.gmra.mxu0 %v5178
      %v6058 = vpop.f32.mrf.mxu0
      %v6059 = vadd.f32 0.0, %v6058
      %6060 = vmatmul.f32.gmra.mxu0 %v5181
      %v6061 = vpop.f32.mrf.mxu0
      %v6062 = vadd.f32 0.0, %v6061
      %6063 = vmatmul.f32.gmra.mxu0 %v5184
      %v6064 = vpop.f32.mrf.mxu0
      %v6065 = vadd.f32 0.0, %v6064
      %6066 = vmatmul.f32.gmra.mxu0 %v5187
      %v6067 = vpop.f32.mrf.mxu0
      %v6068 = vadd.f32 0.0, %v6067
      %6069 = vmatmul.f32.gmra.mxu0 %v5190
      %v6070 = vpop.f32.mrf.mxu0
      %v6071 = vadd.f32 0.0, %v6070
      %6072 = vmatmul.f32.gmra.mxu0 %v5193
      %v6073 = vpop.f32.mrf.mxu0
      %v6074 = vadd.f32 0.0, %v6073
      %6075 = vmatmul.f32.gmra.mxu0 %v5196
      %v6076 = vpop.f32.mrf.mxu0
      %v6077 = vadd.f32 0.0, %v6076
      %6078 = vmatmul.f32.gmra.mxu0 %v5199
      %v6079 = vpop.f32.mrf.mxu0
      %v6080 = vadd.f32 0.0, %v6079
      %6081 = vmatmul.f32.gmra.mxu0 %v5202
      %v6082 = vpop.f32.mrf.mxu0
      %v6083 = vadd.f32 0.0, %v6082
      %6084 = vmatmul.f32.gmra.mxu0 %v5205
      %v6085 = vpop.f32.mrf.mxu0
      %v6086 = vadd.f32 0.0, %v6085
      %6087 = vmatmul.f32.gmra.mxu0 %v5208
      %v6088 = vpop.f32.mrf.mxu0
      %v6089 = vadd.f32 0.0, %v6088
      %6090 = vmatmul.f32.gmra.mxu0 %v5211
      %v6091 = vpop.f32.mrf.mxu0
      %v6092 = vadd.f32 0.0, %v6091
      %6093 = vmatmul.f32.gmra.mxu0 %v5214
      %v6094 = vpop.f32.mrf.mxu0
      %v6095 = vadd.f32 0.0, %v6094
      %6096 = vmatmul.f32.gmra.mxu0 %v5217
      %v6097 = vpop.f32.mrf.mxu0
      %v6098 = vadd.f32 0.0, %v6097
      %6099 = vmatmul.f32.gmra.mxu0 %v5220
      %v6100 = vpop.f32.mrf.mxu0
      %v6101 = vadd.f32 0.0, %v6100
      %6102 = vmatmul.f32.gmra.mxu0 %v5223
      %v6103 = vpop.f32.mrf.mxu0
      %v6104 = vadd.f32 0.0, %v6103
      %6105 = vmatmul.f32.gmra.mxu0 %v5226
      %v6106 = vpop.f32.mrf.mxu0
      %v6107 = vadd.f32 0.0, %v6106
      %6108 = vmatmul.f32.gmra.mxu0 %v5229
      %v6109 = vpop.f32.mrf.mxu0
      %v6110 = vadd.f32 0.0, %v6109
      %6111 = vmatmul.f32.gmra.mxu0 %v5232
      %v6112 = vpop.f32.mrf.mxu0
      %v6113 = vadd.f32 0.0, %v6112
      %6114 = vmatmul.f32.gmra.mxu0 %v5235
      %v6115 = vpop.f32.mrf.mxu0
      %v6116 = vadd.f32 0.0, %v6115
      %6117 = vmatmul.f32.gmra.mxu0 %v5238
      %v6118 = vpop.f32.mrf.mxu0
      %v6119 = vadd.f32 0.0, %v6118
      %6120 = vmatmul.f32.gmra.mxu0 %v5241
      %v6121 = vpop.f32.mrf.mxu0
      %v6122 = vadd.f32 0.0, %v6121
      %6123 = vmatmul.f32.gmra.mxu0 %v5244
      %v6124 = vpop.f32.mrf.mxu0
      %v6125 = vadd.f32 0.0, %v6124
      %6126 = vmatmul.f32.gmra.mxu0 %v5247
      %v6127 = vpop.f32.mrf.mxu0
      %v6128 = vadd.f32 0.0, %v6127
      %6129 = vmatmul.f32.gmra.mxu0 %v5250
      %v6130 = vpop.f32.mrf.mxu0
      %v6131 = vadd.f32 0.0, %v6130
      %6132 = vmatmul.f32.gmra.mxu0 %v5253
      %v6133 = vpop.f32.mrf.mxu0
      %v6134 = vadd.f32 0.0, %v6133
      %6135 = vmatmul.f32.gmra.mxu0 %v5256
      %v6136 = vpop.f32.mrf.mxu0
      %v6137 = vadd.f32 0.0, %v6136
      %6138 = vmatmul.f32.gmra.mxu0 %v5259
      %v6139 = vpop.f32.mrf.mxu0
      %v6140 = vadd.f32 0.0, %v6139
      %6141 = vmatmul.f32.gmra.mxu0 %v5262
      %v6142 = vpop.f32.mrf.mxu0
      %v6143 = vadd.f32 0.0, %v6142
      %6144 = vmatmul.f32.gmra.mxu0 %v5265
      %v6145 = vpop.f32.mrf.mxu0
      %v6146 = vadd.f32 0.0, %v6145
      %6147 = vmatmul.f32.gmra.mxu0 %v5268
      %v6148 = vpop.f32.mrf.mxu0
      %v6149 = vadd.f32 0.0, %v6148
      %6150 = vmatmul.f32.gmra.mxu0 %v5271
      %v6151 = vpop.f32.mrf.mxu0
      %v6152 = vadd.f32 0.0, %v6151
      %6153 = vmatmul.f32.gmra.mxu0 %v5274
      %v6154 = vpop.f32.mrf.mxu0
      %v6155 = vadd.f32 0.0, %v6154
      %6156 = vmatmul.f32.gmra.mxu0 %v5277
      %v6157 = vpop.f32.mrf.mxu0
      %v6158 = vadd.f32 0.0, %v6157
      %6159 = vmatmul.f32.gmra.mxu0 %v5280
      %v6160 = vpop.f32.mrf.mxu0
      %v6161 = vadd.f32 0.0, %v6160
      %6162 = vmatmul.f32.gmra.mxu0 %v5283
      %v6163 = vpop.f32.mrf.mxu0
      %v6164 = vadd.f32 0.0, %v6163
      %6165 = vmatmul.f32.gmra.mxu0 %v5286
      %v6166 = vpop.f32.mrf.mxu0
      %v6167 = vadd.f32 0.0, %v6166
      %6168 = vmatmul.f32.gmra.mxu0 %v5289
      %v6169 = vpop.f32.mrf.mxu0
      %v6170 = vadd.f32 0.0, %v6169
      %6171 = vmatmul.f32.gmra.mxu0 %v5292
      %v6172 = vpop.f32.mrf.mxu0
      %v6173 = vadd.f32 0.0, %v6172
      %6174 = vmatmul.f32.gmra.mxu0 %v5295
      %v6175 = vpop.f32.mrf.mxu0
      %v6176 = vadd.f32 0.0, %v6175
      %6177 = vmatmul.f32.gmra.mxu0 %v5298
      %v6178 = vpop.f32.mrf.mxu0
      %v6179 = vadd.f32 0.0, %v6178
      %6180 = vmatmul.f32.gmra.mxu0 %v5301
      %v6181 = vpop.f32.mrf.mxu0
      %v6182 = vadd.f32 0.0, %v6181
      %6183 = vmatmul.f32.gmra.mxu0 %v5304
      %v6184 = vpop.f32.mrf.mxu0
      %v6185 = vadd.f32 0.0, %v6184
      %6186 = vmatmul.f32.gmra.mxu0 %v5307
      %v6187 = vpop.f32.mrf.mxu0
      %v6188 = vadd.f32 0.0, %v6187
      %6189 = vmatmul.f32.gmra.mxu0 %v5310
      %v6190 = vpop.f32.mrf.mxu0
      %v6191 = vadd.f32 0.0, %v6190
      %6192 = vmatmul.f32.gmra.mxu0 %v5313
      %v6193 = vpop.f32.mrf.mxu0
      %v6194 = vadd.f32 0.0, %v6193
      %6195 = vmatmul.f32.gmra.mxu0 %v5316
      %v6196 = vpop.f32.mrf.mxu0
      %v6197 = vadd.f32 0.0, %v6196
      %6198 = vmatmul.f32.gmra.mxu0 %v5319
      %v6199 = vpop.f32.mrf.mxu0
      %v6200 = vadd.f32 0.0, %v6199
      %6201 = vmatmul.f32.gmra.mxu0 %v5322
      %v6202 = vpop.f32.mrf.mxu0
      %v6203 = vadd.f32 0.0, %v6202
      %6204 = vmatmul.f32.gmra.mxu0 %v5325
      %v6205 = vpop.f32.mrf.mxu0
      %v6206 = vadd.f32 0.0, %v6205
      %6207 = vmatmul.f32.gmra.mxu0 %v5328
      %v6208 = vpop.f32.mrf.mxu0
      %v6209 = vadd.f32 0.0, %v6208
      %6210 = vmatmul.f32.gmra.mxu0 %v5331
      %v6211 = vpop.f32.mrf.mxu0
      %v6212 = vadd.f32 0.0, %v6211
      %6213 = vmatmul.f32.gmra.mxu0 %v5334
      %v6214 = vpop.f32.mrf.mxu0
      %v6215 = vadd.f32 0.0, %v6214
      %6216 = vmatmul.f32.gmra.mxu0 %v5337
      %v6217 = vpop.f32.mrf.mxu0
      %v6218 = vadd.f32 0.0, %v6217
      %6219 = vmatmul.f32.gmra.mxu0 %v5340
      %v6220 = vpop.f32.mrf.mxu0
      %v6221 = vadd.f32 0.0, %v6220
      %6222 = vmatmul.f32.gmra.mxu0 %v5343
      %v6223 = vpop.f32.mrf.mxu0
      %v6224 = vadd.f32 0.0, %v6223
      %6225 = vmatmul.f32.gmra.mxu0 %v5346
      %v6226 = vpop.f32.mrf.mxu0
      %v6227 = vadd.f32 0.0, %v6226
      %6228 = vmatmul.f32.gmra.mxu0 %v5349
      %v6229 = vpop.f32.mrf.mxu0
      %v6230 = vadd.f32 0.0, %v6229
      %6231 = vmatmul.f32.gmra.mxu0 %v5352
      %v6232 = vpop.f32.mrf.mxu0
      %v6233 = vadd.f32 0.0, %v6232
      %6234 = vmatmul.f32.gmra.mxu0 %v5355
      %v6235 = vpop.f32.mrf.mxu0
      %v6236 = vadd.f32 0.0, %v6235
      %6237 = vmatmul.f32.gmra.mxu0 %v5358
      %v6238 = vpop.f32.mrf.mxu0
      %v6239 = vadd.f32 0.0, %v6238
      %6240 = vmatmul.f32.gmra.mxu0 %v5361
      %v6241 = vpop.f32.mrf.mxu0
      %v6242 = vadd.f32 0.0, %v6241
      %6243 = vmatmul.f32.gmra.mxu0 %v5364
      %v6244 = vpop.f32.mrf.mxu0
      %v6245 = vadd.f32 0.0, %v6244
      %6246 = vmatmul.f32.gmra.mxu0 %v5367
      %v6247 = vpop.f32.mrf.mxu0
      %v6248 = vadd.f32 0.0, %v6247
      %6249 = vmatmul.f32.gmra.mxu0 %v5370
      %v6250 = vpop.f32.mrf.mxu0
      %v6251 = vadd.f32 0.0, %v6250
      %6252 = vmatmul.f32.gmra.mxu0 %v5373
      %v6253 = vpop.f32.mrf.mxu0
      %v6254 = vadd.f32 0.0, %v6253
      %6255 = vmatmul.f32.gmra.mxu0 %v5376
      %v6256 = vpop.f32.mrf.mxu0
      %v6257 = vadd.f32 0.0, %v6256
      %6258 = vmatmul.f32.gmra.mxu0 %v5379
      %v6259 = vpop.f32.mrf.mxu0
      %v6260 = vadd.f32 0.0, %v6259
      %6261 = vmatmul.f32.gmra.mxu0 %v5382
      %v6262 = vpop.f32.mrf.mxu0
      %v6263 = vadd.f32 0.0, %v6262
      %6264 = vmatmul.f32.gmra.mxu0 %v5385
      %v6265 = vpop.f32.mrf.mxu0
      %v6266 = vadd.f32 0.0, %v6265
      %6267 = vmatmul.f32.gmra.mxu0 %v5388
      %v6268 = vpop.f32.mrf.mxu0
      %v6269 = vadd.f32 0.0, %v6268
      %6270 = vmatmul.f32.gmra.mxu0 %v5391
      %v6271 = vpop.f32.mrf.mxu0
      %v6272 = vadd.f32 0.0, %v6271
      %6273 = vmatmul.f32.gmra.mxu0 %v5394
      %v6274 = vpop.f32.mrf.mxu0
      %v6275 = vadd.f32 0.0, %v6274
      %6276 = vmatmul.f32.gmra.mxu0 %v5397
      %v6277 = vpop.f32.mrf.mxu0
      %v6278 = vadd.f32 0.0, %v6277
      %6279 = vmatmul.f32.gmra.mxu0 %v5400
      %v6280 = vpop.f32.mrf.mxu0
      %v6281 = vadd.f32 0.0, %v6280
      %6282 = vmatmul.f32.gmra.mxu0 %v5403
      %v6283 = vpop.f32.mrf.mxu0
      %v6284 = vadd.f32 0.0, %v6283
      %6285 = vmatmul.f32.gmra.mxu0 %v5406
      %v6286 = vpop.f32.mrf.mxu0
      %v6287 = vadd.f32 0.0, %v6286
      %6288 = vmatmul.f32.gmra.mxu0 %v5409
      %v6289 = vpop.f32.mrf.mxu0
      %v6290 = vadd.f32 0.0, %v6289
      %6291 = vmatmul.f32.gmra.mxu0 %v5412
      %v6292 = vpop.f32.mrf.mxu0
      %v6293 = vadd.f32 0.0, %v6292
      %6294 = vmatmul.f32.gmra.mxu0 %v5415
      %v6295 = vpop.f32.mrf.mxu0
      %v6296 = vadd.f32 0.0, %v6295
      %6297 = vmatmul.f32.gmra.mxu0 %v5418
      %v6298 = vpop.f32.mrf.mxu0
      %v6299 = vadd.f32 0.0, %v6298
      %6300 = vmatmul.f32.gmra.mxu0 %v5421
      %v6301 = vpop.f32.mrf.mxu0
      %v6302 = vadd.f32 0.0, %v6301
      %6303 = vmatmul.f32.gmra.mxu0 %v5424
      %v6304 = vpop.f32.mrf.mxu0
      %v6305 = vadd.f32 0.0, %v6304
      %6306 = vmatmul.f32.gmra.mxu0 %v5427
      %v6307 = vpop.f32.mrf.mxu0
      %v6308 = vadd.f32 0.0, %v6307
      %6309 = vmatmul.f32.gmra.mxu0 %v5430
      %v6310 = vpop.f32.mrf.mxu0
      %v6311 = vadd.f32 0.0, %v6310
      %6312 = vmatmul.f32.gmra.mxu0 %v5433
      %v6313 = vpop.f32.mrf.mxu0
      %v6314 = vadd.f32 0.0, %v6313
      %6315 = vmatmul.f32.gmra.mxu0 %v5436
      %v6316 = vpop.f32.mrf.mxu0
      %v6317 = vadd.f32 0.0, %v6316
      %6318 = vmatmul.f32.gmra.mxu0 %v5439
      %v6319 = vpop.f32.mrf.mxu0
      %v6320 = vadd.f32 0.0, %v6319
      %6321 = vmatmul.f32.gmra.mxu0 %v5442
      %v6322 = vpop.f32.mrf.mxu0
      %v6323 = vadd.f32 0.0, %v6322
      %6324 = vmatmul.f32.gmra.mxu0 %v5445
      %v6325 = vpop.f32.mrf.mxu0
      %v6326 = vadd.f32 0.0, %v6325
      %6327 = vmatmul.f32.gmra.mxu0 %v5448
      %v6328 = vpop.f32.mrf.mxu0
      %v6329 = vadd.f32 0.0, %v6328
      %6330 = vmatmul.f32.gmra.mxu0 %v5451
      %v6331 = vpop.f32.mrf.mxu0
      %v6332 = vadd.f32 0.0, %v6331
      %6333 = vmatmul.f32.gmra.mxu0 %v5454
      %v6334 = vpop.f32.mrf.mxu0
      %v6335 = vadd.f32 0.0, %v6334
      %6336 = vmatmul.f32.gmra.mxu0 %v5457
      %v6337 = vpop.f32.mrf.mxu0
      %v6338 = vadd.f32 0.0, %v6337
      %6339 = vmatmul.f32.gmra.mxu0 %v5460
      %v6340 = vpop.f32.mrf.mxu0
      %v6341 = vadd.f32 0.0, %v6340
      %6342 = vmatmul.f32.gmra.mxu0 %v5463
      %v6343 = vpop.f32.mrf.mxu0
      %v6344 = vadd.f32 0.0, %v6343
      %6345 = vmatmul.f32.gmra.mxu0 %v5466
      %v6346 = vpop.f32.mrf.mxu0
      %v6347 = vadd.f32 0.0, %v6346
      %6348 = vmatmul.f32.gmra.mxu0 %v5469
      %v6349 = vpop.f32.mrf.mxu0
      %v6350 = vadd.f32 0.0, %v6349
      %6351 = vmatmul.f32.gmra.mxu0 %v5472
      %v6352 = vpop.f32.mrf.mxu0
      %v6353 = vadd.f32 0.0, %v6352
      %6354 = vmatmul.f32.gmra.mxu0 %v5475
      %v6355 = vpop.f32.mrf.mxu0
      %v6356 = vadd.f32 0.0, %v6355
      %6357 = vmatmul.f32.gmra.mxu0 %v5478
      %v6358 = vpop.f32.mrf.mxu0
      %v6359 = vadd.f32 0.0, %v6358
      %6360 = vmatmul.f32.gmra.mxu0 %v5481
      %v6361 = vpop.f32.mrf.mxu0
      %v6362 = vadd.f32 0.0, %v6361
      %6363 = vmatmul.f32.gmra.mxu0 %v5484
      %v6364 = vpop.f32.mrf.mxu0
      %v6365 = vadd.f32 0.0, %v6364
      %6366 = vmatmul.f32.gmra.mxu0 %v5487
      %v6367 = vpop.f32.mrf.mxu0
      %v6368 = vadd.f32 0.0, %v6367
      %6369 = vmatmul.f32.gmra.mxu0 %v5490
      %v6370 = vpop.f32.mrf.mxu0
      %v6371 = vadd.f32 0.0, %v6370
      %6372 = vmatmul.f32.gmra.mxu0 %v5493
      %v6373 = vpop.f32.mrf.mxu0
      %v6374 = vadd.f32 0.0, %v6373
      %6375 = vmatmul.f32.gmra.mxu0 %v5496
      %v6376 = vpop.f32.mrf.mxu0
      %v6377 = vadd.f32 0.0, %v6376
      %6378 = vmatmul.f32.gmra.mxu0 %v5499
      %v6379 = vpop.f32.mrf.mxu0
      %v6380 = vadd.f32 0.0, %v6379
      %6381 = vmatmul.f32.gmra.mxu0 %v5502
      %v6382 = vpop.f32.mrf.mxu0
      %v6383 = vadd.f32 0.0, %v6382
      %6384 = vmatmul.f32.gmra.mxu0 %v5505
      %v6385 = vpop.f32.mrf.mxu0
      %v6386 = vadd.f32 0.0, %v6385
      %6387 = vmatmul.f32.gmra.mxu0 %v5508
      %v6388 = vpop.f32.mrf.mxu0
      %v6389 = vadd.f32 0.0, %v6388
      %6390 = vmatmul.f32.gmra.mxu0 %v5511
      %v6391 = vpop.f32.mrf.mxu0
      %v6392 = vadd.f32 0.0, %v6391
      %6393 = vmatmul.f32.gmra.mxu0 %v5514
      %v6394 = vpop.f32.mrf.mxu0
      %v6395 = vadd.f32 0.0, %v6394
      %6396 = vmatmul.f32.gmra.mxu0 %v5517
      %v6397 = vpop.f32.mrf.mxu0
      %v6398 = vadd.f32 0.0, %v6397
      %6399 = vmatmul.f32.gmra.mxu0 %v5520
      %v6400 = vpop.f32.mrf.mxu0
      %v6401 = vadd.f32 0.0, %v6400
      %6402 = vmatmul.f32.gmra.mxu0 %v5523
      %v6403 = vpop.f32.mrf.mxu0
      %v6404 = vadd.f32 0.0, %v6403
      %6405 = vmatmul.f32.gmra.mxu0 %v5526
      %v6406 = vpop.f32.mrf.mxu0
      %v6407 = vadd.f32 0.0, %v6406
      %6408 = vmatmul.f32.gmra.mxu0 %v5529
      %v6409 = vpop.f32.mrf.mxu0
      %v6410 = vadd.f32 0.0, %v6409
      %6411 = vmatmul.f32.gmra.mxu0 %v5532
      %v6412 = vpop.f32.mrf.mxu0
      %v6413 = vadd.f32 0.0, %v6412
      %6414 = vmatmul.f32.gmra.mxu0 %v5535
      %v6415 = vpop.f32.mrf.mxu0
      %v6416 = vadd.f32 0.0, %v6415
      %6417 = vmatmul.f32.gmra.mxu0 %v5538
      %v6418 = vpop.f32.mrf.mxu0
      %v6419 = vadd.f32 0.0, %v6418
      %6420 = vmatmul.f32.gmra.mxu0 %v5541
      %v6421 = vpop.f32.mrf.mxu0
      %v6422 = vadd.f32 0.0, %v6421
      %6423 = vmatmul.f32.gmra.mxu0 %v5544
      %v6424 = vpop.f32.mrf.mxu0
      %v6425 = vadd.f32 0.0, %v6424
      %6426 = vmatmul.f32.gmra.mxu0 %v5547
      %v6427 = vpop.f32.mrf.mxu0
      %v6428 = vadd.f32 0.0, %v6427
      %6429 = vmatmul.f32.gmra.mxu0 %v5550
      %v6430 = vpop.f32.mrf.mxu0
      %v6431 = vadd.f32 0.0, %v6430
      %6432 = vmatmul.f32.gmra.mxu0 %v5553
      %v6433 = vpop.f32.mrf.mxu0
      %v6434 = vadd.f32 0.0, %v6433
      %6435 = vmatmul.f32.gmra.mxu0 %v5556
      %v6436 = vpop.f32.mrf.mxu0
      %v6437 = vadd.f32 0.0, %v6436
      %6438 = vmatmul.f32.gmra.mxu0 %v5559
      %v6439 = vpop.f32.mrf.mxu0
      %v6440 = vadd.f32 0.0, %v6439
      %6441 = vmatmul.f32.gmra.mxu0 %v5562
      %v6442 = vpop.f32.mrf.mxu0
      %v6443 = vadd.f32 0.0, %v6442
      %6444 = vmatmul.f32.gmra.mxu0 %v5565
      %v6445 = vpop.f32.mrf.mxu0
      %v6446 = vadd.f32 0.0, %v6445
      %6447 = vmatmul.f32.gmra.mxu0 %v5568
      %v6448 = vpop.f32.mrf.mxu0
      %v6449 = vadd.f32 0.0, %v6448
      %6450 = vmatmul.f32.gmra.mxu0 %v5571
      %v6451 = vpop.f32.mrf.mxu0
      %v6452 = vadd.f32 0.0, %v6451
      %6453 = vmatmul.f32.gmra.mxu0 %v5574
      %v6454 = vpop.f32.mrf.mxu0
      %v6455 = vadd.f32 0.0, %v6454
      %6456 = vmatmul.f32.gmra.mxu0 %v5577
      %v6457 = vpop.f32.mrf.mxu0
      %v6458 = vadd.f32 0.0, %v6457
      %6459 = vmatmul.f32.gmra.mxu0 %v5580
      %v6460 = vpop.f32.mrf.mxu0
      %v6461 = vadd.f32 0.0, %v6460
      %6462 = vmatmul.f32.gmra.mxu0 %v5583
      %v6463 = vpop.f32.mrf.mxu0
      %v6464 = vadd.f32 0.0, %v6463
      %6465 = vmatmul.f32.gmra.mxu0 %v5586
      %v6466 = vpop.f32.mrf.mxu0
      %v6467 = vadd.f32 0.0, %v6466
      %6468 = vmatmul.f32.gmra.mxu0 %v5589
      %v6469 = vpop.f32.mrf.mxu0
      %v6470 = vadd.f32 0.0, %v6469
      %6471 = vmatmul.f32.gmra.mxu0 %v5592
      %v6472 = vpop.f32.mrf.mxu0
      %v6473 = vadd.f32 0.0, %v6472
      %6474 = vmatmul.f32.gmra.mxu0 %v5595
      %v6475 = vpop.f32.mrf.mxu0
      %v6476 = vadd.f32 0.0, %v6475
      %6477 = vmatmul.f32.gmra.mxu0 %v5598
      %v6478 = vpop.f32.mrf.mxu0
      %v6479 = vadd.f32 0.0, %v6478
      %6480 = vmatmul.f32.gmra.mxu0 %v5601
      %v6481 = vpop.f32.mrf.mxu0
      %v6482 = vadd.f32 0.0, %v6481
      %6483 = vmatmul.f32.gmra.mxu0 %v5604
      %v6484 = vpop.f32.mrf.mxu0
      %v6485 = vadd.f32 0.0, %v6484
      %6486 = vmatmul.f32.gmra.mxu0 %v5607
      %v6487 = vpop.f32.mrf.mxu0
      %v6488 = vadd.f32 0.0, %v6487
      %6489 = vmatmul.f32.gmra.mxu0 %v5610
      %v6490 = vpop.f32.mrf.mxu0
      %v6491 = vadd.f32 0.0, %v6490
      %6492 = vmatmul.f32.gmra.mxu0 %v5613
      %v6493 = vpop.f32.mrf.mxu0
      %v6494 = vadd.f32 0.0, %v6493
      %6495 = vmatmul.f32.gmra.mxu0 %v5616
      %v6496 = vpop.f32.mrf.mxu0
      %v6497 = vadd.f32 0.0, %v6496
      %6498 = vdwg.mxu0
      %v6499 = vld [vmem:[%s17] sm:$0xff]
      %v6500 = vld [vmem:[%s17 + $0x8] sm:$0xff]
      %v6501 = vld [vmem:[%s17 + $0x10] sm:$0xff]
      %v6502 = vld [vmem:[%s17 + $0x18] sm:$0xff]
      %v6503 = vld [vmem:[%s17 + $0x20] sm:$0xff]
      %v6504 = vld [vmem:[%s17 + $0x28] sm:$0xff]
      %v6505 = vld [vmem:[%s17 + $0x30] sm:$0xff]
      %v6506 = vld [vmem:[%s17 + $0x38] sm:$0xff]
      %v6507 = vld [vmem:[%s17 + $0x40] sm:$0xff]
      %v6508 = vld [vmem:[%s17 + $0x48] sm:$0xff]
      %v6509 = vld [vmem:[%s17 + $0x50] sm:$0xff]
      %v6510 = vld [vmem:[%s17 + $0x58] sm:$0xff]
      %v6511 = vld [vmem:[%s17 + $0x60] sm:$0xff]
      %v6512 = vld [vmem:[%s17 + $0x68] sm:$0xff]
      %v6513 = vld [vmem:[%s17 + $0x70] sm:$0xff]
      %v6514 = vld [vmem:[%s17 + $0x78] sm:$0xff]
      %v6515 = vld [vmem:[%s17 + $0x80] sm:$0xff]
      %v6516 = vld [vmem:[%s17 + $0x88] sm:$0xff]
      %v6517 = vld [vmem:[%s17 + $0x90] sm:$0xff]
      %v6518 = vld [vmem:[%s17 + $0x98] sm:$0xff]
      %v6519 = vld [vmem:[%s17 + $0xa0] sm:$0xff]
      %v6520 = vld [vmem:[%s17 + $0xa8] sm:$0xff]
      %v6521 = vld [vmem:[%s17 + $0xb0] sm:$0xff]
      %v6522 = vld [vmem:[%s17 + $0xb8] sm:$0xff]
      %v6523 = vld [vmem:[%s17 + $0xc0] sm:$0xff]
      %v6524 = vld [vmem:[%s17 + $0xc8] sm:$0xff]
      %v6525 = vld [vmem:[%s17 + $0xd0] sm:$0xff]
      %v6526 = vld [vmem:[%s17 + $0xd8] sm:$0xff]
      %v6527 = vld [vmem:[%s17 + $0xe0] sm:$0xff]
      %v6528 = vld [vmem:[%s17 + $0xe8] sm:$0xff]
      %v6529 = vld [vmem:[%s17 + $0xf0] sm:$0xff]
      %v6530 = vld [vmem:[%s17 + $0xf8] sm:$0xff]
      %v6531 = vld [vmem:[%s17 + $0x100] sm:$0xff]
      %v6532 = vld [vmem:[%s17 + $0x108] sm:$0xff]
      %v6533 = vld [vmem:[%s17 + $0x110] sm:$0xff]
      %v6534 = vld [vmem:[%s17 + $0x118] sm:$0xff]
      %v6535 = vld [vmem:[%s17 + $0x120] sm:$0xff]
      %v6536 = vld [vmem:[%s17 + $0x128] sm:$0xff]
      %v6537 = vld [vmem:[%s17 + $0x130] sm:$0xff]
      %v6538 = vld [vmem:[%s17 + $0x138] sm:$0xff]
      %v6539 = vld [vmem:[%s17 + $0x140] sm:$0xff]
      %v6540 = vld [vmem:[%s17 + $0x148] sm:$0xff]
      %v6541 = vld [vmem:[%s17 + $0x150] sm:$0xff]
      %v6542 = vld [vmem:[%s17 + $0x158] sm:$0xff]
      %v6543 = vld [vmem:[%s17 + $0x160] sm:$0xff]
      %v6544 = vld [vmem:[%s17 + $0x168] sm:$0xff]
      %v6545 = vld [vmem:[%s17 + $0x170] sm:$0xff]
      %v6546 = vld [vmem:[%s17 + $0x178] sm:$0xff]
      %v6547 = vld [vmem:[%s17 + $0x180] sm:$0xff]
      %v6548 = vld [vmem:[%s17 + $0x188] sm:$0xff]
      %v6549 = vld [vmem:[%s17 + $0x190] sm:$0xff]
      %v6550 = vld [vmem:[%s17 + $0x198] sm:$0xff]
      %v6551 = vld [vmem:[%s17 + $0x1a0] sm:$0xff]
      %v6552 = vld [vmem:[%s17 + $0x1a8] sm:$0xff]
      %v6553 = vld [vmem:[%s17 + $0x1b0] sm:$0xff]
      %v6554 = vld [vmem:[%s17 + $0x1b8] sm:$0xff]
      %v6555 = vld [vmem:[%s17 + $0x1c0] sm:$0xff]
      %v6556 = vld [vmem:[%s17 + $0x1c8] sm:$0xff]
      %v6557 = vld [vmem:[%s17 + $0x1d0] sm:$0xff]
      %v6558 = vld [vmem:[%s17 + $0x1d8] sm:$0xff]
      %v6559 = vld [vmem:[%s17 + $0x1e0] sm:$0xff]
      %v6560 = vld [vmem:[%s17 + $0x1e8] sm:$0xff]
      %v6561 = vld [vmem:[%s17 + $0x1f0] sm:$0xff]
      %v6562 = vld [vmem:[%s17 + $0x1f8] sm:$0xff]
      %v6563 = vld [vmem:[%s17 + $0x200] sm:$0xff]
      %v6564 = vld [vmem:[%s17 + $0x208] sm:$0xff]
      %v6565 = vld [vmem:[%s17 + $0x210] sm:$0xff]
      %v6566 = vld [vmem:[%s17 + $0x218] sm:$0xff]
      %v6567 = vld [vmem:[%s17 + $0x220] sm:$0xff]
      %v6568 = vld [vmem:[%s17 + $0x228] sm:$0xff]
      %v6569 = vld [vmem:[%s17 + $0x230] sm:$0xff]
      %v6570 = vld [vmem:[%s17 + $0x238] sm:$0xff]
      %v6571 = vld [vmem:[%s17 + $0x240] sm:$0xff]
      %v6572 = vld [vmem:[%s17 + $0x248] sm:$0xff]
      %v6573 = vld [vmem:[%s17 + $0x250] sm:$0xff]
      %v6574 = vld [vmem:[%s17 + $0x258] sm:$0xff]
      %v6575 = vld [vmem:[%s17 + $0x260] sm:$0xff]
      %v6576 = vld [vmem:[%s17 + $0x268] sm:$0xff]
      %v6577 = vld [vmem:[%s17 + $0x270] sm:$0xff]
      %v6578 = vld [vmem:[%s17 + $0x278] sm:$0xff]
      %v6579 = vld [vmem:[%s17 + $0x280] sm:$0xff]
      %v6580 = vld [vmem:[%s17 + $0x288] sm:$0xff]
      %v6581 = vld [vmem:[%s17 + $0x290] sm:$0xff]
      %v6582 = vld [vmem:[%s17 + $0x298] sm:$0xff]
      %v6583 = vld [vmem:[%s17 + $0x2a0] sm:$0xff]
      %v6584 = vld [vmem:[%s17 + $0x2a8] sm:$0xff]
      %v6585 = vld [vmem:[%s17 + $0x2b0] sm:$0xff]
      %v6586 = vld [vmem:[%s17 + $0x2b8] sm:$0xff]
      %v6587 = vld [vmem:[%s17 + $0x2c0] sm:$0xff]
      %v6588 = vld [vmem:[%s17 + $0x2c8] sm:$0xff]
      %v6589 = vld [vmem:[%s17 + $0x2d0] sm:$0xff]
      %v6590 = vld [vmem:[%s17 + $0x2d8] sm:$0xff]
      %v6591 = vld [vmem:[%s17 + $0x2e0] sm:$0xff]
      %v6592 = vld [vmem:[%s17 + $0x2e8] sm:$0xff]
      %v6593 = vld [vmem:[%s17 + $0x2f0] sm:$0xff]
      %v6594 = vld [vmem:[%s17 + $0x2f8] sm:$0xff]
      %v6595 = vld [vmem:[%s17 + $0x300] sm:$0xff]
      %v6596 = vld [vmem:[%s17 + $0x308] sm:$0xff]
      %v6597 = vld [vmem:[%s17 + $0x310] sm:$0xff]
      %v6598 = vld [vmem:[%s17 + $0x318] sm:$0xff]
      %v6599 = vld [vmem:[%s17 + $0x320] sm:$0xff]
      %v6600 = vld [vmem:[%s17 + $0x328] sm:$0xff]
      %v6601 = vld [vmem:[%s17 + $0x330] sm:$0xff]
      %v6602 = vld [vmem:[%s17 + $0x338] sm:$0xff]
      %v6603 = vld [vmem:[%s17 + $0x340] sm:$0xff]
      %v6604 = vld [vmem:[%s17 + $0x348] sm:$0xff]
      %v6605 = vld [vmem:[%s17 + $0x350] sm:$0xff]
      %v6606 = vld [vmem:[%s17 + $0x358] sm:$0xff]
      %v6607 = vld [vmem:[%s17 + $0x360] sm:$0xff]
      %v6608 = vld [vmem:[%s17 + $0x368] sm:$0xff]
      %v6609 = vld [vmem:[%s17 + $0x370] sm:$0xff]
      %v6610 = vld [vmem:[%s17 + $0x378] sm:$0xff]
      %v6611 = vld [vmem:[%s17 + $0x380] sm:$0xff]
      %v6612 = vld [vmem:[%s17 + $0x388] sm:$0xff]
      %v6613 = vld [vmem:[%s17 + $0x390] sm:$0xff]
      %v6614 = vld [vmem:[%s17 + $0x398] sm:$0xff]
      %v6615 = vld [vmem:[%s17 + $0x3a0] sm:$0xff]
      %v6616 = vld [vmem:[%s17 + $0x3a8] sm:$0xff]
      %v6617 = vld [vmem:[%s17 + $0x3b0] sm:$0xff]
      %v6618 = vld [vmem:[%s17 + $0x3b8] sm:$0xff]
      %v6619 = vld [vmem:[%s17 + $0x3c0] sm:$0xff]
      %v6620 = vld [vmem:[%s17 + $0x3c8] sm:$0xff]
      %v6621 = vld [vmem:[%s17 + $0x3d0] sm:$0xff]
      %v6622 = vld [vmem:[%s17 + $0x3d8] sm:$0xff]
      %v6623 = vld [vmem:[%s17 + $0x3e0] sm:$0xff]
      %v6624 = vld [vmem:[%s17 + $0x3e8] sm:$0xff]
      %v6625 = vld [vmem:[%s17 + $0x3f0] sm:$0xff]
      %v6626 = vld [vmem:[%s17 + $0x3f8] sm:$0xff]
      %v6627 = vld [vmem:[%s17 + $0x400] sm:$0xff]
      %v6628 = vld [vmem:[%s17 + $0x408] sm:$0xff]
      %v6629 = vld [vmem:[%s17 + $0x410] sm:$0xff]
      %v6630 = vld [vmem:[%s17 + $0x418] sm:$0xff]
      %v6631 = vld [vmem:[%s17 + $0x420] sm:$0xff]
      %v6632 = vld [vmem:[%s17 + $0x428] sm:$0xff]
      %v6633 = vld [vmem:[%s17 + $0x430] sm:$0xff]
      %v6634 = vld [vmem:[%s17 + $0x438] sm:$0xff]
      %v6635 = vld [vmem:[%s17 + $0x440] sm:$0xff]
      %v6636 = vld [vmem:[%s17 + $0x448] sm:$0xff]
      %v6637 = vld [vmem:[%s17 + $0x450] sm:$0xff]
      %v6638 = vld [vmem:[%s17 + $0x458] sm:$0xff]
      %v6639 = vld [vmem:[%s17 + $0x460] sm:$0xff]
      %v6640 = vld [vmem:[%s17 + $0x468] sm:$0xff]
      %v6641 = vld [vmem:[%s17 + $0x470] sm:$0xff]
      %v6642 = vld [vmem:[%s17 + $0x478] sm:$0xff]
      %6643 = vmatpush.msra.mxu0 %v6530
      %6644 = vmatpush.msra.mxu0 %v6529
      %6645 = vmatpush.msra.mxu0 %v6528
      %6646 = vmatpush.msra.mxu0 %v6527
      %6647 = vmatpush.msra.mxu0 %v6526
      %6648 = vmatpush.msra.mxu0 %v6525
      %6649 = vmatpush.msra.mxu0 %v6524
      %6650 = vmatpush.msra.mxu0 %v6523
      %6651 = vmatpush.msra.mxu0 %v6522
      %6652 = vmatpush.msra.mxu0 %v6521
      %6653 = vmatpush.msra.mxu0 %v6520
      %6654 = vmatpush.msra.mxu0 %v6519
      %6655 = vmatpush.msra.mxu0 %v6518
      %6656 = vmatpush.msra.mxu0 %v6517
      %6657 = vmatpush.msra.mxu0 %v6516
      %6658 = vmatpush.msra.mxu0 %v6515
      %6659 = vmatmul.f32.gmra.mxu0 %v5732
      %v6660 = vpop.f32.mrf.mxu0
      %v6661 = vadd.f32 0.0, %v6660
      %6662 = vmatmul.f32.gmra.mxu0 %v5735
      %v6663 = vpop.f32.mrf.mxu0
      %v6664 = vadd.f32 0.0, %v6663
      %6665 = vmatmul.f32.gmra.mxu0 %v5738
      %v6666 = vpop.f32.mrf.mxu0
      %v6667 = vadd.f32 0.0, %v6666
      %6668 = vmatmul.f32.gmra.mxu0 %v5741
      %v6669 = vpop.f32.mrf.mxu0
      %v6670 = vadd.f32 0.0, %v6669
      %6671 = vmatmul.f32.gmra.mxu0 %v5744
      %v6672 = vpop.f32.mrf.mxu0
      %v6673 = vadd.f32 0.0, %v6672
      %6674 = vmatmul.f32.gmra.mxu0 %v5747
      %v6675 = vpop.f32.mrf.mxu0
      %v6676 = vadd.f32 0.0, %v6675
      %6677 = vmatmul.f32.gmra.mxu0 %v5750
      %v6678 = vpop.f32.mrf.mxu0
      %v6679 = vadd.f32 0.0, %v6678
      %6680 = vmatmul.f32.gmra.mxu0 %v5753
      %v6681 = vpop.f32.mrf.mxu0
      %v6682 = vadd.f32 0.0, %v6681
      %6683 = vmatmul.f32.gmra.mxu0 %v5756
      %v6684 = vpop.f32.mrf.mxu0
      %v6685 = vadd.f32 0.0, %v6684
      %6686 = vmatmul.f32.gmra.mxu0 %v5759
      %v6687 = vpop.f32.mrf.mxu0
      %v6688 = vadd.f32 0.0, %v6687
      %6689 = vmatmul.f32.gmra.mxu0 %v5762
      %v6690 = vpop.f32.mrf.mxu0
      %v6691 = vadd.f32 0.0, %v6690
      %6692 = vmatmul.f32.gmra.mxu0 %v5765
      %v6693 = vpop.f32.mrf.mxu0
      %v6694 = vadd.f32 0.0, %v6693
      %6695 = vmatmul.f32.gmra.mxu0 %v5768
      %v6696 = vpop.f32.mrf.mxu0
      %v6697 = vadd.f32 0.0, %v6696
      %6698 = vmatmul.f32.gmra.mxu0 %v5771
      %v6699 = vpop.f32.mrf.mxu0
      %v6700 = vadd.f32 0.0, %v6699
      %6701 = vmatmul.f32.gmra.mxu0 %v5774
      %v6702 = vpop.f32.mrf.mxu0
      %v6703 = vadd.f32 0.0, %v6702
      %6704 = vmatmul.f32.gmra.mxu0 %v5777
      %v6705 = vpop.f32.mrf.mxu0
      %v6706 = vadd.f32 0.0, %v6705
      %6707 = vmatmul.f32.gmra.mxu0 %v5780
      %v6708 = vpop.f32.mrf.mxu0
      %v6709 = vadd.f32 0.0, %v6708
      %6710 = vmatmul.f32.gmra.mxu0 %v5783
      %v6711 = vpop.f32.mrf.mxu0
      %v6712 = vadd.f32 0.0, %v6711
      %6713 = vmatmul.f32.gmra.mxu0 %v5786
      %v6714 = vpop.f32.mrf.mxu0
      %v6715 = vadd.f32 0.0, %v6714
      %6716 = vmatmul.f32.gmra.mxu0 %v5789
      %v6717 = vpop.f32.mrf.mxu0
      %v6718 = vadd.f32 0.0, %v6717
      %6719 = vmatmul.f32.gmra.mxu0 %v5792
      %v6720 = vpop.f32.mrf.mxu0
      %v6721 = vadd.f32 0.0, %v6720
      %6722 = vmatmul.f32.gmra.mxu0 %v5795
      %v6723 = vpop.f32.mrf.mxu0
      %v6724 = vadd.f32 0.0, %v6723
      %6725 = vmatmul.f32.gmra.mxu0 %v5798
      %v6726 = vpop.f32.mrf.mxu0
      %v6727 = vadd.f32 0.0, %v6726
      %6728 = vmatmul.f32.gmra.mxu0 %v5801
      %v6729 = vpop.f32.mrf.mxu0
      %v6730 = vadd.f32 0.0, %v6729
      %6731 = vmatmul.f32.gmra.mxu0 %v5804
      %v6732 = vpop.f32.mrf.mxu0
      %v6733 = vadd.f32 0.0, %v6732
      %6734 = vmatmul.f32.gmra.mxu0 %v5807
      %v6735 = vpop.f32.mrf.mxu0
      %v6736 = vadd.f32 0.0, %v6735
      %6737 = vmatmul.f32.gmra.mxu0 %v5810
      %v6738 = vpop.f32.mrf.mxu0
      %v6739 = vadd.f32 0.0, %v6738
      %6740 = vmatmul.f32.gmra.mxu0 %v5813
      %v6741 = vpop.f32.mrf.mxu0
      %v6742 = vadd.f32 0.0, %v6741
      %6743 = vmatmul.f32.gmra.mxu0 %v5816
      %v6744 = vpop.f32.mrf.mxu0
      %v6745 = vadd.f32 0.0, %v6744
      %6746 = vmatmul.f32.gmra.mxu0 %v5819
      %v6747 = vpop.f32.mrf.mxu0
      %v6748 = vadd.f32 0.0, %v6747
      %6749 = vmatmul.f32.gmra.mxu0 %v5822
      %v6750 = vpop.f32.mrf.mxu0
      %v6751 = vadd.f32 0.0, %v6750
      %6752 = vmatmul.f32.gmra.mxu0 %v5825
      %v6753 = vpop.f32.mrf.mxu0
      %v6754 = vadd.f32 0.0, %v6753
      %6755 = vdwg.mxu0
      %6756 = vmatpush.msra.mxu0 %v6514
      %6757 = vmatpush.msra.mxu0 %v6513
      %6758 = vmatpush.msra.mxu0 %v6512
      %6759 = vmatpush.msra.mxu0 %v6511
      %6760 = vmatpush.msra.mxu0 %v6510
      %6761 = vmatpush.msra.mxu0 %v6509
      %6762 = vmatpush.msra.mxu0 %v6508
      %6763 = vmatpush.msra.mxu0 %v6507
      %6764 = vmatpush.msra.mxu0 %v6506
      %6765 = vmatpush.msra.mxu0 %v6505
      %6766 = vmatpush.msra.mxu0 %v6504
      %6767 = vmatpush.msra.mxu0 %v6503
      %6768 = vmatpush.msra.mxu0 %v6502
      %6769 = vmatpush.msra.mxu0 %v6501
      %6770 = vmatpush.msra.mxu0 %v6500
      %6771 = vmatpush.msra.mxu0 %v6499
      %6772 = vmatmul.f32.gmra.mxu0 %v5636
      %v6773 = vpop.f32.mrf.mxu0
      %v6774 = vadd.f32 %v6661, %v6773
      %6775 = vmatmul.f32.gmra.mxu0 %v5639
      %v6776 = vpop.f32.mrf.mxu0
      %v6777 = vadd.f32 %v6664, %v6776
      %6778 = vmatmul.f32.gmra.mxu0 %v5642
      %v6779 = vpop.f32.mrf.mxu0
      %v6780 = vadd.f32 %v6667, %v6779
      %6781 = vmatmul.f32.gmra.mxu0 %v5645
      %v6782 = vpop.f32.mrf.mxu0
      %v6783 = vadd.f32 %v6670, %v6782
      %6784 = vmatmul.f32.gmra.mxu0 %v5648
      %v6785 = vpop.f32.mrf.mxu0
      %v6786 = vadd.f32 %v6673, %v6785
      %6787 = vmatmul.f32.gmra.mxu0 %v5651
      %v6788 = vpop.f32.mrf.mxu0
      %v6789 = vadd.f32 %v6676, %v6788
      %6790 = vmatmul.f32.gmra.mxu0 %v5654
      %v6791 = vpop.f32.mrf.mxu0
      %v6792 = vadd.f32 %v6679, %v6791
      %6793 = vmatmul.f32.gmra.mxu0 %v5657
      %v6794 = vpop.f32.mrf.mxu0
      %v6795 = vadd.f32 %v6682, %v6794
      %6796 = vmatmul.f32.gmra.mxu0 %v5660
      %v6797 = vpop.f32.mrf.mxu0
      %v6798 = vadd.f32 %v6685, %v6797
      %6799 = vmatmul.f32.gmra.mxu0 %v5663
      %v6800 = vpop.f32.mrf.mxu0
      %v6801 = vadd.f32 %v6688, %v6800
      %6802 = vmatmul.f32.gmra.mxu0 %v5666
      %v6803 = vpop.f32.mrf.mxu0
      %v6804 = vadd.f32 %v6691, %v6803
      %6805 = vmatmul.f32.gmra.mxu0 %v5669
      %v6806 = vpop.f32.mrf.mxu0
      %v6807 = vadd.f32 %v6694, %v6806
      %6808 = vmatmul.f32.gmra.mxu0 %v5672
      %v6809 = vpop.f32.mrf.mxu0
      %v6810 = vadd.f32 %v6697, %v6809
      %6811 = vmatmul.f32.gmra.mxu0 %v5675
      %v6812 = vpop.f32.mrf.mxu0
      %v6813 = vadd.f32 %v6700, %v6812
      %6814 = vmatmul.f32.gmra.mxu0 %v5678
      %v6815 = vpop.f32.mrf.mxu0
      %v6816 = vadd.f32 %v6703, %v6815
      %6817 = vmatmul.f32.gmra.mxu0 %v5681
      %v6818 = vpop.f32.mrf.mxu0
      %v6819 = vadd.f32 %v6706, %v6818
      %6820 = vmatmul.f32.gmra.mxu0 %v5684
      %v6821 = vpop.f32.mrf.mxu0
      %v6822 = vadd.f32 %v6709, %v6821
      %6823 = vmatmul.f32.gmra.mxu0 %v5687
      %v6824 = vpop.f32.mrf.mxu0
      %v6825 = vadd.f32 %v6712, %v6824
      %6826 = vmatmul.f32.gmra.mxu0 %v5690
      %v6827 = vpop.f32.mrf.mxu0
      %v6828 = vadd.f32 %v6715, %v6827
      %6829 = vmatmul.f32.gmra.mxu0 %v5693
      %v6830 = vpop.f32.mrf.mxu0
      %v6831 = vadd.f32 %v6718, %v6830
      %6832 = vmatmul.f32.gmra.mxu0 %v5696
      %v6833 = vpop.f32.mrf.mxu0
      %v6834 = vadd.f32 %v6721, %v6833
      %6835 = vmatmul.f32.gmra.mxu0 %v5699
      %v6836 = vpop.f32.mrf.mxu0
      %v6837 = vadd.f32 %v6724, %v6836
      %6838 = vmatmul.f32.gmra.mxu0 %v5702
      %v6839 = vpop.f32.mrf.mxu0
      %v6840 = vadd.f32 %v6727, %v6839
      %6841 = vmatmul.f32.gmra.mxu0 %v5705
      %v6842 = vpop.f32.mrf.mxu0
      %v6843 = vadd.f32 %v6730, %v6842
      %6844 = vmatmul.f32.gmra.mxu0 %v5708
      %v6845 = vpop.f32.mrf.mxu0
      %v6846 = vadd.f32 %v6733, %v6845
      %6847 = vmatmul.f32.gmra.mxu0 %v5711
      %v6848 = vpop.f32.mrf.mxu0
      %v6849 = vadd.f32 %v6736, %v6848
      %6850 = vmatmul.f32.gmra.mxu0 %v5714
      %v6851 = vpop.f32.mrf.mxu0
      %v6852 = vadd.f32 %v6739, %v6851
      %6853 = vmatmul.f32.gmra.mxu0 %v5717
      %v6854 = vpop.f32.mrf.mxu0
      %v6855 = vadd.f32 %v6742, %v6854
      %6856 = vmatmul.f32.gmra.mxu0 %v5720
      %v6857 = vpop.f32.mrf.mxu0
      %v6858 = vadd.f32 %v6745, %v6857
      %6859 = vmatmul.f32.gmra.mxu0 %v5723
      %v6860 = vpop.f32.mrf.mxu0
      %v6861 = vadd.f32 %v6748, %v6860
      %6862 = vmatmul.f32.gmra.mxu0 %v5726
      %v6863 = vpop.f32.mrf.mxu0
      %v6864 = vadd.f32 %v6751, %v6863
      %6865 = vmatmul.f32.gmra.mxu0 %v5729
      %v6866 = vpop.f32.mrf.mxu0
      %v6867 = vadd.f32 %v6754, %v6866
      %6868 = vdwg.mxu0
      %6869 = vmatpush.msra.mxu0 %v6546
      %6870 = vmatpush.msra.mxu0 %v6545
      %6871 = vmatpush.msra.mxu0 %v6544
      %6872 = vmatpush.msra.mxu0 %v6543
      %6873 = vmatpush.msra.mxu0 %v6542
      %6874 = vmatpush.msra.mxu0 %v6541
      %6875 = vmatpush.msra.mxu0 %v6540
      %6876 = vmatpush.msra.mxu0 %v6539
      %6877 = vmatpush.msra.mxu0 %v6538
      %6878 = vmatpush.msra.mxu0 %v6537
      %6879 = vmatpush.msra.mxu0 %v6536
      %6880 = vmatpush.msra.mxu0 %v6535
      %6881 = vmatpush.msra.mxu0 %v6534
      %6882 = vmatpush.msra.mxu0 %v6533
      %6883 = vmatpush.msra.mxu0 %v6532
      %6884 = vmatpush.msra.mxu0 %v6531
      %6885 = vmatmul.f32.gmra.mxu0 %v5828
      %v6886 = vpop.f32.mrf.mxu0
      %v6887 = vadd.f32 0.0, %v6886
      %6888 = vmatmul.f32.gmra.mxu0 %v5831
      %v6889 = vpop.f32.mrf.mxu0
      %v6890 = vadd.f32 0.0, %v6889
      %6891 = vmatmul.f32.gmra.mxu0 %v5834
      %v6892 = vpop.f32.mrf.mxu0
      %v6893 = vadd.f32 0.0, %v6892
      %6894 = vmatmul.f32.gmra.mxu0 %v5837
      %v6895 = vpop.f32.mrf.mxu0
      %v6896 = vadd.f32 0.0, %v6895
      %6897 = vmatmul.f32.gmra.mxu0 %v5840
      %v6898 = vpop.f32.mrf.mxu0
      %v6899 = vadd.f32 0.0, %v6898
      %6900 = vmatmul.f32.gmra.mxu0 %v5843
      %v6901 = vpop.f32.mrf.mxu0
      %v6902 = vadd.f32 0.0, %v6901
      %6903 = vmatmul.f32.gmra.mxu0 %v5846
      %v6904 = vpop.f32.mrf.mxu0
      %v6905 = vadd.f32 0.0, %v6904
      %6906 = vmatmul.f32.gmra.mxu0 %v5849
      %v6907 = vpop.f32.mrf.mxu0
      %v6908 = vadd.f32 0.0, %v6907
      %6909 = vmatmul.f32.gmra.mxu0 %v5852
      %v6910 = vpop.f32.mrf.mxu0
      %v6911 = vadd.f32 0.0, %v6910
      %6912 = vmatmul.f32.gmra.mxu0 %v5855
      %v6913 = vpop.f32.mrf.mxu0
      %v6914 = vadd.f32 0.0, %v6913
      %6915 = vmatmul.f32.gmra.mxu0 %v5858
      %v6916 = vpop.f32.mrf.mxu0
      %v6917 = vadd.f32 0.0, %v6916
      %6918 = vmatmul.f32.gmra.mxu0 %v5861
      %v6919 = vpop.f32.mrf.mxu0
      %v6920 = vadd.f32 0.0, %v6919
      %6921 = vmatmul.f32.gmra.mxu0 %v5864
      %v6922 = vpop.f32.mrf.mxu0
      %v6923 = vadd.f32 0.0, %v6922
      %6924 = vmatmul.f32.gmra.mxu0 %v5867
      %v6925 = vpop.f32.mrf.mxu0
      %v6926 = vadd.f32 0.0, %v6925
      %6927 = vmatmul.f32.gmra.mxu0 %v5870
      %v6928 = vpop.f32.mrf.mxu0
      %v6929 = vadd.f32 0.0, %v6928
      %6930 = vmatmul.f32.gmra.mxu0 %v5873
      %v6931 = vpop.f32.mrf.mxu0
      %v6932 = vadd.f32 0.0, %v6931
      %6933 = vmatmul.f32.gmra.mxu0 %v5876
      %v6934 = vpop.f32.mrf.mxu0
      %v6935 = vadd.f32 0.0, %v6934
      %6936 = vmatmul.f32.gmra.mxu0 %v5879
      %v6937 = vpop.f32.mrf.mxu0
      %v6938 = vadd.f32 0.0, %v6937
      %6939 = vmatmul.f32.gmra.mxu0 %v5882
      %v6940 = vpop.f32.mrf.mxu0
      %v6941 = vadd.f32 0.0, %v6940
      %6942 = vmatmul.f32.gmra.mxu0 %v5885
      %v6943 = vpop.f32.mrf.mxu0
      %v6944 = vadd.f32 0.0, %v6943
      %6945 = vmatmul.f32.gmra.mxu0 %v5888
      %v6946 = vpop.f32.mrf.mxu0
      %v6947 = vadd.f32 0.0, %v6946
      %6948 = vmatmul.f32.gmra.mxu0 %v5891
      %v6949 = vpop.f32.mrf.mxu0
      %v6950 = vadd.f32 0.0, %v6949
      %6951 = vmatmul.f32.gmra.mxu0 %v5894
      %v6952 = vpop.f32.mrf.mxu0
      %v6953 = vadd.f32 0.0, %v6952
      %6954 = vmatmul.f32.gmra.mxu0 %v5897
      %v6955 = vpop.f32.mrf.mxu0
      %v6956 = vadd.f32 0.0, %v6955
      %6957 = vmatmul.f32.gmra.mxu0 %v5900
      %v6958 = vpop.f32.mrf.mxu0
      %v6959 = vadd.f32 0.0, %v6958
      %6960 = vmatmul.f32.gmra.mxu0 %v5903
      %v6961 = vpop.f32.mrf.mxu0
      %v6962 = vadd.f32 0.0, %v6961
      %6963 = vmatmul.f32.gmra.mxu0 %v5906
      %v6964 = vpop.f32.mrf.mxu0
      %v6965 = vadd.f32 0.0, %v6964
      %6966 = vmatmul.f32.gmra.mxu0 %v5909
      %v6967 = vpop.f32.mrf.mxu0
      %v6968 = vadd.f32 0.0, %v6967
      %6969 = vmatmul.f32.gmra.mxu0 %v5912
      %v6970 = vpop.f32.mrf.mxu0
      %v6971 = vadd.f32 0.0, %v6970
      %6972 = vmatmul.f32.gmra.mxu0 %v5915
      %v6973 = vpop.f32.mrf.mxu0
      %v6974 = vadd.f32 0.0, %v6973
      %6975 = vmatmul.f32.gmra.mxu0 %v5918
      %v6976 = vpop.f32.mrf.mxu0
      %v6977 = vadd.f32 0.0, %v6976
      %6978 = vmatmul.f32.gmra.mxu0 %v5921
      %v6979 = vpop.f32.mrf.mxu0
      %v6980 = vadd.f32 0.0, %v6979
      %6981 = vdwg.mxu0
      %v6982 = vadd.f32 %v6774, %v6887
      %v6983 = vadd.f32 %v6777, %v6890
      %v6984 = vadd.f32 %v6780, %v6893
      %v6985 = vadd.f32 %v6783, %v6896
      %v6986 = vadd.f32 %v6786, %v6899
      %v6987 = vadd.f32 %v6789, %v6902
      %v6988 = vadd.f32 %v6792, %v6905
      %v6989 = vadd.f32 %v6795, %v6908
      %v6990 = vadd.f32 %v6798, %v6911
      %v6991 = vadd.f32 %v6801, %v6914
      %v6992 = vadd.f32 %v6804, %v6917
      %v6993 = vadd.f32 %v6807, %v6920
      %v6994 = vadd.f32 %v6810, %v6923
      %v6995 = vadd.f32 %v6813, %v6926
      %v6996 = vadd.f32 %v6816, %v6929
      %v6997 = vadd.f32 %v6819, %v6932
      %v6998 = vadd.f32 %v6822, %v6935
      %v6999 = vadd.f32 %v6825, %v6938
      %v7000 = vadd.f32 %v6828, %v6941
      %v7001 = vadd.f32 %v6831, %v6944
      %v7002 = vadd.f32 %v6834, %v6947
      %v7003 = vadd.f32 %v6837, %v6950
      %v7004 = vadd.f32 %v6840, %v6953
      %v7005 = vadd.f32 %v6843, %v6956
      %v7006 = vadd.f32 %v6846, %v6959
      %v7007 = vadd.f32 %v6849, %v6962
      %v7008 = vadd.f32 %v6852, %v6965
      %v7009 = vadd.f32 %v6855, %v6968
      %v7010 = vadd.f32 %v6858, %v6971
      %v7011 = vadd.f32 %v6861, %v6974
      %v7012 = vadd.f32 %v6864, %v6977
      %v7013 = vadd.f32 %v6867, %v6980
      %7014 = vmatpush.msra.mxu0 %v6562
      %7015 = vmatpush.msra.mxu0 %v6561
      %7016 = vmatpush.msra.mxu0 %v6560
      %7017 = vmatpush.msra.mxu0 %v6559
      %7018 = vmatpush.msra.mxu0 %v6558
      %7019 = vmatpush.msra.mxu0 %v6557
      %7020 = vmatpush.msra.mxu0 %v6556
      %7021 = vmatpush.msra.mxu0 %v6555
      %7022 = vmatpush.msra.mxu0 %v6554
      %7023 = vmatpush.msra.mxu0 %v6553
      %7024 = vmatpush.msra.mxu0 %v6552
      %7025 = vmatpush.msra.mxu0 %v6551
      %7026 = vmatpush.msra.mxu0 %v6550
      %7027 = vmatpush.msra.mxu0 %v6549
      %7028 = vmatpush.msra.mxu0 %v6548
      %7029 = vmatpush.msra.mxu0 %v6547
      %7030 = vmatmul.f32.gmra.mxu0 %v5924
      %v7031 = vpop.f32.mrf.mxu0
      %v7032 = vadd.f32 0.0, %v7031
      %7033 = vmatmul.f32.gmra.mxu0 %v5927
      %v7034 = vpop.f32.mrf.mxu0
      %v7035 = vadd.f32 0.0, %v7034
      %7036 = vmatmul.f32.gmra.mxu0 %v5930
      %v7037 = vpop.f32.mrf.mxu0
      %v7038 = vadd.f32 0.0, %v7037
      %7039 = vmatmul.f32.gmra.mxu0 %v5933
      %v7040 = vpop.f32.mrf.mxu0
      %v7041 = vadd.f32 0.0, %v7040
      %7042 = vmatmul.f32.gmra.mxu0 %v5936
      %v7043 = vpop.f32.mrf.mxu0
      %v7044 = vadd.f32 0.0, %v7043
      %7045 = vmatmul.f32.gmra.mxu0 %v5939
      %v7046 = vpop.f32.mrf.mxu0
      %v7047 = vadd.f32 0.0, %v7046
      %7048 = vmatmul.f32.gmra.mxu0 %v5942
      %v7049 = vpop.f32.mrf.mxu0
      %v7050 = vadd.f32 0.0, %v7049
      %7051 = vmatmul.f32.gmra.mxu0 %v5945
      %v7052 = vpop.f32.mrf.mxu0
      %v7053 = vadd.f32 0.0, %v7052
      %7054 = vmatmul.f32.gmra.mxu0 %v5948
      %v7055 = vpop.f32.mrf.mxu0
      %v7056 = vadd.f32 0.0, %v7055
      %7057 = vmatmul.f32.gmra.mxu0 %v5951
      %v7058 = vpop.f32.mrf.mxu0
      %v7059 = vadd.f32 0.0, %v7058
      %7060 = vmatmul.f32.gmra.mxu0 %v5954
      %v7061 = vpop.f32.mrf.mxu0
      %v7062 = vadd.f32 0.0, %v7061
      %7063 = vmatmul.f32.gmra.mxu0 %v5957
      %v7064 = vpop.f32.mrf.mxu0
      %v7065 = vadd.f32 0.0, %v7064
      %7066 = vmatmul.f32.gmra.mxu0 %v5960
      %v7067 = vpop.f32.mrf.mxu0
      %v7068 = vadd.f32 0.0, %v7067
      %7069 = vmatmul.f32.gmra.mxu0 %v5963
      %v7070 = vpop.f32.mrf.mxu0
      %v7071 = vadd.f32 0.0, %v7070
      %7072 = vmatmul.f32.gmra.mxu0 %v5966
      %v7073 = vpop.f32.mrf.mxu0
      %v7074 = vadd.f32 0.0, %v7073
      %7075 = vmatmul.f32.gmra.mxu0 %v5969
      %v7076 = vpop.f32.mrf.mxu0
      %v7077 = vadd.f32 0.0, %v7076
      %7078 = vmatmul.f32.gmra.mxu0 %v5972
      %v7079 = vpop.f32.mrf.mxu0
      %v7080 = vadd.f32 0.0, %v7079
      %7081 = vmatmul.f32.gmra.mxu0 %v5975
      %v7082 = vpop.f32.mrf.mxu0
      %v7083 = vadd.f32 0.0, %v7082
      %7084 = vmatmul.f32.gmra.mxu0 %v5978
      %v7085 = vpop.f32.mrf.mxu0
      %v7086 = vadd.f32 0.0, %v7085
      %7087 = vmatmul.f32.gmra.mxu0 %v5981
      %v7088 = vpop.f32.mrf.mxu0
      %v7089 = vadd.f32 0.0, %v7088
      %7090 = vmatmul.f32.gmra.mxu0 %v5984
      %v7091 = vpop.f32.mrf.mxu0
      %v7092 = vadd.f32 0.0, %v7091
      %7093 = vmatmul.f32.gmra.mxu0 %v5987
      %v7094 = vpop.f32.mrf.mxu0
      %v7095 = vadd.f32 0.0, %v7094
      %7096 = vmatmul.f32.gmra.mxu0 %v5990
      %v7097 = vpop.f32.mrf.mxu0
      %v7098 = vadd.f32 0.0, %v7097
      %7099 = vmatmul.f32.gmra.mxu0 %v5993
      %v7100 = vpop.f32.mrf.mxu0
      %v7101 = vadd.f32 0.0, %v7100
      %7102 = vmatmul.f32.gmra.mxu0 %v5996
      %v7103 = vpop.f32.mrf.mxu0
      %v7104 = vadd.f32 0.0, %v7103
      %7105 = vmatmul.f32.gmra.mxu0 %v5999
      %v7106 = vpop.f32.mrf.mxu0
      %v7107 = vadd.f32 0.0, %v7106
      %7108 = vmatmul.f32.gmra.mxu0 %v6002
      %v7109 = vpop.f32.mrf.mxu0
      %v7110 = vadd.f32 0.0, %v7109
      %7111 = vmatmul.f32.gmra.mxu0 %v6005
      %v7112 = vpop.f32.mrf.mxu0
      %v7113 = vadd.f32 0.0, %v7112
      %7114 = vmatmul.f32.gmra.mxu0 %v6008
      %v7115 = vpop.f32.mrf.mxu0
      %v7116 = vadd.f32 0.0, %v7115
      %7117 = vmatmul.f32.gmra.mxu0 %v6011
      %v7118 = vpop.f32.mrf.mxu0
      %v7119 = vadd.f32 0.0, %v7118
      %7120 = vmatmul.f32.gmra.mxu0 %v6014
      %v7121 = vpop.f32.mrf.mxu0
      %v7122 = vadd.f32 0.0, %v7121
      %7123 = vmatmul.f32.gmra.mxu0 %v6017
      %v7124 = vpop.f32.mrf.mxu0
      %v7125 = vadd.f32 0.0, %v7124
      %7126 = vdwg.mxu0
      %v7127 = vadd.f32 %v6982, %v7032
      %v7128 = vadd.f32 %v6983, %v7035
      %v7129 = vadd.f32 %v6984, %v7038
      %v7130 = vadd.f32 %v6985, %v7041
      %v7131 = vadd.f32 %v6986, %v7044
      %v7132 = vadd.f32 %v6987, %v7047
      %v7133 = vadd.f32 %v6988, %v7050
      %v7134 = vadd.f32 %v6989, %v7053
      %v7135 = vadd.f32 %v6990, %v7056
      %v7136 = vadd.f32 %v6991, %v7059
      %v7137 = vadd.f32 %v6992, %v7062
      %v7138 = vadd.f32 %v6993, %v7065
      %v7139 = vadd.f32 %v6994, %v7068
      %v7140 = vadd.f32 %v6995, %v7071
      %v7141 = vadd.f32 %v6996, %v7074
      %v7142 = vadd.f32 %v6997, %v7077
      %v7143 = vadd.f32 %v6998, %v7080
      %v7144 = vadd.f32 %v6999, %v7083
      %v7145 = vadd.f32 %v7000, %v7086
      %v7146 = vadd.f32 %v7001, %v7089
      %v7147 = vadd.f32 %v7002, %v7092
      %v7148 = vadd.f32 %v7003, %v7095
      %v7149 = vadd.f32 %v7004, %v7098
      %v7150 = vadd.f32 %v7005, %v7101
      %v7151 = vadd.f32 %v7006, %v7104
      %v7152 = vadd.f32 %v7007, %v7107
      %v7153 = vadd.f32 %v7008, %v7110
      %v7154 = vadd.f32 %v7009, %v7113
      %v7155 = vadd.f32 %v7010, %v7116
      %v7156 = vadd.f32 %v7011, %v7119
      %v7157 = vadd.f32 %v7012, %v7122
      %v7158 = vadd.f32 %v7013, %v7125
      %7159 = vmatpush.msra.mxu0 %v6578
      %7160 = vmatpush.msra.mxu0 %v6577
      %7161 = vmatpush.msra.mxu0 %v6576
      %7162 = vmatpush.msra.mxu0 %v6575
      %7163 = vmatpush.msra.mxu0 %v6574
      %7164 = vmatpush.msra.mxu0 %v6573
      %7165 = vmatpush.msra.mxu0 %v6572
      %7166 = vmatpush.msra.mxu0 %v6571
      %7167 = vmatpush.msra.mxu0 %v6570
      %7168 = vmatpush.msra.mxu0 %v6569
      %7169 = vmatpush.msra.mxu0 %v6568
      %7170 = vmatpush.msra.mxu0 %v6567
      %7171 = vmatpush.msra.mxu0 %v6566
      %7172 = vmatpush.msra.mxu0 %v6565
      %7173 = vmatpush.msra.mxu0 %v6564
      %7174 = vmatpush.msra.mxu0 %v6563
      %7175 = vmatmul.f32.gmra.mxu0 %v6020
      %v7176 = vpop.f32.mrf.mxu0
      %v7177 = vadd.f32 0.0, %v7176
      %7178 = vmatmul.f32.gmra.mxu0 %v6023
      %v7179 = vpop.f32.mrf.mxu0
      %v7180 = vadd.f32 0.0, %v7179
      %7181 = vmatmul.f32.gmra.mxu0 %v6026
      %v7182 = vpop.f32.mrf.mxu0
      %v7183 = vadd.f32 0.0, %v7182
      %7184 = vmatmul.f32.gmra.mxu0 %v6029
      %v7185 = vpop.f32.mrf.mxu0
      %v7186 = vadd.f32 0.0, %v7185
      %7187 = vmatmul.f32.gmra.mxu0 %v6032
      %v7188 = vpop.f32.mrf.mxu0
      %v7189 = vadd.f32 0.0, %v7188
      %7190 = vmatmul.f32.gmra.mxu0 %v6035
      %v7191 = vpop.f32.mrf.mxu0
      %v7192 = vadd.f32 0.0, %v7191
      %7193 = vmatmul.f32.gmra.mxu0 %v6038
      %v7194 = vpop.f32.mrf.mxu0
      %v7195 = vadd.f32 0.0, %v7194
      %7196 = vmatmul.f32.gmra.mxu0 %v6041
      %v7197 = vpop.f32.mrf.mxu0
      %v7198 = vadd.f32 0.0, %v7197
      %7199 = vmatmul.f32.gmra.mxu0 %v6044
      %v7200 = vpop.f32.mrf.mxu0
      %v7201 = vadd.f32 0.0, %v7200
      %7202 = vmatmul.f32.gmra.mxu0 %v6047
      %v7203 = vpop.f32.mrf.mxu0
      %v7204 = vadd.f32 0.0, %v7203
      %7205 = vmatmul.f32.gmra.mxu0 %v6050
      %v7206 = vpop.f32.mrf.mxu0
      %v7207 = vadd.f32 0.0, %v7206
      %7208 = vmatmul.f32.gmra.mxu0 %v6053
      %v7209 = vpop.f32.mrf.mxu0
      %v7210 = vadd.f32 0.0, %v7209
      %7211 = vmatmul.f32.gmra.mxu0 %v6056
      %v7212 = vpop.f32.mrf.mxu0
      %v7213 = vadd.f32 0.0, %v7212
      %7214 = vmatmul.f32.gmra.mxu0 %v6059
      %v7215 = vpop.f32.mrf.mxu0
      %v7216 = vadd.f32 0.0, %v7215
      %7217 = vmatmul.f32.gmra.mxu0 %v6062
      %v7218 = vpop.f32.mrf.mxu0
      %v7219 = vadd.f32 0.0, %v7218
      %7220 = vmatmul.f32.gmra.mxu0 %v6065
      %v7221 = vpop.f32.mrf.mxu0
      %v7222 = vadd.f32 0.0, %v7221
      %7223 = vmatmul.f32.gmra.mxu0 %v6068
      %v7224 = vpop.f32.mrf.mxu0
      %v7225 = vadd.f32 0.0, %v7224
      %7226 = vmatmul.f32.gmra.mxu0 %v6071
      %v7227 = vpop.f32.mrf.mxu0
      %v7228 = vadd.f32 0.0, %v7227
      %7229 = vmatmul.f32.gmra.mxu0 %v6074
      %v7230 = vpop.f32.mrf.mxu0
      %v7231 = vadd.f32 0.0, %v7230
      %7232 = vmatmul.f32.gmra.mxu0 %v6077
      %v7233 = vpop.f32.mrf.mxu0
      %v7234 = vadd.f32 0.0, %v7233
      %7235 = vmatmul.f32.gmra.mxu0 %v6080
      %v7236 = vpop.f32.mrf.mxu0
      %v7237 = vadd.f32 0.0, %v7236
      %7238 = vmatmul.f32.gmra.mxu0 %v6083
      %v7239 = vpop.f32.mrf.mxu0
      %v7240 = vadd.f32 0.0, %v7239
      %7241 = vmatmul.f32.gmra.mxu0 %v6086
      %v7242 = vpop.f32.mrf.mxu0
      %v7243 = vadd.f32 0.0, %v7242
      %7244 = vmatmul.f32.gmra.mxu0 %v6089
      %v7245 = vpop.f32.mrf.mxu0
      %v7246 = vadd.f32 0.0, %v7245
      %7247 = vmatmul.f32.gmra.mxu0 %v6092
      %v7248 = vpop.f32.mrf.mxu0
      %v7249 = vadd.f32 0.0, %v7248
      %7250 = vmatmul.f32.gmra.mxu0 %v6095
      %v7251 = vpop.f32.mrf.mxu0
      %v7252 = vadd.f32 0.0, %v7251
      %7253 = vmatmul.f32.gmra.mxu0 %v6098
      %v7254 = vpop.f32.mrf.mxu0
      %v7255 = vadd.f32 0.0, %v7254
      %7256 = vmatmul.f32.gmra.mxu0 %v6101
      %v7257 = vpop.f32.mrf.mxu0
      %v7258 = vadd.f32 0.0, %v7257
      %7259 = vmatmul.f32.gmra.mxu0 %v6104
      %v7260 = vpop.f32.mrf.mxu0
      %v7261 = vadd.f32 0.0, %v7260
      %7262 = vmatmul.f32.gmra.mxu0 %v6107
      %v7263 = vpop.f32.mrf.mxu0
      %v7264 = vadd.f32 0.0, %v7263
      %7265 = vmatmul.f32.gmra.mxu0 %v6110
      %v7266 = vpop.f32.mrf.mxu0
      %v7267 = vadd.f32 0.0, %v7266
      %7268 = vmatmul.f32.gmra.mxu0 %v6113
      %v7269 = vpop.f32.mrf.mxu0
      %v7270 = vadd.f32 0.0, %v7269
      %7271 = vdwg.mxu0
      %v7272 = vadd.f32 %v7127, %v7177
      %v7273 = vadd.f32 %v7128, %v7180
      %v7274 = vadd.f32 %v7129, %v7183
      %v7275 = vadd.f32 %v7130, %v7186
      %v7276 = vadd.f32 %v7131, %v7189
      %v7277 = vadd.f32 %v7132, %v7192
      %v7278 = vadd.f32 %v7133, %v7195
      %v7279 = vadd.f32 %v7134, %v7198
      %v7280 = vadd.f32 %v7135, %v7201
      %v7281 = vadd.f32 %v7136, %v7204
      %v7282 = vadd.f32 %v7137, %v7207
      %v7283 = vadd.f32 %v7138, %v7210
      %v7284 = vadd.f32 %v7139, %v7213
      %v7285 = vadd.f32 %v7140, %v7216
      %v7286 = vadd.f32 %v7141, %v7219
      %v7287 = vadd.f32 %v7142, %v7222
      %v7288 = vadd.f32 %v7143, %v7225
      %v7289 = vadd.f32 %v7144, %v7228
      %v7290 = vadd.f32 %v7145, %v7231
      %v7291 = vadd.f32 %v7146, %v7234
      %v7292 = vadd.f32 %v7147, %v7237
      %v7293 = vadd.f32 %v7148, %v7240
      %v7294 = vadd.f32 %v7149, %v7243
      %v7295 = vadd.f32 %v7150, %v7246
      %v7296 = vadd.f32 %v7151, %v7249
      %v7297 = vadd.f32 %v7152, %v7252
      %v7298 = vadd.f32 %v7153, %v7255
      %v7299 = vadd.f32 %v7154, %v7258
      %v7300 = vadd.f32 %v7155, %v7261
      %v7301 = vadd.f32 %v7156, %v7264
      %v7302 = vadd.f32 %v7157, %v7267
      %v7303 = vadd.f32 %v7158, %v7270
      %7304 = vmatpush.msra.mxu0 %v6594
      %7305 = vmatpush.msra.mxu0 %v6593
      %7306 = vmatpush.msra.mxu0 %v6592
      %7307 = vmatpush.msra.mxu0 %v6591
      %7308 = vmatpush.msra.mxu0 %v6590
      %7309 = vmatpush.msra.mxu0 %v6589
      %7310 = vmatpush.msra.mxu0 %v6588
      %7311 = vmatpush.msra.mxu0 %v6587
      %7312 = vmatpush.msra.mxu0 %v6586
      %7313 = vmatpush.msra.mxu0 %v6585
      %7314 = vmatpush.msra.mxu0 %v6584
      %7315 = vmatpush.msra.mxu0 %v6583
      %7316 = vmatpush.msra.mxu0 %v6582
      %7317 = vmatpush.msra.mxu0 %v6581
      %7318 = vmatpush.msra.mxu0 %v6580
      %7319 = vmatpush.msra.mxu0 %v6579
      %7320 = vmatmul.f32.gmra.mxu0 %v6116
      %v7321 = vpop.f32.mrf.mxu0
      %v7322 = vadd.f32 0.0, %v7321
      %7323 = vmatmul.f32.gmra.mxu0 %v6119
      %v7324 = vpop.f32.mrf.mxu0
      %v7325 = vadd.f32 0.0, %v7324
      %7326 = vmatmul.f32.gmra.mxu0 %v6122
      %v7327 = vpop.f32.mrf.mxu0
      %v7328 = vadd.f32 0.0, %v7327
      %7329 = vmatmul.f32.gmra.mxu0 %v6125
      %v7330 = vpop.f32.mrf.mxu0
      %v7331 = vadd.f32 0.0, %v7330
      %7332 = vmatmul.f32.gmra.mxu0 %v6128
      %v7333 = vpop.f32.mrf.mxu0
      %v7334 = vadd.f32 0.0, %v7333
      %7335 = vmatmul.f32.gmra.mxu0 %v6131
      %v7336 = vpop.f32.mrf.mxu0
      %v7337 = vadd.f32 0.0, %v7336
      %7338 = vmatmul.f32.gmra.mxu0 %v6134
      %v7339 = vpop.f32.mrf.mxu0
      %v7340 = vadd.f32 0.0, %v7339
      %7341 = vmatmul.f32.gmra.mxu0 %v6137
      %v7342 = vpop.f32.mrf.mxu0
      %v7343 = vadd.f32 0.0, %v7342
      %7344 = vmatmul.f32.gmra.mxu0 %v6140
      %v7345 = vpop.f32.mrf.mxu0
      %v7346 = vadd.f32 0.0, %v7345
      %7347 = vmatmul.f32.gmra.mxu0 %v6143
      %v7348 = vpop.f32.mrf.mxu0
      %v7349 = vadd.f32 0.0, %v7348
      %7350 = vmatmul.f32.gmra.mxu0 %v6146
      %v7351 = vpop.f32.mrf.mxu0
      %v7352 = vadd.f32 0.0, %v7351
      %7353 = vmatmul.f32.gmra.mxu0 %v6149
      %v7354 = vpop.f32.mrf.mxu0
      %v7355 = vadd.f32 0.0, %v7354
      %7356 = vmatmul.f32.gmra.mxu0 %v6152
      %v7357 = vpop.f32.mrf.mxu0
      %v7358 = vadd.f32 0.0, %v7357
      %7359 = vmatmul.f32.gmra.mxu0 %v6155
      %v7360 = vpop.f32.mrf.mxu0
      %v7361 = vadd.f32 0.0, %v7360
      %7362 = vmatmul.f32.gmra.mxu0 %v6158
      %v7363 = vpop.f32.mrf.mxu0
      %v7364 = vadd.f32 0.0, %v7363
      %7365 = vmatmul.f32.gmra.mxu0 %v6161
      %v7366 = vpop.f32.mrf.mxu0
      %v7367 = vadd.f32 0.0, %v7366
      %7368 = vmatmul.f32.gmra.mxu0 %v6164
      %v7369 = vpop.f32.mrf.mxu0
      %v7370 = vadd.f32 0.0, %v7369
      %7371 = vmatmul.f32.gmra.mxu0 %v6167
      %v7372 = vpop.f32.mrf.mxu0
      %v7373 = vadd.f32 0.0, %v7372
      %7374 = vmatmul.f32.gmra.mxu0 %v6170
      %v7375 = vpop.f32.mrf.mxu0
      %v7376 = vadd.f32 0.0, %v7375
      %7377 = vmatmul.f32.gmra.mxu0 %v6173
      %v7378 = vpop.f32.mrf.mxu0
      %v7379 = vadd.f32 0.0, %v7378
      %7380 = vmatmul.f32.gmra.mxu0 %v6176
      %v7381 = vpop.f32.mrf.mxu0
      %v7382 = vadd.f32 0.0, %v7381
      %7383 = vmatmul.f32.gmra.mxu0 %v6179
      %v7384 = vpop.f32.mrf.mxu0
      %v7385 = vadd.f32 0.0, %v7384
      %7386 = vmatmul.f32.gmra.mxu0 %v6182
      %v7387 = vpop.f32.mrf.mxu0
      %v7388 = vadd.f32 0.0, %v7387
      %7389 = vmatmul.f32.gmra.mxu0 %v6185
      %v7390 = vpop.f32.mrf.mxu0
      %v7391 = vadd.f32 0.0, %v7390
      %7392 = vmatmul.f32.gmra.mxu0 %v6188
      %v7393 = vpop.f32.mrf.mxu0
      %v7394 = vadd.f32 0.0, %v7393
      %7395 = vmatmul.f32.gmra.mxu0 %v6191
      %v7396 = vpop.f32.mrf.mxu0
      %v7397 = vadd.f32 0.0, %v7396
      %7398 = vmatmul.f32.gmra.mxu0 %v6194
      %v7399 = vpop.f32.mrf.mxu0
      %v7400 = vadd.f32 0.0, %v7399
      %7401 = vmatmul.f32.gmra.mxu0 %v6197
      %v7402 = vpop.f32.mrf.mxu0
      %v7403 = vadd.f32 0.0, %v7402
      %7404 = vmatmul.f32.gmra.mxu0 %v6200
      %v7405 = vpop.f32.mrf.mxu0
      %v7406 = vadd.f32 0.0, %v7405
      %7407 = vmatmul.f32.gmra.mxu0 %v6203
      %v7408 = vpop.f32.mrf.mxu0
      %v7409 = vadd.f32 0.0, %v7408
      %7410 = vmatmul.f32.gmra.mxu0 %v6206
      %v7411 = vpop.f32.mrf.mxu0
      %v7412 = vadd.f32 0.0, %v7411
      %7413 = vmatmul.f32.gmra.mxu0 %v6209
      %v7414 = vpop.f32.mrf.mxu0
      %v7415 = vadd.f32 0.0, %v7414
      %7416 = vdwg.mxu0
      %v7417 = vadd.f32 %v7272, %v7322
      %v7418 = vadd.f32 %v7273, %v7325
      %v7419 = vadd.f32 %v7274, %v7328
      %v7420 = vadd.f32 %v7275, %v7331
      %v7421 = vadd.f32 %v7276, %v7334
      %v7422 = vadd.f32 %v7277, %v7337
      %v7423 = vadd.f32 %v7278, %v7340
      %v7424 = vadd.f32 %v7279, %v7343
      %v7425 = vadd.f32 %v7280, %v7346
      %v7426 = vadd.f32 %v7281, %v7349
      %v7427 = vadd.f32 %v7282, %v7352
      %v7428 = vadd.f32 %v7283, %v7355
      %v7429 = vadd.f32 %v7284, %v7358
      %v7430 = vadd.f32 %v7285, %v7361
      %v7431 = vadd.f32 %v7286, %v7364
      %v7432 = vadd.f32 %v7287, %v7367
      %v7433 = vadd.f32 %v7288, %v7370
      %v7434 = vadd.f32 %v7289, %v7373
      %v7435 = vadd.f32 %v7290, %v7376
      %v7436 = vadd.f32 %v7291, %v7379
      %v7437 = vadd.f32 %v7292, %v7382
      %v7438 = vadd.f32 %v7293, %v7385
      %v7439 = vadd.f32 %v7294, %v7388
      %v7440 = vadd.f32 %v7295, %v7391
      %v7441 = vadd.f32 %v7296, %v7394
      %v7442 = vadd.f32 %v7297, %v7397
      %v7443 = vadd.f32 %v7298, %v7400
      %v7444 = vadd.f32 %v7299, %v7403
      %v7445 = vadd.f32 %v7300, %v7406
      %v7446 = vadd.f32 %v7301, %v7409
      %v7447 = vadd.f32 %v7302, %v7412
      %v7448 = vadd.f32 %v7303, %v7415
      %7449 = vmatpush.msra.mxu0 %v6610
      %7450 = vmatpush.msra.mxu0 %v6609
      %7451 = vmatpush.msra.mxu0 %v6608
      %7452 = vmatpush.msra.mxu0 %v6607
      %7453 = vmatpush.msra.mxu0 %v6606
      %7454 = vmatpush.msra.mxu0 %v6605
      %7455 = vmatpush.msra.mxu0 %v6604
      %7456 = vmatpush.msra.mxu0 %v6603
      %7457 = vmatpush.msra.mxu0 %v6602
      %7458 = vmatpush.msra.mxu0 %v6601
      %7459 = vmatpush.msra.mxu0 %v6600
      %7460 = vmatpush.msra.mxu0 %v6599
      %7461 = vmatpush.msra.mxu0 %v6598
      %7462 = vmatpush.msra.mxu0 %v6597
      %7463 = vmatpush.msra.mxu0 %v6596
      %7464 = vmatpush.msra.mxu0 %v6595
      %7465 = vmatmul.f32.gmra.mxu0 %v6212
      %v7466 = vpop.f32.mrf.mxu0
      %v7467 = vadd.f32 0.0, %v7466
      %7468 = vmatmul.f32.gmra.mxu0 %v6215
      %v7469 = vpop.f32.mrf.mxu0
      %v7470 = vadd.f32 0.0, %v7469
      %7471 = vmatmul.f32.gmra.mxu0 %v6218
      %v7472 = vpop.f32.mrf.mxu0
      %v7473 = vadd.f32 0.0, %v7472
      %7474 = vmatmul.f32.gmra.mxu0 %v6221
      %v7475 = vpop.f32.mrf.mxu0
      %v7476 = vadd.f32 0.0, %v7475
      %7477 = vmatmul.f32.gmra.mxu0 %v6224
      %v7478 = vpop.f32.mrf.mxu0
      %v7479 = vadd.f32 0.0, %v7478
      %7480 = vmatmul.f32.gmra.mxu0 %v6227
      %v7481 = vpop.f32.mrf.mxu0
      %v7482 = vadd.f32 0.0, %v7481
      %7483 = vmatmul.f32.gmra.mxu0 %v6230
      %v7484 = vpop.f32.mrf.mxu0
      %v7485 = vadd.f32 0.0, %v7484
      %7486 = vmatmul.f32.gmra.mxu0 %v6233
      %v7487 = vpop.f32.mrf.mxu0
      %v7488 = vadd.f32 0.0, %v7487
      %7489 = vmatmul.f32.gmra.mxu0 %v6236
      %v7490 = vpop.f32.mrf.mxu0
      %v7491 = vadd.f32 0.0, %v7490
      %7492 = vmatmul.f32.gmra.mxu0 %v6239
      %v7493 = vpop.f32.mrf.mxu0
      %v7494 = vadd.f32 0.0, %v7493
      %7495 = vmatmul.f32.gmra.mxu0 %v6242
      %v7496 = vpop.f32.mrf.mxu0
      %v7497 = vadd.f32 0.0, %v7496
      %7498 = vmatmul.f32.gmra.mxu0 %v6245
      %v7499 = vpop.f32.mrf.mxu0
      %v7500 = vadd.f32 0.0, %v7499
      %7501 = vmatmul.f32.gmra.mxu0 %v6248
      %v7502 = vpop.f32.mrf.mxu0
      %v7503 = vadd.f32 0.0, %v7502
      %7504 = vmatmul.f32.gmra.mxu0 %v6251
      %v7505 = vpop.f32.mrf.mxu0
      %v7506 = vadd.f32 0.0, %v7505
      %7507 = vmatmul.f32.gmra.mxu0 %v6254
      %v7508 = vpop.f32.mrf.mxu0
      %v7509 = vadd.f32 0.0, %v7508
      %7510 = vmatmul.f32.gmra.mxu0 %v6257
      %v7511 = vpop.f32.mrf.mxu0
      %v7512 = vadd.f32 0.0, %v7511
      %7513 = vmatmul.f32.gmra.mxu0 %v6260
      %v7514 = vpop.f32.mrf.mxu0
      %v7515 = vadd.f32 0.0, %v7514
      %7516 = vmatmul.f32.gmra.mxu0 %v6263
      %v7517 = vpop.f32.mrf.mxu0
      %v7518 = vadd.f32 0.0, %v7517
      %7519 = vmatmul.f32.gmra.mxu0 %v6266
      %v7520 = vpop.f32.mrf.mxu0
      %v7521 = vadd.f32 0.0, %v7520
      %7522 = vmatmul.f32.gmra.mxu0 %v6269
      %v7523 = vpop.f32.mrf.mxu0
      %v7524 = vadd.f32 0.0, %v7523
      %7525 = vmatmul.f32.gmra.mxu0 %v6272
      %v7526 = vpop.f32.mrf.mxu0
      %v7527 = vadd.f32 0.0, %v7526
      %7528 = vmatmul.f32.gmra.mxu0 %v6275
      %v7529 = vpop.f32.mrf.mxu0
      %v7530 = vadd.f32 0.0, %v7529
      %7531 = vmatmul.f32.gmra.mxu0 %v6278
      %v7532 = vpop.f32.mrf.mxu0
      %v7533 = vadd.f32 0.0, %v7532
      %7534 = vmatmul.f32.gmra.mxu0 %v6281
      %v7535 = vpop.f32.mrf.mxu0
      %v7536 = vadd.f32 0.0, %v7535
      %7537 = vmatmul.f32.gmra.mxu0 %v6284
      %v7538 = vpop.f32.mrf.mxu0
      %v7539 = vadd.f32 0.0, %v7538
      %7540 = vmatmul.f32.gmra.mxu0 %v6287
      %v7541 = vpop.f32.mrf.mxu0
      %v7542 = vadd.f32 0.0, %v7541
      %7543 = vmatmul.f32.gmra.mxu0 %v6290
      %v7544 = vpop.f32.mrf.mxu0
      %v7545 = vadd.f32 0.0, %v7544
      %7546 = vmatmul.f32.gmra.mxu0 %v6293
      %v7547 = vpop.f32.mrf.mxu0
      %v7548 = vadd.f32 0.0, %v7547
      %7549 = vmatmul.f32.gmra.mxu0 %v6296
      %v7550 = vpop.f32.mrf.mxu0
      %v7551 = vadd.f32 0.0, %v7550
      %7552 = vmatmul.f32.gmra.mxu0 %v6299
      %v7553 = vpop.f32.mrf.mxu0
      %v7554 = vadd.f32 0.0, %v7553
      %7555 = vmatmul.f32.gmra.mxu0 %v6302
      %v7556 = vpop.f32.mrf.mxu0
      %v7557 = vadd.f32 0.0, %v7556
      %7558 = vmatmul.f32.gmra.mxu0 %v6305
      %v7559 = vpop.f32.mrf.mxu0
      %v7560 = vadd.f32 0.0, %v7559
      %7561 = vdwg.mxu0
      %v7562 = vadd.f32 %v7417, %v7467
      %v7563 = vadd.f32 %v7418, %v7470
      %v7564 = vadd.f32 %v7419, %v7473
      %v7565 = vadd.f32 %v7420, %v7476
      %v7566 = vadd.f32 %v7421, %v7479
      %v7567 = vadd.f32 %v7422, %v7482
      %v7568 = vadd.f32 %v7423, %v7485
      %v7569 = vadd.f32 %v7424, %v7488
      %v7570 = vadd.f32 %v7425, %v7491
      %v7571 = vadd.f32 %v7426, %v7494
      %v7572 = vadd.f32 %v7427, %v7497
      %v7573 = vadd.f32 %v7428, %v7500
      %v7574 = vadd.f32 %v7429, %v7503
      %v7575 = vadd.f32 %v7430, %v7506
      %v7576 = vadd.f32 %v7431, %v7509
      %v7577 = vadd.f32 %v7432, %v7512
      %v7578 = vadd.f32 %v7433, %v7515
      %v7579 = vadd.f32 %v7434, %v7518
      %v7580 = vadd.f32 %v7435, %v7521
      %v7581 = vadd.f32 %v7436, %v7524
      %v7582 = vadd.f32 %v7437, %v7527
      %v7583 = vadd.f32 %v7438, %v7530
      %v7584 = vadd.f32 %v7439, %v7533
      %v7585 = vadd.f32 %v7440, %v7536
      %v7586 = vadd.f32 %v7441, %v7539
      %v7587 = vadd.f32 %v7442, %v7542
      %v7588 = vadd.f32 %v7443, %v7545
      %v7589 = vadd.f32 %v7444, %v7548
      %v7590 = vadd.f32 %v7445, %v7551
      %v7591 = vadd.f32 %v7446, %v7554
      %v7592 = vadd.f32 %v7447, %v7557
      %v7593 = vadd.f32 %v7448, %v7560
      %7594 = vmatpush.msra.mxu0 %v6626
      %7595 = vmatpush.msra.mxu0 %v6625
      %7596 = vmatpush.msra.mxu0 %v6624
      %7597 = vmatpush.msra.mxu0 %v6623
      %7598 = vmatpush.msra.mxu0 %v6622
      %7599 = vmatpush.msra.mxu0 %v6621
      %7600 = vmatpush.msra.mxu0 %v6620
      %7601 = vmatpush.msra.mxu0 %v6619
      %7602 = vmatpush.msra.mxu0 %v6618
      %7603 = vmatpush.msra.mxu0 %v6617
      %7604 = vmatpush.msra.mxu0 %v6616
      %7605 = vmatpush.msra.mxu0 %v6615
      %7606 = vmatpush.msra.mxu0 %v6614
      %7607 = vmatpush.msra.mxu0 %v6613
      %7608 = vmatpush.msra.mxu0 %v6612
      %7609 = vmatpush.msra.mxu0 %v6611
      %7610 = vmatmul.f32.gmra.mxu0 %v6308
      %v7611 = vpop.f32.mrf.mxu0
      %v7612 = vadd.f32 0.0, %v7611
      %7613 = vmatmul.f32.gmra.mxu0 %v6311
      %v7614 = vpop.f32.mrf.mxu0
      %v7615 = vadd.f32 0.0, %v7614
      %7616 = vmatmul.f32.gmra.mxu0 %v6314
      %v7617 = vpop.f32.mrf.mxu0
      %v7618 = vadd.f32 0.0, %v7617
      %7619 = vmatmul.f32.gmra.mxu0 %v6317
      %v7620 = vpop.f32.mrf.mxu0
      %v7621 = vadd.f32 0.0, %v7620
      %7622 = vmatmul.f32.gmra.mxu0 %v6320
      %v7623 = vpop.f32.mrf.mxu0
      %v7624 = vadd.f32 0.0, %v7623
      %7625 = vmatmul.f32.gmra.mxu0 %v6323
      %v7626 = vpop.f32.mrf.mxu0
      %v7627 = vadd.f32 0.0, %v7626
      %7628 = vmatmul.f32.gmra.mxu0 %v6326
      %v7629 = vpop.f32.mrf.mxu0
      %v7630 = vadd.f32 0.0, %v7629
      %7631 = vmatmul.f32.gmra.mxu0 %v6329
      %v7632 = vpop.f32.mrf.mxu0
      %v7633 = vadd.f32 0.0, %v7632
      %7634 = vmatmul.f32.gmra.mxu0 %v6332
      %v7635 = vpop.f32.mrf.mxu0
      %v7636 = vadd.f32 0.0, %v7635
      %7637 = vmatmul.f32.gmra.mxu0 %v6335
      %v7638 = vpop.f32.mrf.mxu0
      %v7639 = vadd.f32 0.0, %v7638
      %7640 = vmatmul.f32.gmra.mxu0 %v6338
      %v7641 = vpop.f32.mrf.mxu0
      %v7642 = vadd.f32 0.0, %v7641
      %7643 = vmatmul.f32.gmra.mxu0 %v6341
      %v7644 = vpop.f32.mrf.mxu0
      %v7645 = vadd.f32 0.0, %v7644
      %7646 = vmatmul.f32.gmra.mxu0 %v6344
      %v7647 = vpop.f32.mrf.mxu0
      %v7648 = vadd.f32 0.0, %v7647
      %7649 = vmatmul.f32.gmra.mxu0 %v6347
      %v7650 = vpop.f32.mrf.mxu0
      %v7651 = vadd.f32 0.0, %v7650
      %7652 = vmatmul.f32.gmra.mxu0 %v6350
      %v7653 = vpop.f32.mrf.mxu0
      %v7654 = vadd.f32 0.0, %v7653
      %7655 = vmatmul.f32.gmra.mxu0 %v6353
      %v7656 = vpop.f32.mrf.mxu0
      %v7657 = vadd.f32 0.0, %v7656
      %7658 = vmatmul.f32.gmra.mxu0 %v6356
      %v7659 = vpop.f32.mrf.mxu0
      %v7660 = vadd.f32 0.0, %v7659
      %7661 = vmatmul.f32.gmra.mxu0 %v6359
      %v7662 = vpop.f32.mrf.mxu0
      %v7663 = vadd.f32 0.0, %v7662
      %7664 = vmatmul.f32.gmra.mxu0 %v6362
      %v7665 = vpop.f32.mrf.mxu0
      %v7666 = vadd.f32 0.0, %v7665
      %7667 = vmatmul.f32.gmra.mxu0 %v6365
      %v7668 = vpop.f32.mrf.mxu0
      %v7669 = vadd.f32 0.0, %v7668
      %7670 = vmatmul.f32.gmra.mxu0 %v6368
      %v7671 = vpop.f32.mrf.mxu0
      %v7672 = vadd.f32 0.0, %v7671
      %7673 = vmatmul.f32.gmra.mxu0 %v6371
      %v7674 = vpop.f32.mrf.mxu0
      %v7675 = vadd.f32 0.0, %v7674
      %7676 = vmatmul.f32.gmra.mxu0 %v6374
      %v7677 = vpop.f32.mrf.mxu0
      %v7678 = vadd.f32 0.0, %v7677
      %7679 = vmatmul.f32.gmra.mxu0 %v6377
      %v7680 = vpop.f32.mrf.mxu0
      %v7681 = vadd.f32 0.0, %v7680
      %7682 = vmatmul.f32.gmra.mxu0 %v6380
      %v7683 = vpop.f32.mrf.mxu0
      %v7684 = vadd.f32 0.0, %v7683
      %7685 = vmatmul.f32.gmra.mxu0 %v6383
      %v7686 = vpop.f32.mrf.mxu0
      %v7687 = vadd.f32 0.0, %v7686
      %7688 = vmatmul.f32.gmra.mxu0 %v6386
      %v7689 = vpop.f32.mrf.mxu0
      %v7690 = vadd.f32 0.0, %v7689
      %7691 = vmatmul.f32.gmra.mxu0 %v6389
      %v7692 = vpop.f32.mrf.mxu0
      %v7693 = vadd.f32 0.0, %v7692
      %7694 = vmatmul.f32.gmra.mxu0 %v6392
      %v7695 = vpop.f32.mrf.mxu0
      %v7696 = vadd.f32 0.0, %v7695
      %7697 = vmatmul.f32.gmra.mxu0 %v6395
      %v7698 = vpop.f32.mrf.mxu0
      %v7699 = vadd.f32 0.0, %v7698
      %7700 = vmatmul.f32.gmra.mxu0 %v6398
      %v7701 = vpop.f32.mrf.mxu0
      %v7702 = vadd.f32 0.0, %v7701
      %7703 = vmatmul.f32.gmra.mxu0 %v6401
      %v7704 = vpop.f32.mrf.mxu0
      %v7705 = vadd.f32 0.0, %v7704
      %7706 = vdwg.mxu0
      %v7707 = vadd.f32 %v7562, %v7612
      %v7708 = vadd.f32 %v7563, %v7615
      %v7709 = vadd.f32 %v7564, %v7618
      %v7710 = vadd.f32 %v7565, %v7621
      %v7711 = vadd.f32 %v7566, %v7624
      %v7712 = vadd.f32 %v7567, %v7627
      %v7713 = vadd.f32 %v7568, %v7630
      %v7714 = vadd.f32 %v7569, %v7633
      %v7715 = vadd.f32 %v7570, %v7636
      %v7716 = vadd.f32 %v7571, %v7639
      %v7717 = vadd.f32 %v7572, %v7642
      %v7718 = vadd.f32 %v7573, %v7645
      %v7719 = vadd.f32 %v7574, %v7648
      %v7720 = vadd.f32 %v7575, %v7651
      %v7721 = vadd.f32 %v7576, %v7654
      %v7722 = vadd.f32 %v7577, %v7657
      %v7723 = vadd.f32 %v7578, %v7660
      %v7724 = vadd.f32 %v7579, %v7663
      %v7725 = vadd.f32 %v7580, %v7666
      %v7726 = vadd.f32 %v7581, %v7669
      %v7727 = vadd.f32 %v7582, %v7672
      %v7728 = vadd.f32 %v7583, %v7675
      %v7729 = vadd.f32 %v7584, %v7678
      %v7730 = vadd.f32 %v7585, %v7681
      %v7731 = vadd.f32 %v7586, %v7684
      %v7732 = vadd.f32 %v7587, %v7687
      %v7733 = vadd.f32 %v7588, %v7690
      %v7734 = vadd.f32 %v7589, %v7693
      %v7735 = vadd.f32 %v7590, %v7696
      %v7736 = vadd.f32 %v7591, %v7699
      %v7737 = vadd.f32 %v7592, %v7702
      %v7738 = vadd.f32 %v7593, %v7705
      %7739 = vmatpush.msra.mxu0 %v6642
      %7740 = vmatpush.msra.mxu0 %v6641
      %7741 = vmatpush.msra.mxu0 %v6640
      %7742 = vmatpush.msra.mxu0 %v6639
      %7743 = vmatpush.msra.mxu0 %v6638
      %7744 = vmatpush.msra.mxu0 %v6637
      %7745 = vmatpush.msra.mxu0 %v6636
      %7746 = vmatpush.msra.mxu0 %v6635
      %7747 = vmatpush.msra.mxu0 %v6634
      %7748 = vmatpush.msra.mxu0 %v6633
      %7749 = vmatpush.msra.mxu0 %v6632
      %7750 = vmatpush.msra.mxu0 %v6631
      %7751 = vmatpush.msra.mxu0 %v6630
      %7752 = vmatpush.msra.mxu0 %v6629
      %7753 = vmatpush.msra.mxu0 %v6628
      %7754 = vmatpush.msra.mxu0 %v6627
      %7755 = vmatmul.f32.gmra.mxu0 %v6404
      %v7756 = vpop.f32.mrf.mxu0
      %v7757 = vadd.f32 0.0, %v7756
      %7758 = vmatmul.f32.gmra.mxu0 %v6407
      %v7759 = vpop.f32.mrf.mxu0
      %v7760 = vadd.f32 0.0, %v7759
      %7761 = vmatmul.f32.gmra.mxu0 %v6410
      %v7762 = vpop.f32.mrf.mxu0
      %v7763 = vadd.f32 0.0, %v7762
      %7764 = vmatmul.f32.gmra.mxu0 %v6413
      %v7765 = vpop.f32.mrf.mxu0
      %v7766 = vadd.f32 0.0, %v7765
      %7767 = vmatmul.f32.gmra.mxu0 %v6416
      %v7768 = vpop.f32.mrf.mxu0
      %v7769 = vadd.f32 0.0, %v7768
      %7770 = vmatmul.f32.gmra.mxu0 %v6419
      %v7771 = vpop.f32.mrf.mxu0
      %v7772 = vadd.f32 0.0, %v7771
      %7773 = vmatmul.f32.gmra.mxu0 %v6422
      %v7774 = vpop.f32.mrf.mxu0
      %v7775 = vadd.f32 0.0, %v7774
      %7776 = vmatmul.f32.gmra.mxu0 %v6425
      %v7777 = vpop.f32.mrf.mxu0
      %v7778 = vadd.f32 0.0, %v7777
      %7779 = vmatmul.f32.gmra.mxu0 %v6428
      %v7780 = vpop.f32.mrf.mxu0
      %v7781 = vadd.f32 0.0, %v7780
      %7782 = vmatmul.f32.gmra.mxu0 %v6431
      %v7783 = vpop.f32.mrf.mxu0
      %v7784 = vadd.f32 0.0, %v7783
      %7785 = vmatmul.f32.gmra.mxu0 %v6434
      %v7786 = vpop.f32.mrf.mxu0
      %v7787 = vadd.f32 0.0, %v7786
      %7788 = vmatmul.f32.gmra.mxu0 %v6437
      %v7789 = vpop.f32.mrf.mxu0
      %v7790 = vadd.f32 0.0, %v7789
      %7791 = vmatmul.f32.gmra.mxu0 %v6440
      %v7792 = vpop.f32.mrf.mxu0
      %v7793 = vadd.f32 0.0, %v7792
      %7794 = vmatmul.f32.gmra.mxu0 %v6443
      %v7795 = vpop.f32.mrf.mxu0
      %v7796 = vadd.f32 0.0, %v7795
      %7797 = vmatmul.f32.gmra.mxu0 %v6446
      %v7798 = vpop.f32.mrf.mxu0
      %v7799 = vadd.f32 0.0, %v7798
      %7800 = vmatmul.f32.gmra.mxu0 %v6449
      %v7801 = vpop.f32.mrf.mxu0
      %v7802 = vadd.f32 0.0, %v7801
      %7803 = vmatmul.f32.gmra.mxu0 %v6452
      %v7804 = vpop.f32.mrf.mxu0
      %v7805 = vadd.f32 0.0, %v7804
      %7806 = vmatmul.f32.gmra.mxu0 %v6455
      %v7807 = vpop.f32.mrf.mxu0
      %v7808 = vadd.f32 0.0, %v7807
      %7809 = vmatmul.f32.gmra.mxu0 %v6458
      %v7810 = vpop.f32.mrf.mxu0
      %v7811 = vadd.f32 0.0, %v7810
      %7812 = vmatmul.f32.gmra.mxu0 %v6461
      %v7813 = vpop.f32.mrf.mxu0
      %v7814 = vadd.f32 0.0, %v7813
      %7815 = vmatmul.f32.gmra.mxu0 %v6464
      %v7816 = vpop.f32.mrf.mxu0
      %v7817 = vadd.f32 0.0, %v7816
      %7818 = vmatmul.f32.gmra.mxu0 %v6467
      %v7819 = vpop.f32.mrf.mxu0
      %v7820 = vadd.f32 0.0, %v7819
      %7821 = vmatmul.f32.gmra.mxu0 %v6470
      %v7822 = vpop.f32.mrf.mxu0
      %v7823 = vadd.f32 0.0, %v7822
      %7824 = vmatmul.f32.gmra.mxu0 %v6473
      %v7825 = vpop.f32.mrf.mxu0
      %v7826 = vadd.f32 0.0, %v7825
      %7827 = vmatmul.f32.gmra.mxu0 %v6476
      %v7828 = vpop.f32.mrf.mxu0
      %v7829 = vadd.f32 0.0, %v7828
      %7830 = vmatmul.f32.gmra.mxu0 %v6479
      %v7831 = vpop.f32.mrf.mxu0
      %v7832 = vadd.f32 0.0, %v7831
      %7833 = vmatmul.f32.gmra.mxu0 %v6482
      %v7834 = vpop.f32.mrf.mxu0
      %v7835 = vadd.f32 0.0, %v7834
      %7836 = vmatmul.f32.gmra.mxu0 %v6485
      %v7837 = vpop.f32.mrf.mxu0
      %v7838 = vadd.f32 0.0, %v7837
      %7839 = vmatmul.f32.gmra.mxu0 %v6488
      %v7840 = vpop.f32.mrf.mxu0
      %v7841 = vadd.f32 0.0, %v7840
      %7842 = vmatmul.f32.gmra.mxu0 %v6491
      %v7843 = vpop.f32.mrf.mxu0
      %v7844 = vadd.f32 0.0, %v7843
      %7845 = vmatmul.f32.gmra.mxu0 %v6494
      %v7846 = vpop.f32.mrf.mxu0
      %v7847 = vadd.f32 0.0, %v7846
      %7848 = vmatmul.f32.gmra.mxu0 %v6497
      %v7849 = vpop.f32.mrf.mxu0
      %v7850 = vadd.f32 0.0, %v7849
      %7851 = vdwg.mxu0
      %v7852 = vadd.f32 %v7707, %v7757
      %v7853 = vadd.f32 %v7708, %v7760
      %v7854 = vadd.f32 %v7709, %v7763
      %v7855 = vadd.f32 %v7710, %v7766
      %v7856 = vadd.f32 %v7711, %v7769
      %v7857 = vadd.f32 %v7712, %v7772
      %v7858 = vadd.f32 %v7713, %v7775
      %v7859 = vadd.f32 %v7714, %v7778
      %v7860 = vadd.f32 %v7715, %v7781
      %v7861 = vadd.f32 %v7716, %v7784
      %v7862 = vadd.f32 %v7717, %v7787
      %v7863 = vadd.f32 %v7718, %v7790
      %v7864 = vadd.f32 %v7719, %v7793
      %v7865 = vadd.f32 %v7720, %v7796
      %v7866 = vadd.f32 %v7721, %v7799
      %v7867 = vadd.f32 %v7722, %v7802
      %v7868 = vadd.f32 %v7723, %v7805
      %v7869 = vadd.f32 %v7724, %v7808
      %v7870 = vadd.f32 %v7725, %v7811
      %v7871 = vadd.f32 %v7726, %v7814
      %v7872 = vadd.f32 %v7727, %v7817
      %v7873 = vadd.f32 %v7728, %v7820
      %v7874 = vadd.f32 %v7729, %v7823
      %v7875 = vadd.f32 %v7730, %v7826
      %v7876 = vadd.f32 %v7731, %v7829
      %v7877 = vadd.f32 %v7732, %v7832
      %v7878 = vadd.f32 %v7733, %v7835
      %v7879 = vadd.f32 %v7734, %v7838
      %v7880 = vadd.f32 %v7735, %v7841
      %v7881 = vadd.f32 %v7736, %v7844
      %v7882 = vadd.f32 %v7737, %v7847
      %v7883 = vadd.f32 %v7738, %v7850
      %v7884 = vld [vmem:[%s18] sm:$0x1]
      %v7886 = vperm.slane %v7884, 0
      %v7888 = vadd.f32 %v7852, %v7886
      %v7889 = vadd.f32 %v7853, %v7886
      %v7890 = vadd.f32 %v7854, %v7886
      %v7891 = vadd.f32 %v7855, %v7886
      %v7892 = vadd.f32 %v7856, %v7886
      %v7893 = vadd.f32 %v7857, %v7886
      %v7894 = vadd.f32 %v7858, %v7886
      %v7895 = vadd.f32 %v7859, %v7886
      %v7896 = vadd.f32 %v7860, %v7886
      %v7897 = vadd.f32 %v7861, %v7886
      %v7898 = vadd.f32 %v7862, %v7886
      %v7899 = vadd.f32 %v7863, %v7886
      %v7900 = vadd.f32 %v7864, %v7886
      %v7901 = vadd.f32 %v7865, %v7886
      %v7902 = vadd.f32 %v7866, %v7886
      %v7903 = vadd.f32 %v7867, %v7886
      %v7904 = vadd.f32 %v7868, %v7886
      %v7905 = vadd.f32 %v7869, %v7886
      %v7906 = vadd.f32 %v7870, %v7886
      %v7907 = vadd.f32 %v7871, %v7886
      %v7908 = vadd.f32 %v7872, %v7886
      %v7909 = vadd.f32 %v7873, %v7886
      %v7910 = vadd.f32 %v7874, %v7886
      %v7911 = vadd.f32 %v7875, %v7886
      %v7912 = vadd.f32 %v7876, %v7886
      %v7913 = vadd.f32 %v7877, %v7886
      %v7914 = vadd.f32 %v7878, %v7886
      %v7915 = vadd.f32 %v7879, %v7886
      %v7916 = vadd.f32 %v7880, %v7886
      %v7917 = vadd.f32 %v7881, %v7886
      %v7918 = vadd.f32 %v7882, %v7886
      %v7919 = vadd.f32 %v7883, %v7886
      %v7920 = vxor.u32 %v7888, 2147483648
      %v7921 = vxor.u32 %v7889, 2147483648
      %v7922 = vxor.u32 %v7890, 2147483648
      %v7923 = vxor.u32 %v7891, 2147483648
      %v7924 = vxor.u32 %v7892, 2147483648
      %v7925 = vxor.u32 %v7893, 2147483648
      %v7926 = vxor.u32 %v7894, 2147483648
      %v7927 = vxor.u32 %v7895, 2147483648
      %v7928 = vxor.u32 %v7896, 2147483648
      %v7929 = vxor.u32 %v7897, 2147483648
      %v7930 = vxor.u32 %v7898, 2147483648
      %v7931 = vxor.u32 %v7899, 2147483648
      %v7932 = vxor.u32 %v7900, 2147483648
      %v7933 = vxor.u32 %v7901, 2147483648
      %v7934 = vxor.u32 %v7902, 2147483648
      %v7935 = vxor.u32 %v7903, 2147483648
      %v7936 = vxor.u32 %v7904, 2147483648
      %v7937 = vxor.u32 %v7905, 2147483648
      %v7938 = vxor.u32 %v7906, 2147483648
      %v7939 = vxor.u32 %v7907, 2147483648
      %v7940 = vxor.u32 %v7908, 2147483648
      %v7941 = vxor.u32 %v7909, 2147483648
      %v7942 = vxor.u32 %v7910, 2147483648
      %v7943 = vxor.u32 %v7911, 2147483648
      %v7944 = vxor.u32 %v7912, 2147483648
      %v7945 = vxor.u32 %v7913, 2147483648
      %v7946 = vxor.u32 %v7914, 2147483648
      %v7947 = vxor.u32 %v7915, 2147483648
      %v7948 = vxor.u32 %v7916, 2147483648
      %v7949 = vxor.u32 %v7917, 2147483648
      %v7950 = vxor.u32 %v7918, 2147483648
      %v7951 = vxor.u32 %v7919, 2147483648
      %v7952 = vmul.f32 %v7920, 1.442695
      %v7953 = vpow.pop %v7952
      %v7954 = vmul.f32 %v7921, 1.442695
      %v7955 = vpow.pop %v7954
      %v7956 = vmul.f32 %v7922, 1.442695
      %v7957 = vpow.pop %v7956
      %v7958 = vmul.f32 %v7923, 1.442695
      %v7959 = vpow.pop %v7958
      %v7960 = vmul.f32 %v7924, 1.442695
      %v7961 = vpow.pop %v7960
      %v7962 = vmul.f32 %v7925, 1.442695
      %v7963 = vpow.pop %v7962
      %v7964 = vmul.f32 %v7926, 1.442695
      %v7965 = vpow.pop %v7964
      %v7966 = vmul.f32 %v7927, 1.442695
      %v7967 = vpow.pop %v7966
      %v7968 = vmul.f32 %v7928, 1.442695
      %v7969 = vpow.pop %v7968
      %v7970 = vmul.f32 %v7929, 1.442695
      %v7971 = vpow.pop %v7970
      %v7972 = vmul.f32 %v7930, 1.442695
      %v7973 = vpow.pop %v7972
      %v7974 = vmul.f32 %v7931, 1.442695
      %v7975 = vpow.pop %v7974
      %v7976 = vmul.f32 %v7932, 1.442695
      %v7977 = vpow.pop %v7976
      %v7978 = vmul.f32 %v7933, 1.442695
      %v7979 = vpow.pop %v7978
      %v7980 = vmul.f32 %v7934, 1.442695
      %v7981 = vpow.pop %v7980
      %v7982 = vmul.f32 %v7935, 1.442695
      %v7983 = vpow.pop %v7982
      %v7984 = vmul.f32 %v7936, 1.442695
      %v7985 = vpow.pop %v7984
      %v7986 = vmul.f32 %v7937, 1.442695
      %v7987 = vpow.pop %v7986
      %v7988 = vmul.f32 %v7938, 1.442695
      %v7989 = vpow.pop %v7988
      %v7990 = vmul.f32 %v7939, 1.442695
      %v7991 = vpow.pop %v7990
      %v7992 = vmul.f32 %v7940, 1.442695
      %v7993 = vpow.pop %v7992
      %v7994 = vmul.f32 %v7941, 1.442695
      %v7995 = vpow.pop %v7994
      %v7996 = vmul.f32 %v7942, 1.442695
      %v7997 = vpow.pop %v7996
      %v7998 = vmul.f32 %v7943, 1.442695
      %v7999 = vpow.pop %v7998
      %v8000 = vmul.f32 %v7944, 1.442695
      %v8001 = vpow.pop %v8000
      %v8002 = vmul.f32 %v7945, 1.442695
      %v8003 = vpow.pop %v8002
      %v8004 = vmul.f32 %v7946, 1.442695
      %v8005 = vpow.pop %v8004
      %v8006 = vmul.f32 %v7947, 1.442695
      %v8007 = vpow.pop %v8006
      %v8008 = vmul.f32 %v7948, 1.442695
      %v8009 = vpow.pop %v8008
      %v8010 = vmul.f32 %v7949, 1.442695
      %v8011 = vpow.pop %v8010
      %v8012 = vmul.f32 %v7950, 1.442695
      %v8013 = vpow.pop %v8012
      %v8014 = vmul.f32 %v7951, 1.442695
      %v8015 = vpow.pop %v8014
      %v8016 = vadd.f32 %v7953, 1.0
      %v8017 = vadd.f32 %v7955, 1.0
      %v8018 = vadd.f32 %v7957, 1.0
      %v8019 = vadd.f32 %v7959, 1.0
      %v8020 = vadd.f32 %v7961, 1.0
      %v8021 = vadd.f32 %v7963, 1.0
      %v8022 = vadd.f32 %v7965, 1.0
      %v8023 = vadd.f32 %v7967, 1.0
      %v8024 = vadd.f32 %v7969, 1.0
      %v8025 = vadd.f32 %v7971, 1.0
      %v8026 = vadd.f32 %v7973, 1.0
      %v8027 = vadd.f32 %v7975, 1.0
      %v8028 = vadd.f32 %v7977, 1.0
      %v8029 = vadd.f32 %v7979, 1.0
      %v8030 = vadd.f32 %v7981, 1.0
      %v8031 = vadd.f32 %v7983, 1.0
      %v8032 = vadd.f32 %v7985, 1.0
      %v8033 = vadd.f32 %v7987, 1.0
      %v8034 = vadd.f32 %v7989, 1.0
      %v8035 = vadd.f32 %v7991, 1.0
      %v8036 = vadd.f32 %v7993, 1.0
      %v8037 = vadd.f32 %v7995, 1.0
      %v8038 = vadd.f32 %v7997, 1.0
      %v8039 = vadd.f32 %v7999, 1.0
      %v8040 = vadd.f32 %v8001, 1.0
      %v8041 = vadd.f32 %v8003, 1.0
      %v8042 = vadd.f32 %v8005, 1.0
      %v8043 = vadd.f32 %v8007, 1.0
      %v8044 = vadd.f32 %v8009, 1.0
      %v8045 = vadd.f32 %v8011, 1.0
      %v8046 = vadd.f32 %v8013, 1.0
      %v8047 = vadd.f32 %v8015, 1.0
      %v8048 = vrcp.pop %v8016
      %v8049 = vmul.f32 %v8016, %v8048
      %v8050 = vsub.f32 1.0, %v8049
      %v8051 = vmul.f32 %v8048, %v8050
      %v8052 = vadd.f32 %v8048, %v8051
      %vm8053 = vweird.f32 %v8016
      %vm8054 = vweird.f32 %v8048
      %vm8055 = vmor %vm8053, %vm8054
      %v8056 = vsel %vm8055, %v8048, %v8052
      %v8057 = vand.u32 2147483647, %v8016
      %vm8058 = vcmp.eq.f32.partialorder %v8057, 8.507059e+37
      %v8059 = vand.u32 %v8016, 2147483648
      %v8060 = vor.u32 1.1754944e-38, %v8059
      %v8061 = vsel %vm8058, %v8060, %v8056
      %v8062 = vmul.f32 1.0, %v8061
      %v8063 = vrcp.pop %v8017
      %v8064 = vmul.f32 %v8017, %v8063
      %v8065 = vsub.f32 1.0, %v8064
      %v8066 = vmul.f32 %v8063, %v8065
      %v8067 = vadd.f32 %v8063, %v8066
      %vm8068 = vweird.f32 %v8017
      %vm8069 = vweird.f32 %v8063
      %vm8070 = vmor %vm8068, %vm8069
      %v8071 = vsel %vm8070, %v8063, %v8067
      %v8072 = vand.u32 2147483647, %v8017
      %vm8073 = vcmp.eq.f32.partialorder %v8072, 8.507059e+37
      %v8074 = vand.u32 %v8017, 2147483648
      %v8075 = vor.u32 1.1754944e-38, %v8074
      %v8076 = vsel %vm8073, %v8075, %v8071
      %v8077 = vmul.f32 1.0, %v8076
      %v8078 = vrcp.pop %v8018
      %v8079 = vmul.f32 %v8018, %v8078
      %v8080 = vsub.f32 1.0, %v8079
      %v8081 = vmul.f32 %v8078, %v8080
      %v8082 = vadd.f32 %v8078, %v8081
      %vm8083 = vweird.f32 %v8018
      %vm8084 = vweird.f32 %v8078
      %vm8085 = vmor %vm8083, %vm8084
      %v8086 = vsel %vm8085, %v8078, %v8082
      %v8087 = vand.u32 2147483647, %v8018
      %vm8088 = vcmp.eq.f32.partialorder %v8087, 8.507059e+37
      %v8089 = vand.u32 %v8018, 2147483648
      %v8090 = vor.u32 1.1754944e-38, %v8089
      %v8091 = vsel %vm8088, %v8090, %v8086
      %v8092 = vmul.f32 1.0, %v8091
      %v8093 = vrcp.pop %v8019
      %v8094 = vmul.f32 %v8019, %v8093
      %v8095 = vsub.f32 1.0, %v8094
      %v8096 = vmul.f32 %v8093, %v8095
      %v8097 = vadd.f32 %v8093, %v8096
      %vm8098 = vweird.f32 %v8019
      %vm8099 = vweird.f32 %v8093
      %vm8100 = vmor %vm8098, %vm8099
      %v8101 = vsel %vm8100, %v8093, %v8097
      %v8102 = vand.u32 2147483647, %v8019
      %vm8103 = vcmp.eq.f32.partialorder %v8102, 8.507059e+37
      %v8104 = vand.u32 %v8019, 2147483648
      %v8105 = vor.u32 1.1754944e-38, %v8104
      %v8106 = vsel %vm8103, %v8105, %v8101
      %v8107 = vmul.f32 1.0, %v8106
      %v8108 = vrcp.pop %v8020
      %v8109 = vmul.f32 %v8020, %v8108
      %v8110 = vsub.f32 1.0, %v8109
      %v8111 = vmul.f32 %v8108, %v8110
      %v8112 = vadd.f32 %v8108, %v8111
      %vm8113 = vweird.f32 %v8020
      %vm8114 = vweird.f32 %v8108
      %vm8115 = vmor %vm8113, %vm8114
      %v8116 = vsel %vm8115, %v8108, %v8112
      %v8117 = vand.u32 2147483647, %v8020
      %vm8118 = vcmp.eq.f32.partialorder %v8117, 8.507059e+37
      %v8119 = vand.u32 %v8020, 2147483648
      %v8120 = vor.u32 1.1754944e-38, %v8119
      %v8121 = vsel %vm8118, %v8120, %v8116
      %v8122 = vmul.f32 1.0, %v8121
      %v8123 = vrcp.pop %v8021
      %v8124 = vmul.f32 %v8021, %v8123
      %v8125 = vsub.f32 1.0, %v8124
      %v8126 = vmul.f32 %v8123, %v8125
      %v8127 = vadd.f32 %v8123, %v8126
      %vm8128 = vweird.f32 %v8021
      %vm8129 = vweird.f32 %v8123
      %vm8130 = vmor %vm8128, %vm8129
      %v8131 = vsel %vm8130, %v8123, %v8127
      %v8132 = vand.u32 2147483647, %v8021
      %vm8133 = vcmp.eq.f32.partialorder %v8132, 8.507059e+37
      %v8134 = vand.u32 %v8021, 2147483648
      %v8135 = vor.u32 1.1754944e-38, %v8134
      %v8136 = vsel %vm8133, %v8135, %v8131
      %v8137 = vmul.f32 1.0, %v8136
      %v8138 = vrcp.pop %v8022
      %v8139 = vmul.f32 %v8022, %v8138
      %v8140 = vsub.f32 1.0, %v8139
      %v8141 = vmul.f32 %v8138, %v8140
      %v8142 = vadd.f32 %v8138, %v8141
      %vm8143 = vweird.f32 %v8022
      %vm8144 = vweird.f32 %v8138
      %vm8145 = vmor %vm8143, %vm8144
      %v8146 = vsel %vm8145, %v8138, %v8142
      %v8147 = vand.u32 2147483647, %v8022
      %vm8148 = vcmp.eq.f32.partialorder %v8147, 8.507059e+37
      %v8149 = vand.u32 %v8022, 2147483648
      %v8150 = vor.u32 1.1754944e-38, %v8149
      %v8151 = vsel %vm8148, %v8150, %v8146
      %v8152 = vmul.f32 1.0, %v8151
      %v8153 = vrcp.pop %v8023
      %v8154 = vmul.f32 %v8023, %v8153
      %v8155 = vsub.f32 1.0, %v8154
      %v8156 = vmul.f32 %v8153, %v8155
      %v8157 = vadd.f32 %v8153, %v8156
      %vm8158 = vweird.f32 %v8023
      %vm8159 = vweird.f32 %v8153
      %vm8160 = vmor %vm8158, %vm8159
      %v8161 = vsel %vm8160, %v8153, %v8157
      %v8162 = vand.u32 2147483647, %v8023
      %vm8163 = vcmp.eq.f32.partialorder %v8162, 8.507059e+37
      %v8164 = vand.u32 %v8023, 2147483648
      %v8165 = vor.u32 1.1754944e-38, %v8164
      %v8166 = vsel %vm8163, %v8165, %v8161
      %v8167 = vmul.f32 1.0, %v8166
      %v8168 = vrcp.pop %v8024
      %v8169 = vmul.f32 %v8024, %v8168
      %v8170 = vsub.f32 1.0, %v8169
      %v8171 = vmul.f32 %v8168, %v8170
      %v8172 = vadd.f32 %v8168, %v8171
      %vm8173 = vweird.f32 %v8024
      %vm8174 = vweird.f32 %v8168
      %vm8175 = vmor %vm8173, %vm8174
      %v8176 = vsel %vm8175, %v8168, %v8172
      %v8177 = vand.u32 2147483647, %v8024
      %vm8178 = vcmp.eq.f32.partialorder %v8177, 8.507059e+37
      %v8179 = vand.u32 %v8024, 2147483648
      %v8180 = vor.u32 1.1754944e-38, %v8179
      %v8181 = vsel %vm8178, %v8180, %v8176
      %v8182 = vmul.f32 1.0, %v8181
      %v8183 = vrcp.pop %v8025
      %v8184 = vmul.f32 %v8025, %v8183
      %v8185 = vsub.f32 1.0, %v8184
      %v8186 = vmul.f32 %v8183, %v8185
      %v8187 = vadd.f32 %v8183, %v8186
      %vm8188 = vweird.f32 %v8025
      %vm8189 = vweird.f32 %v8183
      %vm8190 = vmor %vm8188, %vm8189
      %v8191 = vsel %vm8190, %v8183, %v8187
      %v8192 = vand.u32 2147483647, %v8025
      %vm8193 = vcmp.eq.f32.partialorder %v8192, 8.507059e+37
      %v8194 = vand.u32 %v8025, 2147483648
      %v8195 = vor.u32 1.1754944e-38, %v8194
      %v8196 = vsel %vm8193, %v8195, %v8191
      %v8197 = vmul.f32 1.0, %v8196
      %v8198 = vrcp.pop %v8026
      %v8199 = vmul.f32 %v8026, %v8198
      %v8200 = vsub.f32 1.0, %v8199
      %v8201 = vmul.f32 %v8198, %v8200
      %v8202 = vadd.f32 %v8198, %v8201
      %vm8203 = vweird.f32 %v8026
      %vm8204 = vweird.f32 %v8198
      %vm8205 = vmor %vm8203, %vm8204
      %v8206 = vsel %vm8205, %v8198, %v8202
      %v8207 = vand.u32 2147483647, %v8026
      %vm8208 = vcmp.eq.f32.partialorder %v8207, 8.507059e+37
      %v8209 = vand.u32 %v8026, 2147483648
      %v8210 = vor.u32 1.1754944e-38, %v8209
      %v8211 = vsel %vm8208, %v8210, %v8206
      %v8212 = vmul.f32 1.0, %v8211
      %v8213 = vrcp.pop %v8027
      %v8214 = vmul.f32 %v8027, %v8213
      %v8215 = vsub.f32 1.0, %v8214
      %v8216 = vmul.f32 %v8213, %v8215
      %v8217 = vadd.f32 %v8213, %v8216
      %vm8218 = vweird.f32 %v8027
      %vm8219 = vweird.f32 %v8213
      %vm8220 = vmor %vm8218, %vm8219
      %v8221 = vsel %vm8220, %v8213, %v8217
      %v8222 = vand.u32 2147483647, %v8027
      %vm8223 = vcmp.eq.f32.partialorder %v8222, 8.507059e+37
      %v8224 = vand.u32 %v8027, 2147483648
      %v8225 = vor.u32 1.1754944e-38, %v8224
      %v8226 = vsel %vm8223, %v8225, %v8221
      %v8227 = vmul.f32 1.0, %v8226
      %v8228 = vrcp.pop %v8028
      %v8229 = vmul.f32 %v8028, %v8228
      %v8230 = vsub.f32 1.0, %v8229
      %v8231 = vmul.f32 %v8228, %v8230
      %v8232 = vadd.f32 %v8228, %v8231
      %vm8233 = vweird.f32 %v8028
      %vm8234 = vweird.f32 %v8228
      %vm8235 = vmor %vm8233, %vm8234
      %v8236 = vsel %vm8235, %v8228, %v8232
      %v8237 = vand.u32 2147483647, %v8028
      %vm8238 = vcmp.eq.f32.partialorder %v8237, 8.507059e+37
      %v8239 = vand.u32 %v8028, 2147483648
      %v8240 = vor.u32 1.1754944e-38, %v8239
      %v8241 = vsel %vm8238, %v8240, %v8236
      %v8242 = vmul.f32 1.0, %v8241
      %v8243 = vrcp.pop %v8029
      %v8244 = vmul.f32 %v8029, %v8243
      %v8245 = vsub.f32 1.0, %v8244
      %v8246 = vmul.f32 %v8243, %v8245
      %v8247 = vadd.f32 %v8243, %v8246
      %vm8248 = vweird.f32 %v8029
      %vm8249 = vweird.f32 %v8243
      %vm8250 = vmor %vm8248, %vm8249
      %v8251 = vsel %vm8250, %v8243, %v8247
      %v8252 = vand.u32 2147483647, %v8029
      %vm8253 = vcmp.eq.f32.partialorder %v8252, 8.507059e+37
      %v8254 = vand.u32 %v8029, 2147483648
      %v8255 = vor.u32 1.1754944e-38, %v8254
      %v8256 = vsel %vm8253, %v8255, %v8251
      %v8257 = vmul.f32 1.0, %v8256
      %v8258 = vrcp.pop %v8030
      %v8259 = vmul.f32 %v8030, %v8258
      %v8260 = vsub.f32 1.0, %v8259
      %v8261 = vmul.f32 %v8258, %v8260
      %v8262 = vadd.f32 %v8258, %v8261
      %vm8263 = vweird.f32 %v8030
      %vm8264 = vweird.f32 %v8258
      %vm8265 = vmor %vm8263, %vm8264
      %v8266 = vsel %vm8265, %v8258, %v8262
      %v8267 = vand.u32 2147483647, %v8030
      %vm8268 = vcmp.eq.f32.partialorder %v8267, 8.507059e+37
      %v8269 = vand.u32 %v8030, 2147483648
      %v8270 = vor.u32 1.1754944e-38, %v8269
      %v8271 = vsel %vm8268, %v8270, %v8266
      %v8272 = vmul.f32 1.0, %v8271
      %v8273 = vrcp.pop %v8031
      %v8274 = vmul.f32 %v8031, %v8273
      %v8275 = vsub.f32 1.0, %v8274
      %v8276 = vmul.f32 %v8273, %v8275
      %v8277 = vadd.f32 %v8273, %v8276
      %vm8278 = vweird.f32 %v8031
      %vm8279 = vweird.f32 %v8273
      %vm8280 = vmor %vm8278, %vm8279
      %v8281 = vsel %vm8280, %v8273, %v8277
      %v8282 = vand.u32 2147483647, %v8031
      %vm8283 = vcmp.eq.f32.partialorder %v8282, 8.507059e+37
      %v8284 = vand.u32 %v8031, 2147483648
      %v8285 = vor.u32 1.1754944e-38, %v8284
      %v8286 = vsel %vm8283, %v8285, %v8281
      %v8287 = vmul.f32 1.0, %v8286
      %v8288 = vrcp.pop %v8032
      %v8289 = vmul.f32 %v8032, %v8288
      %v8290 = vsub.f32 1.0, %v8289
      %v8291 = vmul.f32 %v8288, %v8290
      %v8292 = vadd.f32 %v8288, %v8291
      %vm8293 = vweird.f32 %v8032
      %vm8294 = vweird.f32 %v8288
      %vm8295 = vmor %vm8293, %vm8294
      %v8296 = vsel %vm8295, %v8288, %v8292
      %v8297 = vand.u32 2147483647, %v8032
      %vm8298 = vcmp.eq.f32.partialorder %v8297, 8.507059e+37
      %v8299 = vand.u32 %v8032, 2147483648
      %v8300 = vor.u32 1.1754944e-38, %v8299
      %v8301 = vsel %vm8298, %v8300, %v8296
      %v8302 = vmul.f32 1.0, %v8301
      %v8303 = vrcp.pop %v8033
      %v8304 = vmul.f32 %v8033, %v8303
      %v8305 = vsub.f32 1.0, %v8304
      %v8306 = vmul.f32 %v8303, %v8305
      %v8307 = vadd.f32 %v8303, %v8306
      %vm8308 = vweird.f32 %v8033
      %vm8309 = vweird.f32 %v8303
      %vm8310 = vmor %vm8308, %vm8309
      %v8311 = vsel %vm8310, %v8303, %v8307
      %v8312 = vand.u32 2147483647, %v8033
      %vm8313 = vcmp.eq.f32.partialorder %v8312, 8.507059e+37
      %v8314 = vand.u32 %v8033, 2147483648
      %v8315 = vor.u32 1.1754944e-38, %v8314
      %v8316 = vsel %vm8313, %v8315, %v8311
      %v8317 = vmul.f32 1.0, %v8316
      %v8318 = vrcp.pop %v8034
      %v8319 = vmul.f32 %v8034, %v8318
      %v8320 = vsub.f32 1.0, %v8319
      %v8321 = vmul.f32 %v8318, %v8320
      %v8322 = vadd.f32 %v8318, %v8321
      %vm8323 = vweird.f32 %v8034
      %vm8324 = vweird.f32 %v8318
      %vm8325 = vmor %vm8323, %vm8324
      %v8326 = vsel %vm8325, %v8318, %v8322
      %v8327 = vand.u32 2147483647, %v8034
      %vm8328 = vcmp.eq.f32.partialorder %v8327, 8.507059e+37
      %v8329 = vand.u32 %v8034, 2147483648
      %v8330 = vor.u32 1.1754944e-38, %v8329
      %v8331 = vsel %vm8328, %v8330, %v8326
      %v8332 = vmul.f32 1.0, %v8331
      %v8333 = vrcp.pop %v8035
      %v8334 = vmul.f32 %v8035, %v8333
      %v8335 = vsub.f32 1.0, %v8334
      %v8336 = vmul.f32 %v8333, %v8335
      %v8337 = vadd.f32 %v8333, %v8336
      %vm8338 = vweird.f32 %v8035
      %vm8339 = vweird.f32 %v8333
      %vm8340 = vmor %vm8338, %vm8339
      %v8341 = vsel %vm8340, %v8333, %v8337
      %v8342 = vand.u32 2147483647, %v8035
      %vm8343 = vcmp.eq.f32.partialorder %v8342, 8.507059e+37
      %v8344 = vand.u32 %v8035, 2147483648
      %v8345 = vor.u32 1.1754944e-38, %v8344
      %v8346 = vsel %vm8343, %v8345, %v8341
      %v8347 = vmul.f32 1.0, %v8346
      %v8348 = vrcp.pop %v8036
      %v8349 = vmul.f32 %v8036, %v8348
      %v8350 = vsub.f32 1.0, %v8349
      %v8351 = vmul.f32 %v8348, %v8350
      %v8352 = vadd.f32 %v8348, %v8351
      %vm8353 = vweird.f32 %v8036
      %vm8354 = vweird.f32 %v8348
      %vm8355 = vmor %vm8353, %vm8354
      %v8356 = vsel %vm8355, %v8348, %v8352
      %v8357 = vand.u32 2147483647, %v8036
      %vm8358 = vcmp.eq.f32.partialorder %v8357, 8.507059e+37
      %v8359 = vand.u32 %v8036, 2147483648
      %v8360 = vor.u32 1.1754944e-38, %v8359
      %v8361 = vsel %vm8358, %v8360, %v8356
      %v8362 = vmul.f32 1.0, %v8361
      %v8363 = vrcp.pop %v8037
      %v8364 = vmul.f32 %v8037, %v8363
      %v8365 = vsub.f32 1.0, %v8364
      %v8366 = vmul.f32 %v8363, %v8365
      %v8367 = vadd.f32 %v8363, %v8366
      %vm8368 = vweird.f32 %v8037
      %vm8369 = vweird.f32 %v8363
      %vm8370 = vmor %vm8368, %vm8369
      %v8371 = vsel %vm8370, %v8363, %v8367
      %v8372 = vand.u32 2147483647, %v8037
      %vm8373 = vcmp.eq.f32.partialorder %v8372, 8.507059e+37
      %v8374 = vand.u32 %v8037, 2147483648
      %v8375 = vor.u32 1.1754944e-38, %v8374
      %v8376 = vsel %vm8373, %v8375, %v8371
      %v8377 = vmul.f32 1.0, %v8376
      %v8378 = vrcp.pop %v8038
      %v8379 = vmul.f32 %v8038, %v8378
      %v8380 = vsub.f32 1.0, %v8379
      %v8381 = vmul.f32 %v8378, %v8380
      %v8382 = vadd.f32 %v8378, %v8381
      %vm8383 = vweird.f32 %v8038
      %vm8384 = vweird.f32 %v8378
      %vm8385 = vmor %vm8383, %vm8384
      %v8386 = vsel %vm8385, %v8378, %v8382
      %v8387 = vand.u32 2147483647, %v8038
      %vm8388 = vcmp.eq.f32.partialorder %v8387, 8.507059e+37
      %v8389 = vand.u32 %v8038, 2147483648
      %v8390 = vor.u32 1.1754944e-38, %v8389
      %v8391 = vsel %vm8388, %v8390, %v8386
      %v8392 = vmul.f32 1.0, %v8391
      %v8393 = vrcp.pop %v8039
      %v8394 = vmul.f32 %v8039, %v8393
      %v8395 = vsub.f32 1.0, %v8394
      %v8396 = vmul.f32 %v8393, %v8395
      %v8397 = vadd.f32 %v8393, %v8396
      %vm8398 = vweird.f32 %v8039
      %vm8399 = vweird.f32 %v8393
      %vm8400 = vmor %vm8398, %vm8399
      %v8401 = vsel %vm8400, %v8393, %v8397
      %v8402 = vand.u32 2147483647, %v8039
      %vm8403 = vcmp.eq.f32.partialorder %v8402, 8.507059e+37
      %v8404 = vand.u32 %v8039, 2147483648
      %v8405 = vor.u32 1.1754944e-38, %v8404
      %v8406 = vsel %vm8403, %v8405, %v8401
      %v8407 = vmul.f32 1.0, %v8406
      %v8408 = vrcp.pop %v8040
      %v8409 = vmul.f32 %v8040, %v8408
      %v8410 = vsub.f32 1.0, %v8409
      %v8411 = vmul.f32 %v8408, %v8410
      %v8412 = vadd.f32 %v8408, %v8411
      %vm8413 = vweird.f32 %v8040
      %vm8414 = vweird.f32 %v8408
      %vm8415 = vmor %vm8413, %vm8414
      %v8416 = vsel %vm8415, %v8408, %v8412
      %v8417 = vand.u32 2147483647, %v8040
      %vm8418 = vcmp.eq.f32.partialorder %v8417, 8.507059e+37
      %v8419 = vand.u32 %v8040, 2147483648
      %v8420 = vor.u32 1.1754944e-38, %v8419
      %v8421 = vsel %vm8418, %v8420, %v8416
      %v8422 = vmul.f32 1.0, %v8421
      %v8423 = vrcp.pop %v8041
      %v8424 = vmul.f32 %v8041, %v8423
      %v8425 = vsub.f32 1.0, %v8424
      %v8426 = vmul.f32 %v8423, %v8425
      %v8427 = vadd.f32 %v8423, %v8426
      %vm8428 = vweird.f32 %v8041
      %vm8429 = vweird.f32 %v8423
      %vm8430 = vmor %vm8428, %vm8429
      %v8431 = vsel %vm8430, %v8423, %v8427
      %v8432 = vand.u32 2147483647, %v8041
      %vm8433 = vcmp.eq.f32.partialorder %v8432, 8.507059e+37
      %v8434 = vand.u32 %v8041, 2147483648
      %v8435 = vor.u32 1.1754944e-38, %v8434
      %v8436 = vsel %vm8433, %v8435, %v8431
      %v8437 = vmul.f32 1.0, %v8436
      %v8438 = vrcp.pop %v8042
      %v8439 = vmul.f32 %v8042, %v8438
      %v8440 = vsub.f32 1.0, %v8439
      %v8441 = vmul.f32 %v8438, %v8440
      %v8442 = vadd.f32 %v8438, %v8441
      %vm8443 = vweird.f32 %v8042
      %vm8444 = vweird.f32 %v8438
      %vm8445 = vmor %vm8443, %vm8444
      %v8446 = vsel %vm8445, %v8438, %v8442
      %v8447 = vand.u32 2147483647, %v8042
      %vm8448 = vcmp.eq.f32.partialorder %v8447, 8.507059e+37
      %v8449 = vand.u32 %v8042, 2147483648
      %v8450 = vor.u32 1.1754944e-38, %v8449
      %v8451 = vsel %vm8448, %v8450, %v8446
      %v8452 = vmul.f32 1.0, %v8451
      %v8453 = vrcp.pop %v8043
      %v8454 = vmul.f32 %v8043, %v8453
      %v8455 = vsub.f32 1.0, %v8454
      %v8456 = vmul.f32 %v8453, %v8455
      %v8457 = vadd.f32 %v8453, %v8456
      %vm8458 = vweird.f32 %v8043
      %vm8459 = vweird.f32 %v8453
      %vm8460 = vmor %vm8458, %vm8459
      %v8461 = vsel %vm8460, %v8453, %v8457
      %v8462 = vand.u32 2147483647, %v8043
      %vm8463 = vcmp.eq.f32.partialorder %v8462, 8.507059e+37
      %v8464 = vand.u32 %v8043, 2147483648
      %v8465 = vor.u32 1.1754944e-38, %v8464
      %v8466 = vsel %vm8463, %v8465, %v8461
      %v8467 = vmul.f32 1.0, %v8466
      %v8468 = vrcp.pop %v8044
      %v8469 = vmul.f32 %v8044, %v8468
      %v8470 = vsub.f32 1.0, %v8469
      %v8471 = vmul.f32 %v8468, %v8470
      %v8472 = vadd.f32 %v8468, %v8471
      %vm8473 = vweird.f32 %v8044
      %vm8474 = vweird.f32 %v8468
      %vm8475 = vmor %vm8473, %vm8474
      %v8476 = vsel %vm8475, %v8468, %v8472
      %v8477 = vand.u32 2147483647, %v8044
      %vm8478 = vcmp.eq.f32.partialorder %v8477, 8.507059e+37
      %v8479 = vand.u32 %v8044, 2147483648
      %v8480 = vor.u32 1.1754944e-38, %v8479
      %v8481 = vsel %vm8478, %v8480, %v8476
      %v8482 = vmul.f32 1.0, %v8481
      %v8483 = vrcp.pop %v8045
      %v8484 = vmul.f32 %v8045, %v8483
      %v8485 = vsub.f32 1.0, %v8484
      %v8486 = vmul.f32 %v8483, %v8485
      %v8487 = vadd.f32 %v8483, %v8486
      %vm8488 = vweird.f32 %v8045
      %vm8489 = vweird.f32 %v8483
      %vm8490 = vmor %vm8488, %vm8489
      %v8491 = vsel %vm8490, %v8483, %v8487
      %v8492 = vand.u32 2147483647, %v8045
      %vm8493 = vcmp.eq.f32.partialorder %v8492, 8.507059e+37
      %v8494 = vand.u32 %v8045, 2147483648
      %v8495 = vor.u32 1.1754944e-38, %v8494
      %v8496 = vsel %vm8493, %v8495, %v8491
      %v8497 = vmul.f32 1.0, %v8496
      %v8498 = vrcp.pop %v8046
      %v8499 = vmul.f32 %v8046, %v8498
      %v8500 = vsub.f32 1.0, %v8499
      %v8501 = vmul.f32 %v8498, %v8500
      %v8502 = vadd.f32 %v8498, %v8501
      %vm8503 = vweird.f32 %v8046
      %vm8504 = vweird.f32 %v8498
      %vm8505 = vmor %vm8503, %vm8504
      %v8506 = vsel %vm8505, %v8498, %v8502
      %v8507 = vand.u32 2147483647, %v8046
      %vm8508 = vcmp.eq.f32.partialorder %v8507, 8.507059e+37
      %v8509 = vand.u32 %v8046, 2147483648
      %v8510 = vor.u32 1.1754944e-38, %v8509
      %v8511 = vsel %vm8508, %v8510, %v8506
      %v8512 = vmul.f32 1.0, %v8511
      %v8513 = vrcp.pop %v8047
      %v8514 = vmul.f32 %v8047, %v8513
      %v8515 = vsub.f32 1.0, %v8514
      %v8516 = vmul.f32 %v8513, %v8515
      %v8517 = vadd.f32 %v8513, %v8516
      %vm8518 = vweird.f32 %v8047
      %vm8519 = vweird.f32 %v8513
      %vm8520 = vmor %vm8518, %vm8519
      %v8521 = vsel %vm8520, %v8513, %v8517
      %v8522 = vand.u32 2147483647, %v8047
      %vm8523 = vcmp.eq.f32.partialorder %v8522, 8.507059e+37
      %v8524 = vand.u32 %v8047, 2147483648
      %v8525 = vor.u32 1.1754944e-38, %v8524
      %v8526 = vsel %vm8523, %v8525, %v8521
      %v8527 = vmul.f32 1.0, %v8526
      %8528 = vst.msk [vmem:[%s602] sm:$0xff] %vm1254, %v8062
      %8529 = vst.msk [vmem:[%s602 + $0x8] sm:$0xff] %vm1254, %v8077
      %8530 = vst.msk [vmem:[%s602 + $0x10] sm:$0xff] %vm1254, %v8092
      %8531 = vst.msk [vmem:[%s602 + $0x18] sm:$0xff] %vm1254, %v8107
      %8532 = vst.msk [vmem:[%s602 + $0x20] sm:$0xff] %vm1254, %v8122
      %8533 = vst.msk [vmem:[%s602 + $0x28] sm:$0xff] %vm1254, %v8137
      %8534 = vst.msk [vmem:[%s602 + $0x30] sm:$0xff] %vm1254, %v8152
      %8535 = vst.msk [vmem:[%s602 + $0x38] sm:$0xff] %vm1254, %v8167
      %8536 = vst.msk [vmem:[%s602 + $0x40] sm:$0xff] %vm1254, %v8182
      %8537 = vst.msk [vmem:[%s602 + $0x48] sm:$0xff] %vm1254, %v8197
      %8538 = vst.msk [vmem:[%s602 + $0x50] sm:$0xff] %vm1254, %v8212
      %8539 = vst.msk [vmem:[%s602 + $0x58] sm:$0xff] %vm1254, %v8227
      %8540 = vst.msk [vmem:[%s602 + $0x60] sm:$0xff] %vm1254, %v8242
      %8541 = vst.msk [vmem:[%s602 + $0x68] sm:$0xff] %vm1254, %v8257
      %8542 = vst.msk [vmem:[%s602 + $0x70] sm:$0xff] %vm1254, %v8272
      %8543 = vst.msk [vmem:[%s602 + $0x78] sm:$0xff] %vm1254, %v8287
      %8544 = vst.msk [vmem:[%s602 + $0x80] sm:$0xff] %vm1254, %v8302
      %8545 = vst.msk [vmem:[%s602 + $0x88] sm:$0xff] %vm1254, %v8317
      %8546 = vst.msk [vmem:[%s602 + $0x90] sm:$0xff] %vm1254, %v8332
      %8547 = vst.msk [vmem:[%s602 + $0x98] sm:$0xff] %vm1254, %v8347
      %8548 = vst.msk [vmem:[%s602 + $0xa0] sm:$0xff] %vm1254, %v8362
      %8549 = vst.msk [vmem:[%s602 + $0xa8] sm:$0xff] %vm1254, %v8377
      %8550 = vst.msk [vmem:[%s602 + $0xb0] sm:$0xff] %vm1254, %v8392
      %8551 = vst.msk [vmem:[%s602 + $0xb8] sm:$0xff] %vm1254, %v8407
      %8552 = vst.msk [vmem:[%s602 + $0xc0] sm:$0xff] %vm1254, %v8422
      %8553 = vst.msk [vmem:[%s602 + $0xc8] sm:$0xff] %vm1254, %v8437
      %8554 = vst.msk [vmem:[%s602 + $0xd0] sm:$0xff] %vm1254, %v8452
      %8555 = vst.msk [vmem:[%s602 + $0xd8] sm:$0xff] %vm1254, %v8467
      %8556 = vst.msk [vmem:[%s602 + $0xe0] sm:$0xff] %vm1254, %v8482
      %8557 = vst.msk [vmem:[%s602 + $0xe8] sm:$0xff] %vm1254, %v8497
      %8558 = vst.msk [vmem:[%s602 + $0xf0] sm:$0xff] %vm1254, %v8512
      %8559 = vst.msk [vmem:[%s602 + $0xf8] sm:$0xff] %vm1254, %v8527
      %p8560 = scmp.lt.s32.totalorder %s30, 1
      %s8561 = scalar_select %p8560, %s30, 1
      %s8562 = smul.addr %s8561, 32
      %s8563 = smul.addr %s8562, 8
      %s8564 = scalar_lea.vmem %s19, %s8563
      // Predicated region
      $region97: #{_forward_impl.1} parent=95 // pred_check
        %p8565 = pneg %p452
      $region98: #{_forward_impl.1} parent=95 // pred_check_branch
        %8567 = sbr.rel (%p8565) target = $region100
      $region99: #{_forward_impl.1} parent=95 // pred_region
        _
      $region100: #{_forward_impl.1} parent=95 // pred_fallthru
        _
    $region96: #{_forward_impl.1} parent=5 // pred_fallthru
      _
    %p8568 = scmp.le.s32.totalorder 2, %s25
    // Predicated region
    $region101: #{_forward_impl.1} parent=5 // pred_check
      %p8569 = pneg %p8568
    $region102: #{_forward_impl.1} parent=5 // pred_check_branch
      %8571 = sbr.rel (%p8569) target = $region104
    $region103: #{_forward_impl.1} parent=5 // pred_region
      %s8572 = ssub.s32 %s25, 2
      // Predicated region
      $region105: #{_forward_impl.1} parent=103 // pred_check
        %p8573 = pneg %p458
      $region106: #{_forward_impl.1} parent=103 // pred_check_branch
        %8575 = sbr.rel (%p8573) target = $region108
      $region107: #{_forward_impl.1} parent=103 // pred_region
        %p8576 = scmp.lt.s32.totalorder %s31, 1
        %s8577 = scalar_select %p8576, %s31, 1
        %s8578 = smul.addr %s8577, 32
        %s8579 = smul.addr %s8578, 8
        %s8580 = scalar_lea.vmem %s19, %s8579
      $region108: #{_forward_impl.1} parent=103 // pred_fallthru
        _
    $region104: #{_forward_impl.1} parent=5 // pred_fallthru
      _
  $region6: #{_forward_impl.1} parent=0 // loop_footer
    %s29 = sadd.s32 1, %s25
  $region7: #{_forward_impl.1} parent=0 // loop_footer_branch
    %24 = sbr.rel target = $region3
  $region8: #{_forward_impl.1} parent=0 // loop_exit
    _

</llo_original>
